<compile_context>
chip_gen: v7x
topology: tpu7x:2x2x1
jax: 0.10.0
libtpu: 0.0.40
codegen_flags: <defaults>
</compile_context>

<pallas_src>
import jax
import jax.numpy as jnp
from jax import lax
from jax.experimental import pallas as pl
from jax.experimental.pallas import tpu as pltpu

INPUT_SIZE = 128
HIDDEN = 150
FC1_DIM = 50
NCLASS = 7

HP = 256           # hidden width padded to a lane/MXU-aligned size (150 -> 256)
G3 = 3 * HP        # fused gate width, gate order [r | z | n]
SUBLANE = 8


def _round_up(x, m):
    return (x + m - 1) // m * m


def rnn_forward(x, packed_params):
    """x: (B, 128, T) float32; packed_params: tuple from pack_params()."""
    B, C, T = x.shape
    assert C == INPUT_SIZE and T >= 1
    BP = max(SUBLANE, _round_up(B, SUBLANE))

    xt = jnp.transpose(x, (2, 0, 1))                       # (T, B, 128), batch_first semantics
    if BP != B:
        xt = jnp.pad(xt, ((0, 0), (0, BP - B), (0, 0)))    # pad batch to a full sublane group
    x_flat = xt.reshape(T * BP, INPUT_SIZE)                # free reshape in HBM

    def kernel(x_ref, wih0_ref, bi0_ref, wh0f_ref, bhn0_ref,
               bi1_ref, whh1_ref, bhn1_ref,
               fc1w_ref, fc1b_ref, fc2w_ref, fc2b_ref,
               out_ref, gi0_ref):
        # ---- pre-pass: layer-0 input projection for ALL timesteps (one big MXU matmul) ----
        gi0 = (jnp.dot(x_ref[...], wih0_ref[...], preferred_element_type=jnp.float32)
               + bi0_ref[...])
        gi0_ref[...] = gi0.reshape(T, BP, G3)              # (T, BP, G3): static-stride t-indexing

        # ---- hoist loop-invariant bias broadcasts out of the serial loop ----
        bhn0_b = jnp.broadcast_to(bhn0_ref[...], (BP, HP))
        bhn1_b = jnp.broadcast_to(bhn1_ref[...], (BP, HP))
        bi1_b = jnp.broadcast_to(bi1_ref[...], (BP, G3))

        def recur(gi, gh, h, bhn_b):
            # One GRU recurrent update (PyTorch gate semantics), gates packed [r|z|n].
            r = jax.nn.sigmoid(gi[:, 0 * HP:1 * HP] + gh[:, 0 * HP:1 * HP])
            z = jax.nn.sigmoid(gi[:, 1 * HP:2 * HP] + gh[:, 1 * HP:2 * HP])
            n = jnp.tanh(gi[:, 2 * HP:3 * HP] + r * (gh[:, 2 * HP:3 * HP] + bhn_b))
            return (1.0 - z) * n + z * h

        def h0_proj(h0):
            # Single fused MXU stream for the two per-step matmuls sharing LHS h0(t-1):
            # [h0 @ whh0 | h0 @ wih1] in one (BP,256)x(256,1536) dot.
            proj = jnp.dot(h0, wh0f_ref[...], preferred_element_type=jnp.float32)
            return proj[:, :G3], proj[:, G3:] + bi1_b       # gh0, gi1

        zeros_h = jnp.zeros((BP, HP), jnp.float32)
        zeros_g = jnp.zeros((BP, G3), jnp.float32)

        # prologue: layer-0 step 0 (h0_prev == 0 so gh0 == 0 exactly; matmul skipped)
        h0 = recur(gi0_ref[0], zeros_g, zeros_h, bhn0_b)
        h1 = zeros_h

        # steady state: layer-0(t) and layer-1(t-1) both depend only on h0(t-1);
        # one loop body carries two independent MXU/EUP chains.
        def body(t, carry):
            h0_prev, h1_prev = carry
            gh0, gi1 = h0_proj(h0_prev)
            gh1 = jnp.dot(h1_prev, whh1_ref[...], preferred_element_type=jnp.float32)
            h0_new = recur(gi0_ref[t], gh0, h0_prev, bhn0_b)
            h1_new = recur(gi1, gh1, h1_prev, bhn1_b)
            return (h0_new, h1_new)

        unroll = True if T <= 16 else 4
        h0, h1 = lax.fori_loop(1, T, body, (h0, h1), unroll=unroll)

        # epilogue: layer-1 step T-1, then fc1 -> relu -> fc2 on h_n[-1]
        _, gi1 = h0_proj(h0)
        gh1 = jnp.dot(h1, whh1_ref[...], preferred_element_type=jnp.float32)
        h1 = recur(gi1, gh1, h1, bhn1_b)

        y = jnp.dot(h1, fc1w_ref[...], preferred_element_type=jnp.float32) + fc1b_ref[...]
        y = jnp.maximum(y, 0.0)
        y = jnp.dot(y, fc2w_ref[...], preferred_element_type=jnp.float32) + fc2b_ref[...]
        out_ref[...] = y.astype(out_ref.dtype)

    def full(shape):
        return pl.BlockSpec(shape, lambda i, _n=len(shape): (0,) * _n)

    grid_spec = pltpu.PrefetchScalarGridSpec(
        num_scalar_prefetch=0,
        grid=(1,),                              # time loop lives inside the kernel
        in_specs=[
            full((T * BP, INPUT_SIZE)),         # x, all timesteps
            full((INPUT_SIZE, G3)),             # wih0 fused
            full((1, G3)),                      # bi0 fused (r,z: ih+hh folded; n: ih only)
            full((HP, 2 * G3)),                 # [whh0 | wih1] same-LHS fused weight
            full((1, HP)),                      # b_hn0
            full((1, G3)),                      # bi1 fused
            full((HP, G3)),                     # whh1 fused
            full((1, HP)),                      # b_hn1
            full((HP, FC1_DIM)),                # fc1 w (rows zero-padded 150->256)
            full((1, FC1_DIM)),                 # fc1 b
            full((FC1_DIM, NCLASS)),            # fc2 w
            full((1, NCLASS)),                  # fc2 b
        ],
        out_specs=pl.BlockSpec((BP, NCLASS), lambda i: (0, 0)),
        scratch_shapes=[
            pltpu.VMEM((T, BP, G3), jnp.float32),    # precomputed gi0 for all timesteps
        ],
    )

    # Resident-footprint estimate: gi0 scratch (1x) + x / params (2x: default double
    # buffering at grid=(1,)) + headroom; raise the scoped VMEM limit past the default
    # for long sequences (v5e default is 16 MiB, v6e/v7x 32 MiB).
    param_bytes = sum(int(p.size) * p.dtype.itemsize for p in packed_params)
    est_vmem = (4 * T * BP * G3
                + 2 * 4 * T * BP * INPUT_SIZE
                + 2 * param_bytes
                + (4 << 20))
    vmem_limit = min(max(est_vmem, 32 * 1024 * 1024), 128 * 1024 * 1024)

    out = pl.pallas_call(
        kernel,
        out_shape=jax.ShapeDtypeStruct((BP, NCLASS), jnp.float32),
        grid_spec=grid_spec,
        compiler_params=pltpu.CompilerParams(
            dimension_semantics=("arbitrary",),
            vmem_limit_bytes=vmem_limit),
    )(x_flat, *packed_params)
    return out[:B]


def init_params(key):
    """Deterministic init, PyTorch-like uniform(-1/sqrt(H), 1/sqrt(H)); PyTorch layout."""
    bound = 1.0 / jnp.sqrt(jnp.float32(HIDDEN))
    keys = jax.random.split(key, 12)
    u = lambda k, shape: jax.random.uniform(k, shape, jnp.float32, -bound, bound)
    wih0 = u(keys[0], (3, INPUT_SIZE, HIDDEN))
    whh0 = u(keys[1], (3, HIDDEN, HIDDEN))
    bih0 = u(keys[2], (3, 1, HIDDEN))
    bhh0 = u(keys[3], (3, 1, HIDDEN))
    wih1 = u(keys[4], (3, HIDDEN, HIDDEN))
    whh1 = u(keys[5], (3, HIDDEN, HIDDEN))
    bih1 = u(keys[6], (3, 1, HIDDEN))
    bhh1 = u(keys[7], (3, 1, HIDDEN))
    fc1_w = u(keys[8], (HIDDEN, FC1_DIM))
    fc1_b = u(keys[9], (1, FC1_DIM))
    fc2_w = u(keys[10], (FC1_DIM, NCLASS))
    fc2_b = u(keys[11], (1, NCLASS))
    return (wih0, whh0, bih0, bhh0, wih1, whh1, bih1, bhh1,
            fc1_w, fc1_b, fc2_w, fc2_b)


def pack_params(params):
    """Convert PyTorch-layout GRU/FC params into the fused, lane-padded kernel layout."""
    (wih0, whh0, bih0, bhh0, wih1, whh1, bih1, bhh1,
     fc1_w, fc1_b, fc2_w, fc2_b) = params

    def fuse_w(w):
        # w: (3, in_dim, HIDDEN) -> (in_pad, G3), gates packed [r | z | n], zero-padded
        in_dim = w.shape[1]
        in_pad = in_dim if in_dim == INPUT_SIZE else HP
        out = jnp.zeros((in_pad, G3), jnp.float32)
        for g in range(3):
            out = out.at[:in_dim, g * HP:g * HP + HIDDEN].set(w[g])
        return out

    def fuse_bi(bih, bhh):
        # r/z: fold ih+hh biases into one add; n: ih bias only (hh n-bias kept separate)
        b = jnp.zeros((1, G3), jnp.float32)
        b = b.at[:, 0 * HP:0 * HP + HIDDEN].set(bih[0] + bhh[0])
        b = b.at[:, 1 * HP:1 * HP + HIDDEN].set(bih[1] + bhh[1])
        b = b.at[:, 2 * HP:2 * HP + HIDDEN].set(bih[2])
        return b

    def pad_bhn(bhh):
        return jnp.zeros((1, HP), jnp.float32).at[:, :HIDDEN].set(bhh[2])

    # Same-LHS fusion: both whh0 and wih1 multiply h0(t-1) every step.
    w_h0f = jnp.concatenate([fuse_w(whh0), fuse_w(wih1)], axis=1)      # (HP, 2*G3)
    fc1_w_p = jnp.zeros((HP, FC1_DIM), jnp.float32).at[:HIDDEN, :].set(fc1_w)

    return (fuse_w(wih0), fuse_bi(bih0, bhh0), w_h0f, pad_bhn(bhh0),
            fuse_bi(bih1, bhh1), fuse_w(whh1), pad_bhn(bhh1),
            fc1_w_p, fc1_b, fc2_w, fc2_b)


def ref_forward(x, params):
    """Pure-JAX reference mirroring torch.nn.GRU (eval) + fc1/relu/fc2, original layout."""
    (wih0, whh0, bih0, bhh0, wih1, whh1, bih1, bhh1,
     fc1_w, fc1_b, fc2_w, fc2_b) = params
    xt = jnp.transpose(x, (2, 0, 1))                 # (T, B, 128)
    B = x.shape[0]

    def cell(x_t, h, wih, whh, bih, bhh):
        r = jax.nn.sigmoid(x_t @ wih[0] + bih[0] + h @ whh[0] + bhh[0])
        z = jax.nn.sigmoid(x_t @ wih[1] + bih[1] + h @ whh[1] + bhh[1])
        n = jnp.tanh(x_t @ wih[2] + bih[2] + r * (h @ whh[2] + bhh[2]))
        return (1.0 - z) * n + z * h

    def step(carry, x_t):
        h0, h1 = carry
        h0 = cell(x_t, h0, wih0, whh0, bih0, bhh0)
        h1 = cell(h0, h1, wih1, whh1, bih1, bhh1)
        return (h0, h1), None

    h0 = jnp.zeros((B, HIDDEN), jnp.float32)
    h1 = jnp.zeros((B, HIDDEN), jnp.float32)
    (h0, h1), _ = jax.lax.scan(step, (h0, h1), xt)
    y = jnp.maximum(h1 @ fc1_w + fc1_b, 0.0)
    return y @ fc2_w + fc2_b


if __name__ == "__main__":
    key = jax.random.PRNGKey(0)
    k_x, k_p = jax.random.split(key)

    B, T = 2, 8
    x = jax.random.normal(k_x, (B, INPUT_SIZE, T), dtype=jnp.float32)
    params = init_params(k_p)
    packed = pack_params(params)

    out = jax.block_until_ready(rnn_forward(x, packed))
    assert out.shape == (B, NCLASS)

    ref = jax.block_until_ready(ref_forward(x, params))
    assert jnp.allclose(out, ref, atol=1e-4, rtol=1e-4), (out, ref)

    print("KERNEL_OK")
</pallas_src>

<mosaic_0001>
module attributes {stable_mosaic.version = 11 : i64} {
  func.func @kernel(%arg0: i32, %arg1: memref<64x128xf32, #tpu.memory_space<vmem>>, %arg2: memref<128x768xf32, #tpu.memory_space<vmem>>, %arg3: memref<1x768xf32, #tpu.memory_space<vmem>>, %arg4: memref<256x1536xf32, #tpu.memory_space<vmem>>, %arg5: memref<1x256xf32, #tpu.memory_space<vmem>>, %arg6: memref<1x768xf32, #tpu.memory_space<vmem>>, %arg7: memref<256x768xf32, #tpu.memory_space<vmem>>, %arg8: memref<1x256xf32, #tpu.memory_space<vmem>>, %arg9: memref<256x50xf32, #tpu.memory_space<vmem>>, %arg10: memref<1x50xf32, #tpu.memory_space<vmem>>, %arg11: memref<50x7xf32, #tpu.memory_space<vmem>>, %arg12: memref<1x7xf32, #tpu.memory_space<vmem>>, %arg13: memref<8x7xf32, #tpu.memory_space<vmem>>, %arg14: memref<8x8x768xf32, #tpu.memory_space<vmem>>) attributes {dimension_semantics = [#tpu.dimension_semantics<arbitrary>], iteration_bounds = array<i64: 1>, scalar_prefetch = 0 : i64, scratch_operands = 1 : i64, tpu.core_type = #tpu.core_type<tc>, window_params = [{pipeline_mode = #tpu.pipeline_mode<synchronous>, transform_indices = @transform_0, window_bounds = array<i64: 64, 128>}, {pipeline_mode = #tpu.pipeline_mode<synchronous>, transform_indices = @transform_1, window_bounds = array<i64: 128, 768>}, {pipeline_mode = #tpu.pipeline_mode<synchronous>, transform_indices = @transform_2, window_bounds = array<i64: 1, 768>}, {pipeline_mode = #tpu.pipeline_mode<synchronous>, transform_indices = @transform_3, window_bounds = array<i64: 256, 1536>}, {pipeline_mode = #tpu.pipeline_mode<synchronous>, transform_indices = @transform_4, window_bounds = array<i64: 1, 256>}, {pipeline_mode = #tpu.pipeline_mode<synchronous>, transform_indices = @transform_5, window_bounds = array<i64: 1, 768>}, {pipeline_mode = #tpu.pipeline_mode<synchronous>, transform_indices = @transform_6, window_bounds = array<i64: 256, 768>}, {pipeline_mode = #tpu.pipeline_mode<synchronous>, transform_indices = @transform_7, window_bounds = array<i64: 1, 256>}, {pipeline_mode = #tpu.pipeline_mode<synchronous>, transform_indices = @transform_8, window_bounds = array<i64: 256, 50>}, {pipeline_mode = #tpu.pipeline_mode<synchronous>, transform_indices = @transform_9, window_bounds = array<i64: 1, 50>}, {pipeline_mode = #tpu.pipeline_mode<synchronous>, transform_indices = @transform_10, window_bounds = array<i64: 50, 7>}, {pipeline_mode = #tpu.pipeline_mode<synchronous>, transform_indices = @transform_11, window_bounds = array<i64: 1, 7>}, {pipeline_mode = #tpu.pipeline_mode<synchronous>, transform_indices = @transform_12, window_bounds = array<i64: 8, 7>}]} {
    %c0 = arith.constant 0 : index
    %c0_0 = arith.constant 0 : index
    %0 = vector.load %arg1[%c0, %c0_0] : memref<64x128xf32, #tpu.memory_space<vmem>>, vector<64x128xf32>
    %c0_1 = arith.constant 0 : index
    %c0_2 = arith.constant 0 : index
    %1 = vector.load %arg2[%c0_1, %c0_2] : memref<128x768xf32, #tpu.memory_space<vmem>>, vector<128x768xf32>
    %cst = arith.constant dense<0.000000e+00> : vector<64x768xf32>
    %2 = tpu.matmul %0, %1, %cst {dimension_numbers = #tpu.dot_dimension_numbers<[1], [0], [0], [1], [0, 0, 1, 1], [], []>} : vector<64x128xf32>, vector<128x768xf32>, vector<64x768xf32> -> vector<64x768xf32>
    %c0_3 = arith.constant 0 : index
    %c0_4 = arith.constant 0 : index
    %3 = vector.load %arg3[%c0_3, %c0_4] : memref<1x768xf32, #tpu.memory_space<vmem>>, vector<1x768xf32>
    %4 = vector.broadcast %3 : vector<1x768xf32> to vector<64x768xf32>
    %5 = arith.addf %2, %4 : vector<64x768xf32>
    %6 = vector.shape_cast %5 : vector<64x768xf32> to vector<8x8x768xf32>
    %c0_5 = arith.constant 0 : index
    %c0_6 = arith.constant 0 : index
    %c0_7 = arith.constant 0 : index
    %7 = vector.load %arg14[%c0_5, %c0_6, %c0_7] : memref<8x8x768xf32, #tpu.memory_space<vmem>>, vector<8x8x768xf32>
    tpu.vector_store %arg14[%c0_5, %c0_6, %c0_7], %6 {strides = array<i32>} : memref<8x8x768xf32, #tpu.memory_space<vmem>>, vector<8x8x768xf32>,
    %c0_8 = arith.constant 0 : index
    %c0_9 = arith.constant 0 : index
    %8 = vector.load %arg5[%c0_8, %c0_9] : memref<1x256xf32, #tpu.memory_space<vmem>>, vector<1x256xf32>
    %9 = vector.shape_cast %8 : vector<1x256xf32> to vector<1x256xf32>
    %10 = vector.broadcast %9 : vector<1x256xf32> to vector<8x256xf32>
    %c0_10 = arith.constant 0 : index
    %c0_11 = arith.constant 0 : index
    %11 = vector.load %arg8[%c0_10, %c0_11] : memref<1x256xf32, #tpu.memory_space<vmem>>, vector<1x256xf32>
    %12 = vector.shape_cast %11 : vector<1x256xf32> to vector<1x256xf32>
    %13 = vector.broadcast %12 : vector<1x256xf32> to vector<8x256xf32>
    %c0_12 = arith.constant 0 : index
    %c0_13 = arith.constant 0 : index
    %14 = vector.load %arg6[%c0_12, %c0_13] : memref<1x768xf32, #tpu.memory_space<vmem>>, vector<1x768xf32>
    %15 = vector.shape_cast %14 : vector<1x768xf32> to vector<1x768xf32>
    %16 = vector.broadcast %15 : vector<1x768xf32> to vector<8x768xf32>
    %cst_14 = arith.constant 0.000000e+00 : f32
    %17 = vector.broadcast %cst_14 : f32 to vector<8x256xf32>
    %cst_15 = arith.constant 0.000000e+00 : f32
    %18 = vector.broadcast %cst_15 : f32 to vector<8x768xf32>
    %c0_16 = arith.constant 0 : index
    %c0_17 = arith.constant 0 : index
    %c0_18 = arith.constant 0 : index
    %19 = vector.load %arg14[%c0_16, %c0_17, %c0_18] : memref<8x8x768xf32, #tpu.memory_space<vmem>>, vector<1x8x768xf32>
    %20 = vector.shape_cast %19 : vector<1x8x768xf32> to vector<8x768xf32>
    %21 = vector.extract_strided_slice %20 {offsets = [0, 0], sizes = [8, 256], strides = [1, 1]} : vector<8x768xf32> to vector<8x256xf32>
    %22 = vector.extract_strided_slice %18 {offsets = [0, 0], sizes = [8, 256], strides = [1, 1]} : vector<8x768xf32> to vector<8x256xf32>
    %23 = arith.addf %21, %22 : vector<8x256xf32>
    %24 = arith.negf %23 : vector<8x256xf32>
    %25 = math.exp %24 : vector<8x256xf32>
    %cst_19 = arith.constant 1.000000e+00 : f32
    %26 = vector.broadcast %cst_19 : f32 to vector<8x256xf32>
    %27 = arith.addf %26, %25 : vector<8x256xf32>
    %28 = arith.divf %26, %27 : vector<8x256xf32>
    %29 = vector.extract_strided_slice %20 {offsets = [0, 256], sizes = [8, 256], strides = [1, 1]} : vector<8x768xf32> to vector<8x256xf32>
    %30 = vector.extract_strided_slice %18 {offsets = [0, 256], sizes = [8, 256], strides = [1, 1]} : vector<8x768xf32> to vector<8x256xf32>
    %31 = arith.addf %29, %30 : vector<8x256xf32>
    %32 = arith.negf %31 : vector<8x256xf32>
    %33 = math.exp %32 : vector<8x256xf32>
    %cst_20 = arith.constant 1.000000e+00 : f32
    %34 = vector.broadcast %cst_20 : f32 to vector<8x256xf32>
    %35 = arith.addf %34, %33 : vector<8x256xf32>
    %36 = arith.divf %34, %35 : vector<8x256xf32>
    %37 = vector.extract_strided_slice %20 {offsets = [0, 512], sizes = [8, 256], strides = [1, 1]} : vector<8x768xf32> to vector<8x256xf32>
    %38 = vector.extract_strided_slice %18 {offsets = [0, 512], sizes = [8, 256], strides = [1, 1]} : vector<8x768xf32> to vector<8x256xf32>
    %39 = arith.addf %38, %10 : vector<8x256xf32>
    %40 = arith.mulf %28, %39 : vector<8x256xf32>
    %41 = arith.addf %37, %40 : vector<8x256xf32>
    %42 = math.tanh %41 : vector<8x256xf32>
    %cst_21 = arith.constant 1.000000e+00 : f32
    %43 = vector.broadcast %cst_21 : f32 to vector<8x256xf32>
    %44 = arith.subf %43, %36 : vector<8x256xf32>
    %45 = arith.mulf %44, %42 : vector<8x256xf32>
    %46 = arith.mulf %36, %17 : vector<8x256xf32>
    %47 = arith.addf %45, %46 : vector<8x256xf32>
    %c1_i32 = arith.constant 1 : i32
    %c0_22 = arith.constant 0 : index
    %c0_23 = arith.constant 0 : index
    %48 = vector.load %arg4[%c0_22, %c0_23] : memref<256x1536xf32, #tpu.memory_space<vmem>>, vector<256x1536xf32>
    %cst_24 = arith.constant dense<0.000000e+00> : vector<8x1536xf32>
    %49 = tpu.matmul %47, %48, %cst_24 {dimension_numbers = #tpu.dot_dimension_numbers<[1], [0], [0], [1], [0, 0, 1, 1], [], []>} : vector<8x256xf32>, vector<256x1536xf32>, vector<8x1536xf32> -> vector<8x1536xf32>
    %50 = vector.extract_strided_slice %49 {offsets = [0, 0], sizes = [8, 768], strides = [1, 1]} : vector<8x1536xf32> to vector<8x768xf32>
    %51 = vector.extract_strided_slice %49 {offsets = [0, 768], sizes = [8, 768], strides = [1, 1]} : vector<8x1536xf32> to vector<8x768xf32>
    %52 = arith.addf %51, %16 : vector<8x768xf32>
    %c0_25 = arith.constant 0 : index
    %c0_26 = arith.constant 0 : index
    %53 = vector.load %arg7[%c0_25, %c0_26] : memref<256x768xf32, #tpu.memory_space<vmem>>, vector<256x768xf32>
    %cst_27 = arith.constant dense<0.000000e+00> : vector<8x768xf32>
    %54 = tpu.matmul %17, %53, %cst_27 {dimension_numbers = #tpu.dot_dimension_numbers<[1], [0], [0], [1], [0, 0, 1, 1], [], []>} : vector<8x256xf32>, vector<256x768xf32>, vector<8x768xf32> -> vector<8x768xf32>
    %55 = arith.index_cast %c1_i32 : i32 to index
    %c0_28 = arith.constant 0 : index
    %c0_29 = arith.constant 0 : index
    %56 = vector.load %arg14[%55, %c0_28, %c0_29] : memref<8x8x768xf32, #tpu.memory_space<vmem>>, vector<1x8x768xf32>
    %57 = vector.shape_cast %56 : vector<1x8x768xf32> to vector<8x768xf32>
    %58 = vector.extract_strided_slice %57 {offsets = [0, 0], sizes = [8, 256], strides = [1, 1]} : vector<8x768xf32> to vector<8x256xf32>
    %59 = vector.extract_strided_slice %50 {offsets = [0, 0], sizes = [8, 256], strides = [1, 1]} : vector<8x768xf32> to vector<8x256xf32>
    %60 = arith.addf %58, %59 : vector<8x256xf32>
    %61 = arith.negf %60 : vector<8x256xf32>
    %62 = math.exp %61 : vector<8x256xf32>
    %cst_30 = arith.constant 1.000000e+00 : f32
    %63 = vector.broadcast %cst_30 : f32 to vector<8x256xf32>
    %64 = arith.addf %63, %62 : vector<8x256xf32>
    %65 = arith.divf %63, %64 : vector<8x256xf32>
    %66 = vector.extract_strided_slice %57 {offsets = [0, 256], sizes = [8, 256], strides = [1, 1]} : vector<8x768xf32> to vector<8x256xf32>
    %67 = vector.extract_strided_slice %50 {offsets = [0, 256], sizes = [8, 256], strides = [1, 1]} : vector<8x768xf32> to vector<8x256xf32>
    %68 = arith.addf %66, %67 : vector<8x256xf32>
    %69 = arith.negf %68 : vector<8x256xf32>
    %70 = math.exp %69 : vector<8x256xf32>
    %cst_31 = arith.constant 1.000000e+00 : f32
    %71 = vector.broadcast %cst_31 : f32 to vector<8x256xf32>
    %72 = arith.addf %71, %70 : vector<8x256xf32>
    %73 = arith.divf %71, %72 : vector<8x256xf32>
    %74 = vector.extract_strided_slice %57 {offsets = [0, 512], sizes = [8, 256], strides = [1, 1]} : vector<8x768xf32> to vector<8x256xf32>
    %75 = vector.extract_strided_slice %50 {offsets = [0, 512], sizes = [8, 256], strides = [1, 1]} : vector<8x768xf32> to vector<8x256xf32>
    %76 = arith.addf %75, %10 : vector<8x256xf32>
    %77 = arith.mulf %65, %76 : vector<8x256xf32>
    %78 = arith.addf %74, %77 : vector<8x256xf32>
    %79 = math.tanh %78 : vector<8x256xf32>
    %cst_32 = arith.constant 1.000000e+00 : f32
    %80 = vector.broadcast %cst_32 : f32 to vector<8x256xf32>
    %81 = arith.subf %80, %73 : vector<8x256xf32>
    %82 = arith.mulf %81, %79 : vector<8x256xf32>
    %83 = arith.mulf %73, %47 : vector<8x256xf32>
    %84 = arith.addf %82, %83 : vector<8x256xf32>
    %85 = vector.extract_strided_slice %52 {offsets = [0, 0], sizes = [8, 256], strides = [1, 1]} : vector<8x768xf32> to vector<8x256xf32>
    %86 = vector.extract_strided_slice %54 {offsets = [0, 0], sizes = [8, 256], strides = [1, 1]} : vector<8x768xf32> to vector<8x256xf32>
    %87 = arith.addf %85, %86 : vector<8x256xf32>
    %88 = arith.negf %87 : vector<8x256xf32>
    %89 = math.exp %88 : vector<8x256xf32>
    %cst_33 = arith.constant 1.000000e+00 : f32
    %90 = vector.broadcast %cst_33 : f32 to vector<8x256xf32>
    %91 = arith.addf %90, %89 : vector<8x256xf32>
    %92 = arith.divf %90, %91 : vector<8x256xf32>
    %93 = vector.extract_strided_slice %52 {offsets = [0, 256], sizes = [8, 256], strides = [1, 1]} : vector<8x768xf32> to vector<8x256xf32>
    %94 = vector.extract_strided_slice %54 {offsets = [0, 256], sizes = [8, 256], strides = [1, 1]} : vector<8x768xf32> to vector<8x256xf32>
    %95 = arith.addf %93, %94 : vector<8x256xf32>
    %96 = arith.negf %95 : vector<8x256xf32>
    %97 = math.exp %96 : vector<8x256xf32>
    %cst_34 = arith.constant 1.000000e+00 : f32
    %98 = vector.broadcast %cst_34 : f32 to vector<8x256xf32>
    %99 = arith.addf %98, %97 : vector<8x256xf32>
    %100 = arith.divf %98, %99 : vector<8x256xf32>
    %101 = vector.extract_strided_slice %52 {offsets = [0, 512], sizes = [8, 256], strides = [1, 1]} : vector<8x768xf32> to vector<8x256xf32>
    %102 = vector.extract_strided_slice %54 {offsets = [0, 512], sizes = [8, 256], strides = [1, 1]} : vector<8x768xf32> to vector<8x256xf32>
    %103 = arith.addf %102, %13 : vector<8x256xf32>
    %104 = arith.mulf %92, %103 : vector<8x256xf32>
    %105 = arith.addf %101, %104 : vector<8x256xf32>
    %106 = math.tanh %105 : vector<8x256xf32>
    %cst_35 = arith.constant 1.000000e+00 : f32
    %107 = vector.broadcast %cst_35 : f32 to vector<8x256xf32>
    %108 = arith.subf %107, %100 : vector<8x256xf32>
    %109 = arith.mulf %108, %106 : vector<8x256xf32>
    %110 = arith.mulf %100, %17 : vector<8x256xf32>
    %111 = arith.addf %109, %110 : vector<8x256xf32>
    %c2_i32 = arith.constant 2 : i32
    %c0_36 = arith.constant 0 : index
    %c0_37 = arith.constant 0 : index
    %112 = vector.load %arg4[%c0_36, %c0_37] : memref<256x1536xf32, #tpu.memory_space<vmem>>, vector<256x1536xf32>
    %cst_38 = arith.constant dense<0.000000e+00> : vector<8x1536xf32>
    %113 = tpu.matmul %84, %112, %cst_38 {dimension_numbers = #tpu.dot_dimension_numbers<[1], [0], [0], [1], [0, 0, 1, 1], [], []>} : vector<8x256xf32>, vector<256x1536xf32>, vector<8x1536xf32> -> vector<8x1536xf32>
    %114 = vector.extract_strided_slice %113 {offsets = [0, 0], sizes = [8, 768], strides = [1, 1]} : vector<8x1536xf32> to vector<8x768xf32>
    %115 = vector.extract_strided_slice %113 {offsets = [0, 768], sizes = [8, 768], strides = [1, 1]} : vector<8x1536xf32> to vector<8x768xf32>
    %116 = arith.addf %115, %16 : vector<8x768xf32>
    %c0_39 = arith.constant 0 : index
    %c0_40 = arith.constant 0 : index
    %117 = vector.load %arg7[%c0_39, %c0_40] : memref<256x768xf32, #tpu.memory_space<vmem>>, vector<256x768xf32>
    %cst_41 = arith.constant dense<0.000000e+00> : vector<8x768xf32>
    %118 = tpu.matmul %111, %117, %cst_41 {dimension_numbers = #tpu.dot_dimension_numbers<[1], [0], [0], [1], [0, 0, 1, 1], [], []>} : vector<8x256xf32>, vector<256x768xf32>, vector<8x768xf32> -> vector<8x768xf32>
    %119 = arith.index_cast %c2_i32 : i32 to index
    %c0_42 = arith.constant 0 : index
    %c0_43 = arith.constant 0 : index
    %120 = vector.load %arg14[%119, %c0_42, %c0_43] : memref<8x8x768xf32, #tpu.memory_space<vmem>>, vector<1x8x768xf32>
    %121 = vector.shape_cast %120 : vector<1x8x768xf32> to vector<8x768xf32>
    %122 = vector.extract_strided_slice %121 {offsets = [0, 0], sizes = [8, 256], strides = [1, 1]} : vector<8x768xf32> to vector<8x256xf32>
    %123 = vector.extract_strided_slice %114 {offsets = [0, 0], sizes = [8, 256], strides = [1, 1]} : vector<8x768xf32> to vector<8x256xf32>
    %124 = arith.addf %122, %123 : vector<8x256xf32>
    %125 = arith.negf %124 : vector<8x256xf32>
    %126 = math.exp %125 : vector<8x256xf32>
    %cst_44 = arith.constant 1.000000e+00 : f32
    %127 = vector.broadcast %cst_44 : f32 to vector<8x256xf32>
    %128 = arith.addf %127, %126 : vector<8x256xf32>
    %129 = arith.divf %127, %128 : vector<8x256xf32>
    %130 = vector.extract_strided_slice %121 {offsets = [0, 256], sizes = [8, 256], strides = [1, 1]} : vector<8x768xf32> to vector<8x256xf32>
    %131 = vector.extract_strided_slice %114 {offsets = [0, 256], sizes = [8, 256], strides = [1, 1]} : vector<8x768xf32> to vector<8x256xf32>
    %132 = arith.addf %130, %131 : vector<8x256xf32>
    %133 = arith.negf %132 : vector<8x256xf32>
    %134 = math.exp %133 : vector<8x256xf32>
    %cst_45 = arith.constant 1.000000e+00 : f32
    %135 = vector.broadcast %cst_45 : f32 to vector<8x256xf32>
    %136 = arith.addf %135, %134 : vector<8x256xf32>
    %137 = arith.divf %135, %136 : vector<8x256xf32>
    %138 = vector.extract_strided_slice %121 {offsets = [0, 512], sizes = [8, 256], strides = [1, 1]} : vector<8x768xf32> to vector<8x256xf32>
    %139 = vector.extract_strided_slice %114 {offsets = [0, 512], sizes = [8, 256], strides = [1, 1]} : vector<8x768xf32> to vector<8x256xf32>
    %140 = arith.addf %139, %10 : vector<8x256xf32>
    %141 = arith.mulf %129, %140 : vector<8x256xf32>
    %142 = arith.addf %138, %141 : vector<8x256xf32>
    %143 = math.tanh %142 : vector<8x256xf32>
    %cst_46 = arith.constant 1.000000e+00 : f32
    %144 = vector.broadcast %cst_46 : f32 to vector<8x256xf32>
    %145 = arith.subf %144, %137 : vector<8x256xf32>
    %146 = arith.mulf %145, %143 : vector<8x256xf32>
    %147 = arith.mulf %137, %84 : vector<8x256xf32>
    %148 = arith.addf %146, %147 : vector<8x256xf32>
    %149 = vector.extract_strided_slice %116 {offsets = [0, 0], sizes = [8, 256], strides = [1, 1]} : vector<8x768xf32> to vector<8x256xf32>
    %150 = vector.extract_strided_slice %118 {offsets = [0, 0], sizes = [8, 256], strides = [1, 1]} : vector<8x768xf32> to vector<8x256xf32>
    %151 = arith.addf %149, %150 : vector<8x256xf32>
    %152 = arith.negf %151 : vector<8x256xf32>
    %153 = math.exp %152 : vector<8x256xf32>
    %cst_47 = arith.constant 1.000000e+00 : f32
    %154 = vector.broadcast %cst_47 : f32 to vector<8x256xf32>
    %155 = arith.addf %154, %153 : vector<8x256xf32>
    %156 = arith.divf %154, %155 : vector<8x256xf32>
    %157 = vector.extract_strided_slice %116 {offsets = [0, 256], sizes = [8, 256], strides = [1, 1]} : vector<8x768xf32> to vector<8x256xf32>
    %158 = vector.extract_strided_slice %118 {offsets = [0, 256], sizes = [8, 256], strides = [1, 1]} : vector<8x768xf32> to vector<8x256xf32>
    %159 = arith.addf %157, %158 : vector<8x256xf32>
    %160 = arith.negf %159 : vector<8x256xf32>
    %161 = math.exp %160 : vector<8x256xf32>
    %cst_48 = arith.constant 1.000000e+00 : f32
    %162 = vector.broadcast %cst_48 : f32 to vector<8x256xf32>
    %163 = arith.addf %162, %161 : vector<8x256xf32>
    %164 = arith.divf %162, %163 : vector<8x256xf32>
    %165 = vector.extract_strided_slice %116 {offsets = [0, 512], sizes = [8, 256], strides = [1, 1]} : vector<8x768xf32> to vector<8x256xf32>
    %166 = vector.extract_strided_slice %118 {offsets = [0, 512], sizes = [8, 256], strides = [1, 1]} : vector<8x768xf32> to vector<8x256xf32>
    %167 = arith.addf %166, %13 : vector<8x256xf32>
    %168 = arith.mulf %156, %167 : vector<8x256xf32>
    %169 = arith.addf %165, %168 : vector<8x256xf32>
    %170 = math.tanh %169 : vector<8x256xf32>
    %cst_49 = arith.constant 1.000000e+00 : f32
    %171 = vector.broadcast %cst_49 : f32 to vector<8x256xf32>
    %172 = arith.subf %171, %164 : vector<8x256xf32>
    %173 = arith.mulf %172, %170 : vector<8x256xf32>
    %174 = arith.mulf %164, %111 : vector<8x256xf32>
    %175 = arith.addf %173, %174 : vector<8x256xf32>
    %c3_i32 = arith.constant 3 : i32
    %c0_50 = arith.constant 0 : index
    %c0_51 = arith.constant 0 : index
    %176 = vector.load %arg4[%c0_50, %c0_51] : memref<256x1536xf32, #tpu.memory_space<vmem>>, vector<256x1536xf32>
    %cst_52 = arith.constant dense<0.000000e+00> : vector<8x1536xf32>
    %177 = tpu.matmul %148, %176, %cst_52 {dimension_numbers = #tpu.dot_dimension_numbers<[1], [0], [0], [1], [0, 0, 1, 1], [], []>} : vector<8x256xf32>, vector<256x1536xf32>, vector<8x1536xf32> -> vector<8x1536xf32>
    %178 = vector.extract_strided_slice %177 {offsets = [0, 0], sizes = [8, 768], strides = [1, 1]} : vector<8x1536xf32> to vector<8x768xf32>
    %179 = vector.extract_strided_slice %177 {offsets = [0, 768], sizes = [8, 768], strides = [1, 1]} : vector<8x1536xf32> to vector<8x768xf32>
    %180 = arith.addf %179, %16 : vector<8x768xf32>
    %c0_53 = arith.constant 0 : index
    %c0_54 = arith.constant 0 : index
    %181 = vector.load %arg7[%c0_53, %c0_54] : memref<256x768xf32, #tpu.memory_space<vmem>>, vector<256x768xf32>
    %cst_55 = arith.constant dense<0.000000e+00> : vector<8x768xf32>
    %182 = tpu.matmul %175, %181, %cst_55 {dimension_numbers = #tpu.dot_dimension_numbers<[1], [0], [0], [1], [0, 0, 1, 1], [], []>} : vector<8x256xf32>, vector<256x768xf32>, vector<8x768xf32> -> vector<8x768xf32>
    %183 = arith.index_cast %c3_i32 : i32 to index
    %c0_56 = arith.constant 0 : index
    %c0_57 = arith.constant 0 : index
    %184 = vector.load %arg14[%183, %c0_56, %c0_57] : memref<8x8x768xf32, #tpu.memory_space<vmem>>, vector<1x8x768xf32>
    %185 = vector.shape_cast %184 : vector<1x8x768xf32> to vector<8x768xf32>
    %186 = vector.extract_strided_slice %185 {offsets = [0, 0], sizes = [8, 256], strides = [1, 1]} : vector<8x768xf32> to vector<8x256xf32>
    %187 = vector.extract_strided_slice %178 {offsets = [0, 0], sizes = [8, 256], strides = [1, 1]} : vector<8x768xf32> to vector<8x256xf32>
    %188 = arith.addf %186, %187 : vector<8x256xf32>
    %189 = arith.negf %188 : vector<8x256xf32>
    %190 = math.exp %189 : vector<8x256xf32>
    %cst_58 = arith.constant 1.000000e+00 : f32
    %191 = vector.broadcast %cst_58 : f32 to vector<8x256xf32>
    %192 = arith.addf %191, %190 : vector<8x256xf32>
    %193 = arith.divf %191, %192 : vector<8x256xf32>
    %194 = vector.extract_strided_slice %185 {offsets = [0, 256], sizes = [8, 256], strides = [1, 1]} : vector<8x768xf32> to vector<8x256xf32>
    %195 = vector.extract_strided_slice %178 {offsets = [0, 256], sizes = [8, 256], strides = [1, 1]} : vector<8x768xf32> to vector<8x256xf32>
    %196 = arith.addf %194, %195 : vector<8x256xf32>
    %197 = arith.negf %196 : vector<8x256xf32>
    %198 = math.exp %197 : vector<8x256xf32>
    %cst_59 = arith.constant 1.000000e+00 : f32
    %199 = vector.broadcast %cst_59 : f32 to vector<8x256xf32>
    %200 = arith.addf %199, %198 : vector<8x256xf32>
    %201 = arith.divf %199, %200 : vector<8x256xf32>
    %202 = vector.extract_strided_slice %185 {offsets = [0, 512], sizes = [8, 256], strides = [1, 1]} : vector<8x768xf32> to vector<8x256xf32>
    %203 = vector.extract_strided_slice %178 {offsets = [0, 512], sizes = [8, 256], strides = [1, 1]} : vector<8x768xf32> to vector<8x256xf32>
    %204 = arith.addf %203, %10 : vector<8x256xf32>
    %205 = arith.mulf %193, %204 : vector<8x256xf32>
    %206 = arith.addf %202, %205 : vector<8x256xf32>
    %207 = math.tanh %206 : vector<8x256xf32>
    %cst_60 = arith.constant 1.000000e+00 : f32
    %208 = vector.broadcast %cst_60 : f32 to vector<8x256xf32>
    %209 = arith.subf %208, %201 : vector<8x256xf32>
    %210 = arith.mulf %209, %207 : vector<8x256xf32>
    %211 = arith.mulf %201, %148 : vector<8x256xf32>
    %212 = arith.addf %210, %211 : vector<8x256xf32>
    %213 = vector.extract_strided_slice %180 {offsets = [0, 0], sizes = [8, 256], strides = [1, 1]} : vector<8x768xf32> to vector<8x256xf32>
    %214 = vector.extract_strided_slice %182 {offsets = [0, 0], sizes = [8, 256], strides = [1, 1]} : vector<8x768xf32> to vector<8x256xf32>
    %215 = arith.addf %213, %214 : vector<8x256xf32>
    %216 = arith.negf %215 : vector<8x256xf32>
    %217 = math.exp %216 : vector<8x256xf32>
    %cst_61 = arith.constant 1.000000e+00 : f32
    %218 = vector.broadcast %cst_61 : f32 to vector<8x256xf32>
    %219 = arith.addf %218, %217 : vector<8x256xf32>
    %220 = arith.divf %218, %219 : vector<8x256xf32>
    %221 = vector.extract_strided_slice %180 {offsets = [0, 256], sizes = [8, 256], strides = [1, 1]} : vector<8x768xf32> to vector<8x256xf32>
    %222 = vector.extract_strided_slice %182 {offsets = [0, 256], sizes = [8, 256], strides = [1, 1]} : vector<8x768xf32> to vector<8x256xf32>
    %223 = arith.addf %221, %222 : vector<8x256xf32>
    %224 = arith.negf %223 : vector<8x256xf32>
    %225 = math.exp %224 : vector<8x256xf32>
    %cst_62 = arith.constant 1.000000e+00 : f32
    %226 = vector.broadcast %cst_62 : f32 to vector<8x256xf32>
    %227 = arith.addf %226, %225 : vector<8x256xf32>
    %228 = arith.divf %226, %227 : vector<8x256xf32>
    %229 = vector.extract_strided_slice %180 {offsets = [0, 512], sizes = [8, 256], strides = [1, 1]} : vector<8x768xf32> to vector<8x256xf32>
    %230 = vector.extract_strided_slice %182 {offsets = [0, 512], sizes = [8, 256], strides = [1, 1]} : vector<8x768xf32> to vector<8x256xf32>
    %231 = arith.addf %230, %13 : vector<8x256xf32>
    %232 = arith.mulf %220, %231 : vector<8x256xf32>
    %233 = arith.addf %229, %232 : vector<8x256xf32>
    %234 = math.tanh %233 : vector<8x256xf32>
    %cst_63 = arith.constant 1.000000e+00 : f32
    %235 = vector.broadcast %cst_63 : f32 to vector<8x256xf32>
    %236 = arith.subf %235, %228 : vector<8x256xf32>
    %237 = arith.mulf %236, %234 : vector<8x256xf32>
    %238 = arith.mulf %228, %175 : vector<8x256xf32>
    %239 = arith.addf %237, %238 : vector<8x256xf32>
    %c4_i32 = arith.constant 4 : i32
    %c0_64 = arith.constant 0 : index
    %c0_65 = arith.constant 0 : index
    %240 = vector.load %arg4[%c0_64, %c0_65] : memref<256x1536xf32, #tpu.memory_space<vmem>>, vector<256x1536xf32>
    %cst_66 = arith.constant dense<0.000000e+00> : vector<8x1536xf32>
    %241 = tpu.matmul %212, %240, %cst_66 {dimension_numbers = #tpu.dot_dimension_numbers<[1], [0], [0], [1], [0, 0, 1, 1], [], []>} : vector<8x256xf32>, vector<256x1536xf32>, vector<8x1536xf32> -> vector<8x1536xf32>
    %242 = vector.extract_strided_slice %241 {offsets = [0, 0], sizes = [8, 768], strides = [1, 1]} : vector<8x1536xf32> to vector<8x768xf32>
    %243 = vector.extract_strided_slice %241 {offsets = [0, 768], sizes = [8, 768], strides = [1, 1]} : vector<8x1536xf32> to vector<8x768xf32>
    %244 = arith.addf %243, %16 : vector<8x768xf32>
    %c0_67 = arith.constant 0 : index
    %c0_68 = arith.constant 0 : index
    %245 = vector.load %arg7[%c0_67, %c0_68] : memref<256x768xf32, #tpu.memory_space<vmem>>, vector<256x768xf32>
    %cst_69 = arith.constant dense<0.000000e+00> : vector<8x768xf32>
    %246 = tpu.matmul %239, %245, %cst_69 {dimension_numbers = #tpu.dot_dimension_numbers<[1], [0], [0], [1], [0, 0, 1, 1], [], []>} : vector<8x256xf32>, vector<256x768xf32>, vector<8x768xf32> -> vector<8x768xf32>
    %247 = arith.index_cast %c4_i32 : i32 to index
    %c0_70 = arith.constant 0 : index
    %c0_71 = arith.constant 0 : index
    %248 = vector.load %arg14[%247, %c0_70, %c0_71] : memref<8x8x768xf32, #tpu.memory_space<vmem>>, vector<1x8x768xf32>
    %249 = vector.shape_cast %248 : vector<1x8x768xf32> to vector<8x768xf32>
    %250 = vector.extract_strided_slice %249 {offsets = [0, 0], sizes = [8, 256], strides = [1, 1]} : vector<8x768xf32> to vector<8x256xf32>
    %251 = vector.extract_strided_slice %242 {offsets = [0, 0], sizes = [8, 256], strides = [1, 1]} : vector<8x768xf32> to vector<8x256xf32>
    %252 = arith.addf %250, %251 : vector<8x256xf32>
    %253 = arith.negf %252 : vector<8x256xf32>
    %254 = math.exp %253 : vector<8x256xf32>
    %cst_72 = arith.constant 1.000000e+00 : f32
    %255 = vector.broadcast %cst_72 : f32 to vector<8x256xf32>
    %256 = arith.addf %255, %254 : vector<8x256xf32>
    %257 = arith.divf %255, %256 : vector<8x256xf32>
    %258 = vector.extract_strided_slice %249 {offsets = [0, 256], sizes = [8, 256], strides = [1, 1]} : vector<8x768xf32> to vector<8x256xf32>
    %259 = vector.extract_strided_slice %242 {offsets = [0, 256], sizes = [8, 256], strides = [1, 1]} : vector<8x768xf32> to vector<8x256xf32>
    %260 = arith.addf %258, %259 : vector<8x256xf32>
    %261 = arith.negf %260 : vector<8x256xf32>
    %262 = math.exp %261 : vector<8x256xf32>
    %cst_73 = arith.constant 1.000000e+00 : f32
    %263 = vector.broadcast %cst_73 : f32 to vector<8x256xf32>
    %264 = arith.addf %263, %262 : vector<8x256xf32>
    %265 = arith.divf %263, %264 : vector<8x256xf32>
    %266 = vector.extract_strided_slice %249 {offsets = [0, 512], sizes = [8, 256], strides = [1, 1]} : vector<8x768xf32> to vector<8x256xf32>
    %267 = vector.extract_strided_slice %242 {offsets = [0, 512], sizes = [8, 256], strides = [1, 1]} : vector<8x768xf32> to vector<8x256xf32>
    %268 = arith.addf %267, %10 : vector<8x256xf32>
    %269 = arith.mulf %257, %268 : vector<8x256xf32>
    %270 = arith.addf %266, %269 : vector<8x256xf32>
    %271 = math.tanh %270 : vector<8x256xf32>
    %cst_74 = arith.constant 1.000000e+00 : f32
    %272 = vector.broadcast %cst_74 : f32 to vector<8x256xf32>
    %273 = arith.subf %272, %265 : vector<8x256xf32>
    %274 = arith.mulf %273, %271 : vector<8x256xf32>
    %275 = arith.mulf %265, %212 : vector<8x256xf32>
    %276 = arith.addf %274, %275 : vector<8x256xf32>
    %277 = vector.extract_strided_slice %244 {offsets = [0, 0], sizes = [8, 256], strides = [1, 1]} : vector<8x768xf32> to vector<8x256xf32>
    %278 = vector.extract_strided_slice %246 {offsets = [0, 0], sizes = [8, 256], strides = [1, 1]} : vector<8x768xf32> to vector<8x256xf32>
    %279 = arith.addf %277, %278 : vector<8x256xf32>
    %280 = arith.negf %279 : vector<8x256xf32>
    %281 = math.exp %280 : vector<8x256xf32>
    %cst_75 = arith.constant 1.000000e+00 : f32
    %282 = vector.broadcast %cst_75 : f32 to vector<8x256xf32>
    %283 = arith.addf %282, %281 : vector<8x256xf32>
    %284 = arith.divf %282, %283 : vector<8x256xf32>
    %285 = vector.extract_strided_slice %244 {offsets = [0, 256], sizes = [8, 256], strides = [1, 1]} : vector<8x768xf32> to vector<8x256xf32>
    %286 = vector.extract_strided_slice %246 {offsets = [0, 256], sizes = [8, 256], strides = [1, 1]} : vector<8x768xf32> to vector<8x256xf32>
    %287 = arith.addf %285, %286 : vector<8x256xf32>
    %288 = arith.negf %287 : vector<8x256xf32>
    %289 = math.exp %288 : vector<8x256xf32>
    %cst_76 = arith.constant 1.000000e+00 : f32
    %290 = vector.broadcast %cst_76 : f32 to vector<8x256xf32>
    %291 = arith.addf %290, %289 : vector<8x256xf32>
    %292 = arith.divf %290, %291 : vector<8x256xf32>
    %293 = vector.extract_strided_slice %244 {offsets = [0, 512], sizes = [8, 256], strides = [1, 1]} : vector<8x768xf32> to vector<8x256xf32>
    %294 = vector.extract_strided_slice %246 {offsets = [0, 512], sizes = [8, 256], strides = [1, 1]} : vector<8x768xf32> to vector<8x256xf32>
    %295 = arith.addf %294, %13 : vector<8x256xf32>
    %296 = arith.mulf %284, %295 : vector<8x256xf32>
    %297 = arith.addf %293, %296 : vector<8x256xf32>
    %298 = math.tanh %297 : vector<8x256xf32>
    %cst_77 = arith.constant 1.000000e+00 : f32
    %299 = vector.broadcast %cst_77 : f32 to vector<8x256xf32>
    %300 = arith.subf %299, %292 : vector<8x256xf32>
    %301 = arith.mulf %300, %298 : vector<8x256xf32>
    %302 = arith.mulf %292, %239 : vector<8x256xf32>
    %303 = arith.addf %301, %302 : vector<8x256xf32>
    %c5_i32 = arith.constant 5 : i32
    %c0_78 = arith.constant 0 : index
    %c0_79 = arith.constant 0 : index
    %304 = vector.load %arg4[%c0_78, %c0_79] : memref<256x1536xf32, #tpu.memory_space<vmem>>, vector<256x1536xf32>
    %cst_80 = arith.constant dense<0.000000e+00> : vector<8x1536xf32>
    %305 = tpu.matmul %276, %304, %cst_80 {dimension_numbers = #tpu.dot_dimension_numbers<[1], [0], [0], [1], [0, 0, 1, 1], [], []>} : vector<8x256xf32>, vector<256x1536xf32>, vector<8x1536xf32> -> vector<8x1536xf32>
    %306 = vector.extract_strided_slice %305 {offsets = [0, 0], sizes = [8, 768], strides = [1, 1]} : vector<8x1536xf32> to vector<8x768xf32>
    %307 = vector.extract_strided_slice %305 {offsets = [0, 768], sizes = [8, 768], strides = [1, 1]} : vector<8x1536xf32> to vector<8x768xf32>
    %308 = arith.addf %307, %16 : vector<8x768xf32>
    %c0_81 = arith.constant 0 : index
    %c0_82 = arith.constant 0 : index
    %309 = vector.load %arg7[%c0_81, %c0_82] : memref<256x768xf32, #tpu.memory_space<vmem>>, vector<256x768xf32>
    %cst_83 = arith.constant dense<0.000000e+00> : vector<8x768xf32>
    %310 = tpu.matmul %303, %309, %cst_83 {dimension_numbers = #tpu.dot_dimension_numbers<[1], [0], [0], [1], [0, 0, 1, 1], [], []>} : vector<8x256xf32>, vector<256x768xf32>, vector<8x768xf32> -> vector<8x768xf32>
    %311 = arith.index_cast %c5_i32 : i32 to index
    %c0_84 = arith.constant 0 : index
    %c0_85 = arith.constant 0 : index
    %312 = vector.load %arg14[%311, %c0_84, %c0_85] : memref<8x8x768xf32, #tpu.memory_space<vmem>>, vector<1x8x768xf32>
    %313 = vector.shape_cast %312 : vector<1x8x768xf32> to vector<8x768xf32>
    %314 = vector.extract_strided_slice %313 {offsets = [0, 0], sizes = [8, 256], strides = [1, 1]} : vector<8x768xf32> to vector<8x256xf32>
    %315 = vector.extract_strided_slice %306 {offsets = [0, 0], sizes = [8, 256], strides = [1, 1]} : vector<8x768xf32> to vector<8x256xf32>
    %316 = arith.addf %314, %315 : vector<8x256xf32>
    %317 = arith.negf %316 : vector<8x256xf32>
    %318 = math.exp %317 : vector<8x256xf32>
    %cst_86 = arith.constant 1.000000e+00 : f32
    %319 = vector.broadcast %cst_86 : f32 to vector<8x256xf32>
    %320 = arith.addf %319, %318 : vector<8x256xf32>
    %321 = arith.divf %319, %320 : vector<8x256xf32>
    %322 = vector.extract_strided_slice %313 {offsets = [0, 256], sizes = [8, 256], strides = [1, 1]} : vector<8x768xf32> to vector<8x256xf32>
    %323 = vector.extract_strided_slice %306 {offsets = [0, 256], sizes = [8, 256], strides = [1, 1]} : vector<8x768xf32> to vector<8x256xf32>
    %324 = arith.addf %322, %323 : vector<8x256xf32>
    %325 = arith.negf %324 : vector<8x256xf32>
    %326 = math.exp %325 : vector<8x256xf32>
    %cst_87 = arith.constant 1.000000e+00 : f32
    %327 = vector.broadcast %cst_87 : f32 to vector<8x256xf32>
    %328 = arith.addf %327, %326 : vector<8x256xf32>
    %329 = arith.divf %327, %328 : vector<8x256xf32>
    %330 = vector.extract_strided_slice %313 {offsets = [0, 512], sizes = [8, 256], strides = [1, 1]} : vector<8x768xf32> to vector<8x256xf32>
    %331 = vector.extract_strided_slice %306 {offsets = [0, 512], sizes = [8, 256], strides = [1, 1]} : vector<8x768xf32> to vector<8x256xf32>
    %332 = arith.addf %331, %10 : vector<8x256xf32>
    %333 = arith.mulf %321, %332 : vector<8x256xf32>
    %334 = arith.addf %330, %333 : vector<8x256xf32>
    %335 = math.tanh %334 : vector<8x256xf32>
    %cst_88 = arith.constant 1.000000e+00 : f32
    %336 = vector.broadcast %cst_88 : f32 to vector<8x256xf32>
    %337 = arith.subf %336, %329 : vector<8x256xf32>
    %338 = arith.mulf %337, %335 : vector<8x256xf32>
    %339 = arith.mulf %329, %276 : vector<8x256xf32>
    %340 = arith.addf %338, %339 : vector<8x256xf32>
    %341 = vector.extract_strided_slice %308 {offsets = [0, 0], sizes = [8, 256], strides = [1, 1]} : vector<8x768xf32> to vector<8x256xf32>
    %342 = vector.extract_strided_slice %310 {offsets = [0, 0], sizes = [8, 256], strides = [1, 1]} : vector<8x768xf32> to vector<8x256xf32>
    %343 = arith.addf %341, %342 : vector<8x256xf32>
    %344 = arith.negf %343 : vector<8x256xf32>
    %345 = math.exp %344 : vector<8x256xf32>
    %cst_89 = arith.constant 1.000000e+00 : f32
    %346 = vector.broadcast %cst_89 : f32 to vector<8x256xf32>
    %347 = arith.addf %346, %345 : vector<8x256xf32>
    %348 = arith.divf %346, %347 : vector<8x256xf32>
    %349 = vector.extract_strided_slice %308 {offsets = [0, 256], sizes = [8, 256], strides = [1, 1]} : vector<8x768xf32> to vector<8x256xf32>
    %350 = vector.extract_strided_slice %310 {offsets = [0, 256], sizes = [8, 256], strides = [1, 1]} : vector<8x768xf32> to vector<8x256xf32>
    %351 = arith.addf %349, %350 : vector<8x256xf32>
    %352 = arith.negf %351 : vector<8x256xf32>
    %353 = math.exp %352 : vector<8x256xf32>
    %cst_90 = arith.constant 1.000000e+00 : f32
    %354 = vector.broadcast %cst_90 : f32 to vector<8x256xf32>
    %355 = arith.addf %354, %353 : vector<8x256xf32>
    %356 = arith.divf %354, %355 : vector<8x256xf32>
    %357 = vector.extract_strided_slice %308 {offsets = [0, 512], sizes = [8, 256], strides = [1, 1]} : vector<8x768xf32> to vector<8x256xf32>
    %358 = vector.extract_strided_slice %310 {offsets = [0, 512], sizes = [8, 256], strides = [1, 1]} : vector<8x768xf32> to vector<8x256xf32>
    %359 = arith.addf %358, %13 : vector<8x256xf32>
    %360 = arith.mulf %348, %359 : vector<8x256xf32>
    %361 = arith.addf %357, %360 : vector<8x256xf32>
    %362 = math.tanh %361 : vector<8x256xf32>
    %cst_91 = arith.constant 1.000000e+00 : f32
    %363 = vector.broadcast %cst_91 : f32 to vector<8x256xf32>
    %364 = arith.subf %363, %356 : vector<8x256xf32>
    %365 = arith.mulf %364, %362 : vector<8x256xf32>
    %366 = arith.mulf %356, %303 : vector<8x256xf32>
    %367 = arith.addf %365, %366 : vector<8x256xf32>
    %c6_i32 = arith.constant 6 : i32
    %c0_92 = arith.constant 0 : index
    %c0_93 = arith.constant 0 : index
    %368 = vector.load %arg4[%c0_92, %c0_93] : memref<256x1536xf32, #tpu.memory_space<vmem>>, vector<256x1536xf32>
    %cst_94 = arith.constant dense<0.000000e+00> : vector<8x1536xf32>
    %369 = tpu.matmul %340, %368, %cst_94 {dimension_numbers = #tpu.dot_dimension_numbers<[1], [0], [0], [1], [0, 0, 1, 1], [], []>} : vector<8x256xf32>, vector<256x1536xf32>, vector<8x1536xf32> -> vector<8x1536xf32>
    %370 = vector.extract_strided_slice %369 {offsets = [0, 0], sizes = [8, 768], strides = [1, 1]} : vector<8x1536xf32> to vector<8x768xf32>
    %371 = vector.extract_strided_slice %369 {offsets = [0, 768], sizes = [8, 768], strides = [1, 1]} : vector<8x1536xf32> to vector<8x768xf32>
    %372 = arith.addf %371, %16 : vector<8x768xf32>
    %c0_95 = arith.constant 0 : index
    %c0_96 = arith.constant 0 : index
    %373 = vector.load %arg7[%c0_95, %c0_96] : memref<256x768xf32, #tpu.memory_space<vmem>>, vector<256x768xf32>
    %cst_97 = arith.constant dense<0.000000e+00> : vector<8x768xf32>
    %374 = tpu.matmul %367, %373, %cst_97 {dimension_numbers = #tpu.dot_dimension_numbers<[1], [0], [0], [1], [0, 0, 1, 1], [], []>} : vector<8x256xf32>, vector<256x768xf32>, vector<8x768xf32> -> vector<8x768xf32>
    %375 = arith.index_cast %c6_i32 : i32 to index
    %c0_98 = arith.constant 0 : index
    %c0_99 = arith.constant 0 : index
    %376 = vector.load %arg14[%375, %c0_98, %c0_99] : memref<8x8x768xf32, #tpu.memory_space<vmem>>, vector<1x8x768xf32>
    %377 = vector.shape_cast %376 : vector<1x8x768xf32> to vector<8x768xf32>
    %378 = vector.extract_strided_slice %377 {offsets = [0, 0], sizes = [8, 256], strides = [1, 1]} : vector<8x768xf32> to vector<8x256xf32>
    %379 = vector.extract_strided_slice %370 {offsets = [0, 0], sizes = [8, 256], strides = [1, 1]} : vector<8x768xf32> to vector<8x256xf32>
    %380 = arith.addf %378, %379 : vector<8x256xf32>
    %381 = arith.negf %380 : vector<8x256xf32>
    %382 = math.exp %381 : vector<8x256xf32>
    %cst_100 = arith.constant 1.000000e+00 : f32
    %383 = vector.broadcast %cst_100 : f32 to vector<8x256xf32>
    %384 = arith.addf %383, %382 : vector<8x256xf32>
    %385 = arith.divf %383, %384 : vector<8x256xf32>
    %386 = vector.extract_strided_slice %377 {offsets = [0, 256], sizes = [8, 256], strides = [1, 1]} : vector<8x768xf32> to vector<8x256xf32>
    %387 = vector.extract_strided_slice %370 {offsets = [0, 256], sizes = [8, 256], strides = [1, 1]} : vector<8x768xf32> to vector<8x256xf32>
    %388 = arith.addf %386, %387 : vector<8x256xf32>
    %389 = arith.negf %388 : vector<8x256xf32>
    %390 = math.exp %389 : vector<8x256xf32>
    %cst_101 = arith.constant 1.000000e+00 : f32
    %391 = vector.broadcast %cst_101 : f32 to vector<8x256xf32>
    %392 = arith.addf %391, %390 : vector<8x256xf32>
    %393 = arith.divf %391, %392 : vector<8x256xf32>
    %394 = vector.extract_strided_slice %377 {offsets = [0, 512], sizes = [8, 256], strides = [1, 1]} : vector<8x768xf32> to vector<8x256xf32>
    %395 = vector.extract_strided_slice %370 {offsets = [0, 512], sizes = [8, 256], strides = [1, 1]} : vector<8x768xf32> to vector<8x256xf32>
    %396 = arith.addf %395, %10 : vector<8x256xf32>
    %397 = arith.mulf %385, %396 : vector<8x256xf32>
    %398 = arith.addf %394, %397 : vector<8x256xf32>
    %399 = math.tanh %398 : vector<8x256xf32>
    %cst_102 = arith.constant 1.000000e+00 : f32
    %400 = vector.broadcast %cst_102 : f32 to vector<8x256xf32>
    %401 = arith.subf %400, %393 : vector<8x256xf32>
    %402 = arith.mulf %401, %399 : vector<8x256xf32>
    %403 = arith.mulf %393, %340 : vector<8x256xf32>
    %404 = arith.addf %402, %403 : vector<8x256xf32>
    %405 = vector.extract_strided_slice %372 {offsets = [0, 0], sizes = [8, 256], strides = [1, 1]} : vector<8x768xf32> to vector<8x256xf32>
    %406 = vector.extract_strided_slice %374 {offsets = [0, 0], sizes = [8, 256], strides = [1, 1]} : vector<8x768xf32> to vector<8x256xf32>
    %407 = arith.addf %405, %406 : vector<8x256xf32>
    %408 = arith.negf %407 : vector<8x256xf32>
    %409 = math.exp %408 : vector<8x256xf32>
    %cst_103 = arith.constant 1.000000e+00 : f32
    %410 = vector.broadcast %cst_103 : f32 to vector<8x256xf32>
    %411 = arith.addf %410, %409 : vector<8x256xf32>
    %412 = arith.divf %410, %411 : vector<8x256xf32>
    %413 = vector.extract_strided_slice %372 {offsets = [0, 256], sizes = [8, 256], strides = [1, 1]} : vector<8x768xf32> to vector<8x256xf32>
    %414 = vector.extract_strided_slice %374 {offsets = [0, 256], sizes = [8, 256], strides = [1, 1]} : vector<8x768xf32> to vector<8x256xf32>
    %415 = arith.addf %413, %414 : vector<8x256xf32>
    %416 = arith.negf %415 : vector<8x256xf32>
    %417 = math.exp %416 : vector<8x256xf32>
    %cst_104 = arith.constant 1.000000e+00 : f32
    %418 = vector.broadcast %cst_104 : f32 to vector<8x256xf32>
    %419 = arith.addf %418, %417 : vector<8x256xf32>
    %420 = arith.divf %418, %419 : vector<8x256xf32>
    %421 = vector.extract_strided_slice %372 {offsets = [0, 512], sizes = [8, 256], strides = [1, 1]} : vector<8x768xf32> to vector<8x256xf32>
    %422 = vector.extract_strided_slice %374 {offsets = [0, 512], sizes = [8, 256], strides = [1, 1]} : vector<8x768xf32> to vector<8x256xf32>
    %423 = arith.addf %422, %13 : vector<8x256xf32>
    %424 = arith.mulf %412, %423 : vector<8x256xf32>
    %425 = arith.addf %421, %424 : vector<8x256xf32>
    %426 = math.tanh %425 : vector<8x256xf32>
    %cst_105 = arith.constant 1.000000e+00 : f32
    %427 = vector.broadcast %cst_105 : f32 to vector<8x256xf32>
    %428 = arith.subf %427, %420 : vector<8x256xf32>
    %429 = arith.mulf %428, %426 : vector<8x256xf32>
    %430 = arith.mulf %420, %367 : vector<8x256xf32>
    %431 = arith.addf %429, %430 : vector<8x256xf32>
    %c7_i32 = arith.constant 7 : i32
    %c0_106 = arith.constant 0 : index
    %c0_107 = arith.constant 0 : index
    %432 = vector.load %arg4[%c0_106, %c0_107] : memref<256x1536xf32, #tpu.memory_space<vmem>>, vector<256x1536xf32>
    %cst_108 = arith.constant dense<0.000000e+00> : vector<8x1536xf32>
    %433 = tpu.matmul %404, %432, %cst_108 {dimension_numbers = #tpu.dot_dimension_numbers<[1], [0], [0], [1], [0, 0, 1, 1], [], []>} : vector<8x256xf32>, vector<256x1536xf32>, vector<8x1536xf32> -> vector<8x1536xf32>
    %434 = vector.extract_strided_slice %433 {offsets = [0, 0], sizes = [8, 768], strides = [1, 1]} : vector<8x1536xf32> to vector<8x768xf32>
    %435 = vector.extract_strided_slice %433 {offsets = [0, 768], sizes = [8, 768], strides = [1, 1]} : vector<8x1536xf32> to vector<8x768xf32>
    %436 = arith.addf %435, %16 : vector<8x768xf32>
    %c0_109 = arith.constant 0 : index
    %c0_110 = arith.constant 0 : index
    %437 = vector.load %arg7[%c0_109, %c0_110] : memref<256x768xf32, #tpu.memory_space<vmem>>, vector<256x768xf32>
    %cst_111 = arith.constant dense<0.000000e+00> : vector<8x768xf32>
    %438 = tpu.matmul %431, %437, %cst_111 {dimension_numbers = #tpu.dot_dimension_numbers<[1], [0], [0], [1], [0, 0, 1, 1], [], []>} : vector<8x256xf32>, vector<256x768xf32>, vector<8x768xf32> -> vector<8x768xf32>
    %439 = arith.index_cast %c7_i32 : i32 to index
    %c0_112 = arith.constant 0 : index
    %c0_113 = arith.constant 0 : index
    %440 = vector.load %arg14[%439, %c0_112, %c0_113] : memref<8x8x768xf32, #tpu.memory_space<vmem>>, vector<1x8x768xf32>
    %441 = vector.shape_cast %440 : vector<1x8x768xf32> to vector<8x768xf32>
    %442 = vector.extract_strided_slice %441 {offsets = [0, 0], sizes = [8, 256], strides = [1, 1]} : vector<8x768xf32> to vector<8x256xf32>
    %443 = vector.extract_strided_slice %434 {offsets = [0, 0], sizes = [8, 256], strides = [1, 1]} : vector<8x768xf32> to vector<8x256xf32>
    %444 = arith.addf %442, %443 : vector<8x256xf32>
    %445 = arith.negf %444 : vector<8x256xf32>
    %446 = math.exp %445 : vector<8x256xf32>
    %cst_114 = arith.constant 1.000000e+00 : f32
    %447 = vector.broadcast %cst_114 : f32 to vector<8x256xf32>
    %448 = arith.addf %447, %446 : vector<8x256xf32>
    %449 = arith.divf %447, %448 : vector<8x256xf32>
    %450 = vector.extract_strided_slice %441 {offsets = [0, 256], sizes = [8, 256], strides = [1, 1]} : vector<8x768xf32> to vector<8x256xf32>
    %451 = vector.extract_strided_slice %434 {offsets = [0, 256], sizes = [8, 256], strides = [1, 1]} : vector<8x768xf32> to vector<8x256xf32>
    %452 = arith.addf %450, %451 : vector<8x256xf32>
    %453 = arith.negf %452 : vector<8x256xf32>
    %454 = math.exp %453 : vector<8x256xf32>
    %cst_115 = arith.constant 1.000000e+00 : f32
    %455 = vector.broadcast %cst_115 : f32 to vector<8x256xf32>
    %456 = arith.addf %455, %454 : vector<8x256xf32>
    %457 = arith.divf %455, %456 : vector<8x256xf32>
    %458 = vector.extract_strided_slice %441 {offsets = [0, 512], sizes = [8, 256], strides = [1, 1]} : vector<8x768xf32> to vector<8x256xf32>
    %459 = vector.extract_strided_slice %434 {offsets = [0, 512], sizes = [8, 256], strides = [1, 1]} : vector<8x768xf32> to vector<8x256xf32>
    %460 = arith.addf %459, %10 : vector<8x256xf32>
    %461 = arith.mulf %449, %460 : vector<8x256xf32>
    %462 = arith.addf %458, %461 : vector<8x256xf32>
    %463 = math.tanh %462 : vector<8x256xf32>
    %cst_116 = arith.constant 1.000000e+00 : f32
    %464 = vector.broadcast %cst_116 : f32 to vector<8x256xf32>
    %465 = arith.subf %464, %457 : vector<8x256xf32>
    %466 = arith.mulf %465, %463 : vector<8x256xf32>
    %467 = arith.mulf %457, %404 : vector<8x256xf32>
    %468 = arith.addf %466, %467 : vector<8x256xf32>
    %469 = vector.extract_strided_slice %436 {offsets = [0, 0], sizes = [8, 256], strides = [1, 1]} : vector<8x768xf32> to vector<8x256xf32>
    %470 = vector.extract_strided_slice %438 {offsets = [0, 0], sizes = [8, 256], strides = [1, 1]} : vector<8x768xf32> to vector<8x256xf32>
    %471 = arith.addf %469, %470 : vector<8x256xf32>
    %472 = arith.negf %471 : vector<8x256xf32>
    %473 = math.exp %472 : vector<8x256xf32>
    %cst_117 = arith.constant 1.000000e+00 : f32
    %474 = vector.broadcast %cst_117 : f32 to vector<8x256xf32>
    %475 = arith.addf %474, %473 : vector<8x256xf32>
    %476 = arith.divf %474, %475 : vector<8x256xf32>
    %477 = vector.extract_strided_slice %436 {offsets = [0, 256], sizes = [8, 256], strides = [1, 1]} : vector<8x768xf32> to vector<8x256xf32>
    %478 = vector.extract_strided_slice %438 {offsets = [0, 256], sizes = [8, 256], strides = [1, 1]} : vector<8x768xf32> to vector<8x256xf32>
    %479 = arith.addf %477, %478 : vector<8x256xf32>
    %480 = arith.negf %479 : vector<8x256xf32>
    %481 = math.exp %480 : vector<8x256xf32>
    %cst_118 = arith.constant 1.000000e+00 : f32
    %482 = vector.broadcast %cst_118 : f32 to vector<8x256xf32>
    %483 = arith.addf %482, %481 : vector<8x256xf32>
    %484 = arith.divf %482, %483 : vector<8x256xf32>
    %485 = vector.extract_strided_slice %436 {offsets = [0, 512], sizes = [8, 256], strides = [1, 1]} : vector<8x768xf32> to vector<8x256xf32>
    %486 = vector.extract_strided_slice %438 {offsets = [0, 512], sizes = [8, 256], strides = [1, 1]} : vector<8x768xf32> to vector<8x256xf32>
    %487 = arith.addf %486, %13 : vector<8x256xf32>
    %488 = arith.mulf %476, %487 : vector<8x256xf32>
    %489 = arith.addf %485, %488 : vector<8x256xf32>
    %490 = math.tanh %489 : vector<8x256xf32>
    %cst_119 = arith.constant 1.000000e+00 : f32
    %491 = vector.broadcast %cst_119 : f32 to vector<8x256xf32>
    %492 = arith.subf %491, %484 : vector<8x256xf32>
    %493 = arith.mulf %492, %490 : vector<8x256xf32>
    %494 = arith.mulf %484, %431 : vector<8x256xf32>
    %495 = arith.addf %493, %494 : vector<8x256xf32>
    %c7_i32_120 = arith.constant 7 : i32
    %c0_121 = arith.constant 0 : index
    %c0_122 = arith.constant 0 : index
    %496 = vector.load %arg4[%c0_121, %c0_122] : memref<256x1536xf32, #tpu.memory_space<vmem>>, vector<256x1536xf32>
    %cst_123 = arith.constant dense<0.000000e+00> : vector<8x1536xf32>
    %497 = tpu.matmul %468, %496, %cst_123 {dimension_numbers = #tpu.dot_dimension_numbers<[1], [0], [0], [1], [0, 0, 1, 1], [], []>} : vector<8x256xf32>, vector<256x1536xf32>, vector<8x1536xf32> -> vector<8x1536xf32>
    %498 = vector.extract_strided_slice %497 {offsets = [0, 768], sizes = [8, 768], strides = [1, 1]} : vector<8x1536xf32> to vector<8x768xf32>
    %499 = arith.addf %498, %16 : vector<8x768xf32>
    %c0_124 = arith.constant 0 : index
    %c0_125 = arith.constant 0 : index
    %500 = vector.load %arg7[%c0_124, %c0_125] : memref<256x768xf32, #tpu.memory_space<vmem>>, vector<256x768xf32>
    %cst_126 = arith.constant dense<0.000000e+00> : vector<8x768xf32>
    %501 = tpu.matmul %495, %500, %cst_126 {dimension_numbers = #tpu.dot_dimension_numbers<[1], [0], [0], [1], [0, 0, 1, 1], [], []>} : vector<8x256xf32>, vector<256x768xf32>, vector<8x768xf32> -> vector<8x768xf32>
    %502 = vector.extract_strided_slice %499 {offsets = [0, 0], sizes = [8, 256], strides = [1, 1]} : vector<8x768xf32> to vector<8x256xf32>
    %503 = vector.extract_strided_slice %501 {offsets = [0, 0], sizes = [8, 256], strides = [1, 1]} : vector<8x768xf32> to vector<8x256xf32>
    %504 = arith.addf %502, %503 : vector<8x256xf32>
    %505 = arith.negf %504 : vector<8x256xf32>
    %506 = math.exp %505 : vector<8x256xf32>
    %cst_127 = arith.constant 1.000000e+00 : f32
    %507 = vector.broadcast %cst_127 : f32 to vector<8x256xf32>
    %508 = arith.addf %507, %506 : vector<8x256xf32>
    %509 = arith.divf %507, %508 : vector<8x256xf32>
    %510 = vector.extract_strided_slice %499 {offsets = [0, 256], sizes = [8, 256], strides = [1, 1]} : vector<8x768xf32> to vector<8x256xf32>
    %511 = vector.extract_strided_slice %501 {offsets = [0, 256], sizes = [8, 256], strides = [1, 1]} : vector<8x768xf32> to vector<8x256xf32>
    %512 = arith.addf %510, %511 : vector<8x256xf32>
    %513 = arith.negf %512 : vector<8x256xf32>
    %514 = math.exp %513 : vector<8x256xf32>
    %cst_128 = arith.constant 1.000000e+00 : f32
    %515 = vector.broadcast %cst_128 : f32 to vector<8x256xf32>
    %516 = arith.addf %515, %514 : vector<8x256xf32>
    %517 = arith.divf %515, %516 : vector<8x256xf32>
    %518 = vector.extract_strided_slice %499 {offsets = [0, 512], sizes = [8, 256], strides = [1, 1]} : vector<8x768xf32> to vector<8x256xf32>
    %519 = vector.extract_strided_slice %501 {offsets = [0, 512], sizes = [8, 256], strides = [1, 1]} : vector<8x768xf32> to vector<8x256xf32>
    %520 = arith.addf %519, %13 : vector<8x256xf32>
    %521 = arith.mulf %509, %520 : vector<8x256xf32>
    %522 = arith.addf %518, %521 : vector<8x256xf32>
    %523 = math.tanh %522 : vector<8x256xf32>
    %cst_129 = arith.constant 1.000000e+00 : f32
    %524 = vector.broadcast %cst_129 : f32 to vector<8x256xf32>
    %525 = arith.subf %524, %517 : vector<8x256xf32>
    %526 = arith.mulf %525, %523 : vector<8x256xf32>
    %527 = arith.mulf %517, %495 : vector<8x256xf32>
    %528 = arith.addf %526, %527 : vector<8x256xf32>
    %c0_130 = arith.constant 0 : index
    %c0_131 = arith.constant 0 : index
    %529 = vector.load %arg9[%c0_130, %c0_131] : memref<256x50xf32, #tpu.memory_space<vmem>>, vector<256x50xf32>
    %cst_132 = arith.constant dense<0.000000e+00> : vector<8x50xf32>
    %530 = tpu.matmul %528, %529, %cst_132 {dimension_numbers = #tpu.dot_dimension_numbers<[1], [0], [0], [1], [0, 0, 1, 1], [], []>} : vector<8x256xf32>, vector<256x50xf32>, vector<8x50xf32> -> vector<8x50xf32>
    %c0_133 = arith.constant 0 : index
    %c0_134 = arith.constant 0 : index
    %531 = vector.load %arg10[%c0_133, %c0_134] : memref<1x50xf32, #tpu.memory_space<vmem>>, vector<1x50xf32>
    %532 = vector.broadcast %531 : vector<1x50xf32> to vector<8x50xf32>
    %533 = arith.addf %530, %532 : vector<8x50xf32>
    %cst_135 = arith.constant 0.000000e+00 : f32
    %534 = vector.broadcast %cst_135 : f32 to vector<8x50xf32>
    %535 = arith.maximumf %533, %534 : vector<8x50xf32>
    %c0_136 = arith.constant 0 : index
    %c0_137 = arith.constant 0 : index
    %536 = vector.load %arg11[%c0_136, %c0_137] : memref<50x7xf32, #tpu.memory_space<vmem>>, vector<50x7xf32>
    %cst_138 = arith.constant dense<0.000000e+00> : vector<8x7xf32>
    %537 = tpu.matmul %535, %536, %cst_138 {dimension_numbers = #tpu.dot_dimension_numbers<[1], [0], [0], [1], [0, 0, 1, 1], [], []>} : vector<8x50xf32>, vector<50x7xf32>, vector<8x7xf32> -> vector<8x7xf32>
    %c0_139 = arith.constant 0 : index
    %c0_140 = arith.constant 0 : index
    %538 = vector.load %arg12[%c0_139, %c0_140] : memref<1x7xf32, #tpu.memory_space<vmem>>, vector<1x7xf32>
    %539 = vector.broadcast %538 : vector<1x7xf32> to vector<8x7xf32>
    %540 = arith.addf %537, %539 : vector<8x7xf32>
    %c0_141 = arith.constant 0 : index
    %c0_142 = arith.constant 0 : index
    %541 = vector.load %arg13[%c0_141, %c0_142] : memref<8x7xf32, #tpu.memory_space<vmem>>, vector<8x7xf32>
    tpu.vector_store %arg13[%c0_141, %c0_142], %540 {strides = array<i32>} : memref<8x7xf32, #tpu.memory_space<vmem>>, vector<8x7xf32>,
    return
  }
  func.func @transform_0(%arg0: i32) -> (i32, i32) {
    %c0_i32 = arith.constant 0 : i32
    %c0_i32_0 = arith.constant 0 : i32
    %c0_i32_1 = arith.constant 0 : i32
    return %c0_i32, %c0_i32_0 : i32, i32
  }
  func.func @transform_1(%arg0: i32) -> (i32, i32) {
    %c0_i32 = arith.constant 0 : i32
    %c0_i32_0 = arith.constant 0 : i32
    %c0_i32_1 = arith.constant 0 : i32
    return %c0_i32, %c0_i32_0 : i32, i32
  }
  func.func @transform_2(%arg0: i32) -> (i32, i32) {
    %c0_i32 = arith.constant 0 : i32
    %c0_i32_0 = arith.constant 0 : i32
    %c0_i32_1 = arith.constant 0 : i32
    return %c0_i32, %c0_i32_0 : i32, i32
  }
  func.func @transform_3(%arg0: i32) -> (i32, i32) {
    %c0_i32 = arith.constant 0 : i32
    %c0_i32_0 = arith.constant 0 : i32
    %c0_i32_1 = arith.constant 0 : i32
    return %c0_i32, %c0_i32_0 : i32, i32
  }
  func.func @transform_4(%arg0: i32) -> (i32, i32) {
    %c0_i32 = arith.constant 0 : i32
    %c0_i32_0 = arith.constant 0 : i32
    %c0_i32_1 = arith.constant 0 : i32
    return %c0_i32, %c0_i32_0 : i32, i32
  }
  func.func @transform_5(%arg0: i32) -> (i32, i32) {
    %c0_i32 = arith.constant 0 : i32
    %c0_i32_0 = arith.constant 0 : i32
    %c0_i32_1 = arith.constant 0 : i32
    return %c0_i32, %c0_i32_0 : i32, i32
  }
  func.func @transform_6(%arg0: i32) -> (i32, i32) {
    %c0_i32 = arith.constant 0 : i32
    %c0_i32_0 = arith.constant 0 : i32
    %c0_i32_1 = arith.constant 0 : i32
    return %c0_i32, %c0_i32_0 : i32, i32
  }
  func.func @transform_7(%arg0: i32) -> (i32, i32) {
    %c0_i32 = arith.constant 0 : i32
    %c0_i32_0 = arith.constant 0 : i32
    %c0_i32_1 = arith.constant 0 : i32
    return %c0_i32, %c0_i32_0 : i32, i32
  }
  func.func @transform_8(%arg0: i32) -> (i32, i32) {
    %c0_i32 = arith.constant 0 : i32
    %c0_i32_0 = arith.constant 0 : i32
    %c0_i32_1 = arith.constant 0 : i32
    return %c0_i32, %c0_i32_0 : i32, i32
  }
  func.func @transform_9(%arg0: i32) -> (i32, i32) {
    %c0_i32 = arith.constant 0 : i32
    %c0_i32_0 = arith.constant 0 : i32
    %c0_i32_1 = arith.constant 0 : i32
    return %c0_i32, %c0_i32_0 : i32, i32
  }
  func.func @transform_10(%arg0: i32) -> (i32, i32) {
    %c0_i32 = arith.constant 0 : i32
    %c0_i32_0 = arith.constant 0 : i32
    %c0_i32_1 = arith.constant 0 : i32
    return %c0_i32, %c0_i32_0 : i32, i32
  }
  func.func @transform_11(%arg0: i32) -> (i32, i32) {
    %c0_i32 = arith.constant 0 : i32
    %c0_i32_0 = arith.constant 0 : i32
    %c0_i32_1 = arith.constant 0 : i32
    return %c0_i32, %c0_i32_0 : i32, i32
  }
  func.func @transform_12(%arg0: i32) -> (i32, i32) {
    %c0_i32 = arith.constant 0 : i32
    %c0_i32_0 = arith.constant 0 : i32
    %c0_i32_1 = arith.constant 0 : i32
    return %c0_i32, %c0_i32_0 : i32, i32
  }
}

</mosaic_0001>

<llo_original>
// kernel: tpu_custom_call.1
$region0: #{tpu_custom_call.1}
  #allocation0 [shape = 'u32[]', space=smem, size = 0x4, offset = 0x4, fixed_abs, tag = 'smem constant byte address 0x4 - core index']
  #allocation1 [shape = 'u32[144,128]{1,0:T(1,128)}', space=vmem, size = 0x12000, scoped, tag = 'internal scratch']
  #allocation2 [shape = 'f32[8,8,768]{2,1,0:T(8,128)}', space=vmem, size = 0x30000, scoped, tag = 'scratch operand']
  %s0 = inlined_call_operand.hbm [shape: f32[64,128], index: 0, kind: input, shape index: {}]
  %s1 = inlined_call_operand.hbm [shape: f32[128,768], index: 1, kind: input, shape index: {}]
  %s2 = inlined_call_operand.hbm [shape: f32[1,768], index: 2, kind: input, shape index: {}]
  %s3 = inlined_call_operand.hbm [shape: f32[256,1536], index: 3, kind: input, shape index: {}]
  %s4 = inlined_call_operand.hbm [shape: f32[1,256], index: 4, kind: input, shape index: {}]
  %s5 = inlined_call_operand.hbm [shape: f32[1,768], index: 5, kind: input, shape index: {}]
  %s6 = inlined_call_operand.hbm [shape: f32[256,768], index: 6, kind: input, shape index: {}]
  %s7 = inlined_call_operand.hbm [shape: f32[1,256], index: 7, kind: input, shape index: {}]
  %s8 = inlined_call_operand.vmem [shape: f32[256,50], index: 8, kind: input, shape index: {}]
  %s9 = inlined_call_operand.hbm [shape: f32[1,50], index: 9, kind: input, shape index: {}]
  %s10 = inlined_call_operand.vmem [shape: f32[50,7], index: 10, kind: input, shape index: {}]
  %s11 = inlined_call_operand.hbm [shape: f32[1,7], index: 11, kind: input, shape index: {}]
  %s12 = inlined_call_operand.hbm [shape: f32[8,7], index: 12, kind: output, shape index: {}]
  %s13 = sld [smem:[#allocation0]]
  $region98: #{tpu_custom_call.1} parent=0
    _
  %s15 = ssub.s32 1, %s13
  %s16 = scalar_select 0, %s15, %s13
  $region1: #{tpu_custom_call.1} parent=0
    #allocation3 [shape = 'u8[32768]{0}', space=vmem, size = 0x8000, scoped, tag = 'input window, operand 0, single buffered']
    #allocation4 [shape = 's32[1]{0}', space=sflag, size = 0x4, scoped, tag = 'scoped memory for tpu_custom_call.1']
    #allocation5 [shape = 's32[1]{0}', space=sflag, size = 0x4, scoped, tag = 'scoped memory for tpu_custom_call.1']
    #allocation6 [shape = 'u8[393216]{0}', space=vmem, size = 0x60000, scoped, tag = 'input window, operand 1, single buffered']
    #allocation7 [shape = 's32[1]{0}', space=sflag, size = 0x4, scoped, tag = 'scoped memory for tpu_custom_call.1']
    #allocation8 [shape = 'u8[3072]{0}', space=vmem, size = 0xc00, scoped, tag = 'input window, operand 2, single buffered']
    #allocation9 [shape = 'u8[1572864]{0}', space=vmem, size = 0x180000, scoped, tag = 'input window, operand 3, single buffered']
    #allocation10 [shape = 's32[1]{0}', space=sflag, size = 0x4, scoped, tag = 'scoped memory for tpu_custom_call.1']
    #allocation11 [shape = 'u8[1024]{0}', space=vmem, size = 0x400, scoped, tag = 'input window, operand 4, single buffered']
    #allocation12 [shape = 'u8[3072]{0}', space=vmem, size = 0xc00, scoped, tag = 'input window, operand 5, single buffered']
    #allocation13 [shape = 's32[1]{0}', space=sflag, size = 0x4, scoped, tag = 'scoped memory for tpu_custom_call.1']
    #allocation14 [shape = 'u8[786432]{0}', space=vmem, size = 0xc0000, scoped, tag = 'input window, operand 6, single buffered']
    #allocation15 [shape = 'u8[1024]{0}', space=vmem, size = 0x400, scoped, tag = 'input window, operand 7, single buffered']
    #allocation16 [shape = 's32[1]{0}', space=sflag, size = 0x4, scoped, tag = 'scoped memory for tpu_custom_call.1']
    #allocation17 [shape = 'u8[512]{0}', space=vmem, size = 0x400, scoped, tag = 'input window, operand 9, single buffered']
    #allocation18 [shape = 'u8[512]{0}', space=vmem, size = 0x400, scoped, tag = 'input window, operand 11, single buffered']
    #allocation19 [shape = 's32[1]{0}', space=sflag, size = 0x4, scoped, tag = 'scoped memory for tpu_custom_call.1']
    #allocation20 [shape = 'u8[4096]{0}', space=vmem, size = 0x1000, scoped, tag = 'output window, operand 0, single buffered']
    %17 = vsyncpa [#allocation4], 0
    %18 = vsyncpa [#allocation7], 0
    %19 = vsyncpa [#allocation10], 0
    %20 = vsyncpa [#allocation13], 0
    %21 = vsyncpa [#allocation16], 0
    %22 = vsyncpa [#allocation19], 0
    %23 = vsyncpa [#allocation5], 0
    // Predicated region
    $region2: #{tpu_custom_call.1} parent=1 // pred_check
      _
    $region3: #{tpu_custom_call.1} parent=1 // pred_check_branch
      %25 = sbr.rel (0) target = $region5
    $region4: #{tpu_custom_call.1} parent=1 // pred_region
      %s27 = ssub.s32 1024, 1024
      %28 = vsyncadd [#allocation4], %s27
      %s29 = sshll.u32 [#allocation3], 4
      %s30 = int_to_ptr.vmem [resolvable:$true] %s29
      %35 = dma.hbm_to_vmem [thread:$0]  %s0, 1024, %s30, [#allocation4], 128, 128, 8
    $region5: #{tpu_custom_call.1} parent=1 // pred_fallthru
      _
    // Predicated region
    $region6: #{tpu_custom_call.1} parent=1 // pred_check
      _
    $region7: #{tpu_custom_call.1} parent=1 // pred_check_branch
      %37 = sbr.rel (0) target = $region9
    $region8: #{tpu_custom_call.1} parent=1 // pred_region
      %s39 = ssub.s32 12288, 12288
      %40 = vsyncadd [#allocation7], %s39
      %s41 = sshll.u32 [#allocation6], 4
      %s42 = int_to_ptr.vmem [resolvable:$true] %s41
      %47 = dma.hbm_to_vmem [thread:$0]  %s1, 12288, %s42, [#allocation7], 768, 768, 48
    $region9: #{tpu_custom_call.1} parent=1 // pred_fallthru
      _
    // Predicated region
    $region10: #{tpu_custom_call.1} parent=1 // pred_check
      _
    $region11: #{tpu_custom_call.1} parent=1 // pred_check_branch
      %49 = sbr.rel (0) target = $region13
    $region12: #{tpu_custom_call.1} parent=1 // pred_region
      %s51 = ssub.s32 96, 96
      %52 = vsyncadd [#allocation7], %s51
      %s54 = sshll.u32 [#allocation8], 4
      %s55 = int_to_ptr.vmem [resolvable:$true] %s54
      %57 = dma.hbm_to_vmem [thread:$0]  %s2, 96, %s55, [#allocation7]
    $region13: #{tpu_custom_call.1} parent=1 // pred_fallthru
      _
    // Predicated region
    $region14: #{tpu_custom_call.1} parent=1 // pred_check
      _
    $region15: #{tpu_custom_call.1} parent=1 // pred_check_branch
      %59 = sbr.rel (0) target = $region17
    $region16: #{tpu_custom_call.1} parent=1 // pred_region
      %s61 = ssub.s32 49152, 49152
      %62 = vsyncadd [#allocation10], %s61
      %s63 = sshll.u32 [#allocation9], 4
      %s64 = int_to_ptr.vmem [resolvable:$true] %s63
      %69 = dma.hbm_to_vmem [thread:$0]  %s3, 49152, %s64, [#allocation10], 1536, 1536, 96
    $region17: #{tpu_custom_call.1} parent=1 // pred_fallthru
      _
    // Predicated region
    $region18: #{tpu_custom_call.1} parent=1 // pred_check
      _
    $region19: #{tpu_custom_call.1} parent=1 // pred_check_branch
      %71 = sbr.rel (0) target = $region21
    $region20: #{tpu_custom_call.1} parent=1 // pred_region
      %s73 = ssub.s32 32, 32
      %74 = vsyncadd [#allocation10], %s73
      %s76 = sshll.u32 [#allocation11], 4
      %s77 = int_to_ptr.vmem [resolvable:$true] %s76
      %79 = dma.hbm_to_vmem [thread:$0]  %s4, 32, %s77, [#allocation10]
    $region21: #{tpu_custom_call.1} parent=1 // pred_fallthru
      _
    // Predicated region
    $region22: #{tpu_custom_call.1} parent=1 // pred_check
      _
    $region23: #{tpu_custom_call.1} parent=1 // pred_check_branch
      %81 = sbr.rel (0) target = $region25
    $region24: #{tpu_custom_call.1} parent=1 // pred_region
      %s83 = ssub.s32 96, 96
      %84 = vsyncadd [#allocation13], %s83
      %s86 = sshll.u32 [#allocation12], 4
      %s87 = int_to_ptr.vmem [resolvable:$true] %s86
      %89 = dma.hbm_to_vmem [thread:$0]  %s5, 96, %s87, [#allocation13]
    $region25: #{tpu_custom_call.1} parent=1 // pred_fallthru
      _
    // Predicated region
    $region26: #{tpu_custom_call.1} parent=1 // pred_check
      _
    $region27: #{tpu_custom_call.1} parent=1 // pred_check_branch
      %91 = sbr.rel (0) target = $region29
    $region28: #{tpu_custom_call.1} parent=1 // pred_region
      %s93 = ssub.s32 24576, 24576
      %94 = vsyncadd [#allocation13], %s93
      %s95 = sshll.u32 [#allocation14], 4
      %s96 = int_to_ptr.vmem [resolvable:$true] %s95
      %101 = dma.hbm_to_vmem [thread:$0]  %s6, 24576, %s96, [#allocation13], 768, 768, 48
    $region29: #{tpu_custom_call.1} parent=1 // pred_fallthru
      _
    // Predicated region
    $region30: #{tpu_custom_call.1} parent=1 // pred_check
      _
    $region31: #{tpu_custom_call.1} parent=1 // pred_check_branch
      %103 = sbr.rel (0) target = $region33
    $region32: #{tpu_custom_call.1} parent=1 // pred_region
      %s105 = ssub.s32 32, 32
      %106 = vsyncadd [#allocation16], %s105
      %s108 = sshll.u32 [#allocation15], 4
      %s109 = int_to_ptr.vmem [resolvable:$true] %s108
      %111 = dma.hbm_to_vmem [thread:$0]  %s7, 32, %s109, [#allocation16]
    $region33: #{tpu_custom_call.1} parent=1 // pred_fallthru
      _
    // Predicated region
    $region34: #{tpu_custom_call.1} parent=1 // pred_check
      _
    $region35: #{tpu_custom_call.1} parent=1 // pred_check_branch
      %113 = sbr.rel (0) target = $region37
    $region36: #{tpu_custom_call.1} parent=1 // pred_region
      _
    $region37: #{tpu_custom_call.1} parent=1 // pred_fallthru
      _
    // Predicated region
    $region38: #{tpu_custom_call.1} parent=1 // pred_check
      _
    $region39: #{tpu_custom_call.1} parent=1 // pred_check_branch
      %115 = sbr.rel (0) target = $region41
    $region40: #{tpu_custom_call.1} parent=1 // pred_region
      %s117 = ssub.s32 16, 16
      %118 = vsyncadd [#allocation16], %s117
      %s120 = sshll.u32 [#allocation17], 4
      %s121 = int_to_ptr.vmem [resolvable:$true] %s120
      %123 = dma.hbm_to_vmem [thread:$0]  %s9, 16, %s121, [#allocation16]
    $region41: #{tpu_custom_call.1} parent=1 // pred_fallthru
      _
    // Predicated region
    $region42: #{tpu_custom_call.1} parent=1 // pred_check
      _
    $region43: #{tpu_custom_call.1} parent=1 // pred_check_branch
      %125 = sbr.rel (0) target = $region45
    $region44: #{tpu_custom_call.1} parent=1 // pred_region
      _
    $region45: #{tpu_custom_call.1} parent=1 // pred_fallthru
      _
    // Predicated region
    $region46: #{tpu_custom_call.1} parent=1 // pred_check
      _
    $region47: #{tpu_custom_call.1} parent=1 // pred_check_branch
      %127 = sbr.rel (0) target = $region49
    $region48: #{tpu_custom_call.1} parent=1 // pred_region
      %s129 = ssub.s32 16, 16
      %130 = vsyncadd [#allocation19], %s129
      %s132 = sshll.u32 [#allocation18], 4
      %s133 = int_to_ptr.vmem [resolvable:$true] %s132
      %135 = dma.hbm_to_vmem [thread:$0]  %s11, 16, %s133, [#allocation19]
    $region49: #{tpu_custom_call.1} parent=1 // pred_fallthru
      _
    // Predicated region
    $region50: #{tpu_custom_call.1} parent=1 // pred_check
      _
    $region51: #{tpu_custom_call.1} parent=1 // pred_check_branch
      %137 = sbr.rel (0) target = $region53
    $region52: #{tpu_custom_call.1} parent=1 // pred_region
      %138 = dma.done [#allocation4], 1024
    $region53: #{tpu_custom_call.1} parent=1 // pred_fallthru
      _
    // Predicated region
    $region54: #{tpu_custom_call.1} parent=1 // pred_check
      _
    $region55: #{tpu_custom_call.1} parent=1 // pred_check_branch
      %140 = sbr.rel (0) target = $region57
    $region56: #{tpu_custom_call.1} parent=1 // pred_region
      %141 = dma.done [#allocation7], 12288
    $region57: #{tpu_custom_call.1} parent=1 // pred_fallthru
      _
    // Predicated region
    $region58: #{tpu_custom_call.1} parent=1 // pred_check
      _
    $region59: #{tpu_custom_call.1} parent=1 // pred_check_branch
      %143 = sbr.rel (0) target = $region61
    $region60: #{tpu_custom_call.1} parent=1 // pred_region
      %144 = dma.done [#allocation7], 96
    $region61: #{tpu_custom_call.1} parent=1 // pred_fallthru
      _
    // Predicated region
    $region62: #{tpu_custom_call.1} parent=1 // pred_check
      _
    $region63: #{tpu_custom_call.1} parent=1 // pred_check_branch
      %146 = sbr.rel (0) target = $region65
    $region64: #{tpu_custom_call.1} parent=1 // pred_region
      %147 = dma.done [#allocation10], 49152
    $region65: #{tpu_custom_call.1} parent=1 // pred_fallthru
      _
    // Predicated region
    $region66: #{tpu_custom_call.1} parent=1 // pred_check
      _
    $region67: #{tpu_custom_call.1} parent=1 // pred_check_branch
      %149 = sbr.rel (0) target = $region69
    $region68: #{tpu_custom_call.1} parent=1 // pred_region
      %150 = dma.done [#allocation10], 32
    $region69: #{tpu_custom_call.1} parent=1 // pred_fallthru
      _
    // Predicated region
    $region70: #{tpu_custom_call.1} parent=1 // pred_check
      _
    $region71: #{tpu_custom_call.1} parent=1 // pred_check_branch
      %152 = sbr.rel (0) target = $region73
    $region72: #{tpu_custom_call.1} parent=1 // pred_region
      %153 = dma.done [#allocation13], 96
    $region73: #{tpu_custom_call.1} parent=1 // pred_fallthru
      _
    // Predicated region
    $region74: #{tpu_custom_call.1} parent=1 // pred_check
      _
    $region75: #{tpu_custom_call.1} parent=1 // pred_check_branch
      %155 = sbr.rel (0) target = $region77
    $region76: #{tpu_custom_call.1} parent=1 // pred_region
      %156 = dma.done [#allocation13], 24576
    $region77: #{tpu_custom_call.1} parent=1 // pred_fallthru
      _
    // Predicated region
    $region78: #{tpu_custom_call.1} parent=1 // pred_check
      _
    $region79: #{tpu_custom_call.1} parent=1 // pred_check_branch
      %158 = sbr.rel (0) target = $region81
    $region80: #{tpu_custom_call.1} parent=1 // pred_region
      %159 = dma.done [#allocation16], 32
    $region81: #{tpu_custom_call.1} parent=1 // pred_fallthru
      _
    // Predicated region
    $region82: #{tpu_custom_call.1} parent=1 // pred_check
      _
    $region83: #{tpu_custom_call.1} parent=1 // pred_check_branch
      %161 = sbr.rel (0) target = $region85
    $region84: #{tpu_custom_call.1} parent=1 // pred_region
      %162 = dma.done [#allocation16], 16
    $region85: #{tpu_custom_call.1} parent=1 // pred_fallthru
      _
    // Predicated region
    $region86: #{tpu_custom_call.1} parent=1 // pred_check
      _
    $region87: #{tpu_custom_call.1} parent=1 // pred_check_branch
      %164 = sbr.rel (0) target = $region89
    $region88: #{tpu_custom_call.1} parent=1 // pred_region
      %165 = dma.done [#allocation19], 16
    $region89: #{tpu_custom_call.1} parent=1 // pred_fallthru
      _
    %v166 = vld [vmem:[#allocation3] sm:$0xff]
    %v167 = vld [vmem:[#allocation3 + $0x8] sm:$0xff]
    %v168 = vld [vmem:[#allocation3 + $0x10] sm:$0xff]
    %v169 = vld [vmem:[#allocation3 + $0x18] sm:$0xff]
    %v170 = vld [vmem:[#allocation3 + $0x20] sm:$0xff]
    %v171 = vld [vmem:[#allocation3 + $0x28] sm:$0xff]
    %v172 = vld [vmem:[#allocation3 + $0x30] sm:$0xff]
    %v173 = vld [vmem:[#allocation3 + $0x38] sm:$0xff]
    %v174 = vld [vmem:[#allocation6] sm:$0xff]
    %v175 = vld [vmem:[#allocation6 + $0x8] sm:$0xff]
    %v176 = vld [vmem:[#allocation6 + $0x10] sm:$0xff]
    %v177 = vld [vmem:[#allocation6 + $0x18] sm:$0xff]
    %v178 = vld [vmem:[#allocation6 + $0x20] sm:$0xff]
    %v179 = vld [vmem:[#allocation6 + $0x28] sm:$0xff]
    %v180 = vld [vmem:[#allocation6 + $0x30] sm:$0xff]
    %v181 = vld [vmem:[#allocation6 + $0x38] sm:$0xff]
    %v182 = vld [vmem:[#allocation6 + $0x40] sm:$0xff]
    %v183 = vld [vmem:[#allocation6 + $0x48] sm:$0xff]
    %v184 = vld [vmem:[#allocation6 + $0x50] sm:$0xff]
    %v185 = vld [vmem:[#allocation6 + $0x58] sm:$0xff]
    %v186 = vld [vmem:[#allocation6 + $0x60] sm:$0xff]
    %v187 = vld [vmem:[#allocation6 + $0x68] sm:$0xff]
    %v188 = vld [vmem:[#allocation6 + $0x70] sm:$0xff]
    %v189 = vld [vmem:[#allocation6 + $0x78] sm:$0xff]
    %v190 = vld [vmem:[#allocation6 + $0x80] sm:$0xff]
    %v191 = vld [vmem:[#allocation6 + $0x88] sm:$0xff]
    %v192 = vld [vmem:[#allocation6 + $0x90] sm:$0xff]
    %v193 = vld [vmem:[#allocation6 + $0x98] sm:$0xff]
    %v194 = vld [vmem:[#allocation6 + $0xa0] sm:$0xff]
    %v195 = vld [vmem:[#allocation6 + $0xa8] sm:$0xff]
    %v196 = vld [vmem:[#allocation6 + $0xb0] sm:$0xff]
    %v197 = vld [vmem:[#allocation6 + $0xb8] sm:$0xff]
    %v198 = vld [vmem:[#allocation6 + $0xc0] sm:$0xff]
    %v199 = vld [vmem:[#allocation6 + $0xc8] sm:$0xff]
    %v200 = vld [vmem:[#allocation6 + $0xd0] sm:$0xff]
    %v201 = vld [vmem:[#allocation6 + $0xd8] sm:$0xff]
    %v202 = vld [vmem:[#allocation6 + $0xe0] sm:$0xff]
    %v203 = vld [vmem:[#allocation6 + $0xe8] sm:$0xff]
    %v204 = vld [vmem:[#allocation6 + $0xf0] sm:$0xff]
    %v205 = vld [vmem:[#allocation6 + $0xf8] sm:$0xff]
    %v206 = vld [vmem:[#allocation6 + $0x100] sm:$0xff]
    %v207 = vld [vmem:[#allocation6 + $0x108] sm:$0xff]
    %v208 = vld [vmem:[#allocation6 + $0x110] sm:$0xff]
    %v209 = vld [vmem:[#allocation6 + $0x118] sm:$0xff]
    %v210 = vld [vmem:[#allocation6 + $0x120] sm:$0xff]
    %v211 = vld [vmem:[#allocation6 + $0x128] sm:$0xff]
    %v212 = vld [vmem:[#allocation6 + $0x130] sm:$0xff]
    %v213 = vld [vmem:[#allocation6 + $0x138] sm:$0xff]
    %v214 = vld [vmem:[#allocation6 + $0x140] sm:$0xff]
    %v215 = vld [vmem:[#allocation6 + $0x148] sm:$0xff]
    %v216 = vld [vmem:[#allocation6 + $0x150] sm:$0xff]
    %v217 = vld [vmem:[#allocation6 + $0x158] sm:$0xff]
    %v218 = vld [vmem:[#allocation6 + $0x160] sm:$0xff]
    %v219 = vld [vmem:[#allocation6 + $0x168] sm:$0xff]
    %v220 = vld [vmem:[#allocation6 + $0x170] sm:$0xff]
    %v221 = vld [vmem:[#allocation6 + $0x178] sm:$0xff]
    %v222 = vld [vmem:[#allocation6 + $0x180] sm:$0xff]
    %v223 = vld [vmem:[#allocation6 + $0x188] sm:$0xff]
    %v224 = vld [vmem:[#allocation6 + $0x190] sm:$0xff]
    %v225 = vld [vmem:[#allocation6 + $0x198] sm:$0xff]
    %v226 = vld [vmem:[#allocation6 + $0x1a0] sm:$0xff]
    %v227 = vld [vmem:[#allocation6 + $0x1a8] sm:$0xff]
    %v228 = vld [vmem:[#allocation6 + $0x1b0] sm:$0xff]
    %v229 = vld [vmem:[#allocation6 + $0x1b8] sm:$0xff]
    %v230 = vld [vmem:[#allocation6 + $0x1c0] sm:$0xff]
    %v231 = vld [vmem:[#allocation6 + $0x1c8] sm:$0xff]
    %v232 = vld [vmem:[#allocation6 + $0x1d0] sm:$0xff]
    %v233 = vld [vmem:[#allocation6 + $0x1d8] sm:$0xff]
    %v234 = vld [vmem:[#allocation6 + $0x1e0] sm:$0xff]
    %v235 = vld [vmem:[#allocation6 + $0x1e8] sm:$0xff]
    %v236 = vld [vmem:[#allocation6 + $0x1f0] sm:$0xff]
    %v237 = vld [vmem:[#allocation6 + $0x1f8] sm:$0xff]
    %v238 = vld [vmem:[#allocation6 + $0x200] sm:$0xff]
    %v239 = vld [vmem:[#allocation6 + $0x208] sm:$0xff]
    %v240 = vld [vmem:[#allocation6 + $0x210] sm:$0xff]
    %v241 = vld [vmem:[#allocation6 + $0x218] sm:$0xff]
    %v242 = vld [vmem:[#allocation6 + $0x220] sm:$0xff]
    %v243 = vld [vmem:[#allocation6 + $0x228] sm:$0xff]
    %v244 = vld [vmem:[#allocation6 + $0x230] sm:$0xff]
    %v245 = vld [vmem:[#allocation6 + $0x238] sm:$0xff]
    %v246 = vld [vmem:[#allocation6 + $0x240] sm:$0xff]
    %v247 = vld [vmem:[#allocation6 + $0x248] sm:$0xff]
    %v248 = vld [vmem:[#allocation6 + $0x250] sm:$0xff]
    %v249 = vld [vmem:[#allocation6 + $0x258] sm:$0xff]
    %v250 = vld [vmem:[#allocation6 + $0x260] sm:$0xff]
    %v251 = vld [vmem:[#allocation6 + $0x268] sm:$0xff]
    %v252 = vld [vmem:[#allocation6 + $0x270] sm:$0xff]
    %v253 = vld [vmem:[#allocation6 + $0x278] sm:$0xff]
    %v254 = vld [vmem:[#allocation6 + $0x280] sm:$0xff]
    %v255 = vld [vmem:[#allocation6 + $0x288] sm:$0xff]
    %v256 = vld [vmem:[#allocation6 + $0x290] sm:$0xff]
    %v257 = vld [vmem:[#allocation6 + $0x298] sm:$0xff]
    %v258 = vld [vmem:[#allocation6 + $0x2a0] sm:$0xff]
    %v259 = vld [vmem:[#allocation6 + $0x2a8] sm:$0xff]
    %v260 = vld [vmem:[#allocation6 + $0x2b0] sm:$0xff]
    %v261 = vld [vmem:[#allocation6 + $0x2b8] sm:$0xff]
    %v262 = vld [vmem:[#allocation6 + $0x2c0] sm:$0xff]
    %v263 = vld [vmem:[#allocation6 + $0x2c8] sm:$0xff]
    %v264 = vld [vmem:[#allocation6 + $0x2d0] sm:$0xff]
    %v265 = vld [vmem:[#allocation6 + $0x2d8] sm:$0xff]
    %v266 = vld [vmem:[#allocation6 + $0x2e0] sm:$0xff]
    %v267 = vld [vmem:[#allocation6 + $0x2e8] sm:$0xff]
    %v268 = vld [vmem:[#allocation6 + $0x2f0] sm:$0xff]
    %v269 = vld [vmem:[#allocation6 + $0x2f8] sm:$0xff]
    %v270 = vld [vmem:[#allocation8] sm:$0x3f]
    %v272 = vlaneseq
    %v273 = vshrl.u32 %v272, 7
    %v274 = vsub.s32 0, %v273
    %v275 = vrot.slane %v270, %v274
    %v276 = vlaneseq
    %v277 = vshrl.u32 %v276, 7
    %v278 = vsub.s32 1, %v277
    %v279 = vrot.slane %v270, %v278
    %v280 = vlaneseq
    %v281 = vshrl.u32 %v280, 7
    %v282 = vsub.s32 2, %v281
    %v283 = vrot.slane %v270, %v282
    %v284 = vlaneseq
    %v285 = vshrl.u32 %v284, 7
    %v286 = vsub.s32 3, %v285
    %v287 = vrot.slane %v270, %v286
    %v288 = vlaneseq
    %v289 = vshrl.u32 %v288, 7
    %v290 = vsub.s32 4, %v289
    %v291 = vrot.slane %v270, %v290
    %v292 = vlaneseq
    %v293 = vshrl.u32 %v292, 7
    %v294 = vsub.s32 5, %v293
    %v295 = vrot.slane %v270, %v294
    %302 = vmatprep.subr.mxu0 %v175
    %303 = vmatpush1.msra.mxu0 %v174
    %304 = vmatprep.subr.mxu0 %v181
    %305 = vmatpush1.msra.mxu0 %v180
    %306 = vmatprep.subr.mxu0 %v187
    %307 = vmatpush1.msra.mxu0 %v186
    %308 = vmatprep.subr.mxu0 %v193
    %309 = vmatpush1.msra.mxu0 %v192
    %310 = vmatprep.subr.mxu0 %v199
    %311 = vmatpush1.msra.mxu0 %v198
    %312 = vmatprep.subr.mxu0 %v205
    %313 = vmatpush1.msra.mxu0 %v204
    %314 = vmatprep.subr.mxu0 %v211
    %315 = vmatpush1.msra.mxu0 %v210
    %316 = vmatprep.subr.mxu0 %v217
    %317 = vmatpush1.msra.mxu0 %v216
    %318 = vmatprep.subr.mxu0 %v223
    %319 = vmatpush1.msra.mxu0 %v222
    %320 = vmatprep.subr.mxu0 %v229
    %321 = vmatpush1.msra.mxu0 %v228
    %322 = vmatprep.subr.mxu0 %v235
    %323 = vmatpush1.msra.mxu0 %v234
    %324 = vmatprep.subr.mxu0 %v241
    %325 = vmatpush1.msra.mxu0 %v240
    %326 = vmatprep.subr.mxu0 %v247
    %327 = vmatpush1.msra.mxu0 %v246
    %328 = vmatprep.subr.mxu0 %v253
    %329 = vmatpush1.msra.mxu0 %v252
    %330 = vmatprep.subr.mxu0 %v259
    %331 = vmatpush1.msra.mxu0 %v258
    %332 = vmatprep.subr.mxu0 %v265
    %333 = vmatpush1.msra.mxu0 %v264
    %334 = vmatprep.subr.mxu0 0.0
    %335 = vmatpush1.msra.mxu0 0.0
    %336 = vmatprep.subr.mxu0 0.0
    %337 = vmatpush1.msra.mxu0 0.0
    %338 = vmatprep.subr.mxu0 0.0
    %339 = vmatpush1.msra.mxu0 0.0
    %340 = vmatprep.subr.mxu0 0.0
    %341 = vmatpush1.msra.mxu0 0.0
    %342 = vmatprep.subr.mxu0 0.0
    %343 = vmatpush1.msra.mxu0 0.0
    %344 = vmatprep.subr.mxu0 0.0
    %345 = vmatpush1.msra.mxu0 0.0
    %346 = vmatprep.subr.mxu0 0.0
    %347 = vmatpush1.msra.mxu0 0.0
    %348 = vmatprep.subr.mxu0 0.0
    %349 = vmatpush1.msra.mxu0 0.0
    %350 = vmatprep.subr.mxu0 0.0
    %351 = vmatpush1.msra.mxu0 0.0
    %352 = vmatprep.subr.mxu0 0.0
    %353 = vmatpush1.msra.mxu0 0.0
    %354 = vmatprep.subr.mxu0 0.0
    %355 = vmatpush1.msra.mxu0 0.0
    %356 = vmatprep.subr.mxu0 0.0
    %357 = vmatpush1.msra.mxu0 0.0
    %358 = vmatprep.subr.mxu0 0.0
    %359 = vmatpush1.msra.mxu0 0.0
    %360 = vmatprep.subr.mxu0 0.0
    %361 = vmatpush1.msra.mxu0 0.0
    %362 = vmatprep.subr.mxu0 0.0
    %363 = vmatpush1.msra.mxu0 0.0
    %364 = vmatprep.subr.mxu0 0.0
    %365 = vmatpush1.msra.mxu0 0.0
    %366 = vmatprep.mubr.f32.mxu0 0.0
    %367 = vmatmul.mubr.f32.gmra.mrb[0].mxu0 %v166
    %v368 = vpop.f32.mrb[0].mxu0
    %v369 = vadd.f32 %v275, %v368
    %v370 = vpop.f32.mrb[0].mxu0
    %v371 = vadd.f32 %v279, %v370
    %372 = vmatprep.mubr.f32.mxu0 0.0
    %373 = vmatmul.mubr.f32.gmra.mrb[0].mxu0 %v167
    %v374 = vpop.f32.mrb[0].mxu0
    %v375 = vadd.f32 %v275, %v374
    %v376 = vpop.f32.mrb[0].mxu0
    %v377 = vadd.f32 %v279, %v376
    %378 = vmatprep.mubr.f32.mxu0 0.0
    %379 = vmatmul.mubr.f32.gmra.mrb[0].mxu0 %v168
    %v380 = vpop.f32.mrb[0].mxu0
    %v381 = vadd.f32 %v275, %v380
    %v382 = vpop.f32.mrb[0].mxu0
    %v383 = vadd.f32 %v279, %v382
    %384 = vmatprep.mubr.f32.mxu0 0.0
    %385 = vmatmul.mubr.f32.gmra.mrb[0].mxu0 %v169
    %v386 = vpop.f32.mrb[0].mxu0
    %v387 = vadd.f32 %v275, %v386
    %v388 = vpop.f32.mrb[0].mxu0
    %v389 = vadd.f32 %v279, %v388
    %390 = vmatprep.mubr.f32.mxu0 0.0
    %391 = vmatmul.mubr.f32.gmra.mrb[0].mxu0 %v170
    %v392 = vpop.f32.mrb[0].mxu0
    %v393 = vadd.f32 %v275, %v392
    %v394 = vpop.f32.mrb[0].mxu0
    %v395 = vadd.f32 %v279, %v394
    %396 = vmatprep.mubr.f32.mxu0 0.0
    %397 = vmatmul.mubr.f32.gmra.mrb[0].mxu0 %v171
    %v398 = vpop.f32.mrb[0].mxu0
    %v399 = vadd.f32 %v275, %v398
    %v400 = vpop.f32.mrb[0].mxu0
    %v401 = vadd.f32 %v279, %v400
    %402 = vmatprep.mubr.f32.mxu0 0.0
    %403 = vmatmul.mubr.f32.gmra.mrb[0].mxu0 %v172
    %v404 = vpop.f32.mrb[0].mxu0
    %v405 = vadd.f32 %v275, %v404
    %v406 = vpop.f32.mrb[0].mxu0
    %v407 = vadd.f32 %v279, %v406
    %408 = vmatprep.mubr.f32.mxu0 0.0
    %409 = vmatmul.mubr.f32.gmra.mrb[0].mxu0 %v173
    %v410 = vpop.f32.mrb[0].mxu0
    %v411 = vadd.f32 %v275, %v410
    %v412 = vpop.f32.mrb[0].mxu0
    %v413 = vadd.f32 %v279, %v412
    %414 = vdwg.mxu0
    %415 = vmatprep.subr.mxu0 %v177
    %416 = vmatpush1.msra.mxu0 %v176
    %417 = vmatprep.subr.mxu0 %v183
    %418 = vmatpush1.msra.mxu0 %v182
    %419 = vmatprep.subr.mxu0 %v189
    %420 = vmatpush1.msra.mxu0 %v188
    %421 = vmatprep.subr.mxu0 %v195
    %422 = vmatpush1.msra.mxu0 %v194
    %423 = vmatprep.subr.mxu0 %v201
    %424 = vmatpush1.msra.mxu0 %v200
    %425 = vmatprep.subr.mxu0 %v207
    %426 = vmatpush1.msra.mxu0 %v206
    %427 = vmatprep.subr.mxu0 %v213
    %428 = vmatpush1.msra.mxu0 %v212
    %429 = vmatprep.subr.mxu0 %v219
    %430 = vmatpush1.msra.mxu0 %v218
    %431 = vmatprep.subr.mxu0 %v225
    %432 = vmatpush1.msra.mxu0 %v224
    %433 = vmatprep.subr.mxu0 %v231
    %434 = vmatpush1.msra.mxu0 %v230
    %435 = vmatprep.subr.mxu0 %v237
    %436 = vmatpush1.msra.mxu0 %v236
    %437 = vmatprep.subr.mxu0 %v243
    %438 = vmatpush1.msra.mxu0 %v242
    %439 = vmatprep.subr.mxu0 %v249
    %440 = vmatpush1.msra.mxu0 %v248
    %441 = vmatprep.subr.mxu0 %v255
    %442 = vmatpush1.msra.mxu0 %v254
    %443 = vmatprep.subr.mxu0 %v261
    %444 = vmatpush1.msra.mxu0 %v260
    %445 = vmatprep.subr.mxu0 %v267
    %446 = vmatpush1.msra.mxu0 %v266
    %447 = vmatprep.subr.mxu0 0.0
    %448 = vmatpush1.msra.mxu0 0.0
    %449 = vmatprep.subr.mxu0 0.0
    %450 = vmatpush1.msra.mxu0 0.0
    %451 = vmatprep.subr.mxu0 0.0
    %452 = vmatpush1.msra.mxu0 0.0
    %453 = vmatprep.subr.mxu0 0.0
    %454 = vmatpush1.msra.mxu0 0.0
    %455 = vmatprep.subr.mxu0 0.0
    %456 = vmatpush1.msra.mxu0 0.0
    %457 = vmatprep.subr.mxu0 0.0
    %458 = vmatpush1.msra.mxu0 0.0
    %459 = vmatprep.subr.mxu0 0.0
    %460 = vmatpush1.msra.mxu0 0.0
    %461 = vmatprep.subr.mxu0 0.0
    %462 = vmatpush1.msra.mxu0 0.0
    %463 = vmatprep.subr.mxu0 0.0
    %464 = vmatpush1.msra.mxu0 0.0
    %465 = vmatprep.subr.mxu0 0.0
    %466 = vmatpush1.msra.mxu0 0.0
    %467 = vmatprep.subr.mxu0 0.0
    %468 = vmatpush1.msra.mxu0 0.0
    %469 = vmatprep.subr.mxu0 0.0
    %470 = vmatpush1.msra.mxu0 0.0
    %471 = vmatprep.subr.mxu0 0.0
    %472 = vmatpush1.msra.mxu0 0.0
    %473 = vmatprep.subr.mxu0 0.0
    %474 = vmatpush1.msra.mxu0 0.0
    %475 = vmatprep.subr.mxu0 0.0
    %476 = vmatpush1.msra.mxu0 0.0
    %477 = vmatprep.subr.mxu0 0.0
    %478 = vmatpush1.msra.mxu0 0.0
    %479 = vmatprep.mubr.f32.mxu0 0.0
    %480 = vmatmul.mubr.f32.gmra.mrb[0].mxu0 %v166
    %v481 = vpop.f32.mrb[0].mxu0
    %v482 = vadd.f32 %v283, %v481
    %v483 = vpop.f32.mrb[0].mxu0
    %v484 = vadd.f32 %v287, %v483
    %485 = vmatprep.mubr.f32.mxu0 0.0
    %486 = vmatmul.mubr.f32.gmra.mrb[0].mxu0 %v167
    %v487 = vpop.f32.mrb[0].mxu0
    %v488 = vadd.f32 %v283, %v487
    %v489 = vpop.f32.mrb[0].mxu0
    %v490 = vadd.f32 %v287, %v489
    %491 = vmatprep.mubr.f32.mxu0 0.0
    %492 = vmatmul.mubr.f32.gmra.mrb[0].mxu0 %v168
    %v493 = vpop.f32.mrb[0].mxu0
    %v494 = vadd.f32 %v283, %v493
    %v495 = vpop.f32.mrb[0].mxu0
    %v496 = vadd.f32 %v287, %v495
    %497 = vmatprep.mubr.f32.mxu0 0.0
    %498 = vmatmul.mubr.f32.gmra.mrb[0].mxu0 %v169
    %v499 = vpop.f32.mrb[0].mxu0
    %v500 = vadd.f32 %v283, %v499
    %v501 = vpop.f32.mrb[0].mxu0
    %v502 = vadd.f32 %v287, %v501
    %503 = vmatprep.mubr.f32.mxu0 0.0
    %504 = vmatmul.mubr.f32.gmra.mrb[0].mxu0 %v170
    %v505 = vpop.f32.mrb[0].mxu0
    %v506 = vadd.f32 %v283, %v505
    %v507 = vpop.f32.mrb[0].mxu0
    %v508 = vadd.f32 %v287, %v507
    %509 = vmatprep.mubr.f32.mxu0 0.0
    %510 = vmatmul.mubr.f32.gmra.mrb[0].mxu0 %v171
    %v511 = vpop.f32.mrb[0].mxu0
    %v512 = vadd.f32 %v283, %v511
    %v513 = vpop.f32.mrb[0].mxu0
    %v514 = vadd.f32 %v287, %v513
    %515 = vmatprep.mubr.f32.mxu0 0.0
    %516 = vmatmul.mubr.f32.gmra.mrb[0].mxu0 %v172
    %v517 = vpop.f32.mrb[0].mxu0
    %v518 = vadd.f32 %v283, %v517
    %v519 = vpop.f32.mrb[0].mxu0
    %v520 = vadd.f32 %v287, %v519
    %521 = vmatprep.mubr.f32.mxu0 0.0
    %522 = vmatmul.mubr.f32.gmra.mrb[0].mxu0 %v173
    %v523 = vpop.f32.mrb[0].mxu0
    %v524 = vadd.f32 %v283, %v523
    %v525 = vpop.f32.mrb[0].mxu0
    %v526 = vadd.f32 %v287, %v525
    %527 = vdwg.mxu0
    %528 = vmatprep.subr.mxu0 %v179
    %529 = vmatpush1.msra.mxu0 %v178
    %530 = vmatprep.subr.mxu0 %v185
    %531 = vmatpush1.msra.mxu0 %v184
    %532 = vmatprep.subr.mxu0 %v191
    %533 = vmatpush1.msra.mxu0 %v190
    %534 = vmatprep.subr.mxu0 %v197
    %535 = vmatpush1.msra.mxu0 %v196
    %536 = vmatprep.subr.mxu0 %v203
    %537 = vmatpush1.msra.mxu0 %v202
    %538 = vmatprep.subr.mxu0 %v209
    %539 = vmatpush1.msra.mxu0 %v208
    %540 = vmatprep.subr.mxu0 %v215
    %541 = vmatpush1.msra.mxu0 %v214
    %542 = vmatprep.subr.mxu0 %v221
    %543 = vmatpush1.msra.mxu0 %v220
    %544 = vmatprep.subr.mxu0 %v227
    %545 = vmatpush1.msra.mxu0 %v226
    %546 = vmatprep.subr.mxu0 %v233
    %547 = vmatpush1.msra.mxu0 %v232
    %548 = vmatprep.subr.mxu0 %v239
    %549 = vmatpush1.msra.mxu0 %v238
    %550 = vmatprep.subr.mxu0 %v245
    %551 = vmatpush1.msra.mxu0 %v244
    %552 = vmatprep.subr.mxu0 %v251
    %553 = vmatpush1.msra.mxu0 %v250
    %554 = vmatprep.subr.mxu0 %v257
    %555 = vmatpush1.msra.mxu0 %v256
    %556 = vmatprep.subr.mxu0 %v263
    %557 = vmatpush1.msra.mxu0 %v262
    %558 = vmatprep.subr.mxu0 %v269
    %559 = vmatpush1.msra.mxu0 %v268
    %560 = vmatprep.subr.mxu0 0.0
    %561 = vmatpush1.msra.mxu0 0.0
    %562 = vmatprep.subr.mxu0 0.0
    %563 = vmatpush1.msra.mxu0 0.0
    %564 = vmatprep.subr.mxu0 0.0
    %565 = vmatpush1.msra.mxu0 0.0
    %566 = vmatprep.subr.mxu0 0.0
    %567 = vmatpush1.msra.mxu0 0.0
    %568 = vmatprep.subr.mxu0 0.0
    %569 = vmatpush1.msra.mxu0 0.0
    %570 = vmatprep.subr.mxu0 0.0
    %571 = vmatpush1.msra.mxu0 0.0
    %572 = vmatprep.subr.mxu0 0.0
    %573 = vmatpush1.msra.mxu0 0.0
    %574 = vmatprep.subr.mxu0 0.0
    %575 = vmatpush1.msra.mxu0 0.0
    %576 = vmatprep.subr.mxu0 0.0
    %577 = vmatpush1.msra.mxu0 0.0
    %578 = vmatprep.subr.mxu0 0.0
    %579 = vmatpush1.msra.mxu0 0.0
    %580 = vmatprep.subr.mxu0 0.0
    %581 = vmatpush1.msra.mxu0 0.0
    %582 = vmatprep.subr.mxu0 0.0
    %583 = vmatpush1.msra.mxu0 0.0
    %584 = vmatprep.subr.mxu0 0.0
    %585 = vmatpush1.msra.mxu0 0.0
    %586 = vmatprep.subr.mxu0 0.0
    %587 = vmatpush1.msra.mxu0 0.0
    %588 = vmatprep.subr.mxu0 0.0
    %589 = vmatpush1.msra.mxu0 0.0
    %590 = vmatprep.subr.mxu0 0.0
    %591 = vmatpush1.msra.mxu0 0.0
    %592 = vmatprep.mubr.f32.mxu0 0.0
    %593 = vmatmul.mubr.f32.gmra.mrb[0].mxu0 %v166
    %v594 = vpop.f32.mrb[0].mxu0
    %v595 = vadd.f32 %v291, %v594
    %v596 = vpop.f32.mrb[0].mxu0
    %v597 = vadd.f32 %v295, %v596
    %598 = vmatprep.mubr.f32.mxu0 0.0
    %599 = vmatmul.mubr.f32.gmra.mrb[0].mxu0 %v167
    %v600 = vpop.f32.mrb[0].mxu0
    %v601 = vadd.f32 %v291, %v600
    %v602 = vpop.f32.mrb[0].mxu0
    %v603 = vadd.f32 %v295, %v602
    %604 = vmatprep.mubr.f32.mxu0 0.0
    %605 = vmatmul.mubr.f32.gmra.mrb[0].mxu0 %v168
    %v606 = vpop.f32.mrb[0].mxu0
    %v607 = vadd.f32 %v291, %v606
    %v608 = vpop.f32.mrb[0].mxu0
    %v609 = vadd.f32 %v295, %v608
    %610 = vmatprep.mubr.f32.mxu0 0.0
    %611 = vmatmul.mubr.f32.gmra.mrb[0].mxu0 %v169
    %v612 = vpop.f32.mrb[0].mxu0
    %v613 = vadd.f32 %v291, %v612
    %v614 = vpop.f32.mrb[0].mxu0
    %v615 = vadd.f32 %v295, %v614
    %616 = vmatprep.mubr.f32.mxu0 0.0
    %617 = vmatmul.mubr.f32.gmra.mrb[0].mxu0 %v170
    %v618 = vpop.f32.mrb[0].mxu0
    %v619 = vadd.f32 %v291, %v618
    %v620 = vpop.f32.mrb[0].mxu0
    %v621 = vadd.f32 %v295, %v620
    %622 = vmatprep.mubr.f32.mxu0 0.0
    %623 = vmatmul.mubr.f32.gmra.mrb[0].mxu0 %v171
    %v624 = vpop.f32.mrb[0].mxu0
    %v625 = vadd.f32 %v291, %v624
    %v626 = vpop.f32.mrb[0].mxu0
    %v627 = vadd.f32 %v295, %v626
    %628 = vmatprep.mubr.f32.mxu0 0.0
    %629 = vmatmul.mubr.f32.gmra.mrb[0].mxu0 %v172
    %v630 = vpop.f32.mrb[0].mxu0
    %v631 = vadd.f32 %v291, %v630
    %v632 = vpop.f32.mrb[0].mxu0
    %v633 = vadd.f32 %v295, %v632
    %634 = vmatprep.mubr.f32.mxu0 0.0
    %635 = vmatmul.mubr.f32.gmra.mrb[0].mxu0 %v173
    %v636 = vpop.f32.mrb[0].mxu0
    %v637 = vadd.f32 %v291, %v636
    %v638 = vpop.f32.mrb[0].mxu0
    %v639 = vadd.f32 %v295, %v638
    %640 = vdwg.mxu0
    %641 = vst [vmem:[#allocation2] sm:$0xff] %v369
    %642 = vst [vmem:[#allocation2 + $0x8] sm:$0xff] %v371
    %643 = vst [vmem:[#allocation2 + $0x10] sm:$0xff] %v482
    %644 = vst [vmem:[#allocation2 + $0x18] sm:$0xff] %v484
    %645 = vst [vmem:[#allocation2 + $0x20] sm:$0xff] %v595
    %646 = vst [vmem:[#allocation2 + $0x28] sm:$0xff] %v597
    %647 = vst [vmem:[#allocation2 + $0x30] sm:$0xff] %v375
    %648 = vst [vmem:[#allocation2 + $0x38] sm:$0xff] %v377
    %649 = vst [vmem:[#allocation2 + $0x40] sm:$0xff] %v488
    %650 = vst [vmem:[#allocation2 + $0x48] sm:$0xff] %v490
    %651 = vst [vmem:[#allocation2 + $0x50] sm:$0xff] %v601
    %652 = vst [vmem:[#allocation2 + $0x58] sm:$0xff] %v603
    %653 = vst [vmem:[#allocation2 + $0x60] sm:$0xff] %v381
    %654 = vst [vmem:[#allocation2 + $0x68] sm:$0xff] %v383
    %655 = vst [vmem:[#allocation2 + $0x70] sm:$0xff] %v494
    %656 = vst [vmem:[#allocation2 + $0x78] sm:$0xff] %v496
    %657 = vst [vmem:[#allocation2 + $0x80] sm:$0xff] %v607
    %658 = vst [vmem:[#allocation2 + $0x88] sm:$0xff] %v609
    %659 = vst [vmem:[#allocation2 + $0x90] sm:$0xff] %v387
    %660 = vst [vmem:[#allocation2 + $0x98] sm:$0xff] %v389
    %661 = vst [vmem:[#allocation2 + $0xa0] sm:$0xff] %v500
    %662 = vst [vmem:[#allocation2 + $0xa8] sm:$0xff] %v502
    %663 = vst [vmem:[#allocation2 + $0xb0] sm:$0xff] %v613
    %664 = vst [vmem:[#allocation2 + $0xb8] sm:$0xff] %v615
    %665 = vst [vmem:[#allocation2 + $0xc0] sm:$0xff] %v393
    %666 = vst [vmem:[#allocation2 + $0xc8] sm:$0xff] %v395
    %667 = vst [vmem:[#allocation2 + $0xd0] sm:$0xff] %v506
    %668 = vst [vmem:[#allocation2 + $0xd8] sm:$0xff] %v508
    %669 = vst [vmem:[#allocation2 + $0xe0] sm:$0xff] %v619
    %670 = vst [vmem:[#allocation2 + $0xe8] sm:$0xff] %v621
    %671 = vst [vmem:[#allocation2 + $0xf0] sm:$0xff] %v399
    %672 = vst [vmem:[#allocation2 + $0xf8] sm:$0xff] %v401
    %673 = vst [vmem:[#allocation2 + $0x100] sm:$0xff] %v512
    %674 = vst [vmem:[#allocation2 + $0x108] sm:$0xff] %v514
    %675 = vst [vmem:[#allocation2 + $0x110] sm:$0xff] %v625
    %676 = vst [vmem:[#allocation2 + $0x118] sm:$0xff] %v627
    %677 = vst [vmem:[#allocation2 + $0x120] sm:$0xff] %v405
    %678 = vst [vmem:[#allocation2 + $0x128] sm:$0xff] %v407
    %679 = vst [vmem:[#allocation2 + $0x130] sm:$0xff] %v518
    %680 = vst [vmem:[#allocation2 + $0x138] sm:$0xff] %v520
    %681 = vst [vmem:[#allocation2 + $0x140] sm:$0xff] %v631
    %682 = vst [vmem:[#allocation2 + $0x148] sm:$0xff] %v633
    %683 = vst [vmem:[#allocation2 + $0x150] sm:$0xff] %v411
    %684 = vst [vmem:[#allocation2 + $0x158] sm:$0xff] %v413
    %685 = vst [vmem:[#allocation2 + $0x160] sm:$0xff] %v524
    %686 = vst [vmem:[#allocation2 + $0x168] sm:$0xff] %v526
    %687 = vst [vmem:[#allocation2 + $0x170] sm:$0xff] %v637
    %688 = vst [vmem:[#allocation2 + $0x178] sm:$0xff] %v639
    %v689 = vld [vmem:[#allocation11] sm:$0x3]
    %v691 = vlaneseq
    %v692 = vshrl.u32 %v691, 7
    %v693 = vsub.s32 0, %v692
    %v694 = vrot.slane %v689, %v693
    %v695 = vlaneseq
    %v696 = vshrl.u32 %v695, 7
    %v697 = vsub.s32 1, %v696
    %v698 = vrot.slane %v689, %v697
    %v701 = vld [vmem:[#allocation15] sm:$0x3]
    %v703 = vlaneseq
    %v704 = vshrl.u32 %v703, 7
    %v705 = vsub.s32 0, %v704
    %v706 = vrot.slane %v701, %v705
    %v707 = vlaneseq
    %v708 = vshrl.u32 %v707, 7
    %v709 = vsub.s32 1, %v708
    %v710 = vrot.slane %v701, %v709
    %v713 = vld [vmem:[#allocation12] sm:$0x3f]
    %v715 = vlaneseq
    %v716 = vshrl.u32 %v715, 7
    %v717 = vsub.s32 0, %v716
    %v718 = vrot.slane %v713, %v717
    %v719 = vlaneseq
    %v720 = vshrl.u32 %v719, 7
    %v721 = vsub.s32 1, %v720
    %v722 = vrot.slane %v713, %v721
    %v723 = vlaneseq
    %v724 = vshrl.u32 %v723, 7
    %v725 = vsub.s32 2, %v724
    %v726 = vrot.slane %v713, %v725
    %v727 = vlaneseq
    %v728 = vshrl.u32 %v727, 7
    %v729 = vsub.s32 3, %v728
    %v730 = vrot.slane %v713, %v729
    %v731 = vlaneseq
    %v732 = vshrl.u32 %v731, 7
    %v733 = vsub.s32 4, %v732
    %v734 = vrot.slane %v713, %v733
    %v735 = vlaneseq
    %v736 = vshrl.u32 %v735, 7
    %v737 = vsub.s32 5, %v736
    %v738 = vrot.slane %v713, %v737
    %v745 = vld [vmem:[#allocation2] sm:$0xff]
    %v746 = vld [vmem:[#allocation2 + $0x8] sm:$0xff]
    %v747 = vld [vmem:[#allocation2 + $0x10] sm:$0xff]
    %v748 = vld [vmem:[#allocation2 + $0x18] sm:$0xff]
    %v749 = vld [vmem:[#allocation2 + $0x20] sm:$0xff]
    %v750 = vld [vmem:[#allocation2 + $0x28] sm:$0xff]
    %v751 = vadd.f32 %v745, 0.0
    %v752 = vadd.f32 %v746, 0.0
    %v753 = vxor.u32 %v751, 2147483648
    %v754 = vxor.u32 %v752, 2147483648
    %v755 = vmul.f32 %v753, 1.442695
    %v756 = vpow.pop %v755
    %v757 = vmul.f32 %v754, 1.442695
    %v758 = vpow.pop %v757
    %v759 = vadd.f32 %v756, 1.0
    %v760 = vadd.f32 %v758, 1.0
    %v761 = vrcp.pop %v759
    %v762 = vmul.f32 1.0, %v761
    %v763 = vrcp.pop %v760
    %v764 = vmul.f32 1.0, %v763
    %v765 = vadd.f32 %v747, 0.0
    %v766 = vadd.f32 %v748, 0.0
    %v767 = vxor.u32 %v765, 2147483648
    %v768 = vxor.u32 %v766, 2147483648
    %v769 = vmul.f32 %v767, 1.442695
    %v770 = vpow.pop %v769
    %v771 = vmul.f32 %v768, 1.442695
    %v772 = vpow.pop %v771
    %v773 = vadd.f32 %v770, 1.0
    %v774 = vadd.f32 %v772, 1.0
    %v775 = vrcp.pop %v773
    %v776 = vmul.f32 1.0, %v775
    %v777 = vrcp.pop %v774
    %v778 = vmul.f32 1.0, %v777
    %v779 = vadd.f32 %v694, 0.0
    %v780 = vadd.f32 %v698, 0.0
    %v781 = vmul.f32 %v762, %v779
    %v782 = vmul.f32 %v764, %v780
    %v783 = vadd.f32 %v749, %v781
    %v784 = vadd.f32 %v750, %v782
    %v785 = vtanh.pop %v783
    %v786 = vtanh.pop %v784
    %v787 = vsub.f32 1.0, %v776
    %v788 = vsub.f32 1.0, %v778
    %v789 = vmul.f32 %v787, %v785
    %v790 = vmul.f32 %v788, %v786
    %v791 = vmul.f32 %v776, 0.0
    %v792 = vmul.f32 %v778, 0.0
    %v793 = vadd.f32 %v789, %v791
    %v794 = vadd.f32 %v790, %v792
    %v795 = vld [vmem:[#allocation9] sm:$0xff]
    %v796 = vld [vmem:[#allocation9 + $0x8] sm:$0xff]
    %v797 = vld [vmem:[#allocation9 + $0x10] sm:$0xff]
    %v798 = vld [vmem:[#allocation9 + $0x18] sm:$0xff]
    %v799 = vld [vmem:[#allocation9 + $0x20] sm:$0xff]
    %v800 = vld [vmem:[#allocation9 + $0x28] sm:$0xff]
    %v801 = vld [vmem:[#allocation9 + $0x30] sm:$0xff]
    %v802 = vld [vmem:[#allocation9 + $0x38] sm:$0xff]
    %v803 = vld [vmem:[#allocation9 + $0x40] sm:$0xff]
    %v804 = vld [vmem:[#allocation9 + $0x48] sm:$0xff]
    %v805 = vld [vmem:[#allocation9 + $0x50] sm:$0xff]
    %v806 = vld [vmem:[#allocation9 + $0x58] sm:$0xff]
    %v807 = vld [vmem:[#allocation9 + $0x60] sm:$0xff]
    %v808 = vld [vmem:[#allocation9 + $0x68] sm:$0xff]
    %v809 = vld [vmem:[#allocation9 + $0x70] sm:$0xff]
    %v810 = vld [vmem:[#allocation9 + $0x78] sm:$0xff]
    %v811 = vld [vmem:[#allocation9 + $0x80] sm:$0xff]
    %v812 = vld [vmem:[#allocation9 + $0x88] sm:$0xff]
    %v813 = vld [vmem:[#allocation9 + $0x90] sm:$0xff]
    %v814 = vld [vmem:[#allocation9 + $0x98] sm:$0xff]
    %v815 = vld [vmem:[#allocation9 + $0xa0] sm:$0xff]
    %v816 = vld [vmem:[#allocation9 + $0xa8] sm:$0xff]
    %v817 = vld [vmem:[#allocation9 + $0xb0] sm:$0xff]
    %v818 = vld [vmem:[#allocation9 + $0xb8] sm:$0xff]
    %v819 = vld [vmem:[#allocation9 + $0xc0] sm:$0xff]
    %v820 = vld [vmem:[#allocation9 + $0xc8] sm:$0xff]
    %v821 = vld [vmem:[#allocation9 + $0xd0] sm:$0xff]
    %v822 = vld [vmem:[#allocation9 + $0xd8] sm:$0xff]
    %v823 = vld [vmem:[#allocation9 + $0xe0] sm:$0xff]
    %v824 = vld [vmem:[#allocation9 + $0xe8] sm:$0xff]
    %v825 = vld [vmem:[#allocation9 + $0xf0] sm:$0xff]
    %v826 = vld [vmem:[#allocation9 + $0xf8] sm:$0xff]
    %v827 = vld [vmem:[#allocation9 + $0x100] sm:$0xff]
    %v828 = vld [vmem:[#allocation9 + $0x108] sm:$0xff]
    %v829 = vld [vmem:[#allocation9 + $0x110] sm:$0xff]
    %v830 = vld [vmem:[#allocation9 + $0x118] sm:$0xff]
    %v831 = vld [vmem:[#allocation9 + $0x120] sm:$0xff]
    %v832 = vld [vmem:[#allocation9 + $0x128] sm:$0xff]
    %v833 = vld [vmem:[#allocation9 + $0x130] sm:$0xff]
    %v834 = vld [vmem:[#allocation9 + $0x138] sm:$0xff]
    %v835 = vld [vmem:[#allocation9 + $0x140] sm:$0xff]
    %v836 = vld [vmem:[#allocation9 + $0x148] sm:$0xff]
    %v837 = vld [vmem:[#allocation9 + $0x150] sm:$0xff]
    %v838 = vld [vmem:[#allocation9 + $0x158] sm:$0xff]
    %v839 = vld [vmem:[#allocation9 + $0x160] sm:$0xff]
    %v840 = vld [vmem:[#allocation9 + $0x168] sm:$0xff]
    %v841 = vld [vmem:[#allocation9 + $0x170] sm:$0xff]
    %v842 = vld [vmem:[#allocation9 + $0x178] sm:$0xff]
    %v843 = vld [vmem:[#allocation9 + $0x180] sm:$0xff]
    %v844 = vld [vmem:[#allocation9 + $0x188] sm:$0xff]
    %v845 = vld [vmem:[#allocation9 + $0x190] sm:$0xff]
    %v846 = vld [vmem:[#allocation9 + $0x198] sm:$0xff]
    %v847 = vld [vmem:[#allocation9 + $0x1a0] sm:$0xff]
    %v848 = vld [vmem:[#allocation9 + $0x1a8] sm:$0xff]
    %v849 = vld [vmem:[#allocation9 + $0x1b0] sm:$0xff]
    %v850 = vld [vmem:[#allocation9 + $0x1b8] sm:$0xff]
    %v851 = vld [vmem:[#allocation9 + $0x1c0] sm:$0xff]
    %v852 = vld [vmem:[#allocation9 + $0x1c8] sm:$0xff]
    %v853 = vld [vmem:[#allocation9 + $0x1d0] sm:$0xff]
    %v854 = vld [vmem:[#allocation9 + $0x1d8] sm:$0xff]
    %v855 = vld [vmem:[#allocation9 + $0x1e0] sm:$0xff]
    %v856 = vld [vmem:[#allocation9 + $0x1e8] sm:$0xff]
    %v857 = vld [vmem:[#allocation9 + $0x1f0] sm:$0xff]
    %v858 = vld [vmem:[#allocation9 + $0x1f8] sm:$0xff]
    %v859 = vld [vmem:[#allocation9 + $0x200] sm:$0xff]
    %v860 = vld [vmem:[#allocation9 + $0x208] sm:$0xff]
    %v861 = vld [vmem:[#allocation9 + $0x210] sm:$0xff]
    %v862 = vld [vmem:[#allocation9 + $0x218] sm:$0xff]
    %v863 = vld [vmem:[#allocation9 + $0x220] sm:$0xff]
    %v864 = vld [vmem:[#allocation9 + $0x228] sm:$0xff]
    %v865 = vld [vmem:[#allocation9 + $0x230] sm:$0xff]
    %v866 = vld [vmem:[#allocation9 + $0x238] sm:$0xff]
    %v867 = vld [vmem:[#allocation9 + $0x240] sm:$0xff]
    %v868 = vld [vmem:[#allocation9 + $0x248] sm:$0xff]
    %v869 = vld [vmem:[#allocation9 + $0x250] sm:$0xff]
    %v870 = vld [vmem:[#allocation9 + $0x258] sm:$0xff]
    %v871 = vld [vmem:[#allocation9 + $0x260] sm:$0xff]
    %v872 = vld [vmem:[#allocation9 + $0x268] sm:$0xff]
    %v873 = vld [vmem:[#allocation9 + $0x270] sm:$0xff]
    %v874 = vld [vmem:[#allocation9 + $0x278] sm:$0xff]
    %v875 = vld [vmem:[#allocation9 + $0x280] sm:$0xff]
    %v876 = vld [vmem:[#allocation9 + $0x288] sm:$0xff]
    %v877 = vld [vmem:[#allocation9 + $0x290] sm:$0xff]
    %v878 = vld [vmem:[#allocation9 + $0x298] sm:$0xff]
    %v879 = vld [vmem:[#allocation9 + $0x2a0] sm:$0xff]
    %v880 = vld [vmem:[#allocation9 + $0x2a8] sm:$0xff]
    %v881 = vld [vmem:[#allocation9 + $0x2b0] sm:$0xff]
    %v882 = vld [vmem:[#allocation9 + $0x2b8] sm:$0xff]
    %v883 = vld [vmem:[#allocation9 + $0x2c0] sm:$0xff]
    %v884 = vld [vmem:[#allocation9 + $0x2c8] sm:$0xff]
    %v885 = vld [vmem:[#allocation9 + $0x2d0] sm:$0xff]
    %v886 = vld [vmem:[#allocation9 + $0x2d8] sm:$0xff]
    %v887 = vld [vmem:[#allocation9 + $0x2e0] sm:$0xff]
    %v888 = vld [vmem:[#allocation9 + $0x2e8] sm:$0xff]
    %v889 = vld [vmem:[#allocation9 + $0x2f0] sm:$0xff]
    %v890 = vld [vmem:[#allocation9 + $0x2f8] sm:$0xff]
    %v891 = vld [vmem:[#allocation9 + $0x300] sm:$0xff]
    %v892 = vld [vmem:[#allocation9 + $0x308] sm:$0xff]
    %v893 = vld [vmem:[#allocation9 + $0x310] sm:$0xff]
    %v894 = vld [vmem:[#allocation9 + $0x318] sm:$0xff]
    %v895 = vld [vmem:[#allocation9 + $0x320] sm:$0xff]
    %v896 = vld [vmem:[#allocation9 + $0x328] sm:$0xff]
    %v897 = vld [vmem:[#allocation9 + $0x330] sm:$0xff]
    %v898 = vld [vmem:[#allocation9 + $0x338] sm:$0xff]
    %v899 = vld [vmem:[#allocation9 + $0x340] sm:$0xff]
    %v900 = vld [vmem:[#allocation9 + $0x348] sm:$0xff]
    %v901 = vld [vmem:[#allocation9 + $0x350] sm:$0xff]
    %v902 = vld [vmem:[#allocation9 + $0x358] sm:$0xff]
    %v903 = vld [vmem:[#allocation9 + $0x360] sm:$0xff]
    %v904 = vld [vmem:[#allocation9 + $0x368] sm:$0xff]
    %v905 = vld [vmem:[#allocation9 + $0x370] sm:$0xff]
    %v906 = vld [vmem:[#allocation9 + $0x378] sm:$0xff]
    %v907 = vld [vmem:[#allocation9 + $0x380] sm:$0xff]
    %v908 = vld [vmem:[#allocation9 + $0x388] sm:$0xff]
    %v909 = vld [vmem:[#allocation9 + $0x390] sm:$0xff]
    %v910 = vld [vmem:[#allocation9 + $0x398] sm:$0xff]
    %v911 = vld [vmem:[#allocation9 + $0x3a0] sm:$0xff]
    %v912 = vld [vmem:[#allocation9 + $0x3a8] sm:$0xff]
    %v913 = vld [vmem:[#allocation9 + $0x3b0] sm:$0xff]
    %v914 = vld [vmem:[#allocation9 + $0x3b8] sm:$0xff]
    %v915 = vld [vmem:[#allocation9 + $0x3c0] sm:$0xff]
    %v916 = vld [vmem:[#allocation9 + $0x3c8] sm:$0xff]
    %v917 = vld [vmem:[#allocation9 + $0x3d0] sm:$0xff]
    %v918 = vld [vmem:[#allocation9 + $0x3d8] sm:$0xff]
    %v919 = vld [vmem:[#allocation9 + $0x3e0] sm:$0xff]
    %v920 = vld [vmem:[#allocation9 + $0x3e8] sm:$0xff]
    %v921 = vld [vmem:[#allocation9 + $0x3f0] sm:$0xff]
    %v922 = vld [vmem:[#allocation9 + $0x3f8] sm:$0xff]
    %v923 = vld [vmem:[#allocation9 + $0x400] sm:$0xff]
    %v924 = vld [vmem:[#allocation9 + $0x408] sm:$0xff]
    %v925 = vld [vmem:[#allocation9 + $0x410] sm:$0xff]
    %v926 = vld [vmem:[#allocation9 + $0x418] sm:$0xff]
    %v927 = vld [vmem:[#allocation9 + $0x420] sm:$0xff]
    %v928 = vld [vmem:[#allocation9 + $0x428] sm:$0xff]
    %v929 = vld [vmem:[#allocation9 + $0x430] sm:$0xff]
    %v930 = vld [vmem:[#allocation9 + $0x438] sm:$0xff]
    %v931 = vld [vmem:[#allocation9 + $0x440] sm:$0xff]
    %v932 = vld [vmem:[#allocation9 + $0x448] sm:$0xff]
    %v933 = vld [vmem:[#allocation9 + $0x450] sm:$0xff]
    %v934 = vld [vmem:[#allocation9 + $0x458] sm:$0xff]
    %v935 = vld [vmem:[#allocation9 + $0x460] sm:$0xff]
    %v936 = vld [vmem:[#allocation9 + $0x468] sm:$0xff]
    %v937 = vld [vmem:[#allocation9 + $0x470] sm:$0xff]
    %v938 = vld [vmem:[#allocation9 + $0x478] sm:$0xff]
    %v939 = vld [vmem:[#allocation9 + $0x480] sm:$0xff]
    %v940 = vld [vmem:[#allocation9 + $0x488] sm:$0xff]
    %v941 = vld [vmem:[#allocation9 + $0x490] sm:$0xff]
    %v942 = vld [vmem:[#allocation9 + $0x498] sm:$0xff]
    %v943 = vld [vmem:[#allocation9 + $0x4a0] sm:$0xff]
    %v944 = vld [vmem:[#allocation9 + $0x4a8] sm:$0xff]
    %v945 = vld [vmem:[#allocation9 + $0x4b0] sm:$0xff]
    %v946 = vld [vmem:[#allocation9 + $0x4b8] sm:$0xff]
    %v947 = vld [vmem:[#allocation9 + $0x4c0] sm:$0xff]
    %v948 = vld [vmem:[#allocation9 + $0x4c8] sm:$0xff]
    %v949 = vld [vmem:[#allocation9 + $0x4d0] sm:$0xff]
    %v950 = vld [vmem:[#allocation9 + $0x4d8] sm:$0xff]
    %v951 = vld [vmem:[#allocation9 + $0x4e0] sm:$0xff]
    %v952 = vld [vmem:[#allocation9 + $0x4e8] sm:$0xff]
    %v953 = vld [vmem:[#allocation9 + $0x4f0] sm:$0xff]
    %v954 = vld [vmem:[#allocation9 + $0x4f8] sm:$0xff]
    %v955 = vld [vmem:[#allocation9 + $0x500] sm:$0xff]
    %v956 = vld [vmem:[#allocation9 + $0x508] sm:$0xff]
    %v957 = vld [vmem:[#allocation9 + $0x510] sm:$0xff]
    %v958 = vld [vmem:[#allocation9 + $0x518] sm:$0xff]
    %v959 = vld [vmem:[#allocation9 + $0x520] sm:$0xff]
    %v960 = vld [vmem:[#allocation9 + $0x528] sm:$0xff]
    %v961 = vld [vmem:[#allocation9 + $0x530] sm:$0xff]
    %v962 = vld [vmem:[#allocation9 + $0x538] sm:$0xff]
    %v963 = vld [vmem:[#allocation9 + $0x540] sm:$0xff]
    %v964 = vld [vmem:[#allocation9 + $0x548] sm:$0xff]
    %v965 = vld [vmem:[#allocation9 + $0x550] sm:$0xff]
    %v966 = vld [vmem:[#allocation9 + $0x558] sm:$0xff]
    %v967 = vld [vmem:[#allocation9 + $0x560] sm:$0xff]
    %v968 = vld [vmem:[#allocation9 + $0x568] sm:$0xff]
    %v969 = vld [vmem:[#allocation9 + $0x570] sm:$0xff]
    %v970 = vld [vmem:[#allocation9 + $0x578] sm:$0xff]
    %v971 = vld [vmem:[#allocation9 + $0x580] sm:$0xff]
    %v972 = vld [vmem:[#allocation9 + $0x588] sm:$0xff]
    %v973 = vld [vmem:[#allocation9 + $0x590] sm:$0xff]
    %v974 = vld [vmem:[#allocation9 + $0x598] sm:$0xff]
    %v975 = vld [vmem:[#allocation9 + $0x5a0] sm:$0xff]
    %v976 = vld [vmem:[#allocation9 + $0x5a8] sm:$0xff]
    %v977 = vld [vmem:[#allocation9 + $0x5b0] sm:$0xff]
    %v978 = vld [vmem:[#allocation9 + $0x5b8] sm:$0xff]
    %v979 = vld [vmem:[#allocation9 + $0x5c0] sm:$0xff]
    %v980 = vld [vmem:[#allocation9 + $0x5c8] sm:$0xff]
    %v981 = vld [vmem:[#allocation9 + $0x5d0] sm:$0xff]
    %v982 = vld [vmem:[#allocation9 + $0x5d8] sm:$0xff]
    %v983 = vld [vmem:[#allocation9 + $0x5e0] sm:$0xff]
    %v984 = vld [vmem:[#allocation9 + $0x5e8] sm:$0xff]
    %v985 = vld [vmem:[#allocation9 + $0x5f0] sm:$0xff]
    %v986 = vld [vmem:[#allocation9 + $0x5f8] sm:$0xff]
    %v987 = vld [vmem:[#allocation9 + $0x600] sm:$0xff]
    %v988 = vld [vmem:[#allocation9 + $0x608] sm:$0xff]
    %v989 = vld [vmem:[#allocation9 + $0x610] sm:$0xff]
    %v990 = vld [vmem:[#allocation9 + $0x618] sm:$0xff]
    %v991 = vld [vmem:[#allocation9 + $0x620] sm:$0xff]
    %v992 = vld [vmem:[#allocation9 + $0x628] sm:$0xff]
    %v993 = vld [vmem:[#allocation9 + $0x630] sm:$0xff]
    %v994 = vld [vmem:[#allocation9 + $0x638] sm:$0xff]
    %v995 = vld [vmem:[#allocation9 + $0x640] sm:$0xff]
    %v996 = vld [vmem:[#allocation9 + $0x648] sm:$0xff]
    %v997 = vld [vmem:[#allocation9 + $0x650] sm:$0xff]
    %v998 = vld [vmem:[#allocation9 + $0x658] sm:$0xff]
    %v999 = vld [vmem:[#allocation9 + $0x660] sm:$0xff]
    %v1000 = vld [vmem:[#allocation9 + $0x668] sm:$0xff]
    %v1001 = vld [vmem:[#allocation9 + $0x670] sm:$0xff]
    %v1002 = vld [vmem:[#allocation9 + $0x678] sm:$0xff]
    %v1003 = vld [vmem:[#allocation9 + $0x680] sm:$0xff]
    %v1004 = vld [vmem:[#allocation9 + $0x688] sm:$0xff]
    %v1005 = vld [vmem:[#allocation9 + $0x690] sm:$0xff]
    %v1006 = vld [vmem:[#allocation9 + $0x698] sm:$0xff]
    %v1007 = vld [vmem:[#allocation9 + $0x6a0] sm:$0xff]
    %v1008 = vld [vmem:[#allocation9 + $0x6a8] sm:$0xff]
    %v1009 = vld [vmem:[#allocation9 + $0x6b0] sm:$0xff]
    %v1010 = vld [vmem:[#allocation9 + $0x6b8] sm:$0xff]
    %v1011 = vld [vmem:[#allocation9 + $0x6c0] sm:$0xff]
    %v1012 = vld [vmem:[#allocation9 + $0x6c8] sm:$0xff]
    %v1013 = vld [vmem:[#allocation9 + $0x6d0] sm:$0xff]
    %v1014 = vld [vmem:[#allocation9 + $0x6d8] sm:$0xff]
    %v1015 = vld [vmem:[#allocation9 + $0x6e0] sm:$0xff]
    %v1016 = vld [vmem:[#allocation9 + $0x6e8] sm:$0xff]
    %v1017 = vld [vmem:[#allocation9 + $0x6f0] sm:$0xff]
    %v1018 = vld [vmem:[#allocation9 + $0x6f8] sm:$0xff]
    %v1019 = vld [vmem:[#allocation9 + $0x700] sm:$0xff]
    %v1020 = vld [vmem:[#allocation9 + $0x708] sm:$0xff]
    %v1021 = vld [vmem:[#allocation9 + $0x710] sm:$0xff]
    %v1022 = vld [vmem:[#allocation9 + $0x718] sm:$0xff]
    %v1023 = vld [vmem:[#allocation9 + $0x720] sm:$0xff]
    %v1024 = vld [vmem:[#allocation9 + $0x728] sm:$0xff]
    %v1025 = vld [vmem:[#allocation9 + $0x730] sm:$0xff]
    %v1026 = vld [vmem:[#allocation9 + $0x738] sm:$0xff]
    %v1027 = vld [vmem:[#allocation9 + $0x740] sm:$0xff]
    %v1028 = vld [vmem:[#allocation9 + $0x748] sm:$0xff]
    %v1029 = vld [vmem:[#allocation9 + $0x750] sm:$0xff]
    %v1030 = vld [vmem:[#allocation9 + $0x758] sm:$0xff]
    %v1031 = vld [vmem:[#allocation9 + $0x760] sm:$0xff]
    %v1032 = vld [vmem:[#allocation9 + $0x768] sm:$0xff]
    %v1033 = vld [vmem:[#allocation9 + $0x770] sm:$0xff]
    %v1034 = vld [vmem:[#allocation9 + $0x778] sm:$0xff]
    %v1035 = vld [vmem:[#allocation9 + $0x780] sm:$0xff]
    %v1036 = vld [vmem:[#allocation9 + $0x788] sm:$0xff]
    %v1037 = vld [vmem:[#allocation9 + $0x790] sm:$0xff]
    %v1038 = vld [vmem:[#allocation9 + $0x798] sm:$0xff]
    %v1039 = vld [vmem:[#allocation9 + $0x7a0] sm:$0xff]
    %v1040 = vld [vmem:[#allocation9 + $0x7a8] sm:$0xff]
    %v1041 = vld [vmem:[#allocation9 + $0x7b0] sm:$0xff]
    %v1042 = vld [vmem:[#allocation9 + $0x7b8] sm:$0xff]
    %v1043 = vld [vmem:[#allocation9 + $0x7c0] sm:$0xff]
    %v1044 = vld [vmem:[#allocation9 + $0x7c8] sm:$0xff]
    %v1045 = vld [vmem:[#allocation9 + $0x7d0] sm:$0xff]
    %v1046 = vld [vmem:[#allocation9 + $0x7d8] sm:$0xff]
    %v1047 = vld [vmem:[#allocation9 + $0x7e0] sm:$0xff]
    %v1048 = vld [vmem:[#allocation9 + $0x7e8] sm:$0xff]
    %v1049 = vld [vmem:[#allocation9 + $0x7f0] sm:$0xff]
    %v1050 = vld [vmem:[#allocation9 + $0x7f8] sm:$0xff]
    %v1051 = vld [vmem:[#allocation9 + $0x800] sm:$0xff]
    %v1052 = vld [vmem:[#allocation9 + $0x808] sm:$0xff]
    %v1053 = vld [vmem:[#allocation9 + $0x810] sm:$0xff]
    %v1054 = vld [vmem:[#allocation9 + $0x818] sm:$0xff]
    %v1055 = vld [vmem:[#allocation9 + $0x820] sm:$0xff]
    %v1056 = vld [vmem:[#allocation9 + $0x828] sm:$0xff]
    %v1057 = vld [vmem:[#allocation9 + $0x830] sm:$0xff]
    %v1058 = vld [vmem:[#allocation9 + $0x838] sm:$0xff]
    %v1059 = vld [vmem:[#allocation9 + $0x840] sm:$0xff]
    %v1060 = vld [vmem:[#allocation9 + $0x848] sm:$0xff]
    %v1061 = vld [vmem:[#allocation9 + $0x850] sm:$0xff]
    %v1062 = vld [vmem:[#allocation9 + $0x858] sm:$0xff]
    %v1063 = vld [vmem:[#allocation9 + $0x860] sm:$0xff]
    %v1064 = vld [vmem:[#allocation9 + $0x868] sm:$0xff]
    %v1065 = vld [vmem:[#allocation9 + $0x870] sm:$0xff]
    %v1066 = vld [vmem:[#allocation9 + $0x878] sm:$0xff]
    %v1067 = vld [vmem:[#allocation9 + $0x880] sm:$0xff]
    %v1068 = vld [vmem:[#allocation9 + $0x888] sm:$0xff]
    %v1069 = vld [vmem:[#allocation9 + $0x890] sm:$0xff]
    %v1070 = vld [vmem:[#allocation9 + $0x898] sm:$0xff]
    %v1071 = vld [vmem:[#allocation9 + $0x8a0] sm:$0xff]
    %v1072 = vld [vmem:[#allocation9 + $0x8a8] sm:$0xff]
    %v1073 = vld [vmem:[#allocation9 + $0x8b0] sm:$0xff]
    %v1074 = vld [vmem:[#allocation9 + $0x8b8] sm:$0xff]
    %v1075 = vld [vmem:[#allocation9 + $0x8c0] sm:$0xff]
    %v1076 = vld [vmem:[#allocation9 + $0x8c8] sm:$0xff]
    %v1077 = vld [vmem:[#allocation9 + $0x8d0] sm:$0xff]
    %v1078 = vld [vmem:[#allocation9 + $0x8d8] sm:$0xff]
    %v1079 = vld [vmem:[#allocation9 + $0x8e0] sm:$0xff]
    %v1080 = vld [vmem:[#allocation9 + $0x8e8] sm:$0xff]
    %v1081 = vld [vmem:[#allocation9 + $0x8f0] sm:$0xff]
    %v1082 = vld [vmem:[#allocation9 + $0x8f8] sm:$0xff]
    %v1083 = vld [vmem:[#allocation9 + $0x900] sm:$0xff]
    %v1084 = vld [vmem:[#allocation9 + $0x908] sm:$0xff]
    %v1085 = vld [vmem:[#allocation9 + $0x910] sm:$0xff]
    %v1086 = vld [vmem:[#allocation9 + $0x918] sm:$0xff]
    %v1087 = vld [vmem:[#allocation9 + $0x920] sm:$0xff]
    %v1088 = vld [vmem:[#allocation9 + $0x928] sm:$0xff]
    %v1089 = vld [vmem:[#allocation9 + $0x930] sm:$0xff]
    %v1090 = vld [vmem:[#allocation9 + $0x938] sm:$0xff]
    %v1091 = vld [vmem:[#allocation9 + $0x940] sm:$0xff]
    %v1092 = vld [vmem:[#allocation9 + $0x948] sm:$0xff]
    %v1093 = vld [vmem:[#allocation9 + $0x950] sm:$0xff]
    %v1094 = vld [vmem:[#allocation9 + $0x958] sm:$0xff]
    %v1095 = vld [vmem:[#allocation9 + $0x960] sm:$0xff]
    %v1096 = vld [vmem:[#allocation9 + $0x968] sm:$0xff]
    %v1097 = vld [vmem:[#allocation9 + $0x970] sm:$0xff]
    %v1098 = vld [vmem:[#allocation9 + $0x978] sm:$0xff]
    %v1099 = vld [vmem:[#allocation9 + $0x980] sm:$0xff]
    %v1100 = vld [vmem:[#allocation9 + $0x988] sm:$0xff]
    %v1101 = vld [vmem:[#allocation9 + $0x990] sm:$0xff]
    %v1102 = vld [vmem:[#allocation9 + $0x998] sm:$0xff]
    %v1103 = vld [vmem:[#allocation9 + $0x9a0] sm:$0xff]
    %v1104 = vld [vmem:[#allocation9 + $0x9a8] sm:$0xff]
    %v1105 = vld [vmem:[#allocation9 + $0x9b0] sm:$0xff]
    %v1106 = vld [vmem:[#allocation9 + $0x9b8] sm:$0xff]
    %v1107 = vld [vmem:[#allocation9 + $0x9c0] sm:$0xff]
    %v1108 = vld [vmem:[#allocation9 + $0x9c8] sm:$0xff]
    %v1109 = vld [vmem:[#allocation9 + $0x9d0] sm:$0xff]
    %v1110 = vld [vmem:[#allocation9 + $0x9d8] sm:$0xff]
    %v1111 = vld [vmem:[#allocation9 + $0x9e0] sm:$0xff]
    %v1112 = vld [vmem:[#allocation9 + $0x9e8] sm:$0xff]
    %v1113 = vld [vmem:[#allocation9 + $0x9f0] sm:$0xff]
    %v1114 = vld [vmem:[#allocation9 + $0x9f8] sm:$0xff]
    %v1115 = vld [vmem:[#allocation9 + $0xa00] sm:$0xff]
    %v1116 = vld [vmem:[#allocation9 + $0xa08] sm:$0xff]
    %v1117 = vld [vmem:[#allocation9 + $0xa10] sm:$0xff]
    %v1118 = vld [vmem:[#allocation9 + $0xa18] sm:$0xff]
    %v1119 = vld [vmem:[#allocation9 + $0xa20] sm:$0xff]
    %v1120 = vld [vmem:[#allocation9 + $0xa28] sm:$0xff]
    %v1121 = vld [vmem:[#allocation9 + $0xa30] sm:$0xff]
    %v1122 = vld [vmem:[#allocation9 + $0xa38] sm:$0xff]
    %v1123 = vld [vmem:[#allocation9 + $0xa40] sm:$0xff]
    %v1124 = vld [vmem:[#allocation9 + $0xa48] sm:$0xff]
    %v1125 = vld [vmem:[#allocation9 + $0xa50] sm:$0xff]
    %v1126 = vld [vmem:[#allocation9 + $0xa58] sm:$0xff]
    %v1127 = vld [vmem:[#allocation9 + $0xa60] sm:$0xff]
    %v1128 = vld [vmem:[#allocation9 + $0xa68] sm:$0xff]
    %v1129 = vld [vmem:[#allocation9 + $0xa70] sm:$0xff]
    %v1130 = vld [vmem:[#allocation9 + $0xa78] sm:$0xff]
    %v1131 = vld [vmem:[#allocation9 + $0xa80] sm:$0xff]
    %v1132 = vld [vmem:[#allocation9 + $0xa88] sm:$0xff]
    %v1133 = vld [vmem:[#allocation9 + $0xa90] sm:$0xff]
    %v1134 = vld [vmem:[#allocation9 + $0xa98] sm:$0xff]
    %v1135 = vld [vmem:[#allocation9 + $0xaa0] sm:$0xff]
    %v1136 = vld [vmem:[#allocation9 + $0xaa8] sm:$0xff]
    %v1137 = vld [vmem:[#allocation9 + $0xab0] sm:$0xff]
    %v1138 = vld [vmem:[#allocation9 + $0xab8] sm:$0xff]
    %v1139 = vld [vmem:[#allocation9 + $0xac0] sm:$0xff]
    %v1140 = vld [vmem:[#allocation9 + $0xac8] sm:$0xff]
    %v1141 = vld [vmem:[#allocation9 + $0xad0] sm:$0xff]
    %v1142 = vld [vmem:[#allocation9 + $0xad8] sm:$0xff]
    %v1143 = vld [vmem:[#allocation9 + $0xae0] sm:$0xff]
    %v1144 = vld [vmem:[#allocation9 + $0xae8] sm:$0xff]
    %v1145 = vld [vmem:[#allocation9 + $0xaf0] sm:$0xff]
    %v1146 = vld [vmem:[#allocation9 + $0xaf8] sm:$0xff]
    %v1147 = vld [vmem:[#allocation9 + $0xb00] sm:$0xff]
    %v1148 = vld [vmem:[#allocation9 + $0xb08] sm:$0xff]
    %v1149 = vld [vmem:[#allocation9 + $0xb10] sm:$0xff]
    %v1150 = vld [vmem:[#allocation9 + $0xb18] sm:$0xff]
    %v1151 = vld [vmem:[#allocation9 + $0xb20] sm:$0xff]
    %v1152 = vld [vmem:[#allocation9 + $0xb28] sm:$0xff]
    %v1153 = vld [vmem:[#allocation9 + $0xb30] sm:$0xff]
    %v1154 = vld [vmem:[#allocation9 + $0xb38] sm:$0xff]
    %v1155 = vld [vmem:[#allocation9 + $0xb40] sm:$0xff]
    %v1156 = vld [vmem:[#allocation9 + $0xb48] sm:$0xff]
    %v1157 = vld [vmem:[#allocation9 + $0xb50] sm:$0xff]
    %v1158 = vld [vmem:[#allocation9 + $0xb58] sm:$0xff]
    %v1159 = vld [vmem:[#allocation9 + $0xb60] sm:$0xff]
    %v1160 = vld [vmem:[#allocation9 + $0xb68] sm:$0xff]
    %v1161 = vld [vmem:[#allocation9 + $0xb70] sm:$0xff]
    %v1162 = vld [vmem:[#allocation9 + $0xb78] sm:$0xff]
    %v1163 = vld [vmem:[#allocation9 + $0xb80] sm:$0xff]
    %v1164 = vld [vmem:[#allocation9 + $0xb88] sm:$0xff]
    %v1165 = vld [vmem:[#allocation9 + $0xb90] sm:$0xff]
    %v1166 = vld [vmem:[#allocation9 + $0xb98] sm:$0xff]
    %v1167 = vld [vmem:[#allocation9 + $0xba0] sm:$0xff]
    %v1168 = vld [vmem:[#allocation9 + $0xba8] sm:$0xff]
    %v1169 = vld [vmem:[#allocation9 + $0xbb0] sm:$0xff]
    %v1170 = vld [vmem:[#allocation9 + $0xbb8] sm:$0xff]
    %v1171 = vld [vmem:[#allocation9 + $0xbc0] sm:$0xff]
    %v1172 = vld [vmem:[#allocation9 + $0xbc8] sm:$0xff]
    %v1173 = vld [vmem:[#allocation9 + $0xbd0] sm:$0xff]
    %v1174 = vld [vmem:[#allocation9 + $0xbd8] sm:$0xff]
    %v1175 = vld [vmem:[#allocation9 + $0xbe0] sm:$0xff]
    %v1176 = vld [vmem:[#allocation9 + $0xbe8] sm:$0xff]
    %v1177 = vld [vmem:[#allocation9 + $0xbf0] sm:$0xff]
    %v1178 = vld [vmem:[#allocation9 + $0xbf8] sm:$0xff]
    %1179 = vmatprep.subr.mxu0 %v796
    %1180 = vmatpush1.msra.mxu0 %v795
    %1181 = vmatprep.subr.mxu0 %v808
    %1182 = vmatpush1.msra.mxu0 %v807
    %1183 = vmatprep.subr.mxu0 %v820
    %1184 = vmatpush1.msra.mxu0 %v819
    %1185 = vmatprep.subr.mxu0 %v832
    %1186 = vmatpush1.msra.mxu0 %v831
    %1187 = vmatprep.subr.mxu0 %v844
    %1188 = vmatpush1.msra.mxu0 %v843
    %1189 = vmatprep.subr.mxu0 %v856
    %1190 = vmatpush1.msra.mxu0 %v855
    %1191 = vmatprep.subr.mxu0 %v868
    %1192 = vmatpush1.msra.mxu0 %v867
    %1193 = vmatprep.subr.mxu0 %v880
    %1194 = vmatpush1.msra.mxu0 %v879
    %1195 = vmatprep.subr.mxu0 %v892
    %1196 = vmatpush1.msra.mxu0 %v891
    %1197 = vmatprep.subr.mxu0 %v904
    %1198 = vmatpush1.msra.mxu0 %v903
    %1199 = vmatprep.subr.mxu0 %v916
    %1200 = vmatpush1.msra.mxu0 %v915
    %1201 = vmatprep.subr.mxu0 %v928
    %1202 = vmatpush1.msra.mxu0 %v927
    %1203 = vmatprep.subr.mxu0 %v940
    %1204 = vmatpush1.msra.mxu0 %v939
    %1205 = vmatprep.subr.mxu0 %v952
    %1206 = vmatpush1.msra.mxu0 %v951
    %1207 = vmatprep.subr.mxu0 %v964
    %1208 = vmatpush1.msra.mxu0 %v963
    %1209 = vmatprep.subr.mxu0 %v976
    %1210 = vmatpush1.msra.mxu0 %v975
    %1211 = vmatprep.subr.mxu0 %v988
    %1212 = vmatpush1.msra.mxu0 %v987
    %1213 = vmatprep.subr.mxu0 %v1000
    %1214 = vmatpush1.msra.mxu0 %v999
    %1215 = vmatprep.subr.mxu0 %v1012
    %1216 = vmatpush1.msra.mxu0 %v1011
    %1217 = vmatprep.subr.mxu0 %v1024
    %1218 = vmatpush1.msra.mxu0 %v1023
    %1219 = vmatprep.subr.mxu0 %v1036
    %1220 = vmatpush1.msra.mxu0 %v1035
    %1221 = vmatprep.subr.mxu0 %v1048
    %1222 = vmatpush1.msra.mxu0 %v1047
    %1223 = vmatprep.subr.mxu0 %v1060
    %1224 = vmatpush1.msra.mxu0 %v1059
    %1225 = vmatprep.subr.mxu0 %v1072
    %1226 = vmatpush1.msra.mxu0 %v1071
    %1227 = vmatprep.subr.mxu0 %v1084
    %1228 = vmatpush1.msra.mxu0 %v1083
    %1229 = vmatprep.subr.mxu0 %v1096
    %1230 = vmatpush1.msra.mxu0 %v1095
    %1231 = vmatprep.subr.mxu0 %v1108
    %1232 = vmatpush1.msra.mxu0 %v1107
    %1233 = vmatprep.subr.mxu0 %v1120
    %1234 = vmatpush1.msra.mxu0 %v1119
    %1235 = vmatprep.subr.mxu0 %v1132
    %1236 = vmatpush1.msra.mxu0 %v1131
    %1237 = vmatprep.subr.mxu0 %v1144
    %1238 = vmatpush1.msra.mxu0 %v1143
    %1239 = vmatprep.subr.mxu0 %v1156
    %1240 = vmatpush1.msra.mxu0 %v1155
    %1241 = vmatprep.subr.mxu0 %v1168
    %1242 = vmatpush1.msra.mxu0 %v1167
    %1243 = vmatprep.mubr.f32.mxu0 %v794
    %1244 = vmatmul.mubr.f32.gmra.mrb[0].mxu0 %v793
    %v1245 = vpop.f32.mrb[0].mxu0
    %v1246 = vadd.f32 0.0, %v1245
    %v1247 = vpop.f32.mrb[0].mxu0
    %v1248 = vadd.f32 0.0, %v1247
    %1249 = vdwg.mxu0
    %1250 = vmatprep.subr.mxu0 %v798
    %1251 = vmatpush1.msra.mxu0 %v797
    %1252 = vmatprep.subr.mxu0 %v810
    %1253 = vmatpush1.msra.mxu0 %v809
    %1254 = vmatprep.subr.mxu0 %v822
    %1255 = vmatpush1.msra.mxu0 %v821
    %1256 = vmatprep.subr.mxu0 %v834
    %1257 = vmatpush1.msra.mxu0 %v833
    %1258 = vmatprep.subr.mxu0 %v846
    %1259 = vmatpush1.msra.mxu0 %v845
    %1260 = vmatprep.subr.mxu0 %v858
    %1261 = vmatpush1.msra.mxu0 %v857
    %1262 = vmatprep.subr.mxu0 %v870
    %1263 = vmatpush1.msra.mxu0 %v869
    %1264 = vmatprep.subr.mxu0 %v882
    %1265 = vmatpush1.msra.mxu0 %v881
    %1266 = vmatprep.subr.mxu0 %v894
    %1267 = vmatpush1.msra.mxu0 %v893
    %1268 = vmatprep.subr.mxu0 %v906
    %1269 = vmatpush1.msra.mxu0 %v905
    %1270 = vmatprep.subr.mxu0 %v918
    %1271 = vmatpush1.msra.mxu0 %v917
    %1272 = vmatprep.subr.mxu0 %v930
    %1273 = vmatpush1.msra.mxu0 %v929
    %1274 = vmatprep.subr.mxu0 %v942
    %1275 = vmatpush1.msra.mxu0 %v941
    %1276 = vmatprep.subr.mxu0 %v954
    %1277 = vmatpush1.msra.mxu0 %v953
    %1278 = vmatprep.subr.mxu0 %v966
    %1279 = vmatpush1.msra.mxu0 %v965
    %1280 = vmatprep.subr.mxu0 %v978
    %1281 = vmatpush1.msra.mxu0 %v977
    %1282 = vmatprep.subr.mxu0 %v990
    %1283 = vmatpush1.msra.mxu0 %v989
    %1284 = vmatprep.subr.mxu0 %v1002
    %1285 = vmatpush1.msra.mxu0 %v1001
    %1286 = vmatprep.subr.mxu0 %v1014
    %1287 = vmatpush1.msra.mxu0 %v1013
    %1288 = vmatprep.subr.mxu0 %v1026
    %1289 = vmatpush1.msra.mxu0 %v1025
    %1290 = vmatprep.subr.mxu0 %v1038
    %1291 = vmatpush1.msra.mxu0 %v1037
    %1292 = vmatprep.subr.mxu0 %v1050
    %1293 = vmatpush1.msra.mxu0 %v1049
    %1294 = vmatprep.subr.mxu0 %v1062
    %1295 = vmatpush1.msra.mxu0 %v1061
    %1296 = vmatprep.subr.mxu0 %v1074
    %1297 = vmatpush1.msra.mxu0 %v1073
    %1298 = vmatprep.subr.mxu0 %v1086
    %1299 = vmatpush1.msra.mxu0 %v1085
    %1300 = vmatprep.subr.mxu0 %v1098
    %1301 = vmatpush1.msra.mxu0 %v1097
    %1302 = vmatprep.subr.mxu0 %v1110
    %1303 = vmatpush1.msra.mxu0 %v1109
    %1304 = vmatprep.subr.mxu0 %v1122
    %1305 = vmatpush1.msra.mxu0 %v1121
    %1306 = vmatprep.subr.mxu0 %v1134
    %1307 = vmatpush1.msra.mxu0 %v1133
    %1308 = vmatprep.subr.mxu0 %v1146
    %1309 = vmatpush1.msra.mxu0 %v1145
    %1310 = vmatprep.subr.mxu0 %v1158
    %1311 = vmatpush1.msra.mxu0 %v1157
    %1312 = vmatprep.subr.mxu0 %v1170
    %1313 = vmatpush1.msra.mxu0 %v1169
    %1314 = vmatprep.mubr.f32.mxu0 %v794
    %1315 = vmatmul.mubr.f32.gmra.mrb[0].mxu0 %v793
    %v1316 = vpop.f32.mrb[0].mxu0
    %v1317 = vadd.f32 0.0, %v1316
    %v1318 = vpop.f32.mrb[0].mxu0
    %v1319 = vadd.f32 0.0, %v1318
    %1320 = vdwg.mxu0
    %1321 = vmatprep.subr.mxu0 %v800
    %1322 = vmatpush1.msra.mxu0 %v799
    %1323 = vmatprep.subr.mxu0 %v812
    %1324 = vmatpush1.msra.mxu0 %v811
    %1325 = vmatprep.subr.mxu0 %v824
    %1326 = vmatpush1.msra.mxu0 %v823
    %1327 = vmatprep.subr.mxu0 %v836
    %1328 = vmatpush1.msra.mxu0 %v835
    %1329 = vmatprep.subr.mxu0 %v848
    %1330 = vmatpush1.msra.mxu0 %v847
    %1331 = vmatprep.subr.mxu0 %v860
    %1332 = vmatpush1.msra.mxu0 %v859
    %1333 = vmatprep.subr.mxu0 %v872
    %1334 = vmatpush1.msra.mxu0 %v871
    %1335 = vmatprep.subr.mxu0 %v884
    %1336 = vmatpush1.msra.mxu0 %v883
    %1337 = vmatprep.subr.mxu0 %v896
    %1338 = vmatpush1.msra.mxu0 %v895
    %1339 = vmatprep.subr.mxu0 %v908
    %1340 = vmatpush1.msra.mxu0 %v907
    %1341 = vmatprep.subr.mxu0 %v920
    %1342 = vmatpush1.msra.mxu0 %v919
    %1343 = vmatprep.subr.mxu0 %v932
    %1344 = vmatpush1.msra.mxu0 %v931
    %1345 = vmatprep.subr.mxu0 %v944
    %1346 = vmatpush1.msra.mxu0 %v943
    %1347 = vmatprep.subr.mxu0 %v956
    %1348 = vmatpush1.msra.mxu0 %v955
    %1349 = vmatprep.subr.mxu0 %v968
    %1350 = vmatpush1.msra.mxu0 %v967
    %1351 = vmatprep.subr.mxu0 %v980
    %1352 = vmatpush1.msra.mxu0 %v979
    %1353 = vmatprep.subr.mxu0 %v992
    %1354 = vmatpush1.msra.mxu0 %v991
    %1355 = vmatprep.subr.mxu0 %v1004
    %1356 = vmatpush1.msra.mxu0 %v1003
    %1357 = vmatprep.subr.mxu0 %v1016
    %1358 = vmatpush1.msra.mxu0 %v1015
    %1359 = vmatprep.subr.mxu0 %v1028
    %1360 = vmatpush1.msra.mxu0 %v1027
    %1361 = vmatprep.subr.mxu0 %v1040
    %1362 = vmatpush1.msra.mxu0 %v1039
    %1363 = vmatprep.subr.mxu0 %v1052
    %1364 = vmatpush1.msra.mxu0 %v1051
    %1365 = vmatprep.subr.mxu0 %v1064
    %1366 = vmatpush1.msra.mxu0 %v1063
    %1367 = vmatprep.subr.mxu0 %v1076
    %1368 = vmatpush1.msra.mxu0 %v1075
    %1369 = vmatprep.subr.mxu0 %v1088
    %1370 = vmatpush1.msra.mxu0 %v1087
    %1371 = vmatprep.subr.mxu0 %v1100
    %1372 = vmatpush1.msra.mxu0 %v1099
    %1373 = vmatprep.subr.mxu0 %v1112
    %1374 = vmatpush1.msra.mxu0 %v1111
    %1375 = vmatprep.subr.mxu0 %v1124
    %1376 = vmatpush1.msra.mxu0 %v1123
    %1377 = vmatprep.subr.mxu0 %v1136
    %1378 = vmatpush1.msra.mxu0 %v1135
    %1379 = vmatprep.subr.mxu0 %v1148
    %1380 = vmatpush1.msra.mxu0 %v1147
    %1381 = vmatprep.subr.mxu0 %v1160
    %1382 = vmatpush1.msra.mxu0 %v1159
    %1383 = vmatprep.subr.mxu0 %v1172
    %1384 = vmatpush1.msra.mxu0 %v1171
    %1385 = vmatprep.mubr.f32.mxu0 %v794
    %1386 = vmatmul.mubr.f32.gmra.mrb[0].mxu0 %v793
    %v1387 = vpop.f32.mrb[0].mxu0
    %v1388 = vadd.f32 0.0, %v1387
    %v1389 = vpop.f32.mrb[0].mxu0
    %v1390 = vadd.f32 0.0, %v1389
    %1391 = vdwg.mxu0
    %1392 = vmatprep.subr.mxu0 %v802
    %1393 = vmatpush1.msra.mxu0 %v801
    %1394 = vmatprep.subr.mxu0 %v814
    %1395 = vmatpush1.msra.mxu0 %v813
    %1396 = vmatprep.subr.mxu0 %v826
    %1397 = vmatpush1.msra.mxu0 %v825
    %1398 = vmatprep.subr.mxu0 %v838
    %1399 = vmatpush1.msra.mxu0 %v837
    %1400 = vmatprep.subr.mxu0 %v850
    %1401 = vmatpush1.msra.mxu0 %v849
    %1402 = vmatprep.subr.mxu0 %v862
    %1403 = vmatpush1.msra.mxu0 %v861
    %1404 = vmatprep.subr.mxu0 %v874
    %1405 = vmatpush1.msra.mxu0 %v873
    %1406 = vmatprep.subr.mxu0 %v886
    %1407 = vmatpush1.msra.mxu0 %v885
    %1408 = vmatprep.subr.mxu0 %v898
    %1409 = vmatpush1.msra.mxu0 %v897
    %1410 = vmatprep.subr.mxu0 %v910
    %1411 = vmatpush1.msra.mxu0 %v909
    %1412 = vmatprep.subr.mxu0 %v922
    %1413 = vmatpush1.msra.mxu0 %v921
    %1414 = vmatprep.subr.mxu0 %v934
    %1415 = vmatpush1.msra.mxu0 %v933
    %1416 = vmatprep.subr.mxu0 %v946
    %1417 = vmatpush1.msra.mxu0 %v945
    %1418 = vmatprep.subr.mxu0 %v958
    %1419 = vmatpush1.msra.mxu0 %v957
    %1420 = vmatprep.subr.mxu0 %v970
    %1421 = vmatpush1.msra.mxu0 %v969
    %1422 = vmatprep.subr.mxu0 %v982
    %1423 = vmatpush1.msra.mxu0 %v981
    %1424 = vmatprep.subr.mxu0 %v994
    %1425 = vmatpush1.msra.mxu0 %v993
    %1426 = vmatprep.subr.mxu0 %v1006
    %1427 = vmatpush1.msra.mxu0 %v1005
    %1428 = vmatprep.subr.mxu0 %v1018
    %1429 = vmatpush1.msra.mxu0 %v1017
    %1430 = vmatprep.subr.mxu0 %v1030
    %1431 = vmatpush1.msra.mxu0 %v1029
    %1432 = vmatprep.subr.mxu0 %v1042
    %1433 = vmatpush1.msra.mxu0 %v1041
    %1434 = vmatprep.subr.mxu0 %v1054
    %1435 = vmatpush1.msra.mxu0 %v1053
    %1436 = vmatprep.subr.mxu0 %v1066
    %1437 = vmatpush1.msra.mxu0 %v1065
    %1438 = vmatprep.subr.mxu0 %v1078
    %1439 = vmatpush1.msra.mxu0 %v1077
    %1440 = vmatprep.subr.mxu0 %v1090
    %1441 = vmatpush1.msra.mxu0 %v1089
    %1442 = vmatprep.subr.mxu0 %v1102
    %1443 = vmatpush1.msra.mxu0 %v1101
    %1444 = vmatprep.subr.mxu0 %v1114
    %1445 = vmatpush1.msra.mxu0 %v1113
    %1446 = vmatprep.subr.mxu0 %v1126
    %1447 = vmatpush1.msra.mxu0 %v1125
    %1448 = vmatprep.subr.mxu0 %v1138
    %1449 = vmatpush1.msra.mxu0 %v1137
    %1450 = vmatprep.subr.mxu0 %v1150
    %1451 = vmatpush1.msra.mxu0 %v1149
    %1452 = vmatprep.subr.mxu0 %v1162
    %1453 = vmatpush1.msra.mxu0 %v1161
    %1454 = vmatprep.subr.mxu0 %v1174
    %1455 = vmatpush1.msra.mxu0 %v1173
    %1456 = vmatprep.mubr.f32.mxu0 %v794
    %1457 = vmatmul.mubr.f32.gmra.mrb[0].mxu0 %v793
    %v1458 = vpop.f32.mrb[0].mxu0
    %v1459 = vadd.f32 0.0, %v1458
    %v1460 = vpop.f32.mrb[0].mxu0
    %v1461 = vadd.f32 0.0, %v1460
    %1462 = vdwg.mxu0
    %1463 = vmatprep.subr.mxu0 %v804
    %1464 = vmatpush1.msra.mxu0 %v803
    %1465 = vmatprep.subr.mxu0 %v816
    %1466 = vmatpush1.msra.mxu0 %v815
    %1467 = vmatprep.subr.mxu0 %v828
    %1468 = vmatpush1.msra.mxu0 %v827
    %1469 = vmatprep.subr.mxu0 %v840
    %1470 = vmatpush1.msra.mxu0 %v839
    %1471 = vmatprep.subr.mxu0 %v852
    %1472 = vmatpush1.msra.mxu0 %v851
    %1473 = vmatprep.subr.mxu0 %v864
    %1474 = vmatpush1.msra.mxu0 %v863
    %1475 = vmatprep.subr.mxu0 %v876
    %1476 = vmatpush1.msra.mxu0 %v875
    %1477 = vmatprep.subr.mxu0 %v888
    %1478 = vmatpush1.msra.mxu0 %v887
    %1479 = vmatprep.subr.mxu0 %v900
    %1480 = vmatpush1.msra.mxu0 %v899
    %1481 = vmatprep.subr.mxu0 %v912
    %1482 = vmatpush1.msra.mxu0 %v911
    %1483 = vmatprep.subr.mxu0 %v924
    %1484 = vmatpush1.msra.mxu0 %v923
    %1485 = vmatprep.subr.mxu0 %v936
    %1486 = vmatpush1.msra.mxu0 %v935
    %1487 = vmatprep.subr.mxu0 %v948
    %1488 = vmatpush1.msra.mxu0 %v947
    %1489 = vmatprep.subr.mxu0 %v960
    %1490 = vmatpush1.msra.mxu0 %v959
    %1491 = vmatprep.subr.mxu0 %v972
    %1492 = vmatpush1.msra.mxu0 %v971
    %1493 = vmatprep.subr.mxu0 %v984
    %1494 = vmatpush1.msra.mxu0 %v983
    %1495 = vmatprep.subr.mxu0 %v996
    %1496 = vmatpush1.msra.mxu0 %v995
    %1497 = vmatprep.subr.mxu0 %v1008
    %1498 = vmatpush1.msra.mxu0 %v1007
    %1499 = vmatprep.subr.mxu0 %v1020
    %1500 = vmatpush1.msra.mxu0 %v1019
    %1501 = vmatprep.subr.mxu0 %v1032
    %1502 = vmatpush1.msra.mxu0 %v1031
    %1503 = vmatprep.subr.mxu0 %v1044
    %1504 = vmatpush1.msra.mxu0 %v1043
    %1505 = vmatprep.subr.mxu0 %v1056
    %1506 = vmatpush1.msra.mxu0 %v1055
    %1507 = vmatprep.subr.mxu0 %v1068
    %1508 = vmatpush1.msra.mxu0 %v1067
    %1509 = vmatprep.subr.mxu0 %v1080
    %1510 = vmatpush1.msra.mxu0 %v1079
    %1511 = vmatprep.subr.mxu0 %v1092
    %1512 = vmatpush1.msra.mxu0 %v1091
    %1513 = vmatprep.subr.mxu0 %v1104
    %1514 = vmatpush1.msra.mxu0 %v1103
    %1515 = vmatprep.subr.mxu0 %v1116
    %1516 = vmatpush1.msra.mxu0 %v1115
    %1517 = vmatprep.subr.mxu0 %v1128
    %1518 = vmatpush1.msra.mxu0 %v1127
    %1519 = vmatprep.subr.mxu0 %v1140
    %1520 = vmatpush1.msra.mxu0 %v1139
    %1521 = vmatprep.subr.mxu0 %v1152
    %1522 = vmatpush1.msra.mxu0 %v1151
    %1523 = vmatprep.subr.mxu0 %v1164
    %1524 = vmatpush1.msra.mxu0 %v1163
    %1525 = vmatprep.subr.mxu0 %v1176
    %1526 = vmatpush1.msra.mxu0 %v1175
    %1527 = vmatprep.mubr.f32.mxu0 %v794
    %1528 = vmatmul.mubr.f32.gmra.mrb[0].mxu0 %v793
    %v1529 = vpop.f32.mrb[0].mxu0
    %v1530 = vadd.f32 0.0, %v1529
    %v1531 = vpop.f32.mrb[0].mxu0
    %v1532 = vadd.f32 0.0, %v1531
    %1533 = vdwg.mxu0
    %1534 = vmatprep.subr.mxu0 %v806
    %1535 = vmatpush1.msra.mxu0 %v805
    %1536 = vmatprep.subr.mxu0 %v818
    %1537 = vmatpush1.msra.mxu0 %v817
    %1538 = vmatprep.subr.mxu0 %v830
    %1539 = vmatpush1.msra.mxu0 %v829
    %1540 = vmatprep.subr.mxu0 %v842
    %1541 = vmatpush1.msra.mxu0 %v841
    %1542 = vmatprep.subr.mxu0 %v854
    %1543 = vmatpush1.msra.mxu0 %v853
    %1544 = vmatprep.subr.mxu0 %v866
    %1545 = vmatpush1.msra.mxu0 %v865
    %1546 = vmatprep.subr.mxu0 %v878
    %1547 = vmatpush1.msra.mxu0 %v877
    %1548 = vmatprep.subr.mxu0 %v890
    %1549 = vmatpush1.msra.mxu0 %v889
    %1550 = vmatprep.subr.mxu0 %v902
    %1551 = vmatpush1.msra.mxu0 %v901
    %1552 = vmatprep.subr.mxu0 %v914
    %1553 = vmatpush1.msra.mxu0 %v913
    %1554 = vmatprep.subr.mxu0 %v926
    %1555 = vmatpush1.msra.mxu0 %v925
    %1556 = vmatprep.subr.mxu0 %v938
    %1557 = vmatpush1.msra.mxu0 %v937
    %1558 = vmatprep.subr.mxu0 %v950
    %1559 = vmatpush1.msra.mxu0 %v949
    %1560 = vmatprep.subr.mxu0 %v962
    %1561 = vmatpush1.msra.mxu0 %v961
    %1562 = vmatprep.subr.mxu0 %v974
    %1563 = vmatpush1.msra.mxu0 %v973
    %1564 = vmatprep.subr.mxu0 %v986
    %1565 = vmatpush1.msra.mxu0 %v985
    %1566 = vmatprep.subr.mxu0 %v998
    %1567 = vmatpush1.msra.mxu0 %v997
    %1568 = vmatprep.subr.mxu0 %v1010
    %1569 = vmatpush1.msra.mxu0 %v1009
    %1570 = vmatprep.subr.mxu0 %v1022
    %1571 = vmatpush1.msra.mxu0 %v1021
    %1572 = vmatprep.subr.mxu0 %v1034
    %1573 = vmatpush1.msra.mxu0 %v1033
    %1574 = vmatprep.subr.mxu0 %v1046
    %1575 = vmatpush1.msra.mxu0 %v1045
    %1576 = vmatprep.subr.mxu0 %v1058
    %1577 = vmatpush1.msra.mxu0 %v1057
    %1578 = vmatprep.subr.mxu0 %v1070
    %1579 = vmatpush1.msra.mxu0 %v1069
    %1580 = vmatprep.subr.mxu0 %v1082
    %1581 = vmatpush1.msra.mxu0 %v1081
    %1582 = vmatprep.subr.mxu0 %v1094
    %1583 = vmatpush1.msra.mxu0 %v1093
    %1584 = vmatprep.subr.mxu0 %v1106
    %1585 = vmatpush1.msra.mxu0 %v1105
    %1586 = vmatprep.subr.mxu0 %v1118
    %1587 = vmatpush1.msra.mxu0 %v1117
    %1588 = vmatprep.subr.mxu0 %v1130
    %1589 = vmatpush1.msra.mxu0 %v1129
    %1590 = vmatprep.subr.mxu0 %v1142
    %1591 = vmatpush1.msra.mxu0 %v1141
    %1592 = vmatprep.subr.mxu0 %v1154
    %1593 = vmatpush1.msra.mxu0 %v1153
    %1594 = vmatprep.subr.mxu0 %v1166
    %1595 = vmatpush1.msra.mxu0 %v1165
    %1596 = vmatprep.subr.mxu0 %v1178
    %1597 = vmatpush1.msra.mxu0 %v1177
    %1598 = vmatprep.mubr.f32.mxu0 %v794
    %1599 = vmatmul.mubr.f32.gmra.mrb[0].mxu0 %v793
    %v1600 = vpop.f32.mrb[0].mxu0
    %v1601 = vadd.f32 0.0, %v1600
    %v1602 = vpop.f32.mrb[0].mxu0
    %v1603 = vadd.f32 0.0, %v1602
    %1604 = vdwg.mxu0
    %v1605 = vadd.f32 %v1459, %v718
    %v1606 = vadd.f32 %v1461, %v722
    %v1607 = vadd.f32 %v1530, %v726
    %v1608 = vadd.f32 %v1532, %v730
    %v1609 = vadd.f32 %v1601, %v734
    %v1610 = vadd.f32 %v1603, %v738
    %v1611 = vld [vmem:[#allocation14] sm:$0xff]
    %v1612 = vld [vmem:[#allocation14 + $0x8] sm:$0xff]
    %v1613 = vld [vmem:[#allocation14 + $0x10] sm:$0xff]
    %v1614 = vld [vmem:[#allocation14 + $0x18] sm:$0xff]
    %v1615 = vld [vmem:[#allocation14 + $0x20] sm:$0xff]
    %v1616 = vld [vmem:[#allocation14 + $0x28] sm:$0xff]
    %v1617 = vld [vmem:[#allocation14 + $0x30] sm:$0xff]
    %v1618 = vld [vmem:[#allocation14 + $0x38] sm:$0xff]
    %v1619 = vld [vmem:[#allocation14 + $0x40] sm:$0xff]
    %v1620 = vld [vmem:[#allocation14 + $0x48] sm:$0xff]
    %v1621 = vld [vmem:[#allocation14 + $0x50] sm:$0xff]
    %v1622 = vld [vmem:[#allocation14 + $0x58] sm:$0xff]
    %v1623 = vld [vmem:[#allocation14 + $0x60] sm:$0xff]
    %v1624 = vld [vmem:[#allocation14 + $0x68] sm:$0xff]
    %v1625 = vld [vmem:[#allocation14 + $0x70] sm:$0xff]
    %v1626 = vld [vmem:[#allocation14 + $0x78] sm:$0xff]
    %v1627 = vld [vmem:[#allocation14 + $0x80] sm:$0xff]
    %v1628 = vld [vmem:[#allocation14 + $0x88] sm:$0xff]
    %v1629 = vld [vmem:[#allocation14 + $0x90] sm:$0xff]
    %v1630 = vld [vmem:[#allocation14 + $0x98] sm:$0xff]
    %v1631 = vld [vmem:[#allocation14 + $0xa0] sm:$0xff]
    %v1632 = vld [vmem:[#allocation14 + $0xa8] sm:$0xff]
    %v1633 = vld [vmem:[#allocation14 + $0xb0] sm:$0xff]
    %v1634 = vld [vmem:[#allocation14 + $0xb8] sm:$0xff]
    %v1635 = vld [vmem:[#allocation14 + $0xc0] sm:$0xff]
    %v1636 = vld [vmem:[#allocation14 + $0xc8] sm:$0xff]
    %v1637 = vld [vmem:[#allocation14 + $0xd0] sm:$0xff]
    %v1638 = vld [vmem:[#allocation14 + $0xd8] sm:$0xff]
    %v1639 = vld [vmem:[#allocation14 + $0xe0] sm:$0xff]
    %v1640 = vld [vmem:[#allocation14 + $0xe8] sm:$0xff]
    %v1641 = vld [vmem:[#allocation14 + $0xf0] sm:$0xff]
    %v1642 = vld [vmem:[#allocation14 + $0xf8] sm:$0xff]
    %v1643 = vld [vmem:[#allocation14 + $0x100] sm:$0xff]
    %v1644 = vld [vmem:[#allocation14 + $0x108] sm:$0xff]
    %v1645 = vld [vmem:[#allocation14 + $0x110] sm:$0xff]
    %v1646 = vld [vmem:[#allocation14 + $0x118] sm:$0xff]
    %v1647 = vld [vmem:[#allocation14 + $0x120] sm:$0xff]
    %v1648 = vld [vmem:[#allocation14 + $0x128] sm:$0xff]
    %v1649 = vld [vmem:[#allocation14 + $0x130] sm:$0xff]
    %v1650 = vld [vmem:[#allocation14 + $0x138] sm:$0xff]
    %v1651 = vld [vmem:[#allocation14 + $0x140] sm:$0xff]
    %v1652 = vld [vmem:[#allocation14 + $0x148] sm:$0xff]
    %v1653 = vld [vmem:[#allocation14 + $0x150] sm:$0xff]
    %v1654 = vld [vmem:[#allocation14 + $0x158] sm:$0xff]
    %v1655 = vld [vmem:[#allocation14 + $0x160] sm:$0xff]
    %v1656 = vld [vmem:[#allocation14 + $0x168] sm:$0xff]
    %v1657 = vld [vmem:[#allocation14 + $0x170] sm:$0xff]
    %v1658 = vld [vmem:[#allocation14 + $0x178] sm:$0xff]
    %v1659 = vld [vmem:[#allocation14 + $0x180] sm:$0xff]
    %v1660 = vld [vmem:[#allocation14 + $0x188] sm:$0xff]
    %v1661 = vld [vmem:[#allocation14 + $0x190] sm:$0xff]
    %v1662 = vld [vmem:[#allocation14 + $0x198] sm:$0xff]
    %v1663 = vld [vmem:[#allocation14 + $0x1a0] sm:$0xff]
    %v1664 = vld [vmem:[#allocation14 + $0x1a8] sm:$0xff]
    %v1665 = vld [vmem:[#allocation14 + $0x1b0] sm:$0xff]
    %v1666 = vld [vmem:[#allocation14 + $0x1b8] sm:$0xff]
    %v1667 = vld [vmem:[#allocation14 + $0x1c0] sm:$0xff]
    %v1668 = vld [vmem:[#allocation14 + $0x1c8] sm:$0xff]
    %v1669 = vld [vmem:[#allocation14 + $0x1d0] sm:$0xff]
    %v1670 = vld [vmem:[#allocation14 + $0x1d8] sm:$0xff]
    %v1671 = vld [vmem:[#allocation14 + $0x1e0] sm:$0xff]
    %v1672 = vld [vmem:[#allocation14 + $0x1e8] sm:$0xff]
    %v1673 = vld [vmem:[#allocation14 + $0x1f0] sm:$0xff]
    %v1674 = vld [vmem:[#allocation14 + $0x1f8] sm:$0xff]
    %v1675 = vld [vmem:[#allocation14 + $0x200] sm:$0xff]
    %v1676 = vld [vmem:[#allocation14 + $0x208] sm:$0xff]
    %v1677 = vld [vmem:[#allocation14 + $0x210] sm:$0xff]
    %v1678 = vld [vmem:[#allocation14 + $0x218] sm:$0xff]
    %v1679 = vld [vmem:[#allocation14 + $0x220] sm:$0xff]
    %v1680 = vld [vmem:[#allocation14 + $0x228] sm:$0xff]
    %v1681 = vld [vmem:[#allocation14 + $0x230] sm:$0xff]
    %v1682 = vld [vmem:[#allocation14 + $0x238] sm:$0xff]
    %v1683 = vld [vmem:[#allocation14 + $0x240] sm:$0xff]
    %v1684 = vld [vmem:[#allocation14 + $0x248] sm:$0xff]
    %v1685 = vld [vmem:[#allocation14 + $0x250] sm:$0xff]
    %v1686 = vld [vmem:[#allocation14 + $0x258] sm:$0xff]
    %v1687 = vld [vmem:[#allocation14 + $0x260] sm:$0xff]
    %v1688 = vld [vmem:[#allocation14 + $0x268] sm:$0xff]
    %v1689 = vld [vmem:[#allocation14 + $0x270] sm:$0xff]
    %v1690 = vld [vmem:[#allocation14 + $0x278] sm:$0xff]
    %v1691 = vld [vmem:[#allocation14 + $0x280] sm:$0xff]
    %v1692 = vld [vmem:[#allocation14 + $0x288] sm:$0xff]
    %v1693 = vld [vmem:[#allocation14 + $0x290] sm:$0xff]
    %v1694 = vld [vmem:[#allocation14 + $0x298] sm:$0xff]
    %v1695 = vld [vmem:[#allocation14 + $0x2a0] sm:$0xff]
    %v1696 = vld [vmem:[#allocation14 + $0x2a8] sm:$0xff]
    %v1697 = vld [vmem:[#allocation14 + $0x2b0] sm:$0xff]
    %v1698 = vld [vmem:[#allocation14 + $0x2b8] sm:$0xff]
    %v1699 = vld [vmem:[#allocation14 + $0x2c0] sm:$0xff]
    %v1700 = vld [vmem:[#allocation14 + $0x2c8] sm:$0xff]
    %v1701 = vld [vmem:[#allocation14 + $0x2d0] sm:$0xff]
    %v1702 = vld [vmem:[#allocation14 + $0x2d8] sm:$0xff]
    %v1703 = vld [vmem:[#allocation14 + $0x2e0] sm:$0xff]
    %v1704 = vld [vmem:[#allocation14 + $0x2e8] sm:$0xff]
    %v1705 = vld [vmem:[#allocation14 + $0x2f0] sm:$0xff]
    %v1706 = vld [vmem:[#allocation14 + $0x2f8] sm:$0xff]
    %v1707 = vld [vmem:[#allocation14 + $0x300] sm:$0xff]
    %v1708 = vld [vmem:[#allocation14 + $0x308] sm:$0xff]
    %v1709 = vld [vmem:[#allocation14 + $0x310] sm:$0xff]
    %v1710 = vld [vmem:[#allocation14 + $0x318] sm:$0xff]
    %v1711 = vld [vmem:[#allocation14 + $0x320] sm:$0xff]
    %v1712 = vld [vmem:[#allocation14 + $0x328] sm:$0xff]
    %v1713 = vld [vmem:[#allocation14 + $0x330] sm:$0xff]
    %v1714 = vld [vmem:[#allocation14 + $0x338] sm:$0xff]
    %v1715 = vld [vmem:[#allocation14 + $0x340] sm:$0xff]
    %v1716 = vld [vmem:[#allocation14 + $0x348] sm:$0xff]
    %v1717 = vld [vmem:[#allocation14 + $0x350] sm:$0xff]
    %v1718 = vld [vmem:[#allocation14 + $0x358] sm:$0xff]
    %v1719 = vld [vmem:[#allocation14 + $0x360] sm:$0xff]
    %v1720 = vld [vmem:[#allocation14 + $0x368] sm:$0xff]
    %v1721 = vld [vmem:[#allocation14 + $0x370] sm:$0xff]
    %v1722 = vld [vmem:[#allocation14 + $0x378] sm:$0xff]
    %v1723 = vld [vmem:[#allocation14 + $0x380] sm:$0xff]
    %v1724 = vld [vmem:[#allocation14 + $0x388] sm:$0xff]
    %v1725 = vld [vmem:[#allocation14 + $0x390] sm:$0xff]
    %v1726 = vld [vmem:[#allocation14 + $0x398] sm:$0xff]
    %v1727 = vld [vmem:[#allocation14 + $0x3a0] sm:$0xff]
    %v1728 = vld [vmem:[#allocation14 + $0x3a8] sm:$0xff]
    %v1729 = vld [vmem:[#allocation14 + $0x3b0] sm:$0xff]
    %v1730 = vld [vmem:[#allocation14 + $0x3b8] sm:$0xff]
    %v1731 = vld [vmem:[#allocation14 + $0x3c0] sm:$0xff]
    %v1732 = vld [vmem:[#allocation14 + $0x3c8] sm:$0xff]
    %v1733 = vld [vmem:[#allocation14 + $0x3d0] sm:$0xff]
    %v1734 = vld [vmem:[#allocation14 + $0x3d8] sm:$0xff]
    %v1735 = vld [vmem:[#allocation14 + $0x3e0] sm:$0xff]
    %v1736 = vld [vmem:[#allocation14 + $0x3e8] sm:$0xff]
    %v1737 = vld [vmem:[#allocation14 + $0x3f0] sm:$0xff]
    %v1738 = vld [vmem:[#allocation14 + $0x3f8] sm:$0xff]
    %v1739 = vld [vmem:[#allocation14 + $0x400] sm:$0xff]
    %v1740 = vld [vmem:[#allocation14 + $0x408] sm:$0xff]
    %v1741 = vld [vmem:[#allocation14 + $0x410] sm:$0xff]
    %v1742 = vld [vmem:[#allocation14 + $0x418] sm:$0xff]
    %v1743 = vld [vmem:[#allocation14 + $0x420] sm:$0xff]
    %v1744 = vld [vmem:[#allocation14 + $0x428] sm:$0xff]
    %v1745 = vld [vmem:[#allocation14 + $0x430] sm:$0xff]
    %v1746 = vld [vmem:[#allocation14 + $0x438] sm:$0xff]
    %v1747 = vld [vmem:[#allocation14 + $0x440] sm:$0xff]
    %v1748 = vld [vmem:[#allocation14 + $0x448] sm:$0xff]
    %v1749 = vld [vmem:[#allocation14 + $0x450] sm:$0xff]
    %v1750 = vld [vmem:[#allocation14 + $0x458] sm:$0xff]
    %v1751 = vld [vmem:[#allocation14 + $0x460] sm:$0xff]
    %v1752 = vld [vmem:[#allocation14 + $0x468] sm:$0xff]
    %v1753 = vld [vmem:[#allocation14 + $0x470] sm:$0xff]
    %v1754 = vld [vmem:[#allocation14 + $0x478] sm:$0xff]
    %v1755 = vld [vmem:[#allocation14 + $0x480] sm:$0xff]
    %v1756 = vld [vmem:[#allocation14 + $0x488] sm:$0xff]
    %v1757 = vld [vmem:[#allocation14 + $0x490] sm:$0xff]
    %v1758 = vld [vmem:[#allocation14 + $0x498] sm:$0xff]
    %v1759 = vld [vmem:[#allocation14 + $0x4a0] sm:$0xff]
    %v1760 = vld [vmem:[#allocation14 + $0x4a8] sm:$0xff]
    %v1761 = vld [vmem:[#allocation14 + $0x4b0] sm:$0xff]
    %v1762 = vld [vmem:[#allocation14 + $0x4b8] sm:$0xff]
    %v1763 = vld [vmem:[#allocation14 + $0x4c0] sm:$0xff]
    %v1764 = vld [vmem:[#allocation14 + $0x4c8] sm:$0xff]
    %v1765 = vld [vmem:[#allocation14 + $0x4d0] sm:$0xff]
    %v1766 = vld [vmem:[#allocation14 + $0x4d8] sm:$0xff]
    %v1767 = vld [vmem:[#allocation14 + $0x4e0] sm:$0xff]
    %v1768 = vld [vmem:[#allocation14 + $0x4e8] sm:$0xff]
    %v1769 = vld [vmem:[#allocation14 + $0x4f0] sm:$0xff]
    %v1770 = vld [vmem:[#allocation14 + $0x4f8] sm:$0xff]
    %v1771 = vld [vmem:[#allocation14 + $0x500] sm:$0xff]
    %v1772 = vld [vmem:[#allocation14 + $0x508] sm:$0xff]
    %v1773 = vld [vmem:[#allocation14 + $0x510] sm:$0xff]
    %v1774 = vld [vmem:[#allocation14 + $0x518] sm:$0xff]
    %v1775 = vld [vmem:[#allocation14 + $0x520] sm:$0xff]
    %v1776 = vld [vmem:[#allocation14 + $0x528] sm:$0xff]
    %v1777 = vld [vmem:[#allocation14 + $0x530] sm:$0xff]
    %v1778 = vld [vmem:[#allocation14 + $0x538] sm:$0xff]
    %v1779 = vld [vmem:[#allocation14 + $0x540] sm:$0xff]
    %v1780 = vld [vmem:[#allocation14 + $0x548] sm:$0xff]
    %v1781 = vld [vmem:[#allocation14 + $0x550] sm:$0xff]
    %v1782 = vld [vmem:[#allocation14 + $0x558] sm:$0xff]
    %v1783 = vld [vmem:[#allocation14 + $0x560] sm:$0xff]
    %v1784 = vld [vmem:[#allocation14 + $0x568] sm:$0xff]
    %v1785 = vld [vmem:[#allocation14 + $0x570] sm:$0xff]
    %v1786 = vld [vmem:[#allocation14 + $0x578] sm:$0xff]
    %v1787 = vld [vmem:[#allocation14 + $0x580] sm:$0xff]
    %v1788 = vld [vmem:[#allocation14 + $0x588] sm:$0xff]
    %v1789 = vld [vmem:[#allocation14 + $0x590] sm:$0xff]
    %v1790 = vld [vmem:[#allocation14 + $0x598] sm:$0xff]
    %v1791 = vld [vmem:[#allocation14 + $0x5a0] sm:$0xff]
    %v1792 = vld [vmem:[#allocation14 + $0x5a8] sm:$0xff]
    %v1793 = vld [vmem:[#allocation14 + $0x5b0] sm:$0xff]
    %v1794 = vld [vmem:[#allocation14 + $0x5b8] sm:$0xff]
    %v1795 = vld [vmem:[#allocation14 + $0x5c0] sm:$0xff]
    %v1796 = vld [vmem:[#allocation14 + $0x5c8] sm:$0xff]
    %v1797 = vld [vmem:[#allocation14 + $0x5d0] sm:$0xff]
    %v1798 = vld [vmem:[#allocation14 + $0x5d8] sm:$0xff]
    %v1799 = vld [vmem:[#allocation14 + $0x5e0] sm:$0xff]
    %v1800 = vld [vmem:[#allocation14 + $0x5e8] sm:$0xff]
    %v1801 = vld [vmem:[#allocation14 + $0x5f0] sm:$0xff]
    %v1802 = vld [vmem:[#allocation14 + $0x5f8] sm:$0xff]
    %1803 = vmatprep.subr.mxu0 %v1612
    %1804 = vmatpush1.msra.mxu0 %v1611
    %1805 = vmatprep.subr.mxu0 %v1618
    %1806 = vmatpush1.msra.mxu0 %v1617
    %1807 = vmatprep.subr.mxu0 %v1624
    %1808 = vmatpush1.msra.mxu0 %v1623
    %1809 = vmatprep.subr.mxu0 %v1630
    %1810 = vmatpush1.msra.mxu0 %v1629
    %1811 = vmatprep.subr.mxu0 %v1636
    %1812 = vmatpush1.msra.mxu0 %v1635
    %1813 = vmatprep.subr.mxu0 %v1642
    %1814 = vmatpush1.msra.mxu0 %v1641
    %1815 = vmatprep.subr.mxu0 %v1648
    %1816 = vmatpush1.msra.mxu0 %v1647
    %1817 = vmatprep.subr.mxu0 %v1654
    %1818 = vmatpush1.msra.mxu0 %v1653
    %1819 = vmatprep.subr.mxu0 %v1660
    %1820 = vmatpush1.msra.mxu0 %v1659
    %1821 = vmatprep.subr.mxu0 %v1666
    %1822 = vmatpush1.msra.mxu0 %v1665
    %1823 = vmatprep.subr.mxu0 %v1672
    %1824 = vmatpush1.msra.mxu0 %v1671
    %1825 = vmatprep.subr.mxu0 %v1678
    %1826 = vmatpush1.msra.mxu0 %v1677
    %1827 = vmatprep.subr.mxu0 %v1684
    %1828 = vmatpush1.msra.mxu0 %v1683
    %1829 = vmatprep.subr.mxu0 %v1690
    %1830 = vmatpush1.msra.mxu0 %v1689
    %1831 = vmatprep.subr.mxu0 %v1696
    %1832 = vmatpush1.msra.mxu0 %v1695
    %1833 = vmatprep.subr.mxu0 %v1702
    %1834 = vmatpush1.msra.mxu0 %v1701
    %1835 = vmatprep.subr.mxu0 %v1708
    %1836 = vmatpush1.msra.mxu0 %v1707
    %1837 = vmatprep.subr.mxu0 %v1714
    %1838 = vmatpush1.msra.mxu0 %v1713
    %1839 = vmatprep.subr.mxu0 %v1720
    %1840 = vmatpush1.msra.mxu0 %v1719
    %1841 = vmatprep.subr.mxu0 %v1726
    %1842 = vmatpush1.msra.mxu0 %v1725
    %1843 = vmatprep.subr.mxu0 %v1732
    %1844 = vmatpush1.msra.mxu0 %v1731
    %1845 = vmatprep.subr.mxu0 %v1738
    %1846 = vmatpush1.msra.mxu0 %v1737
    %1847 = vmatprep.subr.mxu0 %v1744
    %1848 = vmatpush1.msra.mxu0 %v1743
    %1849 = vmatprep.subr.mxu0 %v1750
    %1850 = vmatpush1.msra.mxu0 %v1749
    %1851 = vmatprep.subr.mxu0 %v1756
    %1852 = vmatpush1.msra.mxu0 %v1755
    %1853 = vmatprep.subr.mxu0 %v1762
    %1854 = vmatpush1.msra.mxu0 %v1761
    %1855 = vmatprep.subr.mxu0 %v1768
    %1856 = vmatpush1.msra.mxu0 %v1767
    %1857 = vmatprep.subr.mxu0 %v1774
    %1858 = vmatpush1.msra.mxu0 %v1773
    %1859 = vmatprep.subr.mxu0 %v1780
    %1860 = vmatpush1.msra.mxu0 %v1779
    %1861 = vmatprep.subr.mxu0 %v1786
    %1862 = vmatpush1.msra.mxu0 %v1785
    %1863 = vmatprep.subr.mxu0 %v1792
    %1864 = vmatpush1.msra.mxu0 %v1791
    %1865 = vmatprep.subr.mxu0 %v1798
    %1866 = vmatpush1.msra.mxu0 %v1797
    %1867 = vmatprep.mubr.f32.mxu0 0.0
    %1868 = vmatmul.mubr.f32.gmra.mrb[0].mxu0 0.0
    %v1869 = vpop.f32.mrb[0].mxu0
    %v1870 = vadd.f32 0.0, %v1869
    %v1871 = vpop.f32.mrb[0].mxu0
    %v1872 = vadd.f32 0.0, %v1871
    %1873 = vdwg.mxu0
    %1874 = vmatprep.subr.mxu0 %v1614
    %1875 = vmatpush1.msra.mxu0 %v1613
    %1876 = vmatprep.subr.mxu0 %v1620
    %1877 = vmatpush1.msra.mxu0 %v1619
    %1878 = vmatprep.subr.mxu0 %v1626
    %1879 = vmatpush1.msra.mxu0 %v1625
    %1880 = vmatprep.subr.mxu0 %v1632
    %1881 = vmatpush1.msra.mxu0 %v1631
    %1882 = vmatprep.subr.mxu0 %v1638
    %1883 = vmatpush1.msra.mxu0 %v1637
    %1884 = vmatprep.subr.mxu0 %v1644
    %1885 = vmatpush1.msra.mxu0 %v1643
    %1886 = vmatprep.subr.mxu0 %v1650
    %1887 = vmatpush1.msra.mxu0 %v1649
    %1888 = vmatprep.subr.mxu0 %v1656
    %1889 = vmatpush1.msra.mxu0 %v1655
    %1890 = vmatprep.subr.mxu0 %v1662
    %1891 = vmatpush1.msra.mxu0 %v1661
    %1892 = vmatprep.subr.mxu0 %v1668
    %1893 = vmatpush1.msra.mxu0 %v1667
    %1894 = vmatprep.subr.mxu0 %v1674
    %1895 = vmatpush1.msra.mxu0 %v1673
    %1896 = vmatprep.subr.mxu0 %v1680
    %1897 = vmatpush1.msra.mxu0 %v1679
    %1898 = vmatprep.subr.mxu0 %v1686
    %1899 = vmatpush1.msra.mxu0 %v1685
    %1900 = vmatprep.subr.mxu0 %v1692
    %1901 = vmatpush1.msra.mxu0 %v1691
    %1902 = vmatprep.subr.mxu0 %v1698
    %1903 = vmatpush1.msra.mxu0 %v1697
    %1904 = vmatprep.subr.mxu0 %v1704
    %1905 = vmatpush1.msra.mxu0 %v1703
    %1906 = vmatprep.subr.mxu0 %v1710
    %1907 = vmatpush1.msra.mxu0 %v1709
    %1908 = vmatprep.subr.mxu0 %v1716
    %1909 = vmatpush1.msra.mxu0 %v1715
    %1910 = vmatprep.subr.mxu0 %v1722
    %1911 = vmatpush1.msra.mxu0 %v1721
    %1912 = vmatprep.subr.mxu0 %v1728
    %1913 = vmatpush1.msra.mxu0 %v1727
    %1914 = vmatprep.subr.mxu0 %v1734
    %1915 = vmatpush1.msra.mxu0 %v1733
    %1916 = vmatprep.subr.mxu0 %v1740
    %1917 = vmatpush1.msra.mxu0 %v1739
    %1918 = vmatprep.subr.mxu0 %v1746
    %1919 = vmatpush1.msra.mxu0 %v1745
    %1920 = vmatprep.subr.mxu0 %v1752
    %1921 = vmatpush1.msra.mxu0 %v1751
    %1922 = vmatprep.subr.mxu0 %v1758
    %1923 = vmatpush1.msra.mxu0 %v1757
    %1924 = vmatprep.subr.mxu0 %v1764
    %1925 = vmatpush1.msra.mxu0 %v1763
    %1926 = vmatprep.subr.mxu0 %v1770
    %1927 = vmatpush1.msra.mxu0 %v1769
    %1928 = vmatprep.subr.mxu0 %v1776
    %1929 = vmatpush1.msra.mxu0 %v1775
    %1930 = vmatprep.subr.mxu0 %v1782
    %1931 = vmatpush1.msra.mxu0 %v1781
    %1932 = vmatprep.subr.mxu0 %v1788
    %1933 = vmatpush1.msra.mxu0 %v1787
    %1934 = vmatprep.subr.mxu0 %v1794
    %1935 = vmatpush1.msra.mxu0 %v1793
    %1936 = vmatprep.subr.mxu0 %v1800
    %1937 = vmatpush1.msra.mxu0 %v1799
    %1938 = vmatprep.mubr.f32.mxu0 0.0
    %1939 = vmatmul.mubr.f32.gmra.mrb[0].mxu0 0.0
    %v1940 = vpop.f32.mrb[0].mxu0
    %v1941 = vadd.f32 0.0, %v1940
    %v1942 = vpop.f32.mrb[0].mxu0
    %v1943 = vadd.f32 0.0, %v1942
    %1944 = vdwg.mxu0
    %1945 = vmatprep.subr.mxu0 %v1616
    %1946 = vmatpush1.msra.mxu0 %v1615
    %1947 = vmatprep.subr.mxu0 %v1622
    %1948 = vmatpush1.msra.mxu0 %v1621
    %1949 = vmatprep.subr.mxu0 %v1628
    %1950 = vmatpush1.msra.mxu0 %v1627
    %1951 = vmatprep.subr.mxu0 %v1634
    %1952 = vmatpush1.msra.mxu0 %v1633
    %1953 = vmatprep.subr.mxu0 %v1640
    %1954 = vmatpush1.msra.mxu0 %v1639
    %1955 = vmatprep.subr.mxu0 %v1646
    %1956 = vmatpush1.msra.mxu0 %v1645
    %1957 = vmatprep.subr.mxu0 %v1652
    %1958 = vmatpush1.msra.mxu0 %v1651
    %1959 = vmatprep.subr.mxu0 %v1658
    %1960 = vmatpush1.msra.mxu0 %v1657
    %1961 = vmatprep.subr.mxu0 %v1664
    %1962 = vmatpush1.msra.mxu0 %v1663
    %1963 = vmatprep.subr.mxu0 %v1670
    %1964 = vmatpush1.msra.mxu0 %v1669
    %1965 = vmatprep.subr.mxu0 %v1676
    %1966 = vmatpush1.msra.mxu0 %v1675
    %1967 = vmatprep.subr.mxu0 %v1682
    %1968 = vmatpush1.msra.mxu0 %v1681
    %1969 = vmatprep.subr.mxu0 %v1688
    %1970 = vmatpush1.msra.mxu0 %v1687
    %1971 = vmatprep.subr.mxu0 %v1694
    %1972 = vmatpush1.msra.mxu0 %v1693
    %1973 = vmatprep.subr.mxu0 %v1700
    %1974 = vmatpush1.msra.mxu0 %v1699
    %1975 = vmatprep.subr.mxu0 %v1706
    %1976 = vmatpush1.msra.mxu0 %v1705
    %1977 = vmatprep.subr.mxu0 %v1712
    %1978 = vmatpush1.msra.mxu0 %v1711
    %1979 = vmatprep.subr.mxu0 %v1718
    %1980 = vmatpush1.msra.mxu0 %v1717
    %1981 = vmatprep.subr.mxu0 %v1724
    %1982 = vmatpush1.msra.mxu0 %v1723
    %1983 = vmatprep.subr.mxu0 %v1730
    %1984 = vmatpush1.msra.mxu0 %v1729
    %1985 = vmatprep.subr.mxu0 %v1736
    %1986 = vmatpush1.msra.mxu0 %v1735
    %1987 = vmatprep.subr.mxu0 %v1742
    %1988 = vmatpush1.msra.mxu0 %v1741
    %1989 = vmatprep.subr.mxu0 %v1748
    %1990 = vmatpush1.msra.mxu0 %v1747
    %1991 = vmatprep.subr.mxu0 %v1754
    %1992 = vmatpush1.msra.mxu0 %v1753
    %1993 = vmatprep.subr.mxu0 %v1760
    %1994 = vmatpush1.msra.mxu0 %v1759
    %1995 = vmatprep.subr.mxu0 %v1766
    %1996 = vmatpush1.msra.mxu0 %v1765
    %1997 = vmatprep.subr.mxu0 %v1772
    %1998 = vmatpush1.msra.mxu0 %v1771
    %1999 = vmatprep.subr.mxu0 %v1778
    %2000 = vmatpush1.msra.mxu0 %v1777
    %2001 = vmatprep.subr.mxu0 %v1784
    %2002 = vmatpush1.msra.mxu0 %v1783
    %2003 = vmatprep.subr.mxu0 %v1790
    %2004 = vmatpush1.msra.mxu0 %v1789
    %2005 = vmatprep.subr.mxu0 %v1796
    %2006 = vmatpush1.msra.mxu0 %v1795
    %2007 = vmatprep.subr.mxu0 %v1802
    %2008 = vmatpush1.msra.mxu0 %v1801
    %2009 = vmatprep.mubr.f32.mxu0 0.0
    %2010 = vmatmul.mubr.f32.gmra.mrb[0].mxu0 0.0
    %v2011 = vpop.f32.mrb[0].mxu0
    %v2012 = vadd.f32 0.0, %v2011
    %v2013 = vpop.f32.mrb[0].mxu0
    %v2014 = vadd.f32 0.0, %v2013
    %2015 = vdwg.mxu0
    %s2016 = scalar_lea.vmem [#allocation2], 48
    %v2017 = vld [vmem:[%s2016] sm:$0xff]
    %v2018 = vld [vmem:[%s2016 + $0x8] sm:$0xff]
    %v2019 = vld [vmem:[%s2016 + $0x10] sm:$0xff]
    %v2020 = vld [vmem:[%s2016 + $0x18] sm:$0xff]
    %v2021 = vld [vmem:[%s2016 + $0x20] sm:$0xff]
    %v2022 = vld [vmem:[%s2016 + $0x28] sm:$0xff]
    %v2023 = vadd.f32 %v2017, %v1246
    %v2024 = vadd.f32 %v2018, %v1248
    %v2025 = vxor.u32 %v2023, 2147483648
    %v2026 = vxor.u32 %v2024, 2147483648
    %v2027 = vmul.f32 %v2025, 1.442695
    %v2028 = vpow.pop %v2027
    %v2029 = vmul.f32 %v2026, 1.442695
    %v2030 = vpow.pop %v2029
    %v2031 = vadd.f32 %v2028, 1.0
    %v2032 = vadd.f32 %v2030, 1.0
    %v2033 = vrcp.pop %v2031
    %v2034 = vmul.f32 1.0, %v2033
    %v2035 = vrcp.pop %v2032
    %v2036 = vmul.f32 1.0, %v2035
    %v2037 = vadd.f32 %v2019, %v1317
    %v2038 = vadd.f32 %v2020, %v1319
    %v2039 = vxor.u32 %v2037, 2147483648
    %v2040 = vxor.u32 %v2038, 2147483648
    %v2041 = vmul.f32 %v2039, 1.442695
    %v2042 = vpow.pop %v2041
    %v2043 = vmul.f32 %v2040, 1.442695
    %v2044 = vpow.pop %v2043
    %v2045 = vadd.f32 %v2042, 1.0
    %v2046 = vadd.f32 %v2044, 1.0
    %v2047 = vrcp.pop %v2045
    %v2048 = vmul.f32 1.0, %v2047
    %v2049 = vrcp.pop %v2046
    %v2050 = vmul.f32 1.0, %v2049
    %v2051 = vadd.f32 %v1388, %v694
    %v2052 = vadd.f32 %v1390, %v698
    %v2053 = vmul.f32 %v2034, %v2051
    %v2054 = vmul.f32 %v2036, %v2052
    %v2055 = vadd.f32 %v2021, %v2053
    %v2056 = vadd.f32 %v2022, %v2054
    %v2057 = vtanh.pop %v2055
    %v2058 = vtanh.pop %v2056
    %v2059 = vsub.f32 1.0, %v2048
    %v2060 = vsub.f32 1.0, %v2050
    %v2061 = vmul.f32 %v2059, %v2057
    %v2062 = vmul.f32 %v2060, %v2058
    %v2063 = vmul.f32 %v2048, %v793
    %v2064 = vmul.f32 %v2050, %v794
    %v2065 = vadd.f32 %v2061, %v2063
    %v2066 = vadd.f32 %v2062, %v2064
    %v2067 = vadd.f32 %v1605, %v1870
    %v2068 = vadd.f32 %v1606, %v1872
    %v2069 = vxor.u32 %v2067, 2147483648
    %v2070 = vxor.u32 %v2068, 2147483648
    %v2071 = vmul.f32 %v2069, 1.442695
    %v2072 = vpow.pop %v2071
    %v2073 = vmul.f32 %v2070, 1.442695
    %v2074 = vpow.pop %v2073
    %v2075 = vadd.f32 %v2072, 1.0
    %v2076 = vadd.f32 %v2074, 1.0
    %v2077 = vrcp.pop %v2075
    %v2078 = vmul.f32 1.0, %v2077
    %v2079 = vrcp.pop %v2076
    %v2080 = vmul.f32 1.0, %v2079
    %v2081 = vadd.f32 %v1607, %v1941
    %v2082 = vadd.f32 %v1608, %v1943
    %v2083 = vxor.u32 %v2081, 2147483648
    %v2084 = vxor.u32 %v2082, 2147483648
    %v2085 = vmul.f32 %v2083, 1.442695
    %v2086 = vpow.pop %v2085
    %v2087 = vmul.f32 %v2084, 1.442695
    %v2088 = vpow.pop %v2087
    %v2089 = vadd.f32 %v2086, 1.0
    %v2090 = vadd.f32 %v2088, 1.0
    %v2091 = vrcp.pop %v2089
    %v2092 = vmul.f32 1.0, %v2091
    %v2093 = vrcp.pop %v2090
    %v2094 = vmul.f32 1.0, %v2093
    %v2095 = vadd.f32 %v2012, %v706
    %v2096 = vadd.f32 %v2014, %v710
    %v2097 = vmul.f32 %v2078, %v2095
    %v2098 = vmul.f32 %v2080, %v2096
    %v2099 = vadd.f32 %v1609, %v2097
    %v2100 = vadd.f32 %v1610, %v2098
    %v2101 = vtanh.pop %v2099
    %v2102 = vtanh.pop %v2100
    %v2103 = vsub.f32 1.0, %v2092
    %v2104 = vsub.f32 1.0, %v2094
    %v2105 = vmul.f32 %v2103, %v2101
    %v2106 = vmul.f32 %v2104, %v2102
    %v2107 = vmul.f32 %v2092, 0.0
    %v2108 = vmul.f32 %v2094, 0.0
    %v2109 = vadd.f32 %v2105, %v2107
    %v2110 = vadd.f32 %v2106, %v2108
    %2111 = vmatprep.subr.mxu0 %v796
    %2112 = vmatpush1.msra.mxu0 %v795
    %2113 = vmatprep.subr.mxu0 %v808
    %2114 = vmatpush1.msra.mxu0 %v807
    %2115 = vmatprep.subr.mxu0 %v820
    %2116 = vmatpush1.msra.mxu0 %v819
    %2117 = vmatprep.subr.mxu0 %v832
    %2118 = vmatpush1.msra.mxu0 %v831
    %2119 = vmatprep.subr.mxu0 %v844
    %2120 = vmatpush1.msra.mxu0 %v843
    %2121 = vmatprep.subr.mxu0 %v856
    %2122 = vmatpush1.msra.mxu0 %v855
    %2123 = vmatprep.subr.mxu0 %v868
    %2124 = vmatpush1.msra.mxu0 %v867
    %2125 = vmatprep.subr.mxu0 %v880
    %2126 = vmatpush1.msra.mxu0 %v879
    %2127 = vmatprep.subr.mxu0 %v892
    %2128 = vmatpush1.msra.mxu0 %v891
    %2129 = vmatprep.subr.mxu0 %v904
    %2130 = vmatpush1.msra.mxu0 %v903
    %2131 = vmatprep.subr.mxu0 %v916
    %2132 = vmatpush1.msra.mxu0 %v915
    %2133 = vmatprep.subr.mxu0 %v928
    %2134 = vmatpush1.msra.mxu0 %v927
    %2135 = vmatprep.subr.mxu0 %v940
    %2136 = vmatpush1.msra.mxu0 %v939
    %2137 = vmatprep.subr.mxu0 %v952
    %2138 = vmatpush1.msra.mxu0 %v951
    %2139 = vmatprep.subr.mxu0 %v964
    %2140 = vmatpush1.msra.mxu0 %v963
    %2141 = vmatprep.subr.mxu0 %v976
    %2142 = vmatpush1.msra.mxu0 %v975
    %2143 = vmatprep.subr.mxu0 %v988
    %2144 = vmatpush1.msra.mxu0 %v987
    %2145 = vmatprep.subr.mxu0 %v1000
    %2146 = vmatpush1.msra.mxu0 %v999
    %2147 = vmatprep.subr.mxu0 %v1012
    %2148 = vmatpush1.msra.mxu0 %v1011
    %2149 = vmatprep.subr.mxu0 %v1024
    %2150 = vmatpush1.msra.mxu0 %v1023
    %2151 = vmatprep.subr.mxu0 %v1036
    %2152 = vmatpush1.msra.mxu0 %v1035
    %2153 = vmatprep.subr.mxu0 %v1048
    %2154 = vmatpush1.msra.mxu0 %v1047
    %2155 = vmatprep.subr.mxu0 %v1060
    %2156 = vmatpush1.msra.mxu0 %v1059
    %2157 = vmatprep.subr.mxu0 %v1072
    %2158 = vmatpush1.msra.mxu0 %v1071
    %2159 = vmatprep.subr.mxu0 %v1084
    %2160 = vmatpush1.msra.mxu0 %v1083
    %2161 = vmatprep.subr.mxu0 %v1096
    %2162 = vmatpush1.msra.mxu0 %v1095
    %2163 = vmatprep.subr.mxu0 %v1108
    %2164 = vmatpush1.msra.mxu0 %v1107
    %2165 = vmatprep.subr.mxu0 %v1120
    %2166 = vmatpush1.msra.mxu0 %v1119
    %2167 = vmatprep.subr.mxu0 %v1132
    %2168 = vmatpush1.msra.mxu0 %v1131
    %2169 = vmatprep.subr.mxu0 %v1144
    %2170 = vmatpush1.msra.mxu0 %v1143
    %2171 = vmatprep.subr.mxu0 %v1156
    %2172 = vmatpush1.msra.mxu0 %v1155
    %2173 = vmatprep.subr.mxu0 %v1168
    %2174 = vmatpush1.msra.mxu0 %v1167
    %2175 = vmatprep.mubr.f32.mxu0 %v2066
    %2176 = vmatmul.mubr.f32.gmra.mrb[0].mxu0 %v2065
    %v2177 = vpop.f32.mrb[0].mxu0
    %v2178 = vadd.f32 0.0, %v2177
    %v2179 = vpop.f32.mrb[0].mxu0
    %v2180 = vadd.f32 0.0, %v2179
    %2181 = vdwg.mxu0
    %2182 = vmatprep.subr.mxu0 %v798
    %2183 = vmatpush1.msra.mxu0 %v797
    %2184 = vmatprep.subr.mxu0 %v810
    %2185 = vmatpush1.msra.mxu0 %v809
    %2186 = vmatprep.subr.mxu0 %v822
    %2187 = vmatpush1.msra.mxu0 %v821
    %2188 = vmatprep.subr.mxu0 %v834
    %2189 = vmatpush1.msra.mxu0 %v833
    %2190 = vmatprep.subr.mxu0 %v846
    %2191 = vmatpush1.msra.mxu0 %v845
    %2192 = vmatprep.subr.mxu0 %v858
    %2193 = vmatpush1.msra.mxu0 %v857
    %2194 = vmatprep.subr.mxu0 %v870
    %2195 = vmatpush1.msra.mxu0 %v869
    %2196 = vmatprep.subr.mxu0 %v882
    %2197 = vmatpush1.msra.mxu0 %v881
    %2198 = vmatprep.subr.mxu0 %v894
    %2199 = vmatpush1.msra.mxu0 %v893
    %2200 = vmatprep.subr.mxu0 %v906
    %2201 = vmatpush1.msra.mxu0 %v905
    %2202 = vmatprep.subr.mxu0 %v918
    %2203 = vmatpush1.msra.mxu0 %v917
    %2204 = vmatprep.subr.mxu0 %v930
    %2205 = vmatpush1.msra.mxu0 %v929
    %2206 = vmatprep.subr.mxu0 %v942
    %2207 = vmatpush1.msra.mxu0 %v941
    %2208 = vmatprep.subr.mxu0 %v954
    %2209 = vmatpush1.msra.mxu0 %v953
    %2210 = vmatprep.subr.mxu0 %v966
    %2211 = vmatpush1.msra.mxu0 %v965
    %2212 = vmatprep.subr.mxu0 %v978
    %2213 = vmatpush1.msra.mxu0 %v977
    %2214 = vmatprep.subr.mxu0 %v990
    %2215 = vmatpush1.msra.mxu0 %v989
    %2216 = vmatprep.subr.mxu0 %v1002
    %2217 = vmatpush1.msra.mxu0 %v1001
    %2218 = vmatprep.subr.mxu0 %v1014
    %2219 = vmatpush1.msra.mxu0 %v1013
    %2220 = vmatprep.subr.mxu0 %v1026
    %2221 = vmatpush1.msra.mxu0 %v1025
    %2222 = vmatprep.subr.mxu0 %v1038
    %2223 = vmatpush1.msra.mxu0 %v1037
    %2224 = vmatprep.subr.mxu0 %v1050
    %2225 = vmatpush1.msra.mxu0 %v1049
    %2226 = vmatprep.subr.mxu0 %v1062
    %2227 = vmatpush1.msra.mxu0 %v1061
    %2228 = vmatprep.subr.mxu0 %v1074
    %2229 = vmatpush1.msra.mxu0 %v1073
    %2230 = vmatprep.subr.mxu0 %v1086
    %2231 = vmatpush1.msra.mxu0 %v1085
    %2232 = vmatprep.subr.mxu0 %v1098
    %2233 = vmatpush1.msra.mxu0 %v1097
    %2234 = vmatprep.subr.mxu0 %v1110
    %2235 = vmatpush1.msra.mxu0 %v1109
    %2236 = vmatprep.subr.mxu0 %v1122
    %2237 = vmatpush1.msra.mxu0 %v1121
    %2238 = vmatprep.subr.mxu0 %v1134
    %2239 = vmatpush1.msra.mxu0 %v1133
    %2240 = vmatprep.subr.mxu0 %v1146
    %2241 = vmatpush1.msra.mxu0 %v1145
    %2242 = vmatprep.subr.mxu0 %v1158
    %2243 = vmatpush1.msra.mxu0 %v1157
    %2244 = vmatprep.subr.mxu0 %v1170
    %2245 = vmatpush1.msra.mxu0 %v1169
    %2246 = vmatprep.mubr.f32.mxu0 %v2066
    %2247 = vmatmul.mubr.f32.gmra.mrb[0].mxu0 %v2065
    %v2248 = vpop.f32.mrb[0].mxu0
    %v2249 = vadd.f32 0.0, %v2248
    %v2250 = vpop.f32.mrb[0].mxu0
    %v2251 = vadd.f32 0.0, %v2250
    %2252 = vdwg.mxu0
    %2253 = vmatprep.subr.mxu0 %v800
    %2254 = vmatpush1.msra.mxu0 %v799
    %2255 = vmatprep.subr.mxu0 %v812
    %2256 = vmatpush1.msra.mxu0 %v811
    %2257 = vmatprep.subr.mxu0 %v824
    %2258 = vmatpush1.msra.mxu0 %v823
    %2259 = vmatprep.subr.mxu0 %v836
    %2260 = vmatpush1.msra.mxu0 %v835
    %2261 = vmatprep.subr.mxu0 %v848
    %2262 = vmatpush1.msra.mxu0 %v847
    %2263 = vmatprep.subr.mxu0 %v860
    %2264 = vmatpush1.msra.mxu0 %v859
    %2265 = vmatprep.subr.mxu0 %v872
    %2266 = vmatpush1.msra.mxu0 %v871
    %2267 = vmatprep.subr.mxu0 %v884
    %2268 = vmatpush1.msra.mxu0 %v883
    %2269 = vmatprep.subr.mxu0 %v896
    %2270 = vmatpush1.msra.mxu0 %v895
    %2271 = vmatprep.subr.mxu0 %v908
    %2272 = vmatpush1.msra.mxu0 %v907
    %2273 = vmatprep.subr.mxu0 %v920
    %2274 = vmatpush1.msra.mxu0 %v919
    %2275 = vmatprep.subr.mxu0 %v932
    %2276 = vmatpush1.msra.mxu0 %v931
    %2277 = vmatprep.subr.mxu0 %v944
    %2278 = vmatpush1.msra.mxu0 %v943
    %2279 = vmatprep.subr.mxu0 %v956
    %2280 = vmatpush1.msra.mxu0 %v955
    %2281 = vmatprep.subr.mxu0 %v968
    %2282 = vmatpush1.msra.mxu0 %v967
    %2283 = vmatprep.subr.mxu0 %v980
    %2284 = vmatpush1.msra.mxu0 %v979
    %2285 = vmatprep.subr.mxu0 %v992
    %2286 = vmatpush1.msra.mxu0 %v991
    %2287 = vmatprep.subr.mxu0 %v1004
    %2288 = vmatpush1.msra.mxu0 %v1003
    %2289 = vmatprep.subr.mxu0 %v1016
    %2290 = vmatpush1.msra.mxu0 %v1015
    %2291 = vmatprep.subr.mxu0 %v1028
    %2292 = vmatpush1.msra.mxu0 %v1027
    %2293 = vmatprep.subr.mxu0 %v1040
    %2294 = vmatpush1.msra.mxu0 %v1039
    %2295 = vmatprep.subr.mxu0 %v1052
    %2296 = vmatpush1.msra.mxu0 %v1051
    %2297 = vmatprep.subr.mxu0 %v1064
    %2298 = vmatpush1.msra.mxu0 %v1063
    %2299 = vmatprep.subr.mxu0 %v1076
    %2300 = vmatpush1.msra.mxu0 %v1075
    %2301 = vmatprep.subr.mxu0 %v1088
    %2302 = vmatpush1.msra.mxu0 %v1087
    %2303 = vmatprep.subr.mxu0 %v1100
    %2304 = vmatpush1.msra.mxu0 %v1099
    %2305 = vmatprep.subr.mxu0 %v1112
    %2306 = vmatpush1.msra.mxu0 %v1111
    %2307 = vmatprep.subr.mxu0 %v1124
    %2308 = vmatpush1.msra.mxu0 %v1123
    %2309 = vmatprep.subr.mxu0 %v1136
    %2310 = vmatpush1.msra.mxu0 %v1135
    %2311 = vmatprep.subr.mxu0 %v1148
    %2312 = vmatpush1.msra.mxu0 %v1147
    %2313 = vmatprep.subr.mxu0 %v1160
    %2314 = vmatpush1.msra.mxu0 %v1159
    %2315 = vmatprep.subr.mxu0 %v1172
    %2316 = vmatpush1.msra.mxu0 %v1171
    %2317 = vmatprep.mubr.f32.mxu0 %v2066
    %2318 = vmatmul.mubr.f32.gmra.mrb[0].mxu0 %v2065
    %v2319 = vpop.f32.mrb[0].mxu0
    %v2320 = vadd.f32 0.0, %v2319
    %v2321 = vpop.f32.mrb[0].mxu0
    %v2322 = vadd.f32 0.0, %v2321
    %2323 = vdwg.mxu0
    %2324 = vmatprep.subr.mxu0 %v802
    %2325 = vmatpush1.msra.mxu0 %v801
    %2326 = vmatprep.subr.mxu0 %v814
    %2327 = vmatpush1.msra.mxu0 %v813
    %2328 = vmatprep.subr.mxu0 %v826
    %2329 = vmatpush1.msra.mxu0 %v825
    %2330 = vmatprep.subr.mxu0 %v838
    %2331 = vmatpush1.msra.mxu0 %v837
    %2332 = vmatprep.subr.mxu0 %v850
    %2333 = vmatpush1.msra.mxu0 %v849
    %2334 = vmatprep.subr.mxu0 %v862
    %2335 = vmatpush1.msra.mxu0 %v861
    %2336 = vmatprep.subr.mxu0 %v874
    %2337 = vmatpush1.msra.mxu0 %v873
    %2338 = vmatprep.subr.mxu0 %v886
    %2339 = vmatpush1.msra.mxu0 %v885
    %2340 = vmatprep.subr.mxu0 %v898
    %2341 = vmatpush1.msra.mxu0 %v897
    %2342 = vmatprep.subr.mxu0 %v910
    %2343 = vmatpush1.msra.mxu0 %v909
    %2344 = vmatprep.subr.mxu0 %v922
    %2345 = vmatpush1.msra.mxu0 %v921
    %2346 = vmatprep.subr.mxu0 %v934
    %2347 = vmatpush1.msra.mxu0 %v933
    %2348 = vmatprep.subr.mxu0 %v946
    %2349 = vmatpush1.msra.mxu0 %v945
    %2350 = vmatprep.subr.mxu0 %v958
    %2351 = vmatpush1.msra.mxu0 %v957
    %2352 = vmatprep.subr.mxu0 %v970
    %2353 = vmatpush1.msra.mxu0 %v969
    %2354 = vmatprep.subr.mxu0 %v982
    %2355 = vmatpush1.msra.mxu0 %v981
    %2356 = vmatprep.subr.mxu0 %v994
    %2357 = vmatpush1.msra.mxu0 %v993
    %2358 = vmatprep.subr.mxu0 %v1006
    %2359 = vmatpush1.msra.mxu0 %v1005
    %2360 = vmatprep.subr.mxu0 %v1018
    %2361 = vmatpush1.msra.mxu0 %v1017
    %2362 = vmatprep.subr.mxu0 %v1030
    %2363 = vmatpush1.msra.mxu0 %v1029
    %2364 = vmatprep.subr.mxu0 %v1042
    %2365 = vmatpush1.msra.mxu0 %v1041
    %2366 = vmatprep.subr.mxu0 %v1054
    %2367 = vmatpush1.msra.mxu0 %v1053
    %2368 = vmatprep.subr.mxu0 %v1066
    %2369 = vmatpush1.msra.mxu0 %v1065
    %2370 = vmatprep.subr.mxu0 %v1078
    %2371 = vmatpush1.msra.mxu0 %v1077
    %2372 = vmatprep.subr.mxu0 %v1090
    %2373 = vmatpush1.msra.mxu0 %v1089
    %2374 = vmatprep.subr.mxu0 %v1102
    %2375 = vmatpush1.msra.mxu0 %v1101
    %2376 = vmatprep.subr.mxu0 %v1114
    %2377 = vmatpush1.msra.mxu0 %v1113
    %2378 = vmatprep.subr.mxu0 %v1126
    %2379 = vmatpush1.msra.mxu0 %v1125
    %2380 = vmatprep.subr.mxu0 %v1138
    %2381 = vmatpush1.msra.mxu0 %v1137
    %2382 = vmatprep.subr.mxu0 %v1150
    %2383 = vmatpush1.msra.mxu0 %v1149
    %2384 = vmatprep.subr.mxu0 %v1162
    %2385 = vmatpush1.msra.mxu0 %v1161
    %2386 = vmatprep.subr.mxu0 %v1174
    %2387 = vmatpush1.msra.mxu0 %v1173
    %2388 = vmatprep.mubr.f32.mxu0 %v2066
    %2389 = vmatmul.mubr.f32.gmra.mrb[0].mxu0 %v2065
    %v2390 = vpop.f32.mrb[0].mxu0
    %v2391 = vadd.f32 0.0, %v2390
    %v2392 = vpop.f32.mrb[0].mxu0
    %v2393 = vadd.f32 0.0, %v2392
    %2394 = vdwg.mxu0
    %2395 = vmatprep.subr.mxu0 %v804
    %2396 = vmatpush1.msra.mxu0 %v803
    %2397 = vmatprep.subr.mxu0 %v816
    %2398 = vmatpush1.msra.mxu0 %v815
    %2399 = vmatprep.subr.mxu0 %v828
    %2400 = vmatpush1.msra.mxu0 %v827
    %2401 = vmatprep.subr.mxu0 %v840
    %2402 = vmatpush1.msra.mxu0 %v839
    %2403 = vmatprep.subr.mxu0 %v852
    %2404 = vmatpush1.msra.mxu0 %v851
    %2405 = vmatprep.subr.mxu0 %v864
    %2406 = vmatpush1.msra.mxu0 %v863
    %2407 = vmatprep.subr.mxu0 %v876
    %2408 = vmatpush1.msra.mxu0 %v875
    %2409 = vmatprep.subr.mxu0 %v888
    %2410 = vmatpush1.msra.mxu0 %v887
    %2411 = vmatprep.subr.mxu0 %v900
    %2412 = vmatpush1.msra.mxu0 %v899
    %2413 = vmatprep.subr.mxu0 %v912
    %2414 = vmatpush1.msra.mxu0 %v911
    %2415 = vmatprep.subr.mxu0 %v924
    %2416 = vmatpush1.msra.mxu0 %v923
    %2417 = vmatprep.subr.mxu0 %v936
    %2418 = vmatpush1.msra.mxu0 %v935
    %2419 = vmatprep.subr.mxu0 %v948
    %2420 = vmatpush1.msra.mxu0 %v947
    %2421 = vmatprep.subr.mxu0 %v960
    %2422 = vmatpush1.msra.mxu0 %v959
    %2423 = vmatprep.subr.mxu0 %v972
    %2424 = vmatpush1.msra.mxu0 %v971
    %2425 = vmatprep.subr.mxu0 %v984
    %2426 = vmatpush1.msra.mxu0 %v983
    %2427 = vmatprep.subr.mxu0 %v996
    %2428 = vmatpush1.msra.mxu0 %v995
    %2429 = vmatprep.subr.mxu0 %v1008
    %2430 = vmatpush1.msra.mxu0 %v1007
    %2431 = vmatprep.subr.mxu0 %v1020
    %2432 = vmatpush1.msra.mxu0 %v1019
    %2433 = vmatprep.subr.mxu0 %v1032
    %2434 = vmatpush1.msra.mxu0 %v1031
    %2435 = vmatprep.subr.mxu0 %v1044
    %2436 = vmatpush1.msra.mxu0 %v1043
    %2437 = vmatprep.subr.mxu0 %v1056
    %2438 = vmatpush1.msra.mxu0 %v1055
    %2439 = vmatprep.subr.mxu0 %v1068
    %2440 = vmatpush1.msra.mxu0 %v1067
    %2441 = vmatprep.subr.mxu0 %v1080
    %2442 = vmatpush1.msra.mxu0 %v1079
    %2443 = vmatprep.subr.mxu0 %v1092
    %2444 = vmatpush1.msra.mxu0 %v1091
    %2445 = vmatprep.subr.mxu0 %v1104
    %2446 = vmatpush1.msra.mxu0 %v1103
    %2447 = vmatprep.subr.mxu0 %v1116
    %2448 = vmatpush1.msra.mxu0 %v1115
    %2449 = vmatprep.subr.mxu0 %v1128
    %2450 = vmatpush1.msra.mxu0 %v1127
    %2451 = vmatprep.subr.mxu0 %v1140
    %2452 = vmatpush1.msra.mxu0 %v1139
    %2453 = vmatprep.subr.mxu0 %v1152
    %2454 = vmatpush1.msra.mxu0 %v1151
    %2455 = vmatprep.subr.mxu0 %v1164
    %2456 = vmatpush1.msra.mxu0 %v1163
    %2457 = vmatprep.subr.mxu0 %v1176
    %2458 = vmatpush1.msra.mxu0 %v1175
    %2459 = vmatprep.mubr.f32.mxu0 %v2066
    %2460 = vmatmul.mubr.f32.gmra.mrb[0].mxu0 %v2065
    %v2461 = vpop.f32.mrb[0].mxu0
    %v2462 = vadd.f32 0.0, %v2461
    %v2463 = vpop.f32.mrb[0].mxu0
    %v2464 = vadd.f32 0.0, %v2463
    %2465 = vdwg.mxu0
    %2466 = vmatprep.subr.mxu0 %v806
    %2467 = vmatpush1.msra.mxu0 %v805
    %2468 = vmatprep.subr.mxu0 %v818
    %2469 = vmatpush1.msra.mxu0 %v817
    %2470 = vmatprep.subr.mxu0 %v830
    %2471 = vmatpush1.msra.mxu0 %v829
    %2472 = vmatprep.subr.mxu0 %v842
    %2473 = vmatpush1.msra.mxu0 %v841
    %2474 = vmatprep.subr.mxu0 %v854
    %2475 = vmatpush1.msra.mxu0 %v853
    %2476 = vmatprep.subr.mxu0 %v866
    %2477 = vmatpush1.msra.mxu0 %v865
    %2478 = vmatprep.subr.mxu0 %v878
    %2479 = vmatpush1.msra.mxu0 %v877
    %2480 = vmatprep.subr.mxu0 %v890
    %2481 = vmatpush1.msra.mxu0 %v889
    %2482 = vmatprep.subr.mxu0 %v902
    %2483 = vmatpush1.msra.mxu0 %v901
    %2484 = vmatprep.subr.mxu0 %v914
    %2485 = vmatpush1.msra.mxu0 %v913
    %2486 = vmatprep.subr.mxu0 %v926
    %2487 = vmatpush1.msra.mxu0 %v925
    %2488 = vmatprep.subr.mxu0 %v938
    %2489 = vmatpush1.msra.mxu0 %v937
    %2490 = vmatprep.subr.mxu0 %v950
    %2491 = vmatpush1.msra.mxu0 %v949
    %2492 = vmatprep.subr.mxu0 %v962
    %2493 = vmatpush1.msra.mxu0 %v961
    %2494 = vmatprep.subr.mxu0 %v974
    %2495 = vmatpush1.msra.mxu0 %v973
    %2496 = vmatprep.subr.mxu0 %v986
    %2497 = vmatpush1.msra.mxu0 %v985
    %2498 = vmatprep.subr.mxu0 %v998
    %2499 = vmatpush1.msra.mxu0 %v997
    %2500 = vmatprep.subr.mxu0 %v1010
    %2501 = vmatpush1.msra.mxu0 %v1009
    %2502 = vmatprep.subr.mxu0 %v1022
    %2503 = vmatpush1.msra.mxu0 %v1021
    %2504 = vmatprep.subr.mxu0 %v1034
    %2505 = vmatpush1.msra.mxu0 %v1033
    %2506 = vmatprep.subr.mxu0 %v1046
    %2507 = vmatpush1.msra.mxu0 %v1045
    %2508 = vmatprep.subr.mxu0 %v1058
    %2509 = vmatpush1.msra.mxu0 %v1057
    %2510 = vmatprep.subr.mxu0 %v1070
    %2511 = vmatpush1.msra.mxu0 %v1069
    %2512 = vmatprep.subr.mxu0 %v1082
    %2513 = vmatpush1.msra.mxu0 %v1081
    %2514 = vmatprep.subr.mxu0 %v1094
    %2515 = vmatpush1.msra.mxu0 %v1093
    %2516 = vmatprep.subr.mxu0 %v1106
    %2517 = vmatpush1.msra.mxu0 %v1105
    %2518 = vmatprep.subr.mxu0 %v1118
    %2519 = vmatpush1.msra.mxu0 %v1117
    %2520 = vmatprep.subr.mxu0 %v1130
    %2521 = vmatpush1.msra.mxu0 %v1129
    %2522 = vmatprep.subr.mxu0 %v1142
    %2523 = vmatpush1.msra.mxu0 %v1141
    %2524 = vmatprep.subr.mxu0 %v1154
    %2525 = vmatpush1.msra.mxu0 %v1153
    %2526 = vmatprep.subr.mxu0 %v1166
    %2527 = vmatpush1.msra.mxu0 %v1165
    %2528 = vmatprep.subr.mxu0 %v1178
    %2529 = vmatpush1.msra.mxu0 %v1177
    %2530 = vmatprep.mubr.f32.mxu0 %v2066
    %2531 = vmatmul.mubr.f32.gmra.mrb[0].mxu0 %v2065
    %v2532 = vpop.f32.mrb[0].mxu0
    %v2533 = vadd.f32 0.0, %v2532
    %v2534 = vpop.f32.mrb[0].mxu0
    %v2535 = vadd.f32 0.0, %v2534
    %2536 = vdwg.mxu0
    %v2537 = vadd.f32 %v2391, %v718
    %v2538 = vadd.f32 %v2393, %v722
    %v2539 = vadd.f32 %v2462, %v726
    %v2540 = vadd.f32 %v2464, %v730
    %v2541 = vadd.f32 %v2533, %v734
    %v2542 = vadd.f32 %v2535, %v738
    %2543 = vmatprep.subr.mxu0 %v1612
    %2544 = vmatpush1.msra.mxu0 %v1611
    %2545 = vmatprep.subr.mxu0 %v1618
    %2546 = vmatpush1.msra.mxu0 %v1617
    %2547 = vmatprep.subr.mxu0 %v1624
    %2548 = vmatpush1.msra.mxu0 %v1623
    %2549 = vmatprep.subr.mxu0 %v1630
    %2550 = vmatpush1.msra.mxu0 %v1629
    %2551 = vmatprep.subr.mxu0 %v1636
    %2552 = vmatpush1.msra.mxu0 %v1635
    %2553 = vmatprep.subr.mxu0 %v1642
    %2554 = vmatpush1.msra.mxu0 %v1641
    %2555 = vmatprep.subr.mxu0 %v1648
    %2556 = vmatpush1.msra.mxu0 %v1647
    %2557 = vmatprep.subr.mxu0 %v1654
    %2558 = vmatpush1.msra.mxu0 %v1653
    %2559 = vmatprep.subr.mxu0 %v1660
    %2560 = vmatpush1.msra.mxu0 %v1659
    %2561 = vmatprep.subr.mxu0 %v1666
    %2562 = vmatpush1.msra.mxu0 %v1665
    %2563 = vmatprep.subr.mxu0 %v1672
    %2564 = vmatpush1.msra.mxu0 %v1671
    %2565 = vmatprep.subr.mxu0 %v1678
    %2566 = vmatpush1.msra.mxu0 %v1677
    %2567 = vmatprep.subr.mxu0 %v1684
    %2568 = vmatpush1.msra.mxu0 %v1683
    %2569 = vmatprep.subr.mxu0 %v1690
    %2570 = vmatpush1.msra.mxu0 %v1689
    %2571 = vmatprep.subr.mxu0 %v1696
    %2572 = vmatpush1.msra.mxu0 %v1695
    %2573 = vmatprep.subr.mxu0 %v1702
    %2574 = vmatpush1.msra.mxu0 %v1701
    %2575 = vmatprep.subr.mxu0 %v1708
    %2576 = vmatpush1.msra.mxu0 %v1707
    %2577 = vmatprep.subr.mxu0 %v1714
    %2578 = vmatpush1.msra.mxu0 %v1713
    %2579 = vmatprep.subr.mxu0 %v1720
    %2580 = vmatpush1.msra.mxu0 %v1719
    %2581 = vmatprep.subr.mxu0 %v1726
    %2582 = vmatpush1.msra.mxu0 %v1725
    %2583 = vmatprep.subr.mxu0 %v1732
    %2584 = vmatpush1.msra.mxu0 %v1731
    %2585 = vmatprep.subr.mxu0 %v1738
    %2586 = vmatpush1.msra.mxu0 %v1737
    %2587 = vmatprep.subr.mxu0 %v1744
    %2588 = vmatpush1.msra.mxu0 %v1743
    %2589 = vmatprep.subr.mxu0 %v1750
    %2590 = vmatpush1.msra.mxu0 %v1749
    %2591 = vmatprep.subr.mxu0 %v1756
    %2592 = vmatpush1.msra.mxu0 %v1755
    %2593 = vmatprep.subr.mxu0 %v1762
    %2594 = vmatpush1.msra.mxu0 %v1761
    %2595 = vmatprep.subr.mxu0 %v1768
    %2596 = vmatpush1.msra.mxu0 %v1767
    %2597 = vmatprep.subr.mxu0 %v1774
    %2598 = vmatpush1.msra.mxu0 %v1773
    %2599 = vmatprep.subr.mxu0 %v1780
    %2600 = vmatpush1.msra.mxu0 %v1779
    %2601 = vmatprep.subr.mxu0 %v1786
    %2602 = vmatpush1.msra.mxu0 %v1785
    %2603 = vmatprep.subr.mxu0 %v1792
    %2604 = vmatpush1.msra.mxu0 %v1791
    %2605 = vmatprep.subr.mxu0 %v1798
    %2606 = vmatpush1.msra.mxu0 %v1797
    %2607 = vmatprep.mubr.f32.mxu0 %v2110
    %2608 = vmatmul.mubr.f32.gmra.mrb[0].mxu0 %v2109
    %v2609 = vpop.f32.mrb[0].mxu0
    %v2610 = vadd.f32 0.0, %v2609
    %v2611 = vpop.f32.mrb[0].mxu0
    %v2612 = vadd.f32 0.0, %v2611
    %2613 = vdwg.mxu0
    %2614 = vmatprep.subr.mxu0 %v1614
    %2615 = vmatpush1.msra.mxu0 %v1613
    %2616 = vmatprep.subr.mxu0 %v1620
    %2617 = vmatpush1.msra.mxu0 %v1619
    %2618 = vmatprep.subr.mxu0 %v1626
    %2619 = vmatpush1.msra.mxu0 %v1625
    %2620 = vmatprep.subr.mxu0 %v1632
    %2621 = vmatpush1.msra.mxu0 %v1631
    %2622 = vmatprep.subr.mxu0 %v1638
    %2623 = vmatpush1.msra.mxu0 %v1637
    %2624 = vmatprep.subr.mxu0 %v1644
    %2625 = vmatpush1.msra.mxu0 %v1643
    %2626 = vmatprep.subr.mxu0 %v1650
    %2627 = vmatpush1.msra.mxu0 %v1649
    %2628 = vmatprep.subr.mxu0 %v1656
    %2629 = vmatpush1.msra.mxu0 %v1655
    %2630 = vmatprep.subr.mxu0 %v1662
    %2631 = vmatpush1.msra.mxu0 %v1661
    %2632 = vmatprep.subr.mxu0 %v1668
    %2633 = vmatpush1.msra.mxu0 %v1667
    %2634 = vmatprep.subr.mxu0 %v1674
    %2635 = vmatpush1.msra.mxu0 %v1673
    %2636 = vmatprep.subr.mxu0 %v1680
    %2637 = vmatpush1.msra.mxu0 %v1679
    %2638 = vmatprep.subr.mxu0 %v1686
    %2639 = vmatpush1.msra.mxu0 %v1685
    %2640 = vmatprep.subr.mxu0 %v1692
    %2641 = vmatpush1.msra.mxu0 %v1691
    %2642 = vmatprep.subr.mxu0 %v1698
    %2643 = vmatpush1.msra.mxu0 %v1697
    %2644 = vmatprep.subr.mxu0 %v1704
    %2645 = vmatpush1.msra.mxu0 %v1703
    %2646 = vmatprep.subr.mxu0 %v1710
    %2647 = vmatpush1.msra.mxu0 %v1709
    %2648 = vmatprep.subr.mxu0 %v1716
    %2649 = vmatpush1.msra.mxu0 %v1715
    %2650 = vmatprep.subr.mxu0 %v1722
    %2651 = vmatpush1.msra.mxu0 %v1721
    %2652 = vmatprep.subr.mxu0 %v1728
    %2653 = vmatpush1.msra.mxu0 %v1727
    %2654 = vmatprep.subr.mxu0 %v1734
    %2655 = vmatpush1.msra.mxu0 %v1733
    %2656 = vmatprep.subr.mxu0 %v1740
    %2657 = vmatpush1.msra.mxu0 %v1739
    %2658 = vmatprep.subr.mxu0 %v1746
    %2659 = vmatpush1.msra.mxu0 %v1745
    %2660 = vmatprep.subr.mxu0 %v1752
    %2661 = vmatpush1.msra.mxu0 %v1751
    %2662 = vmatprep.subr.mxu0 %v1758
    %2663 = vmatpush1.msra.mxu0 %v1757
    %2664 = vmatprep.subr.mxu0 %v1764
    %2665 = vmatpush1.msra.mxu0 %v1763
    %2666 = vmatprep.subr.mxu0 %v1770
    %2667 = vmatpush1.msra.mxu0 %v1769
    %2668 = vmatprep.subr.mxu0 %v1776
    %2669 = vmatpush1.msra.mxu0 %v1775
    %2670 = vmatprep.subr.mxu0 %v1782
    %2671 = vmatpush1.msra.mxu0 %v1781
    %2672 = vmatprep.subr.mxu0 %v1788
    %2673 = vmatpush1.msra.mxu0 %v1787
    %2674 = vmatprep.subr.mxu0 %v1794
    %2675 = vmatpush1.msra.mxu0 %v1793
    %2676 = vmatprep.subr.mxu0 %v1800
    %2677 = vmatpush1.msra.mxu0 %v1799
    %2678 = vmatprep.mubr.f32.mxu0 %v2110
    %2679 = vmatmul.mubr.f32.gmra.mrb[0].mxu0 %v2109
    %v2680 = vpop.f32.mrb[0].mxu0
    %v2681 = vadd.f32 0.0, %v2680
    %v2682 = vpop.f32.mrb[0].mxu0
    %v2683 = vadd.f32 0.0, %v2682
    %2684 = vdwg.mxu0
    %2685 = vmatprep.subr.mxu0 %v1616
    %2686 = vmatpush1.msra.mxu0 %v1615
    %2687 = vmatprep.subr.mxu0 %v1622
    %2688 = vmatpush1.msra.mxu0 %v1621
    %2689 = vmatprep.subr.mxu0 %v1628
    %2690 = vmatpush1.msra.mxu0 %v1627
    %2691 = vmatprep.subr.mxu0 %v1634
    %2692 = vmatpush1.msra.mxu0 %v1633
    %2693 = vmatprep.subr.mxu0 %v1640
    %2694 = vmatpush1.msra.mxu0 %v1639
    %2695 = vmatprep.subr.mxu0 %v1646
    %2696 = vmatpush1.msra.mxu0 %v1645
    %2697 = vmatprep.subr.mxu0 %v1652
    %2698 = vmatpush1.msra.mxu0 %v1651
    %2699 = vmatprep.subr.mxu0 %v1658
    %2700 = vmatpush1.msra.mxu0 %v1657
    %2701 = vmatprep.subr.mxu0 %v1664
    %2702 = vmatpush1.msra.mxu0 %v1663
    %2703 = vmatprep.subr.mxu0 %v1670
    %2704 = vmatpush1.msra.mxu0 %v1669
    %2705 = vmatprep.subr.mxu0 %v1676
    %2706 = vmatpush1.msra.mxu0 %v1675
    %2707 = vmatprep.subr.mxu0 %v1682
    %2708 = vmatpush1.msra.mxu0 %v1681
    %2709 = vmatprep.subr.mxu0 %v1688
    %2710 = vmatpush1.msra.mxu0 %v1687
    %2711 = vmatprep.subr.mxu0 %v1694
    %2712 = vmatpush1.msra.mxu0 %v1693
    %2713 = vmatprep.subr.mxu0 %v1700
    %2714 = vmatpush1.msra.mxu0 %v1699
    %2715 = vmatprep.subr.mxu0 %v1706
    %2716 = vmatpush1.msra.mxu0 %v1705
    %2717 = vmatprep.subr.mxu0 %v1712
    %2718 = vmatpush1.msra.mxu0 %v1711
    %2719 = vmatprep.subr.mxu0 %v1718
    %2720 = vmatpush1.msra.mxu0 %v1717
    %2721 = vmatprep.subr.mxu0 %v1724
    %2722 = vmatpush1.msra.mxu0 %v1723
    %2723 = vmatprep.subr.mxu0 %v1730
    %2724 = vmatpush1.msra.mxu0 %v1729
    %2725 = vmatprep.subr.mxu0 %v1736
    %2726 = vmatpush1.msra.mxu0 %v1735
    %2727 = vmatprep.subr.mxu0 %v1742
    %2728 = vmatpush1.msra.mxu0 %v1741
    %2729 = vmatprep.subr.mxu0 %v1748
    %2730 = vmatpush1.msra.mxu0 %v1747
    %2731 = vmatprep.subr.mxu0 %v1754
    %2732 = vmatpush1.msra.mxu0 %v1753
    %2733 = vmatprep.subr.mxu0 %v1760
    %2734 = vmatpush1.msra.mxu0 %v1759
    %2735 = vmatprep.subr.mxu0 %v1766
    %2736 = vmatpush1.msra.mxu0 %v1765
    %2737 = vmatprep.subr.mxu0 %v1772
    %2738 = vmatpush1.msra.mxu0 %v1771
    %2739 = vmatprep.subr.mxu0 %v1778
    %2740 = vmatpush1.msra.mxu0 %v1777
    %2741 = vmatprep.subr.mxu0 %v1784
    %2742 = vmatpush1.msra.mxu0 %v1783
    %2743 = vmatprep.subr.mxu0 %v1790
    %2744 = vmatpush1.msra.mxu0 %v1789
    %2745 = vmatprep.subr.mxu0 %v1796
    %2746 = vmatpush1.msra.mxu0 %v1795
    %2747 = vmatprep.subr.mxu0 %v1802
    %2748 = vmatpush1.msra.mxu0 %v1801
    %2749 = vmatprep.mubr.f32.mxu0 %v2110
    %2750 = vmatmul.mubr.f32.gmra.mrb[0].mxu0 %v2109
    %v2751 = vpop.f32.mrb[0].mxu0
    %v2752 = vadd.f32 0.0, %v2751
    %v2753 = vpop.f32.mrb[0].mxu0
    %v2754 = vadd.f32 0.0, %v2753
    %2755 = vdwg.mxu0
    %s2756 = scalar_lea.vmem [#allocation2], 96
    %v2757 = vld [vmem:[%s2756] sm:$0xff]
    %v2758 = vld [vmem:[%s2756 + $0x8] sm:$0xff]
    %v2759 = vld [vmem:[%s2756 + $0x10] sm:$0xff]
    %v2760 = vld [vmem:[%s2756 + $0x18] sm:$0xff]
    %v2761 = vld [vmem:[%s2756 + $0x20] sm:$0xff]
    %v2762 = vld [vmem:[%s2756 + $0x28] sm:$0xff]
    %v2763 = vadd.f32 %v2757, %v2178
    %v2764 = vadd.f32 %v2758, %v2180
    %v2765 = vxor.u32 %v2763, 2147483648
    %v2766 = vxor.u32 %v2764, 2147483648
    %v2767 = vmul.f32 %v2765, 1.442695
    %v2768 = vpow.pop %v2767
    %v2769 = vmul.f32 %v2766, 1.442695
    %v2770 = vpow.pop %v2769
    %v2771 = vadd.f32 %v2768, 1.0
    %v2772 = vadd.f32 %v2770, 1.0
    %v2773 = vrcp.pop %v2771
    %v2774 = vmul.f32 1.0, %v2773
    %v2775 = vrcp.pop %v2772
    %v2776 = vmul.f32 1.0, %v2775
    %v2777 = vadd.f32 %v2759, %v2249
    %v2778 = vadd.f32 %v2760, %v2251
    %v2779 = vxor.u32 %v2777, 2147483648
    %v2780 = vxor.u32 %v2778, 2147483648
    %v2781 = vmul.f32 %v2779, 1.442695
    %v2782 = vpow.pop %v2781
    %v2783 = vmul.f32 %v2780, 1.442695
    %v2784 = vpow.pop %v2783
    %v2785 = vadd.f32 %v2782, 1.0
    %v2786 = vadd.f32 %v2784, 1.0
    %v2787 = vrcp.pop %v2785
    %v2788 = vmul.f32 1.0, %v2787
    %v2789 = vrcp.pop %v2786
    %v2790 = vmul.f32 1.0, %v2789
    %v2791 = vadd.f32 %v2320, %v694
    %v2792 = vadd.f32 %v2322, %v698
    %v2793 = vmul.f32 %v2774, %v2791
    %v2794 = vmul.f32 %v2776, %v2792
    %v2795 = vadd.f32 %v2761, %v2793
    %v2796 = vadd.f32 %v2762, %v2794
    %v2797 = vtanh.pop %v2795
    %v2798 = vtanh.pop %v2796
    %v2799 = vsub.f32 1.0, %v2788
    %v2800 = vsub.f32 1.0, %v2790
    %v2801 = vmul.f32 %v2799, %v2797
    %v2802 = vmul.f32 %v2800, %v2798
    %v2803 = vmul.f32 %v2788, %v2065
    %v2804 = vmul.f32 %v2790, %v2066
    %v2805 = vadd.f32 %v2801, %v2803
    %v2806 = vadd.f32 %v2802, %v2804
    %v2807 = vadd.f32 %v2537, %v2610
    %v2808 = vadd.f32 %v2538, %v2612
    %v2809 = vxor.u32 %v2807, 2147483648
    %v2810 = vxor.u32 %v2808, 2147483648
    %v2811 = vmul.f32 %v2809, 1.442695
    %v2812 = vpow.pop %v2811
    %v2813 = vmul.f32 %v2810, 1.442695
    %v2814 = vpow.pop %v2813
    %v2815 = vadd.f32 %v2812, 1.0
    %v2816 = vadd.f32 %v2814, 1.0
    %v2817 = vrcp.pop %v2815
    %v2818 = vmul.f32 1.0, %v2817
    %v2819 = vrcp.pop %v2816
    %v2820 = vmul.f32 1.0, %v2819
    %v2821 = vadd.f32 %v2539, %v2681
    %v2822 = vadd.f32 %v2540, %v2683
    %v2823 = vxor.u32 %v2821, 2147483648
    %v2824 = vxor.u32 %v2822, 2147483648
    %v2825 = vmul.f32 %v2823, 1.442695
    %v2826 = vpow.pop %v2825
    %v2827 = vmul.f32 %v2824, 1.442695
    %v2828 = vpow.pop %v2827
    %v2829 = vadd.f32 %v2826, 1.0
    %v2830 = vadd.f32 %v2828, 1.0
    %v2831 = vrcp.pop %v2829
    %v2832 = vmul.f32 1.0, %v2831
    %v2833 = vrcp.pop %v2830
    %v2834 = vmul.f32 1.0, %v2833
    %v2835 = vadd.f32 %v2752, %v706
    %v2836 = vadd.f32 %v2754, %v710
    %v2837 = vmul.f32 %v2818, %v2835
    %v2838 = vmul.f32 %v2820, %v2836
    %v2839 = vadd.f32 %v2541, %v2837
    %v2840 = vadd.f32 %v2542, %v2838
    %v2841 = vtanh.pop %v2839
    %v2842 = vtanh.pop %v2840
    %v2843 = vsub.f32 1.0, %v2832
    %v2844 = vsub.f32 1.0, %v2834
    %v2845 = vmul.f32 %v2843, %v2841
    %v2846 = vmul.f32 %v2844, %v2842
    %v2847 = vmul.f32 %v2832, %v2109
    %v2848 = vmul.f32 %v2834, %v2110
    %v2849 = vadd.f32 %v2845, %v2847
    %v2850 = vadd.f32 %v2846, %v2848
    %2851 = vmatprep.subr.mxu0 %v796
    %2852 = vmatpush1.msra.mxu0 %v795
    %2853 = vmatprep.subr.mxu0 %v808
    %2854 = vmatpush1.msra.mxu0 %v807
    %2855 = vmatprep.subr.mxu0 %v820
    %2856 = vmatpush1.msra.mxu0 %v819
    %2857 = vmatprep.subr.mxu0 %v832
    %2858 = vmatpush1.msra.mxu0 %v831
    %2859 = vmatprep.subr.mxu0 %v844
    %2860 = vmatpush1.msra.mxu0 %v843
    %2861 = vmatprep.subr.mxu0 %v856
    %2862 = vmatpush1.msra.mxu0 %v855
    %2863 = vmatprep.subr.mxu0 %v868
    %2864 = vmatpush1.msra.mxu0 %v867
    %2865 = vmatprep.subr.mxu0 %v880
    %2866 = vmatpush1.msra.mxu0 %v879
    %2867 = vmatprep.subr.mxu0 %v892
    %2868 = vmatpush1.msra.mxu0 %v891
    %2869 = vmatprep.subr.mxu0 %v904
    %2870 = vmatpush1.msra.mxu0 %v903
    %2871 = vmatprep.subr.mxu0 %v916
    %2872 = vmatpush1.msra.mxu0 %v915
    %2873 = vmatprep.subr.mxu0 %v928
    %2874 = vmatpush1.msra.mxu0 %v927
    %2875 = vmatprep.subr.mxu0 %v940
    %2876 = vmatpush1.msra.mxu0 %v939
    %2877 = vmatprep.subr.mxu0 %v952
    %2878 = vmatpush1.msra.mxu0 %v951
    %2879 = vmatprep.subr.mxu0 %v964
    %2880 = vmatpush1.msra.mxu0 %v963
    %2881 = vmatprep.subr.mxu0 %v976
    %2882 = vmatpush1.msra.mxu0 %v975
    %2883 = vmatprep.subr.mxu0 %v988
    %2884 = vmatpush1.msra.mxu0 %v987
    %2885 = vmatprep.subr.mxu0 %v1000
    %2886 = vmatpush1.msra.mxu0 %v999
    %2887 = vmatprep.subr.mxu0 %v1012
    %2888 = vmatpush1.msra.mxu0 %v1011
    %2889 = vmatprep.subr.mxu0 %v1024
    %2890 = vmatpush1.msra.mxu0 %v1023
    %2891 = vmatprep.subr.mxu0 %v1036
    %2892 = vmatpush1.msra.mxu0 %v1035
    %2893 = vmatprep.subr.mxu0 %v1048
    %2894 = vmatpush1.msra.mxu0 %v1047
    %2895 = vmatprep.subr.mxu0 %v1060
    %2896 = vmatpush1.msra.mxu0 %v1059
    %2897 = vmatprep.subr.mxu0 %v1072
    %2898 = vmatpush1.msra.mxu0 %v1071
    %2899 = vmatprep.subr.mxu0 %v1084
    %2900 = vmatpush1.msra.mxu0 %v1083
    %2901 = vmatprep.subr.mxu0 %v1096
    %2902 = vmatpush1.msra.mxu0 %v1095
    %2903 = vmatprep.subr.mxu0 %v1108
    %2904 = vmatpush1.msra.mxu0 %v1107
    %2905 = vmatprep.subr.mxu0 %v1120
    %2906 = vmatpush1.msra.mxu0 %v1119
    %2907 = vmatprep.subr.mxu0 %v1132
    %2908 = vmatpush1.msra.mxu0 %v1131
    %2909 = vmatprep.subr.mxu0 %v1144
    %2910 = vmatpush1.msra.mxu0 %v1143
    %2911 = vmatprep.subr.mxu0 %v1156
    %2912 = vmatpush1.msra.mxu0 %v1155
    %2913 = vmatprep.subr.mxu0 %v1168
    %2914 = vmatpush1.msra.mxu0 %v1167
    %2915 = vmatprep.mubr.f32.mxu0 %v2806
    %2916 = vmatmul.mubr.f32.gmra.mrb[0].mxu0 %v2805
    %v2917 = vpop.f32.mrb[0].mxu0
    %v2918 = vadd.f32 0.0, %v2917
    %v2919 = vpop.f32.mrb[0].mxu0
    %v2920 = vadd.f32 0.0, %v2919
    %2921 = vdwg.mxu0
    %2922 = vmatprep.subr.mxu0 %v798
    %2923 = vmatpush1.msra.mxu0 %v797
    %2924 = vmatprep.subr.mxu0 %v810
    %2925 = vmatpush1.msra.mxu0 %v809
    %2926 = vmatprep.subr.mxu0 %v822
    %2927 = vmatpush1.msra.mxu0 %v821
    %2928 = vmatprep.subr.mxu0 %v834
    %2929 = vmatpush1.msra.mxu0 %v833
    %2930 = vmatprep.subr.mxu0 %v846
    %2931 = vmatpush1.msra.mxu0 %v845
    %2932 = vmatprep.subr.mxu0 %v858
    %2933 = vmatpush1.msra.mxu0 %v857
    %2934 = vmatprep.subr.mxu0 %v870
    %2935 = vmatpush1.msra.mxu0 %v869
    %2936 = vmatprep.subr.mxu0 %v882
    %2937 = vmatpush1.msra.mxu0 %v881
    %2938 = vmatprep.subr.mxu0 %v894
    %2939 = vmatpush1.msra.mxu0 %v893
    %2940 = vmatprep.subr.mxu0 %v906
    %2941 = vmatpush1.msra.mxu0 %v905
    %2942 = vmatprep.subr.mxu0 %v918
    %2943 = vmatpush1.msra.mxu0 %v917
    %2944 = vmatprep.subr.mxu0 %v930
    %2945 = vmatpush1.msra.mxu0 %v929
    %2946 = vmatprep.subr.mxu0 %v942
    %2947 = vmatpush1.msra.mxu0 %v941
    %2948 = vmatprep.subr.mxu0 %v954
    %2949 = vmatpush1.msra.mxu0 %v953
    %2950 = vmatprep.subr.mxu0 %v966
    %2951 = vmatpush1.msra.mxu0 %v965
    %2952 = vmatprep.subr.mxu0 %v978
    %2953 = vmatpush1.msra.mxu0 %v977
    %2954 = vmatprep.subr.mxu0 %v990
    %2955 = vmatpush1.msra.mxu0 %v989
    %2956 = vmatprep.subr.mxu0 %v1002
    %2957 = vmatpush1.msra.mxu0 %v1001
    %2958 = vmatprep.subr.mxu0 %v1014
    %2959 = vmatpush1.msra.mxu0 %v1013
    %2960 = vmatprep.subr.mxu0 %v1026
    %2961 = vmatpush1.msra.mxu0 %v1025
    %2962 = vmatprep.subr.mxu0 %v1038
    %2963 = vmatpush1.msra.mxu0 %v1037
    %2964 = vmatprep.subr.mxu0 %v1050
    %2965 = vmatpush1.msra.mxu0 %v1049
    %2966 = vmatprep.subr.mxu0 %v1062
    %2967 = vmatpush1.msra.mxu0 %v1061
    %2968 = vmatprep.subr.mxu0 %v1074
    %2969 = vmatpush1.msra.mxu0 %v1073
    %2970 = vmatprep.subr.mxu0 %v1086
    %2971 = vmatpush1.msra.mxu0 %v1085
    %2972 = vmatprep.subr.mxu0 %v1098
    %2973 = vmatpush1.msra.mxu0 %v1097
    %2974 = vmatprep.subr.mxu0 %v1110
    %2975 = vmatpush1.msra.mxu0 %v1109
    %2976 = vmatprep.subr.mxu0 %v1122
    %2977 = vmatpush1.msra.mxu0 %v1121
    %2978 = vmatprep.subr.mxu0 %v1134
    %2979 = vmatpush1.msra.mxu0 %v1133
    %2980 = vmatprep.subr.mxu0 %v1146
    %2981 = vmatpush1.msra.mxu0 %v1145
    %2982 = vmatprep.subr.mxu0 %v1158
    %2983 = vmatpush1.msra.mxu0 %v1157
    %2984 = vmatprep.subr.mxu0 %v1170
    %2985 = vmatpush1.msra.mxu0 %v1169
    %2986 = vmatprep.mubr.f32.mxu0 %v2806
    %2987 = vmatmul.mubr.f32.gmra.mrb[0].mxu0 %v2805
    %v2988 = vpop.f32.mrb[0].mxu0
    %v2989 = vadd.f32 0.0, %v2988
    %v2990 = vpop.f32.mrb[0].mxu0
    %v2991 = vadd.f32 0.0, %v2990
    %2992 = vdwg.mxu0
    %2993 = vmatprep.subr.mxu0 %v800
    %2994 = vmatpush1.msra.mxu0 %v799
    %2995 = vmatprep.subr.mxu0 %v812
    %2996 = vmatpush1.msra.mxu0 %v811
    %2997 = vmatprep.subr.mxu0 %v824
    %2998 = vmatpush1.msra.mxu0 %v823
    %2999 = vmatprep.subr.mxu0 %v836
    %3000 = vmatpush1.msra.mxu0 %v835
    %3001 = vmatprep.subr.mxu0 %v848
    %3002 = vmatpush1.msra.mxu0 %v847
    %3003 = vmatprep.subr.mxu0 %v860
    %3004 = vmatpush1.msra.mxu0 %v859
    %3005 = vmatprep.subr.mxu0 %v872
    %3006 = vmatpush1.msra.mxu0 %v871
    %3007 = vmatprep.subr.mxu0 %v884
    %3008 = vmatpush1.msra.mxu0 %v883
    %3009 = vmatprep.subr.mxu0 %v896
    %3010 = vmatpush1.msra.mxu0 %v895
    %3011 = vmatprep.subr.mxu0 %v908
    %3012 = vmatpush1.msra.mxu0 %v907
    %3013 = vmatprep.subr.mxu0 %v920
    %3014 = vmatpush1.msra.mxu0 %v919
    %3015 = vmatprep.subr.mxu0 %v932
    %3016 = vmatpush1.msra.mxu0 %v931
    %3017 = vmatprep.subr.mxu0 %v944
    %3018 = vmatpush1.msra.mxu0 %v943
    %3019 = vmatprep.subr.mxu0 %v956
    %3020 = vmatpush1.msra.mxu0 %v955
    %3021 = vmatprep.subr.mxu0 %v968
    %3022 = vmatpush1.msra.mxu0 %v967
    %3023 = vmatprep.subr.mxu0 %v980
    %3024 = vmatpush1.msra.mxu0 %v979
    %3025 = vmatprep.subr.mxu0 %v992
    %3026 = vmatpush1.msra.mxu0 %v991
    %3027 = vmatprep.subr.mxu0 %v1004
    %3028 = vmatpush1.msra.mxu0 %v1003
    %3029 = vmatprep.subr.mxu0 %v1016
    %3030 = vmatpush1.msra.mxu0 %v1015
    %3031 = vmatprep.subr.mxu0 %v1028
    %3032 = vmatpush1.msra.mxu0 %v1027
    %3033 = vmatprep.subr.mxu0 %v1040
    %3034 = vmatpush1.msra.mxu0 %v1039
    %3035 = vmatprep.subr.mxu0 %v1052
    %3036 = vmatpush1.msra.mxu0 %v1051
    %3037 = vmatprep.subr.mxu0 %v1064
    %3038 = vmatpush1.msra.mxu0 %v1063
    %3039 = vmatprep.subr.mxu0 %v1076
    %3040 = vmatpush1.msra.mxu0 %v1075
    %3041 = vmatprep.subr.mxu0 %v1088
    %3042 = vmatpush1.msra.mxu0 %v1087
    %3043 = vmatprep.subr.mxu0 %v1100
    %3044 = vmatpush1.msra.mxu0 %v1099
    %3045 = vmatprep.subr.mxu0 %v1112
    %3046 = vmatpush1.msra.mxu0 %v1111
    %3047 = vmatprep.subr.mxu0 %v1124
    %3048 = vmatpush1.msra.mxu0 %v1123
    %3049 = vmatprep.subr.mxu0 %v1136
    %3050 = vmatpush1.msra.mxu0 %v1135
    %3051 = vmatprep.subr.mxu0 %v1148
    %3052 = vmatpush1.msra.mxu0 %v1147
    %3053 = vmatprep.subr.mxu0 %v1160
    %3054 = vmatpush1.msra.mxu0 %v1159
    %3055 = vmatprep.subr.mxu0 %v1172
    %3056 = vmatpush1.msra.mxu0 %v1171
    %3057 = vmatprep.mubr.f32.mxu0 %v2806
    %3058 = vmatmul.mubr.f32.gmra.mrb[0].mxu0 %v2805
    %v3059 = vpop.f32.mrb[0].mxu0
    %v3060 = vadd.f32 0.0, %v3059
    %v3061 = vpop.f32.mrb[0].mxu0
    %v3062 = vadd.f32 0.0, %v3061
    %3063 = vdwg.mxu0
    %3064 = vmatprep.subr.mxu0 %v802
    %3065 = vmatpush1.msra.mxu0 %v801
    %3066 = vmatprep.subr.mxu0 %v814
    %3067 = vmatpush1.msra.mxu0 %v813
    %3068 = vmatprep.subr.mxu0 %v826
    %3069 = vmatpush1.msra.mxu0 %v825
    %3070 = vmatprep.subr.mxu0 %v838
    %3071 = vmatpush1.msra.mxu0 %v837
    %3072 = vmatprep.subr.mxu0 %v850
    %3073 = vmatpush1.msra.mxu0 %v849
    %3074 = vmatprep.subr.mxu0 %v862
    %3075 = vmatpush1.msra.mxu0 %v861
    %3076 = vmatprep.subr.mxu0 %v874
    %3077 = vmatpush1.msra.mxu0 %v873
    %3078 = vmatprep.subr.mxu0 %v886
    %3079 = vmatpush1.msra.mxu0 %v885
    %3080 = vmatprep.subr.mxu0 %v898
    %3081 = vmatpush1.msra.mxu0 %v897
    %3082 = vmatprep.subr.mxu0 %v910
    %3083 = vmatpush1.msra.mxu0 %v909
    %3084 = vmatprep.subr.mxu0 %v922
    %3085 = vmatpush1.msra.mxu0 %v921
    %3086 = vmatprep.subr.mxu0 %v934
    %3087 = vmatpush1.msra.mxu0 %v933
    %3088 = vmatprep.subr.mxu0 %v946
    %3089 = vmatpush1.msra.mxu0 %v945
    %3090 = vmatprep.subr.mxu0 %v958
    %3091 = vmatpush1.msra.mxu0 %v957
    %3092 = vmatprep.subr.mxu0 %v970
    %3093 = vmatpush1.msra.mxu0 %v969
    %3094 = vmatprep.subr.mxu0 %v982
    %3095 = vmatpush1.msra.mxu0 %v981
    %3096 = vmatprep.subr.mxu0 %v994
    %3097 = vmatpush1.msra.mxu0 %v993
    %3098 = vmatprep.subr.mxu0 %v1006
    %3099 = vmatpush1.msra.mxu0 %v1005
    %3100 = vmatprep.subr.mxu0 %v1018
    %3101 = vmatpush1.msra.mxu0 %v1017
    %3102 = vmatprep.subr.mxu0 %v1030
    %3103 = vmatpush1.msra.mxu0 %v1029
    %3104 = vmatprep.subr.mxu0 %v1042
    %3105 = vmatpush1.msra.mxu0 %v1041
    %3106 = vmatprep.subr.mxu0 %v1054
    %3107 = vmatpush1.msra.mxu0 %v1053
    %3108 = vmatprep.subr.mxu0 %v1066
    %3109 = vmatpush1.msra.mxu0 %v1065
    %3110 = vmatprep.subr.mxu0 %v1078
    %3111 = vmatpush1.msra.mxu0 %v1077
    %3112 = vmatprep.subr.mxu0 %v1090
    %3113 = vmatpush1.msra.mxu0 %v1089
    %3114 = vmatprep.subr.mxu0 %v1102
    %3115 = vmatpush1.msra.mxu0 %v1101
    %3116 = vmatprep.subr.mxu0 %v1114
    %3117 = vmatpush1.msra.mxu0 %v1113
    %3118 = vmatprep.subr.mxu0 %v1126
    %3119 = vmatpush1.msra.mxu0 %v1125
    %3120 = vmatprep.subr.mxu0 %v1138
    %3121 = vmatpush1.msra.mxu0 %v1137
    %3122 = vmatprep.subr.mxu0 %v1150
    %3123 = vmatpush1.msra.mxu0 %v1149
    %3124 = vmatprep.subr.mxu0 %v1162
    %3125 = vmatpush1.msra.mxu0 %v1161
    %3126 = vmatprep.subr.mxu0 %v1174
    %3127 = vmatpush1.msra.mxu0 %v1173
    %3128 = vmatprep.mubr.f32.mxu0 %v2806
    %3129 = vmatmul.mubr.f32.gmra.mrb[0].mxu0 %v2805
    %v3130 = vpop.f32.mrb[0].mxu0
    %v3131 = vadd.f32 0.0, %v3130
    %v3132 = vpop.f32.mrb[0].mxu0
    %v3133 = vadd.f32 0.0, %v3132
    %3134 = vdwg.mxu0
    %3135 = vmatprep.subr.mxu0 %v804
    %3136 = vmatpush1.msra.mxu0 %v803
    %3137 = vmatprep.subr.mxu0 %v816
    %3138 = vmatpush1.msra.mxu0 %v815
    %3139 = vmatprep.subr.mxu0 %v828
    %3140 = vmatpush1.msra.mxu0 %v827
    %3141 = vmatprep.subr.mxu0 %v840
    %3142 = vmatpush1.msra.mxu0 %v839
    %3143 = vmatprep.subr.mxu0 %v852
    %3144 = vmatpush1.msra.mxu0 %v851
    %3145 = vmatprep.subr.mxu0 %v864
    %3146 = vmatpush1.msra.mxu0 %v863
    %3147 = vmatprep.subr.mxu0 %v876
    %3148 = vmatpush1.msra.mxu0 %v875
    %3149 = vmatprep.subr.mxu0 %v888
    %3150 = vmatpush1.msra.mxu0 %v887
    %3151 = vmatprep.subr.mxu0 %v900
    %3152 = vmatpush1.msra.mxu0 %v899
    %3153 = vmatprep.subr.mxu0 %v912
    %3154 = vmatpush1.msra.mxu0 %v911
    %3155 = vmatprep.subr.mxu0 %v924
    %3156 = vmatpush1.msra.mxu0 %v923
    %3157 = vmatprep.subr.mxu0 %v936
    %3158 = vmatpush1.msra.mxu0 %v935
    %3159 = vmatprep.subr.mxu0 %v948
    %3160 = vmatpush1.msra.mxu0 %v947
    %3161 = vmatprep.subr.mxu0 %v960
    %3162 = vmatpush1.msra.mxu0 %v959
    %3163 = vmatprep.subr.mxu0 %v972
    %3164 = vmatpush1.msra.mxu0 %v971
    %3165 = vmatprep.subr.mxu0 %v984
    %3166 = vmatpush1.msra.mxu0 %v983
    %3167 = vmatprep.subr.mxu0 %v996
    %3168 = vmatpush1.msra.mxu0 %v995
    %3169 = vmatprep.subr.mxu0 %v1008
    %3170 = vmatpush1.msra.mxu0 %v1007
    %3171 = vmatprep.subr.mxu0 %v1020
    %3172 = vmatpush1.msra.mxu0 %v1019
    %3173 = vmatprep.subr.mxu0 %v1032
    %3174 = vmatpush1.msra.mxu0 %v1031
    %3175 = vmatprep.subr.mxu0 %v1044
    %3176 = vmatpush1.msra.mxu0 %v1043
    %3177 = vmatprep.subr.mxu0 %v1056
    %3178 = vmatpush1.msra.mxu0 %v1055
    %3179 = vmatprep.subr.mxu0 %v1068
    %3180 = vmatpush1.msra.mxu0 %v1067
    %3181 = vmatprep.subr.mxu0 %v1080
    %3182 = vmatpush1.msra.mxu0 %v1079
    %3183 = vmatprep.subr.mxu0 %v1092
    %3184 = vmatpush1.msra.mxu0 %v1091
    %3185 = vmatprep.subr.mxu0 %v1104
    %3186 = vmatpush1.msra.mxu0 %v1103
    %3187 = vmatprep.subr.mxu0 %v1116
    %3188 = vmatpush1.msra.mxu0 %v1115
    %3189 = vmatprep.subr.mxu0 %v1128
    %3190 = vmatpush1.msra.mxu0 %v1127
    %3191 = vmatprep.subr.mxu0 %v1140
    %3192 = vmatpush1.msra.mxu0 %v1139
    %3193 = vmatprep.subr.mxu0 %v1152
    %3194 = vmatpush1.msra.mxu0 %v1151
    %3195 = vmatprep.subr.mxu0 %v1164
    %3196 = vmatpush1.msra.mxu0 %v1163
    %3197 = vmatprep.subr.mxu0 %v1176
    %3198 = vmatpush1.msra.mxu0 %v1175
    %3199 = vmatprep.mubr.f32.mxu0 %v2806
    %3200 = vmatmul.mubr.f32.gmra.mrb[0].mxu0 %v2805
    %v3201 = vpop.f32.mrb[0].mxu0
    %v3202 = vadd.f32 0.0, %v3201
    %v3203 = vpop.f32.mrb[0].mxu0
    %v3204 = vadd.f32 0.0, %v3203
    %3205 = vdwg.mxu0
    %3206 = vmatprep.subr.mxu0 %v806
    %3207 = vmatpush1.msra.mxu0 %v805
    %3208 = vmatprep.subr.mxu0 %v818
    %3209 = vmatpush1.msra.mxu0 %v817
    %3210 = vmatprep.subr.mxu0 %v830
    %3211 = vmatpush1.msra.mxu0 %v829
    %3212 = vmatprep.subr.mxu0 %v842
    %3213 = vmatpush1.msra.mxu0 %v841
    %3214 = vmatprep.subr.mxu0 %v854
    %3215 = vmatpush1.msra.mxu0 %v853
    %3216 = vmatprep.subr.mxu0 %v866
    %3217 = vmatpush1.msra.mxu0 %v865
    %3218 = vmatprep.subr.mxu0 %v878
    %3219 = vmatpush1.msra.mxu0 %v877
    %3220 = vmatprep.subr.mxu0 %v890
    %3221 = vmatpush1.msra.mxu0 %v889
    %3222 = vmatprep.subr.mxu0 %v902
    %3223 = vmatpush1.msra.mxu0 %v901
    %3224 = vmatprep.subr.mxu0 %v914
    %3225 = vmatpush1.msra.mxu0 %v913
    %3226 = vmatprep.subr.mxu0 %v926
    %3227 = vmatpush1.msra.mxu0 %v925
    %3228 = vmatprep.subr.mxu0 %v938
    %3229 = vmatpush1.msra.mxu0 %v937
    %3230 = vmatprep.subr.mxu0 %v950
    %3231 = vmatpush1.msra.mxu0 %v949
    %3232 = vmatprep.subr.mxu0 %v962
    %3233 = vmatpush1.msra.mxu0 %v961
    %3234 = vmatprep.subr.mxu0 %v974
    %3235 = vmatpush1.msra.mxu0 %v973
    %3236 = vmatprep.subr.mxu0 %v986
    %3237 = vmatpush1.msra.mxu0 %v985
    %3238 = vmatprep.subr.mxu0 %v998
    %3239 = vmatpush1.msra.mxu0 %v997
    %3240 = vmatprep.subr.mxu0 %v1010
    %3241 = vmatpush1.msra.mxu0 %v1009
    %3242 = vmatprep.subr.mxu0 %v1022
    %3243 = vmatpush1.msra.mxu0 %v1021
    %3244 = vmatprep.subr.mxu0 %v1034
    %3245 = vmatpush1.msra.mxu0 %v1033
    %3246 = vmatprep.subr.mxu0 %v1046
    %3247 = vmatpush1.msra.mxu0 %v1045
    %3248 = vmatprep.subr.mxu0 %v1058
    %3249 = vmatpush1.msra.mxu0 %v1057
    %3250 = vmatprep.subr.mxu0 %v1070
    %3251 = vmatpush1.msra.mxu0 %v1069
    %3252 = vmatprep.subr.mxu0 %v1082
    %3253 = vmatpush1.msra.mxu0 %v1081
    %3254 = vmatprep.subr.mxu0 %v1094
    %3255 = vmatpush1.msra.mxu0 %v1093
    %3256 = vmatprep.subr.mxu0 %v1106
    %3257 = vmatpush1.msra.mxu0 %v1105
    %3258 = vmatprep.subr.mxu0 %v1118
    %3259 = vmatpush1.msra.mxu0 %v1117
    %3260 = vmatprep.subr.mxu0 %v1130
    %3261 = vmatpush1.msra.mxu0 %v1129
    %3262 = vmatprep.subr.mxu0 %v1142
    %3263 = vmatpush1.msra.mxu0 %v1141
    %3264 = vmatprep.subr.mxu0 %v1154
    %3265 = vmatpush1.msra.mxu0 %v1153
    %3266 = vmatprep.subr.mxu0 %v1166
    %3267 = vmatpush1.msra.mxu0 %v1165
    %3268 = vmatprep.subr.mxu0 %v1178
    %3269 = vmatpush1.msra.mxu0 %v1177
    %3270 = vmatprep.mubr.f32.mxu0 %v2806
    %3271 = vmatmul.mubr.f32.gmra.mrb[0].mxu0 %v2805
    %v3272 = vpop.f32.mrb[0].mxu0
    %v3273 = vadd.f32 0.0, %v3272
    %v3274 = vpop.f32.mrb[0].mxu0
    %v3275 = vadd.f32 0.0, %v3274
    %3276 = vdwg.mxu0
    %v3277 = vadd.f32 %v3131, %v718
    %v3278 = vadd.f32 %v3133, %v722
    %v3279 = vadd.f32 %v3202, %v726
    %v3280 = vadd.f32 %v3204, %v730
    %v3281 = vadd.f32 %v3273, %v734
    %v3282 = vadd.f32 %v3275, %v738
    %3283 = vmatprep.subr.mxu0 %v1612
    %3284 = vmatpush1.msra.mxu0 %v1611
    %3285 = vmatprep.subr.mxu0 %v1618
    %3286 = vmatpush1.msra.mxu0 %v1617
    %3287 = vmatprep.subr.mxu0 %v1624
    %3288 = vmatpush1.msra.mxu0 %v1623
    %3289 = vmatprep.subr.mxu0 %v1630
    %3290 = vmatpush1.msra.mxu0 %v1629
    %3291 = vmatprep.subr.mxu0 %v1636
    %3292 = vmatpush1.msra.mxu0 %v1635
    %3293 = vmatprep.subr.mxu0 %v1642
    %3294 = vmatpush1.msra.mxu0 %v1641
    %3295 = vmatprep.subr.mxu0 %v1648
    %3296 = vmatpush1.msra.mxu0 %v1647
    %3297 = vmatprep.subr.mxu0 %v1654
    %3298 = vmatpush1.msra.mxu0 %v1653
    %3299 = vmatprep.subr.mxu0 %v1660
    %3300 = vmatpush1.msra.mxu0 %v1659
    %3301 = vmatprep.subr.mxu0 %v1666
    %3302 = vmatpush1.msra.mxu0 %v1665
    %3303 = vmatprep.subr.mxu0 %v1672
    %3304 = vmatpush1.msra.mxu0 %v1671
    %3305 = vmatprep.subr.mxu0 %v1678
    %3306 = vmatpush1.msra.mxu0 %v1677
    %3307 = vmatprep.subr.mxu0 %v1684
    %3308 = vmatpush1.msra.mxu0 %v1683
    %3309 = vmatprep.subr.mxu0 %v1690
    %3310 = vmatpush1.msra.mxu0 %v1689
    %3311 = vmatprep.subr.mxu0 %v1696
    %3312 = vmatpush1.msra.mxu0 %v1695
    %3313 = vmatprep.subr.mxu0 %v1702
    %3314 = vmatpush1.msra.mxu0 %v1701
    %3315 = vmatprep.subr.mxu0 %v1708
    %3316 = vmatpush1.msra.mxu0 %v1707
    %3317 = vmatprep.subr.mxu0 %v1714
    %3318 = vmatpush1.msra.mxu0 %v1713
    %3319 = vmatprep.subr.mxu0 %v1720
    %3320 = vmatpush1.msra.mxu0 %v1719
    %3321 = vmatprep.subr.mxu0 %v1726
    %3322 = vmatpush1.msra.mxu0 %v1725
    %3323 = vmatprep.subr.mxu0 %v1732
    %3324 = vmatpush1.msra.mxu0 %v1731
    %3325 = vmatprep.subr.mxu0 %v1738
    %3326 = vmatpush1.msra.mxu0 %v1737
    %3327 = vmatprep.subr.mxu0 %v1744
    %3328 = vmatpush1.msra.mxu0 %v1743
    %3329 = vmatprep.subr.mxu0 %v1750
    %3330 = vmatpush1.msra.mxu0 %v1749
    %3331 = vmatprep.subr.mxu0 %v1756
    %3332 = vmatpush1.msra.mxu0 %v1755
    %3333 = vmatprep.subr.mxu0 %v1762
    %3334 = vmatpush1.msra.mxu0 %v1761
    %3335 = vmatprep.subr.mxu0 %v1768
    %3336 = vmatpush1.msra.mxu0 %v1767
    %3337 = vmatprep.subr.mxu0 %v1774
    %3338 = vmatpush1.msra.mxu0 %v1773
    %3339 = vmatprep.subr.mxu0 %v1780
    %3340 = vmatpush1.msra.mxu0 %v1779
    %3341 = vmatprep.subr.mxu0 %v1786
    %3342 = vmatpush1.msra.mxu0 %v1785
    %3343 = vmatprep.subr.mxu0 %v1792
    %3344 = vmatpush1.msra.mxu0 %v1791
    %3345 = vmatprep.subr.mxu0 %v1798
    %3346 = vmatpush1.msra.mxu0 %v1797
    %3347 = vmatprep.mubr.f32.mxu0 %v2850
    %3348 = vmatmul.mubr.f32.gmra.mrb[0].mxu0 %v2849
    %v3349 = vpop.f32.mrb[0].mxu0
    %v3350 = vadd.f32 0.0, %v3349
    %v3351 = vpop.f32.mrb[0].mxu0
    %v3352 = vadd.f32 0.0, %v3351
    %3353 = vdwg.mxu0
    %3354 = vmatprep.subr.mxu0 %v1614
    %3355 = vmatpush1.msra.mxu0 %v1613
    %3356 = vmatprep.subr.mxu0 %v1620
    %3357 = vmatpush1.msra.mxu0 %v1619
    %3358 = vmatprep.subr.mxu0 %v1626
    %3359 = vmatpush1.msra.mxu0 %v1625
    %3360 = vmatprep.subr.mxu0 %v1632
    %3361 = vmatpush1.msra.mxu0 %v1631
    %3362 = vmatprep.subr.mxu0 %v1638
    %3363 = vmatpush1.msra.mxu0 %v1637
    %3364 = vmatprep.subr.mxu0 %v1644
    %3365 = vmatpush1.msra.mxu0 %v1643
    %3366 = vmatprep.subr.mxu0 %v1650
    %3367 = vmatpush1.msra.mxu0 %v1649
    %3368 = vmatprep.subr.mxu0 %v1656
    %3369 = vmatpush1.msra.mxu0 %v1655
    %3370 = vmatprep.subr.mxu0 %v1662
    %3371 = vmatpush1.msra.mxu0 %v1661
    %3372 = vmatprep.subr.mxu0 %v1668
    %3373 = vmatpush1.msra.mxu0 %v1667
    %3374 = vmatprep.subr.mxu0 %v1674
    %3375 = vmatpush1.msra.mxu0 %v1673
    %3376 = vmatprep.subr.mxu0 %v1680
    %3377 = vmatpush1.msra.mxu0 %v1679
    %3378 = vmatprep.subr.mxu0 %v1686
    %3379 = vmatpush1.msra.mxu0 %v1685
    %3380 = vmatprep.subr.mxu0 %v1692
    %3381 = vmatpush1.msra.mxu0 %v1691
    %3382 = vmatprep.subr.mxu0 %v1698
    %3383 = vmatpush1.msra.mxu0 %v1697
    %3384 = vmatprep.subr.mxu0 %v1704
    %3385 = vmatpush1.msra.mxu0 %v1703
    %3386 = vmatprep.subr.mxu0 %v1710
    %3387 = vmatpush1.msra.mxu0 %v1709
    %3388 = vmatprep.subr.mxu0 %v1716
    %3389 = vmatpush1.msra.mxu0 %v1715
    %3390 = vmatprep.subr.mxu0 %v1722
    %3391 = vmatpush1.msra.mxu0 %v1721
    %3392 = vmatprep.subr.mxu0 %v1728
    %3393 = vmatpush1.msra.mxu0 %v1727
    %3394 = vmatprep.subr.mxu0 %v1734
    %3395 = vmatpush1.msra.mxu0 %v1733
    %3396 = vmatprep.subr.mxu0 %v1740
    %3397 = vmatpush1.msra.mxu0 %v1739
    %3398 = vmatprep.subr.mxu0 %v1746
    %3399 = vmatpush1.msra.mxu0 %v1745
    %3400 = vmatprep.subr.mxu0 %v1752
    %3401 = vmatpush1.msra.mxu0 %v1751
    %3402 = vmatprep.subr.mxu0 %v1758
    %3403 = vmatpush1.msra.mxu0 %v1757
    %3404 = vmatprep.subr.mxu0 %v1764
    %3405 = vmatpush1.msra.mxu0 %v1763
    %3406 = vmatprep.subr.mxu0 %v1770
    %3407 = vmatpush1.msra.mxu0 %v1769
    %3408 = vmatprep.subr.mxu0 %v1776
    %3409 = vmatpush1.msra.mxu0 %v1775
    %3410 = vmatprep.subr.mxu0 %v1782
    %3411 = vmatpush1.msra.mxu0 %v1781
    %3412 = vmatprep.subr.mxu0 %v1788
    %3413 = vmatpush1.msra.mxu0 %v1787
    %3414 = vmatprep.subr.mxu0 %v1794
    %3415 = vmatpush1.msra.mxu0 %v1793
    %3416 = vmatprep.subr.mxu0 %v1800
    %3417 = vmatpush1.msra.mxu0 %v1799
    %3418 = vmatprep.mubr.f32.mxu0 %v2850
    %3419 = vmatmul.mubr.f32.gmra.mrb[0].mxu0 %v2849
    %v3420 = vpop.f32.mrb[0].mxu0
    %v3421 = vadd.f32 0.0, %v3420
    %v3422 = vpop.f32.mrb[0].mxu0
    %v3423 = vadd.f32 0.0, %v3422
    %3424 = vdwg.mxu0
    %3425 = vmatprep.subr.mxu0 %v1616
    %3426 = vmatpush1.msra.mxu0 %v1615
    %3427 = vmatprep.subr.mxu0 %v1622
    %3428 = vmatpush1.msra.mxu0 %v1621
    %3429 = vmatprep.subr.mxu0 %v1628
    %3430 = vmatpush1.msra.mxu0 %v1627
    %3431 = vmatprep.subr.mxu0 %v1634
    %3432 = vmatpush1.msra.mxu0 %v1633
    %3433 = vmatprep.subr.mxu0 %v1640
    %3434 = vmatpush1.msra.mxu0 %v1639
    %3435 = vmatprep.subr.mxu0 %v1646
    %3436 = vmatpush1.msra.mxu0 %v1645
    %3437 = vmatprep.subr.mxu0 %v1652
    %3438 = vmatpush1.msra.mxu0 %v1651
    %3439 = vmatprep.subr.mxu0 %v1658
    %3440 = vmatpush1.msra.mxu0 %v1657
    %3441 = vmatprep.subr.mxu0 %v1664
    %3442 = vmatpush1.msra.mxu0 %v1663
    %3443 = vmatprep.subr.mxu0 %v1670
    %3444 = vmatpush1.msra.mxu0 %v1669
    %3445 = vmatprep.subr.mxu0 %v1676
    %3446 = vmatpush1.msra.mxu0 %v1675
    %3447 = vmatprep.subr.mxu0 %v1682
    %3448 = vmatpush1.msra.mxu0 %v1681
    %3449 = vmatprep.subr.mxu0 %v1688
    %3450 = vmatpush1.msra.mxu0 %v1687
    %3451 = vmatprep.subr.mxu0 %v1694
    %3452 = vmatpush1.msra.mxu0 %v1693
    %3453 = vmatprep.subr.mxu0 %v1700
    %3454 = vmatpush1.msra.mxu0 %v1699
    %3455 = vmatprep.subr.mxu0 %v1706
    %3456 = vmatpush1.msra.mxu0 %v1705
    %3457 = vmatprep.subr.mxu0 %v1712
    %3458 = vmatpush1.msra.mxu0 %v1711
    %3459 = vmatprep.subr.mxu0 %v1718
    %3460 = vmatpush1.msra.mxu0 %v1717
    %3461 = vmatprep.subr.mxu0 %v1724
    %3462 = vmatpush1.msra.mxu0 %v1723
    %3463 = vmatprep.subr.mxu0 %v1730
    %3464 = vmatpush1.msra.mxu0 %v1729
    %3465 = vmatprep.subr.mxu0 %v1736
    %3466 = vmatpush1.msra.mxu0 %v1735
    %3467 = vmatprep.subr.mxu0 %v1742
    %3468 = vmatpush1.msra.mxu0 %v1741
    %3469 = vmatprep.subr.mxu0 %v1748
    %3470 = vmatpush1.msra.mxu0 %v1747
    %3471 = vmatprep.subr.mxu0 %v1754
    %3472 = vmatpush1.msra.mxu0 %v1753
    %3473 = vmatprep.subr.mxu0 %v1760
    %3474 = vmatpush1.msra.mxu0 %v1759
    %3475 = vmatprep.subr.mxu0 %v1766
    %3476 = vmatpush1.msra.mxu0 %v1765
    %3477 = vmatprep.subr.mxu0 %v1772
    %3478 = vmatpush1.msra.mxu0 %v1771
    %3479 = vmatprep.subr.mxu0 %v1778
    %3480 = vmatpush1.msra.mxu0 %v1777
    %3481 = vmatprep.subr.mxu0 %v1784
    %3482 = vmatpush1.msra.mxu0 %v1783
    %3483 = vmatprep.subr.mxu0 %v1790
    %3484 = vmatpush1.msra.mxu0 %v1789
    %3485 = vmatprep.subr.mxu0 %v1796
    %3486 = vmatpush1.msra.mxu0 %v1795
    %3487 = vmatprep.subr.mxu0 %v1802
    %3488 = vmatpush1.msra.mxu0 %v1801
    %3489 = vmatprep.mubr.f32.mxu0 %v2850
    %3490 = vmatmul.mubr.f32.gmra.mrb[0].mxu0 %v2849
    %v3491 = vpop.f32.mrb[0].mxu0
    %v3492 = vadd.f32 0.0, %v3491
    %v3493 = vpop.f32.mrb[0].mxu0
    %v3494 = vadd.f32 0.0, %v3493
    %3495 = vdwg.mxu0
    %s3496 = scalar_lea.vmem [#allocation2], 144
    %v3497 = vld [vmem:[%s3496] sm:$0xff]
    %v3498 = vld [vmem:[%s3496 + $0x8] sm:$0xff]
    %v3499 = vld [vmem:[%s3496 + $0x10] sm:$0xff]
    %v3500 = vld [vmem:[%s3496 + $0x18] sm:$0xff]
    %v3501 = vld [vmem:[%s3496 + $0x20] sm:$0xff]
    %v3502 = vld [vmem:[%s3496 + $0x28] sm:$0xff]
    %v3503 = vadd.f32 %v3497, %v2918
    %v3504 = vadd.f32 %v3498, %v2920
    %v3505 = vxor.u32 %v3503, 2147483648
    %v3506 = vxor.u32 %v3504, 2147483648
    %v3507 = vmul.f32 %v3505, 1.442695
    %v3508 = vpow.pop %v3507
    %v3509 = vmul.f32 %v3506, 1.442695
    %v3510 = vpow.pop %v3509
    %v3511 = vadd.f32 %v3508, 1.0
    %v3512 = vadd.f32 %v3510, 1.0
    %v3513 = vrcp.pop %v3511
    %v3514 = vmul.f32 1.0, %v3513
    %v3515 = vrcp.pop %v3512
    %v3516 = vmul.f32 1.0, %v3515
    %v3517 = vadd.f32 %v3499, %v2989
    %v3518 = vadd.f32 %v3500, %v2991
    %v3519 = vxor.u32 %v3517, 2147483648
    %v3520 = vxor.u32 %v3518, 2147483648
    %v3521 = vmul.f32 %v3519, 1.442695
    %v3522 = vpow.pop %v3521
    %v3523 = vmul.f32 %v3520, 1.442695
    %v3524 = vpow.pop %v3523
    %v3525 = vadd.f32 %v3522, 1.0
    %v3526 = vadd.f32 %v3524, 1.0
    %v3527 = vrcp.pop %v3525
    %v3528 = vmul.f32 1.0, %v3527
    %v3529 = vrcp.pop %v3526
    %v3530 = vmul.f32 1.0, %v3529
    %v3531 = vadd.f32 %v3060, %v694
    %v3532 = vadd.f32 %v3062, %v698
    %v3533 = vmul.f32 %v3514, %v3531
    %v3534 = vmul.f32 %v3516, %v3532
    %v3535 = vadd.f32 %v3501, %v3533
    %v3536 = vadd.f32 %v3502, %v3534
    %v3537 = vtanh.pop %v3535
    %v3538 = vtanh.pop %v3536
    %v3539 = vsub.f32 1.0, %v3528
    %v3540 = vsub.f32 1.0, %v3530
    %v3541 = vmul.f32 %v3539, %v3537
    %v3542 = vmul.f32 %v3540, %v3538
    %v3543 = vmul.f32 %v3528, %v2805
    %v3544 = vmul.f32 %v3530, %v2806
    %v3545 = vadd.f32 %v3541, %v3543
    %v3546 = vadd.f32 %v3542, %v3544
    %v3547 = vadd.f32 %v3277, %v3350
    %v3548 = vadd.f32 %v3278, %v3352
    %v3549 = vxor.u32 %v3547, 2147483648
    %v3550 = vxor.u32 %v3548, 2147483648
    %v3551 = vmul.f32 %v3549, 1.442695
    %v3552 = vpow.pop %v3551
    %v3553 = vmul.f32 %v3550, 1.442695
    %v3554 = vpow.pop %v3553
    %v3555 = vadd.f32 %v3552, 1.0
    %v3556 = vadd.f32 %v3554, 1.0
    %v3557 = vrcp.pop %v3555
    %v3558 = vmul.f32 1.0, %v3557
    %v3559 = vrcp.pop %v3556
    %v3560 = vmul.f32 1.0, %v3559
    %v3561 = vadd.f32 %v3279, %v3421
    %v3562 = vadd.f32 %v3280, %v3423
    %v3563 = vxor.u32 %v3561, 2147483648
    %v3564 = vxor.u32 %v3562, 2147483648
    %v3565 = vmul.f32 %v3563, 1.442695
    %v3566 = vpow.pop %v3565
    %v3567 = vmul.f32 %v3564, 1.442695
    %v3568 = vpow.pop %v3567
    %v3569 = vadd.f32 %v3566, 1.0
    %v3570 = vadd.f32 %v3568, 1.0
    %v3571 = vrcp.pop %v3569
    %v3572 = vmul.f32 1.0, %v3571
    %v3573 = vrcp.pop %v3570
    %v3574 = vmul.f32 1.0, %v3573
    %v3575 = vadd.f32 %v3492, %v706
    %v3576 = vadd.f32 %v3494, %v710
    %v3577 = vmul.f32 %v3558, %v3575
    %v3578 = vmul.f32 %v3560, %v3576
    %v3579 = vadd.f32 %v3281, %v3577
    %v3580 = vadd.f32 %v3282, %v3578
    %v3581 = vtanh.pop %v3579
    %v3582 = vtanh.pop %v3580
    %v3583 = vsub.f32 1.0, %v3572
    %v3584 = vsub.f32 1.0, %v3574
    %v3585 = vmul.f32 %v3583, %v3581
    %v3586 = vmul.f32 %v3584, %v3582
    %v3587 = vmul.f32 %v3572, %v2849
    %v3588 = vmul.f32 %v3574, %v2850
    %v3589 = vadd.f32 %v3585, %v3587
    %v3590 = vadd.f32 %v3586, %v3588
    %3591 = vmatprep.subr.mxu0 %v796
    %3592 = vmatpush1.msra.mxu0 %v795
    %3593 = vmatprep.subr.mxu0 %v808
    %3594 = vmatpush1.msra.mxu0 %v807
    %3595 = vmatprep.subr.mxu0 %v820
    %3596 = vmatpush1.msra.mxu0 %v819
    %3597 = vmatprep.subr.mxu0 %v832
    %3598 = vmatpush1.msra.mxu0 %v831
    %3599 = vmatprep.subr.mxu0 %v844
    %3600 = vmatpush1.msra.mxu0 %v843
    %3601 = vmatprep.subr.mxu0 %v856
    %3602 = vmatpush1.msra.mxu0 %v855
    %3603 = vmatprep.subr.mxu0 %v868
    %3604 = vmatpush1.msra.mxu0 %v867
    %3605 = vmatprep.subr.mxu0 %v880
    %3606 = vmatpush1.msra.mxu0 %v879
    %3607 = vmatprep.subr.mxu0 %v892
    %3608 = vmatpush1.msra.mxu0 %v891
    %3609 = vmatprep.subr.mxu0 %v904
    %3610 = vmatpush1.msra.mxu0 %v903
    %3611 = vmatprep.subr.mxu0 %v916
    %3612 = vmatpush1.msra.mxu0 %v915
    %3613 = vmatprep.subr.mxu0 %v928
    %3614 = vmatpush1.msra.mxu0 %v927
    %3615 = vmatprep.subr.mxu0 %v940
    %3616 = vmatpush1.msra.mxu0 %v939
    %3617 = vmatprep.subr.mxu0 %v952
    %3618 = vmatpush1.msra.mxu0 %v951
    %3619 = vmatprep.subr.mxu0 %v964
    %3620 = vmatpush1.msra.mxu0 %v963
    %3621 = vmatprep.subr.mxu0 %v976
    %3622 = vmatpush1.msra.mxu0 %v975
    %3623 = vmatprep.subr.mxu0 %v988
    %3624 = vmatpush1.msra.mxu0 %v987
    %3625 = vmatprep.subr.mxu0 %v1000
    %3626 = vmatpush1.msra.mxu0 %v999
    %3627 = vmatprep.subr.mxu0 %v1012
    %3628 = vmatpush1.msra.mxu0 %v1011
    %3629 = vmatprep.subr.mxu0 %v1024
    %3630 = vmatpush1.msra.mxu0 %v1023
    %3631 = vmatprep.subr.mxu0 %v1036
    %3632 = vmatpush1.msra.mxu0 %v1035
    %3633 = vmatprep.subr.mxu0 %v1048
    %3634 = vmatpush1.msra.mxu0 %v1047
    %3635 = vmatprep.subr.mxu0 %v1060
    %3636 = vmatpush1.msra.mxu0 %v1059
    %3637 = vmatprep.subr.mxu0 %v1072
    %3638 = vmatpush1.msra.mxu0 %v1071
    %3639 = vmatprep.subr.mxu0 %v1084
    %3640 = vmatpush1.msra.mxu0 %v1083
    %3641 = vmatprep.subr.mxu0 %v1096
    %3642 = vmatpush1.msra.mxu0 %v1095
    %3643 = vmatprep.subr.mxu0 %v1108
    %3644 = vmatpush1.msra.mxu0 %v1107
    %3645 = vmatprep.subr.mxu0 %v1120
    %3646 = vmatpush1.msra.mxu0 %v1119
    %3647 = vmatprep.subr.mxu0 %v1132
    %3648 = vmatpush1.msra.mxu0 %v1131
    %3649 = vmatprep.subr.mxu0 %v1144
    %3650 = vmatpush1.msra.mxu0 %v1143
    %3651 = vmatprep.subr.mxu0 %v1156
    %3652 = vmatpush1.msra.mxu0 %v1155
    %3653 = vmatprep.subr.mxu0 %v1168
    %3654 = vmatpush1.msra.mxu0 %v1167
    %3655 = vmatprep.mubr.f32.mxu0 %v3546
    %3656 = vmatmul.mubr.f32.gmra.mrb[0].mxu0 %v3545
    %v3657 = vpop.f32.mrb[0].mxu0
    %v3658 = vadd.f32 0.0, %v3657
    %v3659 = vpop.f32.mrb[0].mxu0
    %v3660 = vadd.f32 0.0, %v3659
    %3661 = vdwg.mxu0
    %3662 = vmatprep.subr.mxu0 %v798
    %3663 = vmatpush1.msra.mxu0 %v797
    %3664 = vmatprep.subr.mxu0 %v810
    %3665 = vmatpush1.msra.mxu0 %v809
    %3666 = vmatprep.subr.mxu0 %v822
    %3667 = vmatpush1.msra.mxu0 %v821
    %3668 = vmatprep.subr.mxu0 %v834
    %3669 = vmatpush1.msra.mxu0 %v833
    %3670 = vmatprep.subr.mxu0 %v846
    %3671 = vmatpush1.msra.mxu0 %v845
    %3672 = vmatprep.subr.mxu0 %v858
    %3673 = vmatpush1.msra.mxu0 %v857
    %3674 = vmatprep.subr.mxu0 %v870
    %3675 = vmatpush1.msra.mxu0 %v869
    %3676 = vmatprep.subr.mxu0 %v882
    %3677 = vmatpush1.msra.mxu0 %v881
    %3678 = vmatprep.subr.mxu0 %v894
    %3679 = vmatpush1.msra.mxu0 %v893
    %3680 = vmatprep.subr.mxu0 %v906
    %3681 = vmatpush1.msra.mxu0 %v905
    %3682 = vmatprep.subr.mxu0 %v918
    %3683 = vmatpush1.msra.mxu0 %v917
    %3684 = vmatprep.subr.mxu0 %v930
    %3685 = vmatpush1.msra.mxu0 %v929
    %3686 = vmatprep.subr.mxu0 %v942
    %3687 = vmatpush1.msra.mxu0 %v941
    %3688 = vmatprep.subr.mxu0 %v954
    %3689 = vmatpush1.msra.mxu0 %v953
    %3690 = vmatprep.subr.mxu0 %v966
    %3691 = vmatpush1.msra.mxu0 %v965
    %3692 = vmatprep.subr.mxu0 %v978
    %3693 = vmatpush1.msra.mxu0 %v977
    %3694 = vmatprep.subr.mxu0 %v990
    %3695 = vmatpush1.msra.mxu0 %v989
    %3696 = vmatprep.subr.mxu0 %v1002
    %3697 = vmatpush1.msra.mxu0 %v1001
    %3698 = vmatprep.subr.mxu0 %v1014
    %3699 = vmatpush1.msra.mxu0 %v1013
    %3700 = vmatprep.subr.mxu0 %v1026
    %3701 = vmatpush1.msra.mxu0 %v1025
    %3702 = vmatprep.subr.mxu0 %v1038
    %3703 = vmatpush1.msra.mxu0 %v1037
    %3704 = vmatprep.subr.mxu0 %v1050
    %3705 = vmatpush1.msra.mxu0 %v1049
    %3706 = vmatprep.subr.mxu0 %v1062
    %3707 = vmatpush1.msra.mxu0 %v1061
    %3708 = vmatprep.subr.mxu0 %v1074
    %3709 = vmatpush1.msra.mxu0 %v1073
    %3710 = vmatprep.subr.mxu0 %v1086
    %3711 = vmatpush1.msra.mxu0 %v1085
    %3712 = vmatprep.subr.mxu0 %v1098
    %3713 = vmatpush1.msra.mxu0 %v1097
    %3714 = vmatprep.subr.mxu0 %v1110
    %3715 = vmatpush1.msra.mxu0 %v1109
    %3716 = vmatprep.subr.mxu0 %v1122
    %3717 = vmatpush1.msra.mxu0 %v1121
    %3718 = vmatprep.subr.mxu0 %v1134
    %3719 = vmatpush1.msra.mxu0 %v1133
    %3720 = vmatprep.subr.mxu0 %v1146
    %3721 = vmatpush1.msra.mxu0 %v1145
    %3722 = vmatprep.subr.mxu0 %v1158
    %3723 = vmatpush1.msra.mxu0 %v1157
    %3724 = vmatprep.subr.mxu0 %v1170
    %3725 = vmatpush1.msra.mxu0 %v1169
    %3726 = vmatprep.mubr.f32.mxu0 %v3546
    %3727 = vmatmul.mubr.f32.gmra.mrb[0].mxu0 %v3545
    %v3728 = vpop.f32.mrb[0].mxu0
    %v3729 = vadd.f32 0.0, %v3728
    %v3730 = vpop.f32.mrb[0].mxu0
    %v3731 = vadd.f32 0.0, %v3730
    %3732 = vdwg.mxu0
    %3733 = vmatprep.subr.mxu0 %v800
    %3734 = vmatpush1.msra.mxu0 %v799
    %3735 = vmatprep.subr.mxu0 %v812
    %3736 = vmatpush1.msra.mxu0 %v811
    %3737 = vmatprep.subr.mxu0 %v824
    %3738 = vmatpush1.msra.mxu0 %v823
    %3739 = vmatprep.subr.mxu0 %v836
    %3740 = vmatpush1.msra.mxu0 %v835
    %3741 = vmatprep.subr.mxu0 %v848
    %3742 = vmatpush1.msra.mxu0 %v847
    %3743 = vmatprep.subr.mxu0 %v860
    %3744 = vmatpush1.msra.mxu0 %v859
    %3745 = vmatprep.subr.mxu0 %v872
    %3746 = vmatpush1.msra.mxu0 %v871
    %3747 = vmatprep.subr.mxu0 %v884
    %3748 = vmatpush1.msra.mxu0 %v883
    %3749 = vmatprep.subr.mxu0 %v896
    %3750 = vmatpush1.msra.mxu0 %v895
    %3751 = vmatprep.subr.mxu0 %v908
    %3752 = vmatpush1.msra.mxu0 %v907
    %3753 = vmatprep.subr.mxu0 %v920
    %3754 = vmatpush1.msra.mxu0 %v919
    %3755 = vmatprep.subr.mxu0 %v932
    %3756 = vmatpush1.msra.mxu0 %v931
    %3757 = vmatprep.subr.mxu0 %v944
    %3758 = vmatpush1.msra.mxu0 %v943
    %3759 = vmatprep.subr.mxu0 %v956
    %3760 = vmatpush1.msra.mxu0 %v955
    %3761 = vmatprep.subr.mxu0 %v968
    %3762 = vmatpush1.msra.mxu0 %v967
    %3763 = vmatprep.subr.mxu0 %v980
    %3764 = vmatpush1.msra.mxu0 %v979
    %3765 = vmatprep.subr.mxu0 %v992
    %3766 = vmatpush1.msra.mxu0 %v991
    %3767 = vmatprep.subr.mxu0 %v1004
    %3768 = vmatpush1.msra.mxu0 %v1003
    %3769 = vmatprep.subr.mxu0 %v1016
    %3770 = vmatpush1.msra.mxu0 %v1015
    %3771 = vmatprep.subr.mxu0 %v1028
    %3772 = vmatpush1.msra.mxu0 %v1027
    %3773 = vmatprep.subr.mxu0 %v1040
    %3774 = vmatpush1.msra.mxu0 %v1039
    %3775 = vmatprep.subr.mxu0 %v1052
    %3776 = vmatpush1.msra.mxu0 %v1051
    %3777 = vmatprep.subr.mxu0 %v1064
    %3778 = vmatpush1.msra.mxu0 %v1063
    %3779 = vmatprep.subr.mxu0 %v1076
    %3780 = vmatpush1.msra.mxu0 %v1075
    %3781 = vmatprep.subr.mxu0 %v1088
    %3782 = vmatpush1.msra.mxu0 %v1087
    %3783 = vmatprep.subr.mxu0 %v1100
    %3784 = vmatpush1.msra.mxu0 %v1099
    %3785 = vmatprep.subr.mxu0 %v1112
    %3786 = vmatpush1.msra.mxu0 %v1111
    %3787 = vmatprep.subr.mxu0 %v1124
    %3788 = vmatpush1.msra.mxu0 %v1123
    %3789 = vmatprep.subr.mxu0 %v1136
    %3790 = vmatpush1.msra.mxu0 %v1135
    %3791 = vmatprep.subr.mxu0 %v1148
    %3792 = vmatpush1.msra.mxu0 %v1147
    %3793 = vmatprep.subr.mxu0 %v1160
    %3794 = vmatpush1.msra.mxu0 %v1159
    %3795 = vmatprep.subr.mxu0 %v1172
    %3796 = vmatpush1.msra.mxu0 %v1171
    %3797 = vmatprep.mubr.f32.mxu0 %v3546
    %3798 = vmatmul.mubr.f32.gmra.mrb[0].mxu0 %v3545
    %v3799 = vpop.f32.mrb[0].mxu0
    %v3800 = vadd.f32 0.0, %v3799
    %v3801 = vpop.f32.mrb[0].mxu0
    %v3802 = vadd.f32 0.0, %v3801
    %3803 = vdwg.mxu0
    %3804 = vmatprep.subr.mxu0 %v802
    %3805 = vmatpush1.msra.mxu0 %v801
    %3806 = vmatprep.subr.mxu0 %v814
    %3807 = vmatpush1.msra.mxu0 %v813
    %3808 = vmatprep.subr.mxu0 %v826
    %3809 = vmatpush1.msra.mxu0 %v825
    %3810 = vmatprep.subr.mxu0 %v838
    %3811 = vmatpush1.msra.mxu0 %v837
    %3812 = vmatprep.subr.mxu0 %v850
    %3813 = vmatpush1.msra.mxu0 %v849
    %3814 = vmatprep.subr.mxu0 %v862
    %3815 = vmatpush1.msra.mxu0 %v861
    %3816 = vmatprep.subr.mxu0 %v874
    %3817 = vmatpush1.msra.mxu0 %v873
    %3818 = vmatprep.subr.mxu0 %v886
    %3819 = vmatpush1.msra.mxu0 %v885
    %3820 = vmatprep.subr.mxu0 %v898
    %3821 = vmatpush1.msra.mxu0 %v897
    %3822 = vmatprep.subr.mxu0 %v910
    %3823 = vmatpush1.msra.mxu0 %v909
    %3824 = vmatprep.subr.mxu0 %v922
    %3825 = vmatpush1.msra.mxu0 %v921
    %3826 = vmatprep.subr.mxu0 %v934
    %3827 = vmatpush1.msra.mxu0 %v933
    %3828 = vmatprep.subr.mxu0 %v946
    %3829 = vmatpush1.msra.mxu0 %v945
    %3830 = vmatprep.subr.mxu0 %v958
    %3831 = vmatpush1.msra.mxu0 %v957
    %3832 = vmatprep.subr.mxu0 %v970
    %3833 = vmatpush1.msra.mxu0 %v969
    %3834 = vmatprep.subr.mxu0 %v982
    %3835 = vmatpush1.msra.mxu0 %v981
    %3836 = vmatprep.subr.mxu0 %v994
    %3837 = vmatpush1.msra.mxu0 %v993
    %3838 = vmatprep.subr.mxu0 %v1006
    %3839 = vmatpush1.msra.mxu0 %v1005
    %3840 = vmatprep.subr.mxu0 %v1018
    %3841 = vmatpush1.msra.mxu0 %v1017
    %3842 = vmatprep.subr.mxu0 %v1030
    %3843 = vmatpush1.msra.mxu0 %v1029
    %3844 = vmatprep.subr.mxu0 %v1042
    %3845 = vmatpush1.msra.mxu0 %v1041
    %3846 = vmatprep.subr.mxu0 %v1054
    %3847 = vmatpush1.msra.mxu0 %v1053
    %3848 = vmatprep.subr.mxu0 %v1066
    %3849 = vmatpush1.msra.mxu0 %v1065
    %3850 = vmatprep.subr.mxu0 %v1078
    %3851 = vmatpush1.msra.mxu0 %v1077
    %3852 = vmatprep.subr.mxu0 %v1090
    %3853 = vmatpush1.msra.mxu0 %v1089
    %3854 = vmatprep.subr.mxu0 %v1102
    %3855 = vmatpush1.msra.mxu0 %v1101
    %3856 = vmatprep.subr.mxu0 %v1114
    %3857 = vmatpush1.msra.mxu0 %v1113
    %3858 = vmatprep.subr.mxu0 %v1126
    %3859 = vmatpush1.msra.mxu0 %v1125
    %3860 = vmatprep.subr.mxu0 %v1138
    %3861 = vmatpush1.msra.mxu0 %v1137
    %3862 = vmatprep.subr.mxu0 %v1150
    %3863 = vmatpush1.msra.mxu0 %v1149
    %3864 = vmatprep.subr.mxu0 %v1162
    %3865 = vmatpush1.msra.mxu0 %v1161
    %3866 = vmatprep.subr.mxu0 %v1174
    %3867 = vmatpush1.msra.mxu0 %v1173
    %3868 = vmatprep.mubr.f32.mxu0 %v3546
    %3869 = vmatmul.mubr.f32.gmra.mrb[0].mxu0 %v3545
    %v3870 = vpop.f32.mrb[0].mxu0
    %v3871 = vadd.f32 0.0, %v3870
    %v3872 = vpop.f32.mrb[0].mxu0
    %v3873 = vadd.f32 0.0, %v3872
    %3874 = vdwg.mxu0
    %3875 = vmatprep.subr.mxu0 %v804
    %3876 = vmatpush1.msra.mxu0 %v803
    %3877 = vmatprep.subr.mxu0 %v816
    %3878 = vmatpush1.msra.mxu0 %v815
    %3879 = vmatprep.subr.mxu0 %v828
    %3880 = vmatpush1.msra.mxu0 %v827
    %3881 = vmatprep.subr.mxu0 %v840
    %3882 = vmatpush1.msra.mxu0 %v839
    %3883 = vmatprep.subr.mxu0 %v852
    %3884 = vmatpush1.msra.mxu0 %v851
    %3885 = vmatprep.subr.mxu0 %v864
    %3886 = vmatpush1.msra.mxu0 %v863
    %3887 = vmatprep.subr.mxu0 %v876
    %3888 = vmatpush1.msra.mxu0 %v875
    %3889 = vmatprep.subr.mxu0 %v888
    %3890 = vmatpush1.msra.mxu0 %v887
    %3891 = vmatprep.subr.mxu0 %v900
    %3892 = vmatpush1.msra.mxu0 %v899
    %3893 = vmatprep.subr.mxu0 %v912
    %3894 = vmatpush1.msra.mxu0 %v911
    %3895 = vmatprep.subr.mxu0 %v924
    %3896 = vmatpush1.msra.mxu0 %v923
    %3897 = vmatprep.subr.mxu0 %v936
    %3898 = vmatpush1.msra.mxu0 %v935
    %3899 = vmatprep.subr.mxu0 %v948
    %3900 = vmatpush1.msra.mxu0 %v947
    %3901 = vmatprep.subr.mxu0 %v960
    %3902 = vmatpush1.msra.mxu0 %v959
    %3903 = vmatprep.subr.mxu0 %v972
    %3904 = vmatpush1.msra.mxu0 %v971
    %3905 = vmatprep.subr.mxu0 %v984
    %3906 = vmatpush1.msra.mxu0 %v983
    %3907 = vmatprep.subr.mxu0 %v996
    %3908 = vmatpush1.msra.mxu0 %v995
    %3909 = vmatprep.subr.mxu0 %v1008
    %3910 = vmatpush1.msra.mxu0 %v1007
    %3911 = vmatprep.subr.mxu0 %v1020
    %3912 = vmatpush1.msra.mxu0 %v1019
    %3913 = vmatprep.subr.mxu0 %v1032
    %3914 = vmatpush1.msra.mxu0 %v1031
    %3915 = vmatprep.subr.mxu0 %v1044
    %3916 = vmatpush1.msra.mxu0 %v1043
    %3917 = vmatprep.subr.mxu0 %v1056
    %3918 = vmatpush1.msra.mxu0 %v1055
    %3919 = vmatprep.subr.mxu0 %v1068
    %3920 = vmatpush1.msra.mxu0 %v1067
    %3921 = vmatprep.subr.mxu0 %v1080
    %3922 = vmatpush1.msra.mxu0 %v1079
    %3923 = vmatprep.subr.mxu0 %v1092
    %3924 = vmatpush1.msra.mxu0 %v1091
    %3925 = vmatprep.subr.mxu0 %v1104
    %3926 = vmatpush1.msra.mxu0 %v1103
    %3927 = vmatprep.subr.mxu0 %v1116
    %3928 = vmatpush1.msra.mxu0 %v1115
    %3929 = vmatprep.subr.mxu0 %v1128
    %3930 = vmatpush1.msra.mxu0 %v1127
    %3931 = vmatprep.subr.mxu0 %v1140
    %3932 = vmatpush1.msra.mxu0 %v1139
    %3933 = vmatprep.subr.mxu0 %v1152
    %3934 = vmatpush1.msra.mxu0 %v1151
    %3935 = vmatprep.subr.mxu0 %v1164
    %3936 = vmatpush1.msra.mxu0 %v1163
    %3937 = vmatprep.subr.mxu0 %v1176
    %3938 = vmatpush1.msra.mxu0 %v1175
    %3939 = vmatprep.mubr.f32.mxu0 %v3546
    %3940 = vmatmul.mubr.f32.gmra.mrb[0].mxu0 %v3545
    %v3941 = vpop.f32.mrb[0].mxu0
    %v3942 = vadd.f32 0.0, %v3941
    %v3943 = vpop.f32.mrb[0].mxu0
    %v3944 = vadd.f32 0.0, %v3943
    %3945 = vdwg.mxu0
    %3946 = vmatprep.subr.mxu0 %v806
    %3947 = vmatpush1.msra.mxu0 %v805
    %3948 = vmatprep.subr.mxu0 %v818
    %3949 = vmatpush1.msra.mxu0 %v817
    %3950 = vmatprep.subr.mxu0 %v830
    %3951 = vmatpush1.msra.mxu0 %v829
    %3952 = vmatprep.subr.mxu0 %v842
    %3953 = vmatpush1.msra.mxu0 %v841
    %3954 = vmatprep.subr.mxu0 %v854
    %3955 = vmatpush1.msra.mxu0 %v853
    %3956 = vmatprep.subr.mxu0 %v866
    %3957 = vmatpush1.msra.mxu0 %v865
    %3958 = vmatprep.subr.mxu0 %v878
    %3959 = vmatpush1.msra.mxu0 %v877
    %3960 = vmatprep.subr.mxu0 %v890
    %3961 = vmatpush1.msra.mxu0 %v889
    %3962 = vmatprep.subr.mxu0 %v902
    %3963 = vmatpush1.msra.mxu0 %v901
    %3964 = vmatprep.subr.mxu0 %v914
    %3965 = vmatpush1.msra.mxu0 %v913
    %3966 = vmatprep.subr.mxu0 %v926
    %3967 = vmatpush1.msra.mxu0 %v925
    %3968 = vmatprep.subr.mxu0 %v938
    %3969 = vmatpush1.msra.mxu0 %v937
    %3970 = vmatprep.subr.mxu0 %v950
    %3971 = vmatpush1.msra.mxu0 %v949
    %3972 = vmatprep.subr.mxu0 %v962
    %3973 = vmatpush1.msra.mxu0 %v961
    %3974 = vmatprep.subr.mxu0 %v974
    %3975 = vmatpush1.msra.mxu0 %v973
    %3976 = vmatprep.subr.mxu0 %v986
    %3977 = vmatpush1.msra.mxu0 %v985
    %3978 = vmatprep.subr.mxu0 %v998
    %3979 = vmatpush1.msra.mxu0 %v997
    %3980 = vmatprep.subr.mxu0 %v1010
    %3981 = vmatpush1.msra.mxu0 %v1009
    %3982 = vmatprep.subr.mxu0 %v1022
    %3983 = vmatpush1.msra.mxu0 %v1021
    %3984 = vmatprep.subr.mxu0 %v1034
    %3985 = vmatpush1.msra.mxu0 %v1033
    %3986 = vmatprep.subr.mxu0 %v1046
    %3987 = vmatpush1.msra.mxu0 %v1045
    %3988 = vmatprep.subr.mxu0 %v1058
    %3989 = vmatpush1.msra.mxu0 %v1057
    %3990 = vmatprep.subr.mxu0 %v1070
    %3991 = vmatpush1.msra.mxu0 %v1069
    %3992 = vmatprep.subr.mxu0 %v1082
    %3993 = vmatpush1.msra.mxu0 %v1081
    %3994 = vmatprep.subr.mxu0 %v1094
    %3995 = vmatpush1.msra.mxu0 %v1093
    %3996 = vmatprep.subr.mxu0 %v1106
    %3997 = vmatpush1.msra.mxu0 %v1105
    %3998 = vmatprep.subr.mxu0 %v1118
    %3999 = vmatpush1.msra.mxu0 %v1117
    %4000 = vmatprep.subr.mxu0 %v1130
    %4001 = vmatpush1.msra.mxu0 %v1129
    %4002 = vmatprep.subr.mxu0 %v1142
    %4003 = vmatpush1.msra.mxu0 %v1141
    %4004 = vmatprep.subr.mxu0 %v1154
    %4005 = vmatpush1.msra.mxu0 %v1153
    %4006 = vmatprep.subr.mxu0 %v1166
    %4007 = vmatpush1.msra.mxu0 %v1165
    %4008 = vmatprep.subr.mxu0 %v1178
    %4009 = vmatpush1.msra.mxu0 %v1177
    %4010 = vmatprep.mubr.f32.mxu0 %v3546
    %4011 = vmatmul.mubr.f32.gmra.mrb[0].mxu0 %v3545
    %v4012 = vpop.f32.mrb[0].mxu0
    %v4013 = vadd.f32 0.0, %v4012
    %v4014 = vpop.f32.mrb[0].mxu0
    %v4015 = vadd.f32 0.0, %v4014
    %4016 = vdwg.mxu0
    %v4017 = vadd.f32 %v3871, %v718
    %v4018 = vadd.f32 %v3873, %v722
    %v4019 = vadd.f32 %v3942, %v726
    %v4020 = vadd.f32 %v3944, %v730
    %v4021 = vadd.f32 %v4013, %v734
    %v4022 = vadd.f32 %v4015, %v738
    %4023 = vmatprep.subr.mxu0 %v1612
    %4024 = vmatpush1.msra.mxu0 %v1611
    %4025 = vmatprep.subr.mxu0 %v1618
    %4026 = vmatpush1.msra.mxu0 %v1617
    %4027 = vmatprep.subr.mxu0 %v1624
    %4028 = vmatpush1.msra.mxu0 %v1623
    %4029 = vmatprep.subr.mxu0 %v1630
    %4030 = vmatpush1.msra.mxu0 %v1629
    %4031 = vmatprep.subr.mxu0 %v1636
    %4032 = vmatpush1.msra.mxu0 %v1635
    %4033 = vmatprep.subr.mxu0 %v1642
    %4034 = vmatpush1.msra.mxu0 %v1641
    %4035 = vmatprep.subr.mxu0 %v1648
    %4036 = vmatpush1.msra.mxu0 %v1647
    %4037 = vmatprep.subr.mxu0 %v1654
    %4038 = vmatpush1.msra.mxu0 %v1653
    %4039 = vmatprep.subr.mxu0 %v1660
    %4040 = vmatpush1.msra.mxu0 %v1659
    %4041 = vmatprep.subr.mxu0 %v1666
    %4042 = vmatpush1.msra.mxu0 %v1665
    %4043 = vmatprep.subr.mxu0 %v1672
    %4044 = vmatpush1.msra.mxu0 %v1671
    %4045 = vmatprep.subr.mxu0 %v1678
    %4046 = vmatpush1.msra.mxu0 %v1677
    %4047 = vmatprep.subr.mxu0 %v1684
    %4048 = vmatpush1.msra.mxu0 %v1683
    %4049 = vmatprep.subr.mxu0 %v1690
    %4050 = vmatpush1.msra.mxu0 %v1689
    %4051 = vmatprep.subr.mxu0 %v1696
    %4052 = vmatpush1.msra.mxu0 %v1695
    %4053 = vmatprep.subr.mxu0 %v1702
    %4054 = vmatpush1.msra.mxu0 %v1701
    %4055 = vmatprep.subr.mxu0 %v1708
    %4056 = vmatpush1.msra.mxu0 %v1707
    %4057 = vmatprep.subr.mxu0 %v1714
    %4058 = vmatpush1.msra.mxu0 %v1713
    %4059 = vmatprep.subr.mxu0 %v1720
    %4060 = vmatpush1.msra.mxu0 %v1719
    %4061 = vmatprep.subr.mxu0 %v1726
    %4062 = vmatpush1.msra.mxu0 %v1725
    %4063 = vmatprep.subr.mxu0 %v1732
    %4064 = vmatpush1.msra.mxu0 %v1731
    %4065 = vmatprep.subr.mxu0 %v1738
    %4066 = vmatpush1.msra.mxu0 %v1737
    %4067 = vmatprep.subr.mxu0 %v1744
    %4068 = vmatpush1.msra.mxu0 %v1743
    %4069 = vmatprep.subr.mxu0 %v1750
    %4070 = vmatpush1.msra.mxu0 %v1749
    %4071 = vmatprep.subr.mxu0 %v1756
    %4072 = vmatpush1.msra.mxu0 %v1755
    %4073 = vmatprep.subr.mxu0 %v1762
    %4074 = vmatpush1.msra.mxu0 %v1761
    %4075 = vmatprep.subr.mxu0 %v1768
    %4076 = vmatpush1.msra.mxu0 %v1767
    %4077 = vmatprep.subr.mxu0 %v1774
    %4078 = vmatpush1.msra.mxu0 %v1773
    %4079 = vmatprep.subr.mxu0 %v1780
    %4080 = vmatpush1.msra.mxu0 %v1779
    %4081 = vmatprep.subr.mxu0 %v1786
    %4082 = vmatpush1.msra.mxu0 %v1785
    %4083 = vmatprep.subr.mxu0 %v1792
    %4084 = vmatpush1.msra.mxu0 %v1791
    %4085 = vmatprep.subr.mxu0 %v1798
    %4086 = vmatpush1.msra.mxu0 %v1797
    %4087 = vmatprep.mubr.f32.mxu0 %v3590
    %4088 = vmatmul.mubr.f32.gmra.mrb[0].mxu0 %v3589
    %v4089 = vpop.f32.mrb[0].mxu0
    %v4090 = vadd.f32 0.0, %v4089
    %v4091 = vpop.f32.mrb[0].mxu0
    %v4092 = vadd.f32 0.0, %v4091
    %4093 = vdwg.mxu0
    %4094 = vmatprep.subr.mxu0 %v1614
    %4095 = vmatpush1.msra.mxu0 %v1613
    %4096 = vmatprep.subr.mxu0 %v1620
    %4097 = vmatpush1.msra.mxu0 %v1619
    %4098 = vmatprep.subr.mxu0 %v1626
    %4099 = vmatpush1.msra.mxu0 %v1625
    %4100 = vmatprep.subr.mxu0 %v1632
    %4101 = vmatpush1.msra.mxu0 %v1631
    %4102 = vmatprep.subr.mxu0 %v1638
    %4103 = vmatpush1.msra.mxu0 %v1637
    %4104 = vmatprep.subr.mxu0 %v1644
    %4105 = vmatpush1.msra.mxu0 %v1643
    %4106 = vmatprep.subr.mxu0 %v1650
    %4107 = vmatpush1.msra.mxu0 %v1649
    %4108 = vmatprep.subr.mxu0 %v1656
    %4109 = vmatpush1.msra.mxu0 %v1655
    %4110 = vmatprep.subr.mxu0 %v1662
    %4111 = vmatpush1.msra.mxu0 %v1661
    %4112 = vmatprep.subr.mxu0 %v1668
    %4113 = vmatpush1.msra.mxu0 %v1667
    %4114 = vmatprep.subr.mxu0 %v1674
    %4115 = vmatpush1.msra.mxu0 %v1673
    %4116 = vmatprep.subr.mxu0 %v1680
    %4117 = vmatpush1.msra.mxu0 %v1679
    %4118 = vmatprep.subr.mxu0 %v1686
    %4119 = vmatpush1.msra.mxu0 %v1685
    %4120 = vmatprep.subr.mxu0 %v1692
    %4121 = vmatpush1.msra.mxu0 %v1691
    %4122 = vmatprep.subr.mxu0 %v1698
    %4123 = vmatpush1.msra.mxu0 %v1697
    %4124 = vmatprep.subr.mxu0 %v1704
    %4125 = vmatpush1.msra.mxu0 %v1703
    %4126 = vmatprep.subr.mxu0 %v1710
    %4127 = vmatpush1.msra.mxu0 %v1709
    %4128 = vmatprep.subr.mxu0 %v1716
    %4129 = vmatpush1.msra.mxu0 %v1715
    %4130 = vmatprep.subr.mxu0 %v1722
    %4131 = vmatpush1.msra.mxu0 %v1721
    %4132 = vmatprep.subr.mxu0 %v1728
    %4133 = vmatpush1.msra.mxu0 %v1727
    %4134 = vmatprep.subr.mxu0 %v1734
    %4135 = vmatpush1.msra.mxu0 %v1733
    %4136 = vmatprep.subr.mxu0 %v1740
    %4137 = vmatpush1.msra.mxu0 %v1739
    %4138 = vmatprep.subr.mxu0 %v1746
    %4139 = vmatpush1.msra.mxu0 %v1745
    %4140 = vmatprep.subr.mxu0 %v1752
    %4141 = vmatpush1.msra.mxu0 %v1751
    %4142 = vmatprep.subr.mxu0 %v1758
    %4143 = vmatpush1.msra.mxu0 %v1757
    %4144 = vmatprep.subr.mxu0 %v1764
    %4145 = vmatpush1.msra.mxu0 %v1763
    %4146 = vmatprep.subr.mxu0 %v1770
    %4147 = vmatpush1.msra.mxu0 %v1769
    %4148 = vmatprep.subr.mxu0 %v1776
    %4149 = vmatpush1.msra.mxu0 %v1775
    %4150 = vmatprep.subr.mxu0 %v1782
    %4151 = vmatpush1.msra.mxu0 %v1781
    %4152 = vmatprep.subr.mxu0 %v1788
    %4153 = vmatpush1.msra.mxu0 %v1787
    %4154 = vmatprep.subr.mxu0 %v1794
    %4155 = vmatpush1.msra.mxu0 %v1793
    %4156 = vmatprep.subr.mxu0 %v1800
    %4157 = vmatpush1.msra.mxu0 %v1799
    %4158 = vmatprep.mubr.f32.mxu0 %v3590
    %4159 = vmatmul.mubr.f32.gmra.mrb[0].mxu0 %v3589
    %v4160 = vpop.f32.mrb[0].mxu0
    %v4161 = vadd.f32 0.0, %v4160
    %v4162 = vpop.f32.mrb[0].mxu0
    %v4163 = vadd.f32 0.0, %v4162
    %4164 = vdwg.mxu0
    %4165 = vmatprep.subr.mxu0 %v1616
    %4166 = vmatpush1.msra.mxu0 %v1615
    %4167 = vmatprep.subr.mxu0 %v1622
    %4168 = vmatpush1.msra.mxu0 %v1621
    %4169 = vmatprep.subr.mxu0 %v1628
    %4170 = vmatpush1.msra.mxu0 %v1627
    %4171 = vmatprep.subr.mxu0 %v1634
    %4172 = vmatpush1.msra.mxu0 %v1633
    %4173 = vmatprep.subr.mxu0 %v1640
    %4174 = vmatpush1.msra.mxu0 %v1639
    %4175 = vmatprep.subr.mxu0 %v1646
    %4176 = vmatpush1.msra.mxu0 %v1645
    %4177 = vmatprep.subr.mxu0 %v1652
    %4178 = vmatpush1.msra.mxu0 %v1651
    %4179 = vmatprep.subr.mxu0 %v1658
    %4180 = vmatpush1.msra.mxu0 %v1657
    %4181 = vmatprep.subr.mxu0 %v1664
    %4182 = vmatpush1.msra.mxu0 %v1663
    %4183 = vmatprep.subr.mxu0 %v1670
    %4184 = vmatpush1.msra.mxu0 %v1669
    %4185 = vmatprep.subr.mxu0 %v1676
    %4186 = vmatpush1.msra.mxu0 %v1675
    %4187 = vmatprep.subr.mxu0 %v1682
    %4188 = vmatpush1.msra.mxu0 %v1681
    %4189 = vmatprep.subr.mxu0 %v1688
    %4190 = vmatpush1.msra.mxu0 %v1687
    %4191 = vmatprep.subr.mxu0 %v1694
    %4192 = vmatpush1.msra.mxu0 %v1693
    %4193 = vmatprep.subr.mxu0 %v1700
    %4194 = vmatpush1.msra.mxu0 %v1699
    %4195 = vmatprep.subr.mxu0 %v1706
    %4196 = vmatpush1.msra.mxu0 %v1705
    %4197 = vmatprep.subr.mxu0 %v1712
    %4198 = vmatpush1.msra.mxu0 %v1711
    %4199 = vmatprep.subr.mxu0 %v1718
    %4200 = vmatpush1.msra.mxu0 %v1717
    %4201 = vmatprep.subr.mxu0 %v1724
    %4202 = vmatpush1.msra.mxu0 %v1723
    %4203 = vmatprep.subr.mxu0 %v1730
    %4204 = vmatpush1.msra.mxu0 %v1729
    %4205 = vmatprep.subr.mxu0 %v1736
    %4206 = vmatpush1.msra.mxu0 %v1735
    %4207 = vmatprep.subr.mxu0 %v1742
    %4208 = vmatpush1.msra.mxu0 %v1741
    %4209 = vmatprep.subr.mxu0 %v1748
    %4210 = vmatpush1.msra.mxu0 %v1747
    %4211 = vmatprep.subr.mxu0 %v1754
    %4212 = vmatpush1.msra.mxu0 %v1753
    %4213 = vmatprep.subr.mxu0 %v1760
    %4214 = vmatpush1.msra.mxu0 %v1759
    %4215 = vmatprep.subr.mxu0 %v1766
    %4216 = vmatpush1.msra.mxu0 %v1765
    %4217 = vmatprep.subr.mxu0 %v1772
    %4218 = vmatpush1.msra.mxu0 %v1771
    %4219 = vmatprep.subr.mxu0 %v1778
    %4220 = vmatpush1.msra.mxu0 %v1777
    %4221 = vmatprep.subr.mxu0 %v1784
    %4222 = vmatpush1.msra.mxu0 %v1783
    %4223 = vmatprep.subr.mxu0 %v1790
    %4224 = vmatpush1.msra.mxu0 %v1789
    %4225 = vmatprep.subr.mxu0 %v1796
    %4226 = vmatpush1.msra.mxu0 %v1795
    %4227 = vmatprep.subr.mxu0 %v1802
    %4228 = vmatpush1.msra.mxu0 %v1801
    %4229 = vmatprep.mubr.f32.mxu0 %v3590
    %4230 = vmatmul.mubr.f32.gmra.mrb[0].mxu0 %v3589
    %v4231 = vpop.f32.mrb[0].mxu0
    %v4232 = vadd.f32 0.0, %v4231
    %v4233 = vpop.f32.mrb[0].mxu0
    %v4234 = vadd.f32 0.0, %v4233
    %4235 = vdwg.mxu0
    %s4236 = scalar_lea.vmem [#allocation2], 192
    %v4237 = vld [vmem:[%s4236] sm:$0xff]
    %v4238 = vld [vmem:[%s4236 + $0x8] sm:$0xff]
    %v4239 = vld [vmem:[%s4236 + $0x10] sm:$0xff]
    %v4240 = vld [vmem:[%s4236 + $0x18] sm:$0xff]
    %v4241 = vld [vmem:[%s4236 + $0x20] sm:$0xff]
    %v4242 = vld [vmem:[%s4236 + $0x28] sm:$0xff]
    %v4243 = vadd.f32 %v4237, %v3658
    %v4244 = vadd.f32 %v4238, %v3660
    %v4245 = vxor.u32 %v4243, 2147483648
    %v4246 = vxor.u32 %v4244, 2147483648
    %v4247 = vmul.f32 %v4245, 1.442695
    %v4248 = vpow.pop %v4247
    %v4249 = vmul.f32 %v4246, 1.442695
    %v4250 = vpow.pop %v4249
    %v4251 = vadd.f32 %v4248, 1.0
    %v4252 = vadd.f32 %v4250, 1.0
    %v4253 = vrcp.pop %v4251
    %v4254 = vmul.f32 1.0, %v4253
    %v4255 = vrcp.pop %v4252
    %v4256 = vmul.f32 1.0, %v4255
    %v4257 = vadd.f32 %v4239, %v3729
    %v4258 = vadd.f32 %v4240, %v3731
    %v4259 = vxor.u32 %v4257, 2147483648
    %v4260 = vxor.u32 %v4258, 2147483648
    %v4261 = vmul.f32 %v4259, 1.442695
    %v4262 = vpow.pop %v4261
    %v4263 = vmul.f32 %v4260, 1.442695
    %v4264 = vpow.pop %v4263
    %v4265 = vadd.f32 %v4262, 1.0
    %v4266 = vadd.f32 %v4264, 1.0
    %v4267 = vrcp.pop %v4265
    %v4268 = vmul.f32 1.0, %v4267
    %v4269 = vrcp.pop %v4266
    %v4270 = vmul.f32 1.0, %v4269
    %v4271 = vadd.f32 %v3800, %v694
    %v4272 = vadd.f32 %v3802, %v698
    %v4273 = vmul.f32 %v4254, %v4271
    %v4274 = vmul.f32 %v4256, %v4272
    %v4275 = vadd.f32 %v4241, %v4273
    %v4276 = vadd.f32 %v4242, %v4274
    %v4277 = vtanh.pop %v4275
    %v4278 = vtanh.pop %v4276
    %v4279 = vsub.f32 1.0, %v4268
    %v4280 = vsub.f32 1.0, %v4270
    %v4281 = vmul.f32 %v4279, %v4277
    %v4282 = vmul.f32 %v4280, %v4278
    %v4283 = vmul.f32 %v4268, %v3545
    %v4284 = vmul.f32 %v4270, %v3546
    %v4285 = vadd.f32 %v4281, %v4283
    %v4286 = vadd.f32 %v4282, %v4284
    %v4287 = vadd.f32 %v4017, %v4090
    %v4288 = vadd.f32 %v4018, %v4092
    %v4289 = vxor.u32 %v4287, 2147483648
    %v4290 = vxor.u32 %v4288, 2147483648
    %v4291 = vmul.f32 %v4289, 1.442695
    %v4292 = vpow.pop %v4291
    %v4293 = vmul.f32 %v4290, 1.442695
    %v4294 = vpow.pop %v4293
    %v4295 = vadd.f32 %v4292, 1.0
    %v4296 = vadd.f32 %v4294, 1.0
    %v4297 = vrcp.pop %v4295
    %v4298 = vmul.f32 1.0, %v4297
    %v4299 = vrcp.pop %v4296
    %v4300 = vmul.f32 1.0, %v4299
    %v4301 = vadd.f32 %v4019, %v4161
    %v4302 = vadd.f32 %v4020, %v4163
    %v4303 = vxor.u32 %v4301, 2147483648
    %v4304 = vxor.u32 %v4302, 2147483648
    %v4305 = vmul.f32 %v4303, 1.442695
    %v4306 = vpow.pop %v4305
    %v4307 = vmul.f32 %v4304, 1.442695
    %v4308 = vpow.pop %v4307
    %v4309 = vadd.f32 %v4306, 1.0
    %v4310 = vadd.f32 %v4308, 1.0
    %v4311 = vrcp.pop %v4309
    %v4312 = vmul.f32 1.0, %v4311
    %v4313 = vrcp.pop %v4310
    %v4314 = vmul.f32 1.0, %v4313
    %v4315 = vadd.f32 %v4232, %v706
    %v4316 = vadd.f32 %v4234, %v710
    %v4317 = vmul.f32 %v4298, %v4315
    %v4318 = vmul.f32 %v4300, %v4316
    %v4319 = vadd.f32 %v4021, %v4317
    %v4320 = vadd.f32 %v4022, %v4318
    %v4321 = vtanh.pop %v4319
    %v4322 = vtanh.pop %v4320
    %v4323 = vsub.f32 1.0, %v4312
    %v4324 = vsub.f32 1.0, %v4314
    %v4325 = vmul.f32 %v4323, %v4321
    %v4326 = vmul.f32 %v4324, %v4322
    %v4327 = vmul.f32 %v4312, %v3589
    %v4328 = vmul.f32 %v4314, %v3590
    %v4329 = vadd.f32 %v4325, %v4327
    %v4330 = vadd.f32 %v4326, %v4328
    %4331 = vmatprep.subr.mxu0 %v796
    %4332 = vmatpush1.msra.mxu0 %v795
    %4333 = vmatprep.subr.mxu0 %v808
    %4334 = vmatpush1.msra.mxu0 %v807
    %4335 = vmatprep.subr.mxu0 %v820
    %4336 = vmatpush1.msra.mxu0 %v819
    %4337 = vmatprep.subr.mxu0 %v832
    %4338 = vmatpush1.msra.mxu0 %v831
    %4339 = vmatprep.subr.mxu0 %v844
    %4340 = vmatpush1.msra.mxu0 %v843
    %4341 = vmatprep.subr.mxu0 %v856
    %4342 = vmatpush1.msra.mxu0 %v855
    %4343 = vmatprep.subr.mxu0 %v868
    %4344 = vmatpush1.msra.mxu0 %v867
    %4345 = vmatprep.subr.mxu0 %v880
    %4346 = vmatpush1.msra.mxu0 %v879
    %4347 = vmatprep.subr.mxu0 %v892
    %4348 = vmatpush1.msra.mxu0 %v891
    %4349 = vmatprep.subr.mxu0 %v904
    %4350 = vmatpush1.msra.mxu0 %v903
    %4351 = vmatprep.subr.mxu0 %v916
    %4352 = vmatpush1.msra.mxu0 %v915
    %4353 = vmatprep.subr.mxu0 %v928
    %4354 = vmatpush1.msra.mxu0 %v927
    %4355 = vmatprep.subr.mxu0 %v940
    %4356 = vmatpush1.msra.mxu0 %v939
    %4357 = vmatprep.subr.mxu0 %v952
    %4358 = vmatpush1.msra.mxu0 %v951
    %4359 = vmatprep.subr.mxu0 %v964
    %4360 = vmatpush1.msra.mxu0 %v963
    %4361 = vmatprep.subr.mxu0 %v976
    %4362 = vmatpush1.msra.mxu0 %v975
    %4363 = vmatprep.subr.mxu0 %v988
    %4364 = vmatpush1.msra.mxu0 %v987
    %4365 = vmatprep.subr.mxu0 %v1000
    %4366 = vmatpush1.msra.mxu0 %v999
    %4367 = vmatprep.subr.mxu0 %v1012
    %4368 = vmatpush1.msra.mxu0 %v1011
    %4369 = vmatprep.subr.mxu0 %v1024
    %4370 = vmatpush1.msra.mxu0 %v1023
    %4371 = vmatprep.subr.mxu0 %v1036
    %4372 = vmatpush1.msra.mxu0 %v1035
    %4373 = vmatprep.subr.mxu0 %v1048
    %4374 = vmatpush1.msra.mxu0 %v1047
    %4375 = vmatprep.subr.mxu0 %v1060
    %4376 = vmatpush1.msra.mxu0 %v1059
    %4377 = vmatprep.subr.mxu0 %v1072
    %4378 = vmatpush1.msra.mxu0 %v1071
    %4379 = vmatprep.subr.mxu0 %v1084
    %4380 = vmatpush1.msra.mxu0 %v1083
    %4381 = vmatprep.subr.mxu0 %v1096
    %4382 = vmatpush1.msra.mxu0 %v1095
    %4383 = vmatprep.subr.mxu0 %v1108
    %4384 = vmatpush1.msra.mxu0 %v1107
    %4385 = vmatprep.subr.mxu0 %v1120
    %4386 = vmatpush1.msra.mxu0 %v1119
    %4387 = vmatprep.subr.mxu0 %v1132
    %4388 = vmatpush1.msra.mxu0 %v1131
    %4389 = vmatprep.subr.mxu0 %v1144
    %4390 = vmatpush1.msra.mxu0 %v1143
    %4391 = vmatprep.subr.mxu0 %v1156
    %4392 = vmatpush1.msra.mxu0 %v1155
    %4393 = vmatprep.subr.mxu0 %v1168
    %4394 = vmatpush1.msra.mxu0 %v1167
    %4395 = vmatprep.mubr.f32.mxu0 %v4286
    %4396 = vmatmul.mubr.f32.gmra.mrb[0].mxu0 %v4285
    %v4397 = vpop.f32.mrb[0].mxu0
    %v4398 = vadd.f32 0.0, %v4397
    %v4399 = vpop.f32.mrb[0].mxu0
    %v4400 = vadd.f32 0.0, %v4399
    %4401 = vdwg.mxu0
    %4402 = vmatprep.subr.mxu0 %v798
    %4403 = vmatpush1.msra.mxu0 %v797
    %4404 = vmatprep.subr.mxu0 %v810
    %4405 = vmatpush1.msra.mxu0 %v809
    %4406 = vmatprep.subr.mxu0 %v822
    %4407 = vmatpush1.msra.mxu0 %v821
    %4408 = vmatprep.subr.mxu0 %v834
    %4409 = vmatpush1.msra.mxu0 %v833
    %4410 = vmatprep.subr.mxu0 %v846
    %4411 = vmatpush1.msra.mxu0 %v845
    %4412 = vmatprep.subr.mxu0 %v858
    %4413 = vmatpush1.msra.mxu0 %v857
    %4414 = vmatprep.subr.mxu0 %v870
    %4415 = vmatpush1.msra.mxu0 %v869
    %4416 = vmatprep.subr.mxu0 %v882
    %4417 = vmatpush1.msra.mxu0 %v881
    %4418 = vmatprep.subr.mxu0 %v894
    %4419 = vmatpush1.msra.mxu0 %v893
    %4420 = vmatprep.subr.mxu0 %v906
    %4421 = vmatpush1.msra.mxu0 %v905
    %4422 = vmatprep.subr.mxu0 %v918
    %4423 = vmatpush1.msra.mxu0 %v917
    %4424 = vmatprep.subr.mxu0 %v930
    %4425 = vmatpush1.msra.mxu0 %v929
    %4426 = vmatprep.subr.mxu0 %v942
    %4427 = vmatpush1.msra.mxu0 %v941
    %4428 = vmatprep.subr.mxu0 %v954
    %4429 = vmatpush1.msra.mxu0 %v953
    %4430 = vmatprep.subr.mxu0 %v966
    %4431 = vmatpush1.msra.mxu0 %v965
    %4432 = vmatprep.subr.mxu0 %v978
    %4433 = vmatpush1.msra.mxu0 %v977
    %4434 = vmatprep.subr.mxu0 %v990
    %4435 = vmatpush1.msra.mxu0 %v989
    %4436 = vmatprep.subr.mxu0 %v1002
    %4437 = vmatpush1.msra.mxu0 %v1001
    %4438 = vmatprep.subr.mxu0 %v1014
    %4439 = vmatpush1.msra.mxu0 %v1013
    %4440 = vmatprep.subr.mxu0 %v1026
    %4441 = vmatpush1.msra.mxu0 %v1025
    %4442 = vmatprep.subr.mxu0 %v1038
    %4443 = vmatpush1.msra.mxu0 %v1037
    %4444 = vmatprep.subr.mxu0 %v1050
    %4445 = vmatpush1.msra.mxu0 %v1049
    %4446 = vmatprep.subr.mxu0 %v1062
    %4447 = vmatpush1.msra.mxu0 %v1061
    %4448 = vmatprep.subr.mxu0 %v1074
    %4449 = vmatpush1.msra.mxu0 %v1073
    %4450 = vmatprep.subr.mxu0 %v1086
    %4451 = vmatpush1.msra.mxu0 %v1085
    %4452 = vmatprep.subr.mxu0 %v1098
    %4453 = vmatpush1.msra.mxu0 %v1097
    %4454 = vmatprep.subr.mxu0 %v1110
    %4455 = vmatpush1.msra.mxu0 %v1109
    %4456 = vmatprep.subr.mxu0 %v1122
    %4457 = vmatpush1.msra.mxu0 %v1121
    %4458 = vmatprep.subr.mxu0 %v1134
    %4459 = vmatpush1.msra.mxu0 %v1133
    %4460 = vmatprep.subr.mxu0 %v1146
    %4461 = vmatpush1.msra.mxu0 %v1145
    %4462 = vmatprep.subr.mxu0 %v1158
    %4463 = vmatpush1.msra.mxu0 %v1157
    %4464 = vmatprep.subr.mxu0 %v1170
    %4465 = vmatpush1.msra.mxu0 %v1169
    %4466 = vmatprep.mubr.f32.mxu0 %v4286
    %4467 = vmatmul.mubr.f32.gmra.mrb[0].mxu0 %v4285
    %v4468 = vpop.f32.mrb[0].mxu0
    %v4469 = vadd.f32 0.0, %v4468
    %v4470 = vpop.f32.mrb[0].mxu0
    %v4471 = vadd.f32 0.0, %v4470
    %4472 = vdwg.mxu0
    %4473 = vmatprep.subr.mxu0 %v800
    %4474 = vmatpush1.msra.mxu0 %v799
    %4475 = vmatprep.subr.mxu0 %v812
    %4476 = vmatpush1.msra.mxu0 %v811
    %4477 = vmatprep.subr.mxu0 %v824
    %4478 = vmatpush1.msra.mxu0 %v823
    %4479 = vmatprep.subr.mxu0 %v836
    %4480 = vmatpush1.msra.mxu0 %v835
    %4481 = vmatprep.subr.mxu0 %v848
    %4482 = vmatpush1.msra.mxu0 %v847
    %4483 = vmatprep.subr.mxu0 %v860
    %4484 = vmatpush1.msra.mxu0 %v859
    %4485 = vmatprep.subr.mxu0 %v872
    %4486 = vmatpush1.msra.mxu0 %v871
    %4487 = vmatprep.subr.mxu0 %v884
    %4488 = vmatpush1.msra.mxu0 %v883
    %4489 = vmatprep.subr.mxu0 %v896
    %4490 = vmatpush1.msra.mxu0 %v895
    %4491 = vmatprep.subr.mxu0 %v908
    %4492 = vmatpush1.msra.mxu0 %v907
    %4493 = vmatprep.subr.mxu0 %v920
    %4494 = vmatpush1.msra.mxu0 %v919
    %4495 = vmatprep.subr.mxu0 %v932
    %4496 = vmatpush1.msra.mxu0 %v931
    %4497 = vmatprep.subr.mxu0 %v944
    %4498 = vmatpush1.msra.mxu0 %v943
    %4499 = vmatprep.subr.mxu0 %v956
    %4500 = vmatpush1.msra.mxu0 %v955
    %4501 = vmatprep.subr.mxu0 %v968
    %4502 = vmatpush1.msra.mxu0 %v967
    %4503 = vmatprep.subr.mxu0 %v980
    %4504 = vmatpush1.msra.mxu0 %v979
    %4505 = vmatprep.subr.mxu0 %v992
    %4506 = vmatpush1.msra.mxu0 %v991
    %4507 = vmatprep.subr.mxu0 %v1004
    %4508 = vmatpush1.msra.mxu0 %v1003
    %4509 = vmatprep.subr.mxu0 %v1016
    %4510 = vmatpush1.msra.mxu0 %v1015
    %4511 = vmatprep.subr.mxu0 %v1028
    %4512 = vmatpush1.msra.mxu0 %v1027
    %4513 = vmatprep.subr.mxu0 %v1040
    %4514 = vmatpush1.msra.mxu0 %v1039
    %4515 = vmatprep.subr.mxu0 %v1052
    %4516 = vmatpush1.msra.mxu0 %v1051
    %4517 = vmatprep.subr.mxu0 %v1064
    %4518 = vmatpush1.msra.mxu0 %v1063
    %4519 = vmatprep.subr.mxu0 %v1076
    %4520 = vmatpush1.msra.mxu0 %v1075
    %4521 = vmatprep.subr.mxu0 %v1088
    %4522 = vmatpush1.msra.mxu0 %v1087
    %4523 = vmatprep.subr.mxu0 %v1100
    %4524 = vmatpush1.msra.mxu0 %v1099
    %4525 = vmatprep.subr.mxu0 %v1112
    %4526 = vmatpush1.msra.mxu0 %v1111
    %4527 = vmatprep.subr.mxu0 %v1124
    %4528 = vmatpush1.msra.mxu0 %v1123
    %4529 = vmatprep.subr.mxu0 %v1136
    %4530 = vmatpush1.msra.mxu0 %v1135
    %4531 = vmatprep.subr.mxu0 %v1148
    %4532 = vmatpush1.msra.mxu0 %v1147
    %4533 = vmatprep.subr.mxu0 %v1160
    %4534 = vmatpush1.msra.mxu0 %v1159
    %4535 = vmatprep.subr.mxu0 %v1172
    %4536 = vmatpush1.msra.mxu0 %v1171
    %4537 = vmatprep.mubr.f32.mxu0 %v4286
    %4538 = vmatmul.mubr.f32.gmra.mrb[0].mxu0 %v4285
    %v4539 = vpop.f32.mrb[0].mxu0
    %v4540 = vadd.f32 0.0, %v4539
    %v4541 = vpop.f32.mrb[0].mxu0
    %v4542 = vadd.f32 0.0, %v4541
    %4543 = vdwg.mxu0
    %4544 = vmatprep.subr.mxu0 %v802
    %4545 = vmatpush1.msra.mxu0 %v801
    %4546 = vmatprep.subr.mxu0 %v814
    %4547 = vmatpush1.msra.mxu0 %v813
    %4548 = vmatprep.subr.mxu0 %v826
    %4549 = vmatpush1.msra.mxu0 %v825
    %4550 = vmatprep.subr.mxu0 %v838
    %4551 = vmatpush1.msra.mxu0 %v837
    %4552 = vmatprep.subr.mxu0 %v850
    %4553 = vmatpush1.msra.mxu0 %v849
    %4554 = vmatprep.subr.mxu0 %v862
    %4555 = vmatpush1.msra.mxu0 %v861
    %4556 = vmatprep.subr.mxu0 %v874
    %4557 = vmatpush1.msra.mxu0 %v873
    %4558 = vmatprep.subr.mxu0 %v886
    %4559 = vmatpush1.msra.mxu0 %v885
    %4560 = vmatprep.subr.mxu0 %v898
    %4561 = vmatpush1.msra.mxu0 %v897
    %4562 = vmatprep.subr.mxu0 %v910
    %4563 = vmatpush1.msra.mxu0 %v909
    %4564 = vmatprep.subr.mxu0 %v922
    %4565 = vmatpush1.msra.mxu0 %v921
    %4566 = vmatprep.subr.mxu0 %v934
    %4567 = vmatpush1.msra.mxu0 %v933
    %4568 = vmatprep.subr.mxu0 %v946
    %4569 = vmatpush1.msra.mxu0 %v945
    %4570 = vmatprep.subr.mxu0 %v958
    %4571 = vmatpush1.msra.mxu0 %v957
    %4572 = vmatprep.subr.mxu0 %v970
    %4573 = vmatpush1.msra.mxu0 %v969
    %4574 = vmatprep.subr.mxu0 %v982
    %4575 = vmatpush1.msra.mxu0 %v981
    %4576 = vmatprep.subr.mxu0 %v994
    %4577 = vmatpush1.msra.mxu0 %v993
    %4578 = vmatprep.subr.mxu0 %v1006
    %4579 = vmatpush1.msra.mxu0 %v1005
    %4580 = vmatprep.subr.mxu0 %v1018
    %4581 = vmatpush1.msra.mxu0 %v1017
    %4582 = vmatprep.subr.mxu0 %v1030
    %4583 = vmatpush1.msra.mxu0 %v1029
    %4584 = vmatprep.subr.mxu0 %v1042
    %4585 = vmatpush1.msra.mxu0 %v1041
    %4586 = vmatprep.subr.mxu0 %v1054
    %4587 = vmatpush1.msra.mxu0 %v1053
    %4588 = vmatprep.subr.mxu0 %v1066
    %4589 = vmatpush1.msra.mxu0 %v1065
    %4590 = vmatprep.subr.mxu0 %v1078
    %4591 = vmatpush1.msra.mxu0 %v1077
    %4592 = vmatprep.subr.mxu0 %v1090
    %4593 = vmatpush1.msra.mxu0 %v1089
    %4594 = vmatprep.subr.mxu0 %v1102
    %4595 = vmatpush1.msra.mxu0 %v1101
    %4596 = vmatprep.subr.mxu0 %v1114
    %4597 = vmatpush1.msra.mxu0 %v1113
    %4598 = vmatprep.subr.mxu0 %v1126
    %4599 = vmatpush1.msra.mxu0 %v1125
    %4600 = vmatprep.subr.mxu0 %v1138
    %4601 = vmatpush1.msra.mxu0 %v1137
    %4602 = vmatprep.subr.mxu0 %v1150
    %4603 = vmatpush1.msra.mxu0 %v1149
    %4604 = vmatprep.subr.mxu0 %v1162
    %4605 = vmatpush1.msra.mxu0 %v1161
    %4606 = vmatprep.subr.mxu0 %v1174
    %4607 = vmatpush1.msra.mxu0 %v1173
    %4608 = vmatprep.mubr.f32.mxu0 %v4286
    %4609 = vmatmul.mubr.f32.gmra.mrb[0].mxu0 %v4285
    %v4610 = vpop.f32.mrb[0].mxu0
    %v4611 = vadd.f32 0.0, %v4610
    %v4612 = vpop.f32.mrb[0].mxu0
    %v4613 = vadd.f32 0.0, %v4612
    %4614 = vdwg.mxu0
    %4615 = vmatprep.subr.mxu0 %v804
    %4616 = vmatpush1.msra.mxu0 %v803
    %4617 = vmatprep.subr.mxu0 %v816
    %4618 = vmatpush1.msra.mxu0 %v815
    %4619 = vmatprep.subr.mxu0 %v828
    %4620 = vmatpush1.msra.mxu0 %v827
    %4621 = vmatprep.subr.mxu0 %v840
    %4622 = vmatpush1.msra.mxu0 %v839
    %4623 = vmatprep.subr.mxu0 %v852
    %4624 = vmatpush1.msra.mxu0 %v851
    %4625 = vmatprep.subr.mxu0 %v864
    %4626 = vmatpush1.msra.mxu0 %v863
    %4627 = vmatprep.subr.mxu0 %v876
    %4628 = vmatpush1.msra.mxu0 %v875
    %4629 = vmatprep.subr.mxu0 %v888
    %4630 = vmatpush1.msra.mxu0 %v887
    %4631 = vmatprep.subr.mxu0 %v900
    %4632 = vmatpush1.msra.mxu0 %v899
    %4633 = vmatprep.subr.mxu0 %v912
    %4634 = vmatpush1.msra.mxu0 %v911
    %4635 = vmatprep.subr.mxu0 %v924
    %4636 = vmatpush1.msra.mxu0 %v923
    %4637 = vmatprep.subr.mxu0 %v936
    %4638 = vmatpush1.msra.mxu0 %v935
    %4639 = vmatprep.subr.mxu0 %v948
    %4640 = vmatpush1.msra.mxu0 %v947
    %4641 = vmatprep.subr.mxu0 %v960
    %4642 = vmatpush1.msra.mxu0 %v959
    %4643 = vmatprep.subr.mxu0 %v972
    %4644 = vmatpush1.msra.mxu0 %v971
    %4645 = vmatprep.subr.mxu0 %v984
    %4646 = vmatpush1.msra.mxu0 %v983
    %4647 = vmatprep.subr.mxu0 %v996
    %4648 = vmatpush1.msra.mxu0 %v995
    %4649 = vmatprep.subr.mxu0 %v1008
    %4650 = vmatpush1.msra.mxu0 %v1007
    %4651 = vmatprep.subr.mxu0 %v1020
    %4652 = vmatpush1.msra.mxu0 %v1019
    %4653 = vmatprep.subr.mxu0 %v1032
    %4654 = vmatpush1.msra.mxu0 %v1031
    %4655 = vmatprep.subr.mxu0 %v1044
    %4656 = vmatpush1.msra.mxu0 %v1043
    %4657 = vmatprep.subr.mxu0 %v1056
    %4658 = vmatpush1.msra.mxu0 %v1055
    %4659 = vmatprep.subr.mxu0 %v1068
    %4660 = vmatpush1.msra.mxu0 %v1067
    %4661 = vmatprep.subr.mxu0 %v1080
    %4662 = vmatpush1.msra.mxu0 %v1079
    %4663 = vmatprep.subr.mxu0 %v1092
    %4664 = vmatpush1.msra.mxu0 %v1091
    %4665 = vmatprep.subr.mxu0 %v1104
    %4666 = vmatpush1.msra.mxu0 %v1103
    %4667 = vmatprep.subr.mxu0 %v1116
    %4668 = vmatpush1.msra.mxu0 %v1115
    %4669 = vmatprep.subr.mxu0 %v1128
    %4670 = vmatpush1.msra.mxu0 %v1127
    %4671 = vmatprep.subr.mxu0 %v1140
    %4672 = vmatpush1.msra.mxu0 %v1139
    %4673 = vmatprep.subr.mxu0 %v1152
    %4674 = vmatpush1.msra.mxu0 %v1151
    %4675 = vmatprep.subr.mxu0 %v1164
    %4676 = vmatpush1.msra.mxu0 %v1163
    %4677 = vmatprep.subr.mxu0 %v1176
    %4678 = vmatpush1.msra.mxu0 %v1175
    %4679 = vmatprep.mubr.f32.mxu0 %v4286
    %4680 = vmatmul.mubr.f32.gmra.mrb[0].mxu0 %v4285
    %v4681 = vpop.f32.mrb[0].mxu0
    %v4682 = vadd.f32 0.0, %v4681
    %v4683 = vpop.f32.mrb[0].mxu0
    %v4684 = vadd.f32 0.0, %v4683
    %4685 = vdwg.mxu0
    %4686 = vmatprep.subr.mxu0 %v806
    %4687 = vmatpush1.msra.mxu0 %v805
    %4688 = vmatprep.subr.mxu0 %v818
    %4689 = vmatpush1.msra.mxu0 %v817
    %4690 = vmatprep.subr.mxu0 %v830
    %4691 = vmatpush1.msra.mxu0 %v829
    %4692 = vmatprep.subr.mxu0 %v842
    %4693 = vmatpush1.msra.mxu0 %v841
    %4694 = vmatprep.subr.mxu0 %v854
    %4695 = vmatpush1.msra.mxu0 %v853
    %4696 = vmatprep.subr.mxu0 %v866
    %4697 = vmatpush1.msra.mxu0 %v865
    %4698 = vmatprep.subr.mxu0 %v878
    %4699 = vmatpush1.msra.mxu0 %v877
    %4700 = vmatprep.subr.mxu0 %v890
    %4701 = vmatpush1.msra.mxu0 %v889
    %4702 = vmatprep.subr.mxu0 %v902
    %4703 = vmatpush1.msra.mxu0 %v901
    %4704 = vmatprep.subr.mxu0 %v914
    %4705 = vmatpush1.msra.mxu0 %v913
    %4706 = vmatprep.subr.mxu0 %v926
    %4707 = vmatpush1.msra.mxu0 %v925
    %4708 = vmatprep.subr.mxu0 %v938
    %4709 = vmatpush1.msra.mxu0 %v937
    %4710 = vmatprep.subr.mxu0 %v950
    %4711 = vmatpush1.msra.mxu0 %v949
    %4712 = vmatprep.subr.mxu0 %v962
    %4713 = vmatpush1.msra.mxu0 %v961
    %4714 = vmatprep.subr.mxu0 %v974
    %4715 = vmatpush1.msra.mxu0 %v973
    %4716 = vmatprep.subr.mxu0 %v986
    %4717 = vmatpush1.msra.mxu0 %v985
    %4718 = vmatprep.subr.mxu0 %v998
    %4719 = vmatpush1.msra.mxu0 %v997
    %4720 = vmatprep.subr.mxu0 %v1010
    %4721 = vmatpush1.msra.mxu0 %v1009
    %4722 = vmatprep.subr.mxu0 %v1022
    %4723 = vmatpush1.msra.mxu0 %v1021
    %4724 = vmatprep.subr.mxu0 %v1034
    %4725 = vmatpush1.msra.mxu0 %v1033
    %4726 = vmatprep.subr.mxu0 %v1046
    %4727 = vmatpush1.msra.mxu0 %v1045
    %4728 = vmatprep.subr.mxu0 %v1058
    %4729 = vmatpush1.msra.mxu0 %v1057
    %4730 = vmatprep.subr.mxu0 %v1070
    %4731 = vmatpush1.msra.mxu0 %v1069
    %4732 = vmatprep.subr.mxu0 %v1082
    %4733 = vmatpush1.msra.mxu0 %v1081
    %4734 = vmatprep.subr.mxu0 %v1094
    %4735 = vmatpush1.msra.mxu0 %v1093
    %4736 = vmatprep.subr.mxu0 %v1106
    %4737 = vmatpush1.msra.mxu0 %v1105
    %4738 = vmatprep.subr.mxu0 %v1118
    %4739 = vmatpush1.msra.mxu0 %v1117
    %4740 = vmatprep.subr.mxu0 %v1130
    %4741 = vmatpush1.msra.mxu0 %v1129
    %4742 = vmatprep.subr.mxu0 %v1142
    %4743 = vmatpush1.msra.mxu0 %v1141
    %4744 = vmatprep.subr.mxu0 %v1154
    %4745 = vmatpush1.msra.mxu0 %v1153
    %4746 = vmatprep.subr.mxu0 %v1166
    %4747 = vmatpush1.msra.mxu0 %v1165
    %4748 = vmatprep.subr.mxu0 %v1178
    %4749 = vmatpush1.msra.mxu0 %v1177
    %4750 = vmatprep.mubr.f32.mxu0 %v4286
    %4751 = vmatmul.mubr.f32.gmra.mrb[0].mxu0 %v4285
    %v4752 = vpop.f32.mrb[0].mxu0
    %v4753 = vadd.f32 0.0, %v4752
    %v4754 = vpop.f32.mrb[0].mxu0
    %v4755 = vadd.f32 0.0, %v4754
    %4756 = vdwg.mxu0
    %v4757 = vadd.f32 %v4611, %v718
    %v4758 = vadd.f32 %v4613, %v722
    %v4759 = vadd.f32 %v4682, %v726
    %v4760 = vadd.f32 %v4684, %v730
    %v4761 = vadd.f32 %v4753, %v734
    %v4762 = vadd.f32 %v4755, %v738
    %4763 = vmatprep.subr.mxu0 %v1612
    %4764 = vmatpush1.msra.mxu0 %v1611
    %4765 = vmatprep.subr.mxu0 %v1618
    %4766 = vmatpush1.msra.mxu0 %v1617
    %4767 = vmatprep.subr.mxu0 %v1624
    %4768 = vmatpush1.msra.mxu0 %v1623
    %4769 = vmatprep.subr.mxu0 %v1630
    %4770 = vmatpush1.msra.mxu0 %v1629
    %4771 = vmatprep.subr.mxu0 %v1636
    %4772 = vmatpush1.msra.mxu0 %v1635
    %4773 = vmatprep.subr.mxu0 %v1642
    %4774 = vmatpush1.msra.mxu0 %v1641
    %4775 = vmatprep.subr.mxu0 %v1648
    %4776 = vmatpush1.msra.mxu0 %v1647
    %4777 = vmatprep.subr.mxu0 %v1654
    %4778 = vmatpush1.msra.mxu0 %v1653
    %4779 = vmatprep.subr.mxu0 %v1660
    %4780 = vmatpush1.msra.mxu0 %v1659
    %4781 = vmatprep.subr.mxu0 %v1666
    %4782 = vmatpush1.msra.mxu0 %v1665
    %4783 = vmatprep.subr.mxu0 %v1672
    %4784 = vmatpush1.msra.mxu0 %v1671
    %4785 = vmatprep.subr.mxu0 %v1678
    %4786 = vmatpush1.msra.mxu0 %v1677
    %4787 = vmatprep.subr.mxu0 %v1684
    %4788 = vmatpush1.msra.mxu0 %v1683
    %4789 = vmatprep.subr.mxu0 %v1690
    %4790 = vmatpush1.msra.mxu0 %v1689
    %4791 = vmatprep.subr.mxu0 %v1696
    %4792 = vmatpush1.msra.mxu0 %v1695
    %4793 = vmatprep.subr.mxu0 %v1702
    %4794 = vmatpush1.msra.mxu0 %v1701
    %4795 = vmatprep.subr.mxu0 %v1708
    %4796 = vmatpush1.msra.mxu0 %v1707
    %4797 = vmatprep.subr.mxu0 %v1714
    %4798 = vmatpush1.msra.mxu0 %v1713
    %4799 = vmatprep.subr.mxu0 %v1720
    %4800 = vmatpush1.msra.mxu0 %v1719
    %4801 = vmatprep.subr.mxu0 %v1726
    %4802 = vmatpush1.msra.mxu0 %v1725
    %4803 = vmatprep.subr.mxu0 %v1732
    %4804 = vmatpush1.msra.mxu0 %v1731
    %4805 = vmatprep.subr.mxu0 %v1738
    %4806 = vmatpush1.msra.mxu0 %v1737
    %4807 = vmatprep.subr.mxu0 %v1744
    %4808 = vmatpush1.msra.mxu0 %v1743
    %4809 = vmatprep.subr.mxu0 %v1750
    %4810 = vmatpush1.msra.mxu0 %v1749
    %4811 = vmatprep.subr.mxu0 %v1756
    %4812 = vmatpush1.msra.mxu0 %v1755
    %4813 = vmatprep.subr.mxu0 %v1762
    %4814 = vmatpush1.msra.mxu0 %v1761
    %4815 = vmatprep.subr.mxu0 %v1768
    %4816 = vmatpush1.msra.mxu0 %v1767
    %4817 = vmatprep.subr.mxu0 %v1774
    %4818 = vmatpush1.msra.mxu0 %v1773
    %4819 = vmatprep.subr.mxu0 %v1780
    %4820 = vmatpush1.msra.mxu0 %v1779
    %4821 = vmatprep.subr.mxu0 %v1786
    %4822 = vmatpush1.msra.mxu0 %v1785
    %4823 = vmatprep.subr.mxu0 %v1792
    %4824 = vmatpush1.msra.mxu0 %v1791
    %4825 = vmatprep.subr.mxu0 %v1798
    %4826 = vmatpush1.msra.mxu0 %v1797
    %4827 = vmatprep.mubr.f32.mxu0 %v4330
    %4828 = vmatmul.mubr.f32.gmra.mrb[0].mxu0 %v4329
    %v4829 = vpop.f32.mrb[0].mxu0
    %v4830 = vadd.f32 0.0, %v4829
    %v4831 = vpop.f32.mrb[0].mxu0
    %v4832 = vadd.f32 0.0, %v4831
    %4833 = vdwg.mxu0
    %4834 = vmatprep.subr.mxu0 %v1614
    %4835 = vmatpush1.msra.mxu0 %v1613
    %4836 = vmatprep.subr.mxu0 %v1620
    %4837 = vmatpush1.msra.mxu0 %v1619
    %4838 = vmatprep.subr.mxu0 %v1626
    %4839 = vmatpush1.msra.mxu0 %v1625
    %4840 = vmatprep.subr.mxu0 %v1632
    %4841 = vmatpush1.msra.mxu0 %v1631
    %4842 = vmatprep.subr.mxu0 %v1638
    %4843 = vmatpush1.msra.mxu0 %v1637
    %4844 = vmatprep.subr.mxu0 %v1644
    %4845 = vmatpush1.msra.mxu0 %v1643
    %4846 = vmatprep.subr.mxu0 %v1650
    %4847 = vmatpush1.msra.mxu0 %v1649
    %4848 = vmatprep.subr.mxu0 %v1656
    %4849 = vmatpush1.msra.mxu0 %v1655
    %4850 = vmatprep.subr.mxu0 %v1662
    %4851 = vmatpush1.msra.mxu0 %v1661
    %4852 = vmatprep.subr.mxu0 %v1668
    %4853 = vmatpush1.msra.mxu0 %v1667
    %4854 = vmatprep.subr.mxu0 %v1674
    %4855 = vmatpush1.msra.mxu0 %v1673
    %4856 = vmatprep.subr.mxu0 %v1680
    %4857 = vmatpush1.msra.mxu0 %v1679
    %4858 = vmatprep.subr.mxu0 %v1686
    %4859 = vmatpush1.msra.mxu0 %v1685
    %4860 = vmatprep.subr.mxu0 %v1692
    %4861 = vmatpush1.msra.mxu0 %v1691
    %4862 = vmatprep.subr.mxu0 %v1698
    %4863 = vmatpush1.msra.mxu0 %v1697
    %4864 = vmatprep.subr.mxu0 %v1704
    %4865 = vmatpush1.msra.mxu0 %v1703
    %4866 = vmatprep.subr.mxu0 %v1710
    %4867 = vmatpush1.msra.mxu0 %v1709
    %4868 = vmatprep.subr.mxu0 %v1716
    %4869 = vmatpush1.msra.mxu0 %v1715
    %4870 = vmatprep.subr.mxu0 %v1722
    %4871 = vmatpush1.msra.mxu0 %v1721
    %4872 = vmatprep.subr.mxu0 %v1728
    %4873 = vmatpush1.msra.mxu0 %v1727
    %4874 = vmatprep.subr.mxu0 %v1734
    %4875 = vmatpush1.msra.mxu0 %v1733
    %4876 = vmatprep.subr.mxu0 %v1740
    %4877 = vmatpush1.msra.mxu0 %v1739
    %4878 = vmatprep.subr.mxu0 %v1746
    %4879 = vmatpush1.msra.mxu0 %v1745
    %4880 = vmatprep.subr.mxu0 %v1752
    %4881 = vmatpush1.msra.mxu0 %v1751
    %4882 = vmatprep.subr.mxu0 %v1758
    %4883 = vmatpush1.msra.mxu0 %v1757
    %4884 = vmatprep.subr.mxu0 %v1764
    %4885 = vmatpush1.msra.mxu0 %v1763
    %4886 = vmatprep.subr.mxu0 %v1770
    %4887 = vmatpush1.msra.mxu0 %v1769
    %4888 = vmatprep.subr.mxu0 %v1776
    %4889 = vmatpush1.msra.mxu0 %v1775
    %4890 = vmatprep.subr.mxu0 %v1782
    %4891 = vmatpush1.msra.mxu0 %v1781
    %4892 = vmatprep.subr.mxu0 %v1788
    %4893 = vmatpush1.msra.mxu0 %v1787
    %4894 = vmatprep.subr.mxu0 %v1794
    %4895 = vmatpush1.msra.mxu0 %v1793
    %4896 = vmatprep.subr.mxu0 %v1800
    %4897 = vmatpush1.msra.mxu0 %v1799
    %4898 = vmatprep.mubr.f32.mxu0 %v4330
    %4899 = vmatmul.mubr.f32.gmra.mrb[0].mxu0 %v4329
    %v4900 = vpop.f32.mrb[0].mxu0
    %v4901 = vadd.f32 0.0, %v4900
    %v4902 = vpop.f32.mrb[0].mxu0
    %v4903 = vadd.f32 0.0, %v4902
    %4904 = vdwg.mxu0
    %4905 = vmatprep.subr.mxu0 %v1616
    %4906 = vmatpush1.msra.mxu0 %v1615
    %4907 = vmatprep.subr.mxu0 %v1622
    %4908 = vmatpush1.msra.mxu0 %v1621
    %4909 = vmatprep.subr.mxu0 %v1628
    %4910 = vmatpush1.msra.mxu0 %v1627
    %4911 = vmatprep.subr.mxu0 %v1634
    %4912 = vmatpush1.msra.mxu0 %v1633
    %4913 = vmatprep.subr.mxu0 %v1640
    %4914 = vmatpush1.msra.mxu0 %v1639
    %4915 = vmatprep.subr.mxu0 %v1646
    %4916 = vmatpush1.msra.mxu0 %v1645
    %4917 = vmatprep.subr.mxu0 %v1652
    %4918 = vmatpush1.msra.mxu0 %v1651
    %4919 = vmatprep.subr.mxu0 %v1658
    %4920 = vmatpush1.msra.mxu0 %v1657
    %4921 = vmatprep.subr.mxu0 %v1664
    %4922 = vmatpush1.msra.mxu0 %v1663
    %4923 = vmatprep.subr.mxu0 %v1670
    %4924 = vmatpush1.msra.mxu0 %v1669
    %4925 = vmatprep.subr.mxu0 %v1676
    %4926 = vmatpush1.msra.mxu0 %v1675
    %4927 = vmatprep.subr.mxu0 %v1682
    %4928 = vmatpush1.msra.mxu0 %v1681
    %4929 = vmatprep.subr.mxu0 %v1688
    %4930 = vmatpush1.msra.mxu0 %v1687
    %4931 = vmatprep.subr.mxu0 %v1694
    %4932 = vmatpush1.msra.mxu0 %v1693
    %4933 = vmatprep.subr.mxu0 %v1700
    %4934 = vmatpush1.msra.mxu0 %v1699
    %4935 = vmatprep.subr.mxu0 %v1706
    %4936 = vmatpush1.msra.mxu0 %v1705
    %4937 = vmatprep.subr.mxu0 %v1712
    %4938 = vmatpush1.msra.mxu0 %v1711
    %4939 = vmatprep.subr.mxu0 %v1718
    %4940 = vmatpush1.msra.mxu0 %v1717
    %4941 = vmatprep.subr.mxu0 %v1724
    %4942 = vmatpush1.msra.mxu0 %v1723
    %4943 = vmatprep.subr.mxu0 %v1730
    %4944 = vmatpush1.msra.mxu0 %v1729
    %4945 = vmatprep.subr.mxu0 %v1736
    %4946 = vmatpush1.msra.mxu0 %v1735
    %4947 = vmatprep.subr.mxu0 %v1742
    %4948 = vmatpush1.msra.mxu0 %v1741
    %4949 = vmatprep.subr.mxu0 %v1748
    %4950 = vmatpush1.msra.mxu0 %v1747
    %4951 = vmatprep.subr.mxu0 %v1754
    %4952 = vmatpush1.msra.mxu0 %v1753
    %4953 = vmatprep.subr.mxu0 %v1760
    %4954 = vmatpush1.msra.mxu0 %v1759
    %4955 = vmatprep.subr.mxu0 %v1766
    %4956 = vmatpush1.msra.mxu0 %v1765
    %4957 = vmatprep.subr.mxu0 %v1772
    %4958 = vmatpush1.msra.mxu0 %v1771
    %4959 = vmatprep.subr.mxu0 %v1778
    %4960 = vmatpush1.msra.mxu0 %v1777
    %4961 = vmatprep.subr.mxu0 %v1784
    %4962 = vmatpush1.msra.mxu0 %v1783
    %4963 = vmatprep.subr.mxu0 %v1790
    %4964 = vmatpush1.msra.mxu0 %v1789
    %4965 = vmatprep.subr.mxu0 %v1796
    %4966 = vmatpush1.msra.mxu0 %v1795
    %4967 = vmatprep.subr.mxu0 %v1802
    %4968 = vmatpush1.msra.mxu0 %v1801
    %4969 = vmatprep.mubr.f32.mxu0 %v4330
    %4970 = vmatmul.mubr.f32.gmra.mrb[0].mxu0 %v4329
    %v4971 = vpop.f32.mrb[0].mxu0
    %v4972 = vadd.f32 0.0, %v4971
    %v4973 = vpop.f32.mrb[0].mxu0
    %v4974 = vadd.f32 0.0, %v4973
    %4975 = vdwg.mxu0
    %s4976 = scalar_lea.vmem [#allocation2], 240
    %v4977 = vld [vmem:[%s4976] sm:$0xff]
    %v4978 = vld [vmem:[%s4976 + $0x8] sm:$0xff]
    %v4979 = vld [vmem:[%s4976 + $0x10] sm:$0xff]
    %v4980 = vld [vmem:[%s4976 + $0x18] sm:$0xff]
    %v4981 = vld [vmem:[%s4976 + $0x20] sm:$0xff]
    %v4982 = vld [vmem:[%s4976 + $0x28] sm:$0xff]
    %v4983 = vadd.f32 %v4977, %v4398
    %v4984 = vadd.f32 %v4978, %v4400
    %v4985 = vxor.u32 %v4983, 2147483648
    %v4986 = vxor.u32 %v4984, 2147483648
    %v4987 = vmul.f32 %v4985, 1.442695
    %v4988 = vpow.pop %v4987
    %v4989 = vmul.f32 %v4986, 1.442695
    %v4990 = vpow.pop %v4989
    %v4991 = vadd.f32 %v4988, 1.0
    %v4992 = vadd.f32 %v4990, 1.0
    %v4993 = vrcp.pop %v4991
    %v4994 = vmul.f32 1.0, %v4993
    %v4995 = vrcp.pop %v4992
    %v4996 = vmul.f32 1.0, %v4995
    %v4997 = vadd.f32 %v4979, %v4469
    %v4998 = vadd.f32 %v4980, %v4471
    %v4999 = vxor.u32 %v4997, 2147483648
    %v5000 = vxor.u32 %v4998, 2147483648
    %v5001 = vmul.f32 %v4999, 1.442695
    %v5002 = vpow.pop %v5001
    %v5003 = vmul.f32 %v5000, 1.442695
    %v5004 = vpow.pop %v5003
    %v5005 = vadd.f32 %v5002, 1.0
    %v5006 = vadd.f32 %v5004, 1.0
    %v5007 = vrcp.pop %v5005
    %v5008 = vmul.f32 1.0, %v5007
    %v5009 = vrcp.pop %v5006
    %v5010 = vmul.f32 1.0, %v5009
    %v5011 = vadd.f32 %v4540, %v694
    %v5012 = vadd.f32 %v4542, %v698
    %v5013 = vmul.f32 %v4994, %v5011
    %v5014 = vmul.f32 %v4996, %v5012
    %v5015 = vadd.f32 %v4981, %v5013
    %v5016 = vadd.f32 %v4982, %v5014
    %v5017 = vtanh.pop %v5015
    %v5018 = vtanh.pop %v5016
    %v5019 = vsub.f32 1.0, %v5008
    %v5020 = vsub.f32 1.0, %v5010
    %v5021 = vmul.f32 %v5019, %v5017
    %v5022 = vmul.f32 %v5020, %v5018
    %v5023 = vmul.f32 %v5008, %v4285
    %v5024 = vmul.f32 %v5010, %v4286
    %v5025 = vadd.f32 %v5021, %v5023
    %v5026 = vadd.f32 %v5022, %v5024
    %v5027 = vadd.f32 %v4757, %v4830
    %v5028 = vadd.f32 %v4758, %v4832
    %v5029 = vxor.u32 %v5027, 2147483648
    %v5030 = vxor.u32 %v5028, 2147483648
    %v5031 = vmul.f32 %v5029, 1.442695
    %v5032 = vpow.pop %v5031
    %v5033 = vmul.f32 %v5030, 1.442695
    %v5034 = vpow.pop %v5033
    %v5035 = vadd.f32 %v5032, 1.0
    %v5036 = vadd.f32 %v5034, 1.0
    %v5037 = vrcp.pop %v5035
    %v5038 = vmul.f32 1.0, %v5037
    %v5039 = vrcp.pop %v5036
    %v5040 = vmul.f32 1.0, %v5039
    %v5041 = vadd.f32 %v4759, %v4901
    %v5042 = vadd.f32 %v4760, %v4903
    %v5043 = vxor.u32 %v5041, 2147483648
    %v5044 = vxor.u32 %v5042, 2147483648
    %v5045 = vmul.f32 %v5043, 1.442695
    %v5046 = vpow.pop %v5045
    %v5047 = vmul.f32 %v5044, 1.442695
    %v5048 = vpow.pop %v5047
    %v5049 = vadd.f32 %v5046, 1.0
    %v5050 = vadd.f32 %v5048, 1.0
    %v5051 = vrcp.pop %v5049
    %v5052 = vmul.f32 1.0, %v5051
    %v5053 = vrcp.pop %v5050
    %v5054 = vmul.f32 1.0, %v5053
    %v5055 = vadd.f32 %v4972, %v706
    %v5056 = vadd.f32 %v4974, %v710
    %v5057 = vmul.f32 %v5038, %v5055
    %v5058 = vmul.f32 %v5040, %v5056
    %v5059 = vadd.f32 %v4761, %v5057
    %v5060 = vadd.f32 %v4762, %v5058
    %v5061 = vtanh.pop %v5059
    %v5062 = vtanh.pop %v5060
    %v5063 = vsub.f32 1.0, %v5052
    %v5064 = vsub.f32 1.0, %v5054
    %v5065 = vmul.f32 %v5063, %v5061
    %v5066 = vmul.f32 %v5064, %v5062
    %v5067 = vmul.f32 %v5052, %v4329
    %v5068 = vmul.f32 %v5054, %v4330
    %v5069 = vadd.f32 %v5065, %v5067
    %v5070 = vadd.f32 %v5066, %v5068
    %5071 = vmatprep.subr.mxu0 %v796
    %5072 = vmatpush1.msra.mxu0 %v795
    %5073 = vmatprep.subr.mxu0 %v808
    %5074 = vmatpush1.msra.mxu0 %v807
    %5075 = vmatprep.subr.mxu0 %v820
    %5076 = vmatpush1.msra.mxu0 %v819
    %5077 = vmatprep.subr.mxu0 %v832
    %5078 = vmatpush1.msra.mxu0 %v831
    %5079 = vmatprep.subr.mxu0 %v844
    %5080 = vmatpush1.msra.mxu0 %v843
    %5081 = vmatprep.subr.mxu0 %v856
    %5082 = vmatpush1.msra.mxu0 %v855
    %5083 = vmatprep.subr.mxu0 %v868
    %5084 = vmatpush1.msra.mxu0 %v867
    %5085 = vmatprep.subr.mxu0 %v880
    %5086 = vmatpush1.msra.mxu0 %v879
    %5087 = vmatprep.subr.mxu0 %v892
    %5088 = vmatpush1.msra.mxu0 %v891
    %5089 = vmatprep.subr.mxu0 %v904
    %5090 = vmatpush1.msra.mxu0 %v903
    %5091 = vmatprep.subr.mxu0 %v916
    %5092 = vmatpush1.msra.mxu0 %v915
    %5093 = vmatprep.subr.mxu0 %v928
    %5094 = vmatpush1.msra.mxu0 %v927
    %5095 = vmatprep.subr.mxu0 %v940
    %5096 = vmatpush1.msra.mxu0 %v939
    %5097 = vmatprep.subr.mxu0 %v952
    %5098 = vmatpush1.msra.mxu0 %v951
    %5099 = vmatprep.subr.mxu0 %v964
    %5100 = vmatpush1.msra.mxu0 %v963
    %5101 = vmatprep.subr.mxu0 %v976
    %5102 = vmatpush1.msra.mxu0 %v975
    %5103 = vmatprep.subr.mxu0 %v988
    %5104 = vmatpush1.msra.mxu0 %v987
    %5105 = vmatprep.subr.mxu0 %v1000
    %5106 = vmatpush1.msra.mxu0 %v999
    %5107 = vmatprep.subr.mxu0 %v1012
    %5108 = vmatpush1.msra.mxu0 %v1011
    %5109 = vmatprep.subr.mxu0 %v1024
    %5110 = vmatpush1.msra.mxu0 %v1023
    %5111 = vmatprep.subr.mxu0 %v1036
    %5112 = vmatpush1.msra.mxu0 %v1035
    %5113 = vmatprep.subr.mxu0 %v1048
    %5114 = vmatpush1.msra.mxu0 %v1047
    %5115 = vmatprep.subr.mxu0 %v1060
    %5116 = vmatpush1.msra.mxu0 %v1059
    %5117 = vmatprep.subr.mxu0 %v1072
    %5118 = vmatpush1.msra.mxu0 %v1071
    %5119 = vmatprep.subr.mxu0 %v1084
    %5120 = vmatpush1.msra.mxu0 %v1083
    %5121 = vmatprep.subr.mxu0 %v1096
    %5122 = vmatpush1.msra.mxu0 %v1095
    %5123 = vmatprep.subr.mxu0 %v1108
    %5124 = vmatpush1.msra.mxu0 %v1107
    %5125 = vmatprep.subr.mxu0 %v1120
    %5126 = vmatpush1.msra.mxu0 %v1119
    %5127 = vmatprep.subr.mxu0 %v1132
    %5128 = vmatpush1.msra.mxu0 %v1131
    %5129 = vmatprep.subr.mxu0 %v1144
    %5130 = vmatpush1.msra.mxu0 %v1143
    %5131 = vmatprep.subr.mxu0 %v1156
    %5132 = vmatpush1.msra.mxu0 %v1155
    %5133 = vmatprep.subr.mxu0 %v1168
    %5134 = vmatpush1.msra.mxu0 %v1167
    %5135 = vmatprep.mubr.f32.mxu0 %v5026
    %5136 = vmatmul.mubr.f32.gmra.mrb[0].mxu0 %v5025
    %v5137 = vpop.f32.mrb[0].mxu0
    %v5138 = vadd.f32 0.0, %v5137
    %v5139 = vpop.f32.mrb[0].mxu0
    %v5140 = vadd.f32 0.0, %v5139
    %5141 = vdwg.mxu0
    %5142 = vmatprep.subr.mxu0 %v798
    %5143 = vmatpush1.msra.mxu0 %v797
    %5144 = vmatprep.subr.mxu0 %v810
    %5145 = vmatpush1.msra.mxu0 %v809
    %5146 = vmatprep.subr.mxu0 %v822
    %5147 = vmatpush1.msra.mxu0 %v821
    %5148 = vmatprep.subr.mxu0 %v834
    %5149 = vmatpush1.msra.mxu0 %v833
    %5150 = vmatprep.subr.mxu0 %v846
    %5151 = vmatpush1.msra.mxu0 %v845
    %5152 = vmatprep.subr.mxu0 %v858
    %5153 = vmatpush1.msra.mxu0 %v857
    %5154 = vmatprep.subr.mxu0 %v870
    %5155 = vmatpush1.msra.mxu0 %v869
    %5156 = vmatprep.subr.mxu0 %v882
    %5157 = vmatpush1.msra.mxu0 %v881
    %5158 = vmatprep.subr.mxu0 %v894
    %5159 = vmatpush1.msra.mxu0 %v893
    %5160 = vmatprep.subr.mxu0 %v906
    %5161 = vmatpush1.msra.mxu0 %v905
    %5162 = vmatprep.subr.mxu0 %v918
    %5163 = vmatpush1.msra.mxu0 %v917
    %5164 = vmatprep.subr.mxu0 %v930
    %5165 = vmatpush1.msra.mxu0 %v929
    %5166 = vmatprep.subr.mxu0 %v942
    %5167 = vmatpush1.msra.mxu0 %v941
    %5168 = vmatprep.subr.mxu0 %v954
    %5169 = vmatpush1.msra.mxu0 %v953
    %5170 = vmatprep.subr.mxu0 %v966
    %5171 = vmatpush1.msra.mxu0 %v965
    %5172 = vmatprep.subr.mxu0 %v978
    %5173 = vmatpush1.msra.mxu0 %v977
    %5174 = vmatprep.subr.mxu0 %v990
    %5175 = vmatpush1.msra.mxu0 %v989
    %5176 = vmatprep.subr.mxu0 %v1002
    %5177 = vmatpush1.msra.mxu0 %v1001
    %5178 = vmatprep.subr.mxu0 %v1014
    %5179 = vmatpush1.msra.mxu0 %v1013
    %5180 = vmatprep.subr.mxu0 %v1026
    %5181 = vmatpush1.msra.mxu0 %v1025
    %5182 = vmatprep.subr.mxu0 %v1038
    %5183 = vmatpush1.msra.mxu0 %v1037
    %5184 = vmatprep.subr.mxu0 %v1050
    %5185 = vmatpush1.msra.mxu0 %v1049
    %5186 = vmatprep.subr.mxu0 %v1062
    %5187 = vmatpush1.msra.mxu0 %v1061
    %5188 = vmatprep.subr.mxu0 %v1074
    %5189 = vmatpush1.msra.mxu0 %v1073
    %5190 = vmatprep.subr.mxu0 %v1086
    %5191 = vmatpush1.msra.mxu0 %v1085
    %5192 = vmatprep.subr.mxu0 %v1098
    %5193 = vmatpush1.msra.mxu0 %v1097
    %5194 = vmatprep.subr.mxu0 %v1110
    %5195 = vmatpush1.msra.mxu0 %v1109
    %5196 = vmatprep.subr.mxu0 %v1122
    %5197 = vmatpush1.msra.mxu0 %v1121
    %5198 = vmatprep.subr.mxu0 %v1134
    %5199 = vmatpush1.msra.mxu0 %v1133
    %5200 = vmatprep.subr.mxu0 %v1146
    %5201 = vmatpush1.msra.mxu0 %v1145
    %5202 = vmatprep.subr.mxu0 %v1158
    %5203 = vmatpush1.msra.mxu0 %v1157
    %5204 = vmatprep.subr.mxu0 %v1170
    %5205 = vmatpush1.msra.mxu0 %v1169
    %5206 = vmatprep.mubr.f32.mxu0 %v5026
    %5207 = vmatmul.mubr.f32.gmra.mrb[0].mxu0 %v5025
    %v5208 = vpop.f32.mrb[0].mxu0
    %v5209 = vadd.f32 0.0, %v5208
    %v5210 = vpop.f32.mrb[0].mxu0
    %v5211 = vadd.f32 0.0, %v5210
    %5212 = vdwg.mxu0
    %5213 = vmatprep.subr.mxu0 %v800
    %5214 = vmatpush1.msra.mxu0 %v799
    %5215 = vmatprep.subr.mxu0 %v812
    %5216 = vmatpush1.msra.mxu0 %v811
    %5217 = vmatprep.subr.mxu0 %v824
    %5218 = vmatpush1.msra.mxu0 %v823
    %5219 = vmatprep.subr.mxu0 %v836
    %5220 = vmatpush1.msra.mxu0 %v835
    %5221 = vmatprep.subr.mxu0 %v848
    %5222 = vmatpush1.msra.mxu0 %v847
    %5223 = vmatprep.subr.mxu0 %v860
    %5224 = vmatpush1.msra.mxu0 %v859
    %5225 = vmatprep.subr.mxu0 %v872
    %5226 = vmatpush1.msra.mxu0 %v871
    %5227 = vmatprep.subr.mxu0 %v884
    %5228 = vmatpush1.msra.mxu0 %v883
    %5229 = vmatprep.subr.mxu0 %v896
    %5230 = vmatpush1.msra.mxu0 %v895
    %5231 = vmatprep.subr.mxu0 %v908
    %5232 = vmatpush1.msra.mxu0 %v907
    %5233 = vmatprep.subr.mxu0 %v920
    %5234 = vmatpush1.msra.mxu0 %v919
    %5235 = vmatprep.subr.mxu0 %v932
    %5236 = vmatpush1.msra.mxu0 %v931
    %5237 = vmatprep.subr.mxu0 %v944
    %5238 = vmatpush1.msra.mxu0 %v943
    %5239 = vmatprep.subr.mxu0 %v956
    %5240 = vmatpush1.msra.mxu0 %v955
    %5241 = vmatprep.subr.mxu0 %v968
    %5242 = vmatpush1.msra.mxu0 %v967
    %5243 = vmatprep.subr.mxu0 %v980
    %5244 = vmatpush1.msra.mxu0 %v979
    %5245 = vmatprep.subr.mxu0 %v992
    %5246 = vmatpush1.msra.mxu0 %v991
    %5247 = vmatprep.subr.mxu0 %v1004
    %5248 = vmatpush1.msra.mxu0 %v1003
    %5249 = vmatprep.subr.mxu0 %v1016
    %5250 = vmatpush1.msra.mxu0 %v1015
    %5251 = vmatprep.subr.mxu0 %v1028
    %5252 = vmatpush1.msra.mxu0 %v1027
    %5253 = vmatprep.subr.mxu0 %v1040
    %5254 = vmatpush1.msra.mxu0 %v1039
    %5255 = vmatprep.subr.mxu0 %v1052
    %5256 = vmatpush1.msra.mxu0 %v1051
    %5257 = vmatprep.subr.mxu0 %v1064
    %5258 = vmatpush1.msra.mxu0 %v1063
    %5259 = vmatprep.subr.mxu0 %v1076
    %5260 = vmatpush1.msra.mxu0 %v1075
    %5261 = vmatprep.subr.mxu0 %v1088
    %5262 = vmatpush1.msra.mxu0 %v1087
    %5263 = vmatprep.subr.mxu0 %v1100
    %5264 = vmatpush1.msra.mxu0 %v1099
    %5265 = vmatprep.subr.mxu0 %v1112
    %5266 = vmatpush1.msra.mxu0 %v1111
    %5267 = vmatprep.subr.mxu0 %v1124
    %5268 = vmatpush1.msra.mxu0 %v1123
    %5269 = vmatprep.subr.mxu0 %v1136
    %5270 = vmatpush1.msra.mxu0 %v1135
    %5271 = vmatprep.subr.mxu0 %v1148
    %5272 = vmatpush1.msra.mxu0 %v1147
    %5273 = vmatprep.subr.mxu0 %v1160
    %5274 = vmatpush1.msra.mxu0 %v1159
    %5275 = vmatprep.subr.mxu0 %v1172
    %5276 = vmatpush1.msra.mxu0 %v1171
    %5277 = vmatprep.mubr.f32.mxu0 %v5026
    %5278 = vmatmul.mubr.f32.gmra.mrb[0].mxu0 %v5025
    %v5279 = vpop.f32.mrb[0].mxu0
    %v5280 = vadd.f32 0.0, %v5279
    %v5281 = vpop.f32.mrb[0].mxu0
    %v5282 = vadd.f32 0.0, %v5281
    %5283 = vdwg.mxu0
    %5284 = vmatprep.subr.mxu0 %v802
    %5285 = vmatpush1.msra.mxu0 %v801
    %5286 = vmatprep.subr.mxu0 %v814
    %5287 = vmatpush1.msra.mxu0 %v813
    %5288 = vmatprep.subr.mxu0 %v826
    %5289 = vmatpush1.msra.mxu0 %v825
    %5290 = vmatprep.subr.mxu0 %v838
    %5291 = vmatpush1.msra.mxu0 %v837
    %5292 = vmatprep.subr.mxu0 %v850
    %5293 = vmatpush1.msra.mxu0 %v849
    %5294 = vmatprep.subr.mxu0 %v862
    %5295 = vmatpush1.msra.mxu0 %v861
    %5296 = vmatprep.subr.mxu0 %v874
    %5297 = vmatpush1.msra.mxu0 %v873
    %5298 = vmatprep.subr.mxu0 %v886
    %5299 = vmatpush1.msra.mxu0 %v885
    %5300 = vmatprep.subr.mxu0 %v898
    %5301 = vmatpush1.msra.mxu0 %v897
    %5302 = vmatprep.subr.mxu0 %v910
    %5303 = vmatpush1.msra.mxu0 %v909
    %5304 = vmatprep.subr.mxu0 %v922
    %5305 = vmatpush1.msra.mxu0 %v921
    %5306 = vmatprep.subr.mxu0 %v934
    %5307 = vmatpush1.msra.mxu0 %v933
    %5308 = vmatprep.subr.mxu0 %v946
    %5309 = vmatpush1.msra.mxu0 %v945
    %5310 = vmatprep.subr.mxu0 %v958
    %5311 = vmatpush1.msra.mxu0 %v957
    %5312 = vmatprep.subr.mxu0 %v970
    %5313 = vmatpush1.msra.mxu0 %v969
    %5314 = vmatprep.subr.mxu0 %v982
    %5315 = vmatpush1.msra.mxu0 %v981
    %5316 = vmatprep.subr.mxu0 %v994
    %5317 = vmatpush1.msra.mxu0 %v993
    %5318 = vmatprep.subr.mxu0 %v1006
    %5319 = vmatpush1.msra.mxu0 %v1005
    %5320 = vmatprep.subr.mxu0 %v1018
    %5321 = vmatpush1.msra.mxu0 %v1017
    %5322 = vmatprep.subr.mxu0 %v1030
    %5323 = vmatpush1.msra.mxu0 %v1029
    %5324 = vmatprep.subr.mxu0 %v1042
    %5325 = vmatpush1.msra.mxu0 %v1041
    %5326 = vmatprep.subr.mxu0 %v1054
    %5327 = vmatpush1.msra.mxu0 %v1053
    %5328 = vmatprep.subr.mxu0 %v1066
    %5329 = vmatpush1.msra.mxu0 %v1065
    %5330 = vmatprep.subr.mxu0 %v1078
    %5331 = vmatpush1.msra.mxu0 %v1077
    %5332 = vmatprep.subr.mxu0 %v1090
    %5333 = vmatpush1.msra.mxu0 %v1089
    %5334 = vmatprep.subr.mxu0 %v1102
    %5335 = vmatpush1.msra.mxu0 %v1101
    %5336 = vmatprep.subr.mxu0 %v1114
    %5337 = vmatpush1.msra.mxu0 %v1113
    %5338 = vmatprep.subr.mxu0 %v1126
    %5339 = vmatpush1.msra.mxu0 %v1125
    %5340 = vmatprep.subr.mxu0 %v1138
    %5341 = vmatpush1.msra.mxu0 %v1137
    %5342 = vmatprep.subr.mxu0 %v1150
    %5343 = vmatpush1.msra.mxu0 %v1149
    %5344 = vmatprep.subr.mxu0 %v1162
    %5345 = vmatpush1.msra.mxu0 %v1161
    %5346 = vmatprep.subr.mxu0 %v1174
    %5347 = vmatpush1.msra.mxu0 %v1173
    %5348 = vmatprep.mubr.f32.mxu0 %v5026
    %5349 = vmatmul.mubr.f32.gmra.mrb[0].mxu0 %v5025
    %v5350 = vpop.f32.mrb[0].mxu0
    %v5351 = vadd.f32 0.0, %v5350
    %v5352 = vpop.f32.mrb[0].mxu0
    %v5353 = vadd.f32 0.0, %v5352
    %5354 = vdwg.mxu0
    %5355 = vmatprep.subr.mxu0 %v804
    %5356 = vmatpush1.msra.mxu0 %v803
    %5357 = vmatprep.subr.mxu0 %v816
    %5358 = vmatpush1.msra.mxu0 %v815
    %5359 = vmatprep.subr.mxu0 %v828
    %5360 = vmatpush1.msra.mxu0 %v827
    %5361 = vmatprep.subr.mxu0 %v840
    %5362 = vmatpush1.msra.mxu0 %v839
    %5363 = vmatprep.subr.mxu0 %v852
    %5364 = vmatpush1.msra.mxu0 %v851
    %5365 = vmatprep.subr.mxu0 %v864
    %5366 = vmatpush1.msra.mxu0 %v863
    %5367 = vmatprep.subr.mxu0 %v876
    %5368 = vmatpush1.msra.mxu0 %v875
    %5369 = vmatprep.subr.mxu0 %v888
    %5370 = vmatpush1.msra.mxu0 %v887
    %5371 = vmatprep.subr.mxu0 %v900
    %5372 = vmatpush1.msra.mxu0 %v899
    %5373 = vmatprep.subr.mxu0 %v912
    %5374 = vmatpush1.msra.mxu0 %v911
    %5375 = vmatprep.subr.mxu0 %v924
    %5376 = vmatpush1.msra.mxu0 %v923
    %5377 = vmatprep.subr.mxu0 %v936
    %5378 = vmatpush1.msra.mxu0 %v935
    %5379 = vmatprep.subr.mxu0 %v948
    %5380 = vmatpush1.msra.mxu0 %v947
    %5381 = vmatprep.subr.mxu0 %v960
    %5382 = vmatpush1.msra.mxu0 %v959
    %5383 = vmatprep.subr.mxu0 %v972
    %5384 = vmatpush1.msra.mxu0 %v971
    %5385 = vmatprep.subr.mxu0 %v984
    %5386 = vmatpush1.msra.mxu0 %v983
    %5387 = vmatprep.subr.mxu0 %v996
    %5388 = vmatpush1.msra.mxu0 %v995
    %5389 = vmatprep.subr.mxu0 %v1008
    %5390 = vmatpush1.msra.mxu0 %v1007
    %5391 = vmatprep.subr.mxu0 %v1020
    %5392 = vmatpush1.msra.mxu0 %v1019
    %5393 = vmatprep.subr.mxu0 %v1032
    %5394 = vmatpush1.msra.mxu0 %v1031
    %5395 = vmatprep.subr.mxu0 %v1044
    %5396 = vmatpush1.msra.mxu0 %v1043
    %5397 = vmatprep.subr.mxu0 %v1056
    %5398 = vmatpush1.msra.mxu0 %v1055
    %5399 = vmatprep.subr.mxu0 %v1068
    %5400 = vmatpush1.msra.mxu0 %v1067
    %5401 = vmatprep.subr.mxu0 %v1080
    %5402 = vmatpush1.msra.mxu0 %v1079
    %5403 = vmatprep.subr.mxu0 %v1092
    %5404 = vmatpush1.msra.mxu0 %v1091
    %5405 = vmatprep.subr.mxu0 %v1104
    %5406 = vmatpush1.msra.mxu0 %v1103
    %5407 = vmatprep.subr.mxu0 %v1116
    %5408 = vmatpush1.msra.mxu0 %v1115
    %5409 = vmatprep.subr.mxu0 %v1128
    %5410 = vmatpush1.msra.mxu0 %v1127
    %5411 = vmatprep.subr.mxu0 %v1140
    %5412 = vmatpush1.msra.mxu0 %v1139
    %5413 = vmatprep.subr.mxu0 %v1152
    %5414 = vmatpush1.msra.mxu0 %v1151
    %5415 = vmatprep.subr.mxu0 %v1164
    %5416 = vmatpush1.msra.mxu0 %v1163
    %5417 = vmatprep.subr.mxu0 %v1176
    %5418 = vmatpush1.msra.mxu0 %v1175
    %5419 = vmatprep.mubr.f32.mxu0 %v5026
    %5420 = vmatmul.mubr.f32.gmra.mrb[0].mxu0 %v5025
    %v5421 = vpop.f32.mrb[0].mxu0
    %v5422 = vadd.f32 0.0, %v5421
    %v5423 = vpop.f32.mrb[0].mxu0
    %v5424 = vadd.f32 0.0, %v5423
    %5425 = vdwg.mxu0
    %5426 = vmatprep.subr.mxu0 %v806
    %5427 = vmatpush1.msra.mxu0 %v805
    %5428 = vmatprep.subr.mxu0 %v818
    %5429 = vmatpush1.msra.mxu0 %v817
    %5430 = vmatprep.subr.mxu0 %v830
    %5431 = vmatpush1.msra.mxu0 %v829
    %5432 = vmatprep.subr.mxu0 %v842
    %5433 = vmatpush1.msra.mxu0 %v841
    %5434 = vmatprep.subr.mxu0 %v854
    %5435 = vmatpush1.msra.mxu0 %v853
    %5436 = vmatprep.subr.mxu0 %v866
    %5437 = vmatpush1.msra.mxu0 %v865
    %5438 = vmatprep.subr.mxu0 %v878
    %5439 = vmatpush1.msra.mxu0 %v877
    %5440 = vmatprep.subr.mxu0 %v890
    %5441 = vmatpush1.msra.mxu0 %v889
    %5442 = vmatprep.subr.mxu0 %v902
    %5443 = vmatpush1.msra.mxu0 %v901
    %5444 = vmatprep.subr.mxu0 %v914
    %5445 = vmatpush1.msra.mxu0 %v913
    %5446 = vmatprep.subr.mxu0 %v926
    %5447 = vmatpush1.msra.mxu0 %v925
    %5448 = vmatprep.subr.mxu0 %v938
    %5449 = vmatpush1.msra.mxu0 %v937
    %5450 = vmatprep.subr.mxu0 %v950
    %5451 = vmatpush1.msra.mxu0 %v949
    %5452 = vmatprep.subr.mxu0 %v962
    %5453 = vmatpush1.msra.mxu0 %v961
    %5454 = vmatprep.subr.mxu0 %v974
    %5455 = vmatpush1.msra.mxu0 %v973
    %5456 = vmatprep.subr.mxu0 %v986
    %5457 = vmatpush1.msra.mxu0 %v985
    %5458 = vmatprep.subr.mxu0 %v998
    %5459 = vmatpush1.msra.mxu0 %v997
    %5460 = vmatprep.subr.mxu0 %v1010
    %5461 = vmatpush1.msra.mxu0 %v1009
    %5462 = vmatprep.subr.mxu0 %v1022
    %5463 = vmatpush1.msra.mxu0 %v1021
    %5464 = vmatprep.subr.mxu0 %v1034
    %5465 = vmatpush1.msra.mxu0 %v1033
    %5466 = vmatprep.subr.mxu0 %v1046
    %5467 = vmatpush1.msra.mxu0 %v1045
    %5468 = vmatprep.subr.mxu0 %v1058
    %5469 = vmatpush1.msra.mxu0 %v1057
    %5470 = vmatprep.subr.mxu0 %v1070
    %5471 = vmatpush1.msra.mxu0 %v1069
    %5472 = vmatprep.subr.mxu0 %v1082
    %5473 = vmatpush1.msra.mxu0 %v1081
    %5474 = vmatprep.subr.mxu0 %v1094
    %5475 = vmatpush1.msra.mxu0 %v1093
    %5476 = vmatprep.subr.mxu0 %v1106
    %5477 = vmatpush1.msra.mxu0 %v1105
    %5478 = vmatprep.subr.mxu0 %v1118
    %5479 = vmatpush1.msra.mxu0 %v1117
    %5480 = vmatprep.subr.mxu0 %v1130
    %5481 = vmatpush1.msra.mxu0 %v1129
    %5482 = vmatprep.subr.mxu0 %v1142
    %5483 = vmatpush1.msra.mxu0 %v1141
    %5484 = vmatprep.subr.mxu0 %v1154
    %5485 = vmatpush1.msra.mxu0 %v1153
    %5486 = vmatprep.subr.mxu0 %v1166
    %5487 = vmatpush1.msra.mxu0 %v1165
    %5488 = vmatprep.subr.mxu0 %v1178
    %5489 = vmatpush1.msra.mxu0 %v1177
    %5490 = vmatprep.mubr.f32.mxu0 %v5026
    %5491 = vmatmul.mubr.f32.gmra.mrb[0].mxu0 %v5025
    %v5492 = vpop.f32.mrb[0].mxu0
    %v5493 = vadd.f32 0.0, %v5492
    %v5494 = vpop.f32.mrb[0].mxu0
    %v5495 = vadd.f32 0.0, %v5494
    %5496 = vdwg.mxu0
    %v5497 = vadd.f32 %v5351, %v718
    %v5498 = vadd.f32 %v5353, %v722
    %v5499 = vadd.f32 %v5422, %v726
    %v5500 = vadd.f32 %v5424, %v730
    %v5501 = vadd.f32 %v5493, %v734
    %v5502 = vadd.f32 %v5495, %v738
    %5503 = vmatprep.subr.mxu0 %v1612
    %5504 = vmatpush1.msra.mxu0 %v1611
    %5505 = vmatprep.subr.mxu0 %v1618
    %5506 = vmatpush1.msra.mxu0 %v1617
    %5507 = vmatprep.subr.mxu0 %v1624
    %5508 = vmatpush1.msra.mxu0 %v1623
    %5509 = vmatprep.subr.mxu0 %v1630
    %5510 = vmatpush1.msra.mxu0 %v1629
    %5511 = vmatprep.subr.mxu0 %v1636
    %5512 = vmatpush1.msra.mxu0 %v1635
    %5513 = vmatprep.subr.mxu0 %v1642
    %5514 = vmatpush1.msra.mxu0 %v1641
    %5515 = vmatprep.subr.mxu0 %v1648
    %5516 = vmatpush1.msra.mxu0 %v1647
    %5517 = vmatprep.subr.mxu0 %v1654
    %5518 = vmatpush1.msra.mxu0 %v1653
    %5519 = vmatprep.subr.mxu0 %v1660
    %5520 = vmatpush1.msra.mxu0 %v1659
    %5521 = vmatprep.subr.mxu0 %v1666
    %5522 = vmatpush1.msra.mxu0 %v1665
    %5523 = vmatprep.subr.mxu0 %v1672
    %5524 = vmatpush1.msra.mxu0 %v1671
    %5525 = vmatprep.subr.mxu0 %v1678
    %5526 = vmatpush1.msra.mxu0 %v1677
    %5527 = vmatprep.subr.mxu0 %v1684
    %5528 = vmatpush1.msra.mxu0 %v1683
    %5529 = vmatprep.subr.mxu0 %v1690
    %5530 = vmatpush1.msra.mxu0 %v1689
    %5531 = vmatprep.subr.mxu0 %v1696
    %5532 = vmatpush1.msra.mxu0 %v1695
    %5533 = vmatprep.subr.mxu0 %v1702
    %5534 = vmatpush1.msra.mxu0 %v1701
    %5535 = vmatprep.subr.mxu0 %v1708
    %5536 = vmatpush1.msra.mxu0 %v1707
    %5537 = vmatprep.subr.mxu0 %v1714
    %5538 = vmatpush1.msra.mxu0 %v1713
    %5539 = vmatprep.subr.mxu0 %v1720
    %5540 = vmatpush1.msra.mxu0 %v1719
    %5541 = vmatprep.subr.mxu0 %v1726
    %5542 = vmatpush1.msra.mxu0 %v1725
    %5543 = vmatprep.subr.mxu0 %v1732
    %5544 = vmatpush1.msra.mxu0 %v1731
    %5545 = vmatprep.subr.mxu0 %v1738
    %5546 = vmatpush1.msra.mxu0 %v1737
    %5547 = vmatprep.subr.mxu0 %v1744
    %5548 = vmatpush1.msra.mxu0 %v1743
    %5549 = vmatprep.subr.mxu0 %v1750
    %5550 = vmatpush1.msra.mxu0 %v1749
    %5551 = vmatprep.subr.mxu0 %v1756
    %5552 = vmatpush1.msra.mxu0 %v1755
    %5553 = vmatprep.subr.mxu0 %v1762
    %5554 = vmatpush1.msra.mxu0 %v1761
    %5555 = vmatprep.subr.mxu0 %v1768
    %5556 = vmatpush1.msra.mxu0 %v1767
    %5557 = vmatprep.subr.mxu0 %v1774
    %5558 = vmatpush1.msra.mxu0 %v1773
    %5559 = vmatprep.subr.mxu0 %v1780
    %5560 = vmatpush1.msra.mxu0 %v1779
    %5561 = vmatprep.subr.mxu0 %v1786
    %5562 = vmatpush1.msra.mxu0 %v1785
    %5563 = vmatprep.subr.mxu0 %v1792
    %5564 = vmatpush1.msra.mxu0 %v1791
    %5565 = vmatprep.subr.mxu0 %v1798
    %5566 = vmatpush1.msra.mxu0 %v1797
    %5567 = vmatprep.mubr.f32.mxu0 %v5070
    %5568 = vmatmul.mubr.f32.gmra.mrb[0].mxu0 %v5069
    %v5569 = vpop.f32.mrb[0].mxu0
    %v5570 = vadd.f32 0.0, %v5569
    %v5571 = vpop.f32.mrb[0].mxu0
    %v5572 = vadd.f32 0.0, %v5571
    %5573 = vdwg.mxu0
    %5574 = vmatprep.subr.mxu0 %v1614
    %5575 = vmatpush1.msra.mxu0 %v1613
    %5576 = vmatprep.subr.mxu0 %v1620
    %5577 = vmatpush1.msra.mxu0 %v1619
    %5578 = vmatprep.subr.mxu0 %v1626
    %5579 = vmatpush1.msra.mxu0 %v1625
    %5580 = vmatprep.subr.mxu0 %v1632
    %5581 = vmatpush1.msra.mxu0 %v1631
    %5582 = vmatprep.subr.mxu0 %v1638
    %5583 = vmatpush1.msra.mxu0 %v1637
    %5584 = vmatprep.subr.mxu0 %v1644
    %5585 = vmatpush1.msra.mxu0 %v1643
    %5586 = vmatprep.subr.mxu0 %v1650
    %5587 = vmatpush1.msra.mxu0 %v1649
    %5588 = vmatprep.subr.mxu0 %v1656
    %5589 = vmatpush1.msra.mxu0 %v1655
    %5590 = vmatprep.subr.mxu0 %v1662
    %5591 = vmatpush1.msra.mxu0 %v1661
    %5592 = vmatprep.subr.mxu0 %v1668
    %5593 = vmatpush1.msra.mxu0 %v1667
    %5594 = vmatprep.subr.mxu0 %v1674
    %5595 = vmatpush1.msra.mxu0 %v1673
    %5596 = vmatprep.subr.mxu0 %v1680
    %5597 = vmatpush1.msra.mxu0 %v1679
    %5598 = vmatprep.subr.mxu0 %v1686
    %5599 = vmatpush1.msra.mxu0 %v1685
    %5600 = vmatprep.subr.mxu0 %v1692
    %5601 = vmatpush1.msra.mxu0 %v1691
    %5602 = vmatprep.subr.mxu0 %v1698
    %5603 = vmatpush1.msra.mxu0 %v1697
    %5604 = vmatprep.subr.mxu0 %v1704
    %5605 = vmatpush1.msra.mxu0 %v1703
    %5606 = vmatprep.subr.mxu0 %v1710
    %5607 = vmatpush1.msra.mxu0 %v1709
    %5608 = vmatprep.subr.mxu0 %v1716
    %5609 = vmatpush1.msra.mxu0 %v1715
    %5610 = vmatprep.subr.mxu0 %v1722
    %5611 = vmatpush1.msra.mxu0 %v1721
    %5612 = vmatprep.subr.mxu0 %v1728
    %5613 = vmatpush1.msra.mxu0 %v1727
    %5614 = vmatprep.subr.mxu0 %v1734
    %5615 = vmatpush1.msra.mxu0 %v1733
    %5616 = vmatprep.subr.mxu0 %v1740
    %5617 = vmatpush1.msra.mxu0 %v1739
    %5618 = vmatprep.subr.mxu0 %v1746
    %5619 = vmatpush1.msra.mxu0 %v1745
    %5620 = vmatprep.subr.mxu0 %v1752
    %5621 = vmatpush1.msra.mxu0 %v1751
    %5622 = vmatprep.subr.mxu0 %v1758
    %5623 = vmatpush1.msra.mxu0 %v1757
    %5624 = vmatprep.subr.mxu0 %v1764
    %5625 = vmatpush1.msra.mxu0 %v1763
    %5626 = vmatprep.subr.mxu0 %v1770
    %5627 = vmatpush1.msra.mxu0 %v1769
    %5628 = vmatprep.subr.mxu0 %v1776
    %5629 = vmatpush1.msra.mxu0 %v1775
    %5630 = vmatprep.subr.mxu0 %v1782
    %5631 = vmatpush1.msra.mxu0 %v1781
    %5632 = vmatprep.subr.mxu0 %v1788
    %5633 = vmatpush1.msra.mxu0 %v1787
    %5634 = vmatprep.subr.mxu0 %v1794
    %5635 = vmatpush1.msra.mxu0 %v1793
    %5636 = vmatprep.subr.mxu0 %v1800
    %5637 = vmatpush1.msra.mxu0 %v1799
    %5638 = vmatprep.mubr.f32.mxu0 %v5070
    %5639 = vmatmul.mubr.f32.gmra.mrb[0].mxu0 %v5069
    %v5640 = vpop.f32.mrb[0].mxu0
    %v5641 = vadd.f32 0.0, %v5640
    %v5642 = vpop.f32.mrb[0].mxu0
    %v5643 = vadd.f32 0.0, %v5642
    %5644 = vdwg.mxu0
    %5645 = vmatprep.subr.mxu0 %v1616
    %5646 = vmatpush1.msra.mxu0 %v1615
    %5647 = vmatprep.subr.mxu0 %v1622
    %5648 = vmatpush1.msra.mxu0 %v1621
    %5649 = vmatprep.subr.mxu0 %v1628
    %5650 = vmatpush1.msra.mxu0 %v1627
    %5651 = vmatprep.subr.mxu0 %v1634
    %5652 = vmatpush1.msra.mxu0 %v1633
    %5653 = vmatprep.subr.mxu0 %v1640
    %5654 = vmatpush1.msra.mxu0 %v1639
    %5655 = vmatprep.subr.mxu0 %v1646
    %5656 = vmatpush1.msra.mxu0 %v1645
    %5657 = vmatprep.subr.mxu0 %v1652
    %5658 = vmatpush1.msra.mxu0 %v1651
    %5659 = vmatprep.subr.mxu0 %v1658
    %5660 = vmatpush1.msra.mxu0 %v1657
    %5661 = vmatprep.subr.mxu0 %v1664
    %5662 = vmatpush1.msra.mxu0 %v1663
    %5663 = vmatprep.subr.mxu0 %v1670
    %5664 = vmatpush1.msra.mxu0 %v1669
    %5665 = vmatprep.subr.mxu0 %v1676
    %5666 = vmatpush1.msra.mxu0 %v1675
    %5667 = vmatprep.subr.mxu0 %v1682
    %5668 = vmatpush1.msra.mxu0 %v1681
    %5669 = vmatprep.subr.mxu0 %v1688
    %5670 = vmatpush1.msra.mxu0 %v1687
    %5671 = vmatprep.subr.mxu0 %v1694
    %5672 = vmatpush1.msra.mxu0 %v1693
    %5673 = vmatprep.subr.mxu0 %v1700
    %5674 = vmatpush1.msra.mxu0 %v1699
    %5675 = vmatprep.subr.mxu0 %v1706
    %5676 = vmatpush1.msra.mxu0 %v1705
    %5677 = vmatprep.subr.mxu0 %v1712
    %5678 = vmatpush1.msra.mxu0 %v1711
    %5679 = vmatprep.subr.mxu0 %v1718
    %5680 = vmatpush1.msra.mxu0 %v1717
    %5681 = vmatprep.subr.mxu0 %v1724
    %5682 = vmatpush1.msra.mxu0 %v1723
    %5683 = vmatprep.subr.mxu0 %v1730
    %5684 = vmatpush1.msra.mxu0 %v1729
    %5685 = vmatprep.subr.mxu0 %v1736
    %5686 = vmatpush1.msra.mxu0 %v1735
    %5687 = vmatprep.subr.mxu0 %v1742
    %5688 = vmatpush1.msra.mxu0 %v1741
    %5689 = vmatprep.subr.mxu0 %v1748
    %5690 = vmatpush1.msra.mxu0 %v1747
    %5691 = vmatprep.subr.mxu0 %v1754
    %5692 = vmatpush1.msra.mxu0 %v1753
    %5693 = vmatprep.subr.mxu0 %v1760
    %5694 = vmatpush1.msra.mxu0 %v1759
    %5695 = vmatprep.subr.mxu0 %v1766
    %5696 = vmatpush1.msra.mxu0 %v1765
    %5697 = vmatprep.subr.mxu0 %v1772
    %5698 = vmatpush1.msra.mxu0 %v1771
    %5699 = vmatprep.subr.mxu0 %v1778
    %5700 = vmatpush1.msra.mxu0 %v1777
    %5701 = vmatprep.subr.mxu0 %v1784
    %5702 = vmatpush1.msra.mxu0 %v1783
    %5703 = vmatprep.subr.mxu0 %v1790
    %5704 = vmatpush1.msra.mxu0 %v1789
    %5705 = vmatprep.subr.mxu0 %v1796
    %5706 = vmatpush1.msra.mxu0 %v1795
    %5707 = vmatprep.subr.mxu0 %v1802
    %5708 = vmatpush1.msra.mxu0 %v1801
    %5709 = vmatprep.mubr.f32.mxu0 %v5070
    %5710 = vmatmul.mubr.f32.gmra.mrb[0].mxu0 %v5069
    %v5711 = vpop.f32.mrb[0].mxu0
    %v5712 = vadd.f32 0.0, %v5711
    %v5713 = vpop.f32.mrb[0].mxu0
    %v5714 = vadd.f32 0.0, %v5713
    %5715 = vdwg.mxu0
    %s5716 = scalar_lea.vmem [#allocation2], 288
    %v5717 = vld [vmem:[%s5716] sm:$0xff]
    %v5718 = vld [vmem:[%s5716 + $0x8] sm:$0xff]
    %v5719 = vld [vmem:[%s5716 + $0x10] sm:$0xff]
    %v5720 = vld [vmem:[%s5716 + $0x18] sm:$0xff]
    %v5721 = vld [vmem:[%s5716 + $0x20] sm:$0xff]
    %v5722 = vld [vmem:[%s5716 + $0x28] sm:$0xff]
    %v5723 = vadd.f32 %v5717, %v5138
    %v5724 = vadd.f32 %v5718, %v5140
    %v5725 = vxor.u32 %v5723, 2147483648
    %v5726 = vxor.u32 %v5724, 2147483648
    %v5727 = vmul.f32 %v5725, 1.442695
    %v5728 = vpow.pop %v5727
    %v5729 = vmul.f32 %v5726, 1.442695
    %v5730 = vpow.pop %v5729
    %v5731 = vadd.f32 %v5728, 1.0
    %v5732 = vadd.f32 %v5730, 1.0
    %v5733 = vrcp.pop %v5731
    %v5734 = vmul.f32 1.0, %v5733
    %v5735 = vrcp.pop %v5732
    %v5736 = vmul.f32 1.0, %v5735
    %v5737 = vadd.f32 %v5719, %v5209
    %v5738 = vadd.f32 %v5720, %v5211
    %v5739 = vxor.u32 %v5737, 2147483648
    %v5740 = vxor.u32 %v5738, 2147483648
    %v5741 = vmul.f32 %v5739, 1.442695
    %v5742 = vpow.pop %v5741
    %v5743 = vmul.f32 %v5740, 1.442695
    %v5744 = vpow.pop %v5743
    %v5745 = vadd.f32 %v5742, 1.0
    %v5746 = vadd.f32 %v5744, 1.0
    %v5747 = vrcp.pop %v5745
    %v5748 = vmul.f32 1.0, %v5747
    %v5749 = vrcp.pop %v5746
    %v5750 = vmul.f32 1.0, %v5749
    %v5751 = vadd.f32 %v5280, %v694
    %v5752 = vadd.f32 %v5282, %v698
    %v5753 = vmul.f32 %v5734, %v5751
    %v5754 = vmul.f32 %v5736, %v5752
    %v5755 = vadd.f32 %v5721, %v5753
    %v5756 = vadd.f32 %v5722, %v5754
    %v5757 = vtanh.pop %v5755
    %v5758 = vtanh.pop %v5756
    %v5759 = vsub.f32 1.0, %v5748
    %v5760 = vsub.f32 1.0, %v5750
    %v5761 = vmul.f32 %v5759, %v5757
    %v5762 = vmul.f32 %v5760, %v5758
    %v5763 = vmul.f32 %v5748, %v5025
    %v5764 = vmul.f32 %v5750, %v5026
    %v5765 = vadd.f32 %v5761, %v5763
    %v5766 = vadd.f32 %v5762, %v5764
    %v5767 = vadd.f32 %v5497, %v5570
    %v5768 = vadd.f32 %v5498, %v5572
    %v5769 = vxor.u32 %v5767, 2147483648
    %v5770 = vxor.u32 %v5768, 2147483648
    %v5771 = vmul.f32 %v5769, 1.442695
    %v5772 = vpow.pop %v5771
    %v5773 = vmul.f32 %v5770, 1.442695
    %v5774 = vpow.pop %v5773
    %v5775 = vadd.f32 %v5772, 1.0
    %v5776 = vadd.f32 %v5774, 1.0
    %v5777 = vrcp.pop %v5775
    %v5778 = vmul.f32 1.0, %v5777
    %v5779 = vrcp.pop %v5776
    %v5780 = vmul.f32 1.0, %v5779
    %v5781 = vadd.f32 %v5499, %v5641
    %v5782 = vadd.f32 %v5500, %v5643
    %v5783 = vxor.u32 %v5781, 2147483648
    %v5784 = vxor.u32 %v5782, 2147483648
    %v5785 = vmul.f32 %v5783, 1.442695
    %v5786 = vpow.pop %v5785
    %v5787 = vmul.f32 %v5784, 1.442695
    %v5788 = vpow.pop %v5787
    %v5789 = vadd.f32 %v5786, 1.0
    %v5790 = vadd.f32 %v5788, 1.0
    %v5791 = vrcp.pop %v5789
    %v5792 = vmul.f32 1.0, %v5791
    %v5793 = vrcp.pop %v5790
    %v5794 = vmul.f32 1.0, %v5793
    %v5795 = vadd.f32 %v5712, %v706
    %v5796 = vadd.f32 %v5714, %v710
    %v5797 = vmul.f32 %v5778, %v5795
    %v5798 = vmul.f32 %v5780, %v5796
    %v5799 = vadd.f32 %v5501, %v5797
    %v5800 = vadd.f32 %v5502, %v5798
    %v5801 = vtanh.pop %v5799
    %v5802 = vtanh.pop %v5800
    %v5803 = vsub.f32 1.0, %v5792
    %v5804 = vsub.f32 1.0, %v5794
    %v5805 = vmul.f32 %v5803, %v5801
    %v5806 = vmul.f32 %v5804, %v5802
    %v5807 = vmul.f32 %v5792, %v5069
    %v5808 = vmul.f32 %v5794, %v5070
    %v5809 = vadd.f32 %v5805, %v5807
    %v5810 = vadd.f32 %v5806, %v5808
    %5811 = vmatprep.subr.mxu0 %v796
    %5812 = vmatpush1.msra.mxu0 %v795
    %5813 = vmatprep.subr.mxu0 %v808
    %5814 = vmatpush1.msra.mxu0 %v807
    %5815 = vmatprep.subr.mxu0 %v820
    %5816 = vmatpush1.msra.mxu0 %v819
    %5817 = vmatprep.subr.mxu0 %v832
    %5818 = vmatpush1.msra.mxu0 %v831
    %5819 = vmatprep.subr.mxu0 %v844
    %5820 = vmatpush1.msra.mxu0 %v843
    %5821 = vmatprep.subr.mxu0 %v856
    %5822 = vmatpush1.msra.mxu0 %v855
    %5823 = vmatprep.subr.mxu0 %v868
    %5824 = vmatpush1.msra.mxu0 %v867
    %5825 = vmatprep.subr.mxu0 %v880
    %5826 = vmatpush1.msra.mxu0 %v879
    %5827 = vmatprep.subr.mxu0 %v892
    %5828 = vmatpush1.msra.mxu0 %v891
    %5829 = vmatprep.subr.mxu0 %v904
    %5830 = vmatpush1.msra.mxu0 %v903
    %5831 = vmatprep.subr.mxu0 %v916
    %5832 = vmatpush1.msra.mxu0 %v915
    %5833 = vmatprep.subr.mxu0 %v928
    %5834 = vmatpush1.msra.mxu0 %v927
    %5835 = vmatprep.subr.mxu0 %v940
    %5836 = vmatpush1.msra.mxu0 %v939
    %5837 = vmatprep.subr.mxu0 %v952
    %5838 = vmatpush1.msra.mxu0 %v951
    %5839 = vmatprep.subr.mxu0 %v964
    %5840 = vmatpush1.msra.mxu0 %v963
    %5841 = vmatprep.subr.mxu0 %v976
    %5842 = vmatpush1.msra.mxu0 %v975
    %5843 = vmatprep.subr.mxu0 %v988
    %5844 = vmatpush1.msra.mxu0 %v987
    %5845 = vmatprep.subr.mxu0 %v1000
    %5846 = vmatpush1.msra.mxu0 %v999
    %5847 = vmatprep.subr.mxu0 %v1012
    %5848 = vmatpush1.msra.mxu0 %v1011
    %5849 = vmatprep.subr.mxu0 %v1024
    %5850 = vmatpush1.msra.mxu0 %v1023
    %5851 = vmatprep.subr.mxu0 %v1036
    %5852 = vmatpush1.msra.mxu0 %v1035
    %5853 = vmatprep.subr.mxu0 %v1048
    %5854 = vmatpush1.msra.mxu0 %v1047
    %5855 = vmatprep.subr.mxu0 %v1060
    %5856 = vmatpush1.msra.mxu0 %v1059
    %5857 = vmatprep.subr.mxu0 %v1072
    %5858 = vmatpush1.msra.mxu0 %v1071
    %5859 = vmatprep.subr.mxu0 %v1084
    %5860 = vmatpush1.msra.mxu0 %v1083
    %5861 = vmatprep.subr.mxu0 %v1096
    %5862 = vmatpush1.msra.mxu0 %v1095
    %5863 = vmatprep.subr.mxu0 %v1108
    %5864 = vmatpush1.msra.mxu0 %v1107
    %5865 = vmatprep.subr.mxu0 %v1120
    %5866 = vmatpush1.msra.mxu0 %v1119
    %5867 = vmatprep.subr.mxu0 %v1132
    %5868 = vmatpush1.msra.mxu0 %v1131
    %5869 = vmatprep.subr.mxu0 %v1144
    %5870 = vmatpush1.msra.mxu0 %v1143
    %5871 = vmatprep.subr.mxu0 %v1156
    %5872 = vmatpush1.msra.mxu0 %v1155
    %5873 = vmatprep.subr.mxu0 %v1168
    %5874 = vmatpush1.msra.mxu0 %v1167
    %5875 = vmatprep.mubr.f32.mxu0 %v5766
    %5876 = vmatmul.mubr.f32.gmra.mrb[0].mxu0 %v5765
    %v5877 = vpop.f32.mrb[0].mxu0
    %v5878 = vadd.f32 0.0, %v5877
    %v5879 = vpop.f32.mrb[0].mxu0
    %v5880 = vadd.f32 0.0, %v5879
    %5881 = vdwg.mxu0
    %5882 = vmatprep.subr.mxu0 %v798
    %5883 = vmatpush1.msra.mxu0 %v797
    %5884 = vmatprep.subr.mxu0 %v810
    %5885 = vmatpush1.msra.mxu0 %v809
    %5886 = vmatprep.subr.mxu0 %v822
    %5887 = vmatpush1.msra.mxu0 %v821
    %5888 = vmatprep.subr.mxu0 %v834
    %5889 = vmatpush1.msra.mxu0 %v833
    %5890 = vmatprep.subr.mxu0 %v846
    %5891 = vmatpush1.msra.mxu0 %v845
    %5892 = vmatprep.subr.mxu0 %v858
    %5893 = vmatpush1.msra.mxu0 %v857
    %5894 = vmatprep.subr.mxu0 %v870
    %5895 = vmatpush1.msra.mxu0 %v869
    %5896 = vmatprep.subr.mxu0 %v882
    %5897 = vmatpush1.msra.mxu0 %v881
    %5898 = vmatprep.subr.mxu0 %v894
    %5899 = vmatpush1.msra.mxu0 %v893
    %5900 = vmatprep.subr.mxu0 %v906
    %5901 = vmatpush1.msra.mxu0 %v905
    %5902 = vmatprep.subr.mxu0 %v918
    %5903 = vmatpush1.msra.mxu0 %v917
    %5904 = vmatprep.subr.mxu0 %v930
    %5905 = vmatpush1.msra.mxu0 %v929
    %5906 = vmatprep.subr.mxu0 %v942
    %5907 = vmatpush1.msra.mxu0 %v941
    %5908 = vmatprep.subr.mxu0 %v954
    %5909 = vmatpush1.msra.mxu0 %v953
    %5910 = vmatprep.subr.mxu0 %v966
    %5911 = vmatpush1.msra.mxu0 %v965
    %5912 = vmatprep.subr.mxu0 %v978
    %5913 = vmatpush1.msra.mxu0 %v977
    %5914 = vmatprep.subr.mxu0 %v990
    %5915 = vmatpush1.msra.mxu0 %v989
    %5916 = vmatprep.subr.mxu0 %v1002
    %5917 = vmatpush1.msra.mxu0 %v1001
    %5918 = vmatprep.subr.mxu0 %v1014
    %5919 = vmatpush1.msra.mxu0 %v1013
    %5920 = vmatprep.subr.mxu0 %v1026
    %5921 = vmatpush1.msra.mxu0 %v1025
    %5922 = vmatprep.subr.mxu0 %v1038
    %5923 = vmatpush1.msra.mxu0 %v1037
    %5924 = vmatprep.subr.mxu0 %v1050
    %5925 = vmatpush1.msra.mxu0 %v1049
    %5926 = vmatprep.subr.mxu0 %v1062
    %5927 = vmatpush1.msra.mxu0 %v1061
    %5928 = vmatprep.subr.mxu0 %v1074
    %5929 = vmatpush1.msra.mxu0 %v1073
    %5930 = vmatprep.subr.mxu0 %v1086
    %5931 = vmatpush1.msra.mxu0 %v1085
    %5932 = vmatprep.subr.mxu0 %v1098
    %5933 = vmatpush1.msra.mxu0 %v1097
    %5934 = vmatprep.subr.mxu0 %v1110
    %5935 = vmatpush1.msra.mxu0 %v1109
    %5936 = vmatprep.subr.mxu0 %v1122
    %5937 = vmatpush1.msra.mxu0 %v1121
    %5938 = vmatprep.subr.mxu0 %v1134
    %5939 = vmatpush1.msra.mxu0 %v1133
    %5940 = vmatprep.subr.mxu0 %v1146
    %5941 = vmatpush1.msra.mxu0 %v1145
    %5942 = vmatprep.subr.mxu0 %v1158
    %5943 = vmatpush1.msra.mxu0 %v1157
    %5944 = vmatprep.subr.mxu0 %v1170
    %5945 = vmatpush1.msra.mxu0 %v1169
    %5946 = vmatprep.mubr.f32.mxu0 %v5766
    %5947 = vmatmul.mubr.f32.gmra.mrb[0].mxu0 %v5765
    %v5948 = vpop.f32.mrb[0].mxu0
    %v5949 = vadd.f32 0.0, %v5948
    %v5950 = vpop.f32.mrb[0].mxu0
    %v5951 = vadd.f32 0.0, %v5950
    %5952 = vdwg.mxu0
    %5953 = vmatprep.subr.mxu0 %v800
    %5954 = vmatpush1.msra.mxu0 %v799
    %5955 = vmatprep.subr.mxu0 %v812
    %5956 = vmatpush1.msra.mxu0 %v811
    %5957 = vmatprep.subr.mxu0 %v824
    %5958 = vmatpush1.msra.mxu0 %v823
    %5959 = vmatprep.subr.mxu0 %v836
    %5960 = vmatpush1.msra.mxu0 %v835
    %5961 = vmatprep.subr.mxu0 %v848
    %5962 = vmatpush1.msra.mxu0 %v847
    %5963 = vmatprep.subr.mxu0 %v860
    %5964 = vmatpush1.msra.mxu0 %v859
    %5965 = vmatprep.subr.mxu0 %v872
    %5966 = vmatpush1.msra.mxu0 %v871
    %5967 = vmatprep.subr.mxu0 %v884
    %5968 = vmatpush1.msra.mxu0 %v883
    %5969 = vmatprep.subr.mxu0 %v896
    %5970 = vmatpush1.msra.mxu0 %v895
    %5971 = vmatprep.subr.mxu0 %v908
    %5972 = vmatpush1.msra.mxu0 %v907
    %5973 = vmatprep.subr.mxu0 %v920
    %5974 = vmatpush1.msra.mxu0 %v919
    %5975 = vmatprep.subr.mxu0 %v932
    %5976 = vmatpush1.msra.mxu0 %v931
    %5977 = vmatprep.subr.mxu0 %v944
    %5978 = vmatpush1.msra.mxu0 %v943
    %5979 = vmatprep.subr.mxu0 %v956
    %5980 = vmatpush1.msra.mxu0 %v955
    %5981 = vmatprep.subr.mxu0 %v968
    %5982 = vmatpush1.msra.mxu0 %v967
    %5983 = vmatprep.subr.mxu0 %v980
    %5984 = vmatpush1.msra.mxu0 %v979
    %5985 = vmatprep.subr.mxu0 %v992
    %5986 = vmatpush1.msra.mxu0 %v991
    %5987 = vmatprep.subr.mxu0 %v1004
    %5988 = vmatpush1.msra.mxu0 %v1003
    %5989 = vmatprep.subr.mxu0 %v1016
    %5990 = vmatpush1.msra.mxu0 %v1015
    %5991 = vmatprep.subr.mxu0 %v1028
    %5992 = vmatpush1.msra.mxu0 %v1027
    %5993 = vmatprep.subr.mxu0 %v1040
    %5994 = vmatpush1.msra.mxu0 %v1039
    %5995 = vmatprep.subr.mxu0 %v1052
    %5996 = vmatpush1.msra.mxu0 %v1051
    %5997 = vmatprep.subr.mxu0 %v1064
    %5998 = vmatpush1.msra.mxu0 %v1063
    %5999 = vmatprep.subr.mxu0 %v1076
    %6000 = vmatpush1.msra.mxu0 %v1075
    %6001 = vmatprep.subr.mxu0 %v1088
    %6002 = vmatpush1.msra.mxu0 %v1087
    %6003 = vmatprep.subr.mxu0 %v1100
    %6004 = vmatpush1.msra.mxu0 %v1099
    %6005 = vmatprep.subr.mxu0 %v1112
    %6006 = vmatpush1.msra.mxu0 %v1111
    %6007 = vmatprep.subr.mxu0 %v1124
    %6008 = vmatpush1.msra.mxu0 %v1123
    %6009 = vmatprep.subr.mxu0 %v1136
    %6010 = vmatpush1.msra.mxu0 %v1135
    %6011 = vmatprep.subr.mxu0 %v1148
    %6012 = vmatpush1.msra.mxu0 %v1147
    %6013 = vmatprep.subr.mxu0 %v1160
    %6014 = vmatpush1.msra.mxu0 %v1159
    %6015 = vmatprep.subr.mxu0 %v1172
    %6016 = vmatpush1.msra.mxu0 %v1171
    %6017 = vmatprep.mubr.f32.mxu0 %v5766
    %6018 = vmatmul.mubr.f32.gmra.mrb[0].mxu0 %v5765
    %v6019 = vpop.f32.mrb[0].mxu0
    %v6020 = vadd.f32 0.0, %v6019
    %v6021 = vpop.f32.mrb[0].mxu0
    %v6022 = vadd.f32 0.0, %v6021
    %6023 = vdwg.mxu0
    %6024 = vmatprep.subr.mxu0 %v802
    %6025 = vmatpush1.msra.mxu0 %v801
    %6026 = vmatprep.subr.mxu0 %v814
    %6027 = vmatpush1.msra.mxu0 %v813
    %6028 = vmatprep.subr.mxu0 %v826
    %6029 = vmatpush1.msra.mxu0 %v825
    %6030 = vmatprep.subr.mxu0 %v838
    %6031 = vmatpush1.msra.mxu0 %v837
    %6032 = vmatprep.subr.mxu0 %v850
    %6033 = vmatpush1.msra.mxu0 %v849
    %6034 = vmatprep.subr.mxu0 %v862
    %6035 = vmatpush1.msra.mxu0 %v861
    %6036 = vmatprep.subr.mxu0 %v874
    %6037 = vmatpush1.msra.mxu0 %v873
    %6038 = vmatprep.subr.mxu0 %v886
    %6039 = vmatpush1.msra.mxu0 %v885
    %6040 = vmatprep.subr.mxu0 %v898
    %6041 = vmatpush1.msra.mxu0 %v897
    %6042 = vmatprep.subr.mxu0 %v910
    %6043 = vmatpush1.msra.mxu0 %v909
    %6044 = vmatprep.subr.mxu0 %v922
    %6045 = vmatpush1.msra.mxu0 %v921
    %6046 = vmatprep.subr.mxu0 %v934
    %6047 = vmatpush1.msra.mxu0 %v933
    %6048 = vmatprep.subr.mxu0 %v946
    %6049 = vmatpush1.msra.mxu0 %v945
    %6050 = vmatprep.subr.mxu0 %v958
    %6051 = vmatpush1.msra.mxu0 %v957
    %6052 = vmatprep.subr.mxu0 %v970
    %6053 = vmatpush1.msra.mxu0 %v969
    %6054 = vmatprep.subr.mxu0 %v982
    %6055 = vmatpush1.msra.mxu0 %v981
    %6056 = vmatprep.subr.mxu0 %v994
    %6057 = vmatpush1.msra.mxu0 %v993
    %6058 = vmatprep.subr.mxu0 %v1006
    %6059 = vmatpush1.msra.mxu0 %v1005
    %6060 = vmatprep.subr.mxu0 %v1018
    %6061 = vmatpush1.msra.mxu0 %v1017
    %6062 = vmatprep.subr.mxu0 %v1030
    %6063 = vmatpush1.msra.mxu0 %v1029
    %6064 = vmatprep.subr.mxu0 %v1042
    %6065 = vmatpush1.msra.mxu0 %v1041
    %6066 = vmatprep.subr.mxu0 %v1054
    %6067 = vmatpush1.msra.mxu0 %v1053
    %6068 = vmatprep.subr.mxu0 %v1066
    %6069 = vmatpush1.msra.mxu0 %v1065
    %6070 = vmatprep.subr.mxu0 %v1078
    %6071 = vmatpush1.msra.mxu0 %v1077
    %6072 = vmatprep.subr.mxu0 %v1090
    %6073 = vmatpush1.msra.mxu0 %v1089
    %6074 = vmatprep.subr.mxu0 %v1102
    %6075 = vmatpush1.msra.mxu0 %v1101
    %6076 = vmatprep.subr.mxu0 %v1114
    %6077 = vmatpush1.msra.mxu0 %v1113
    %6078 = vmatprep.subr.mxu0 %v1126
    %6079 = vmatpush1.msra.mxu0 %v1125
    %6080 = vmatprep.subr.mxu0 %v1138
    %6081 = vmatpush1.msra.mxu0 %v1137
    %6082 = vmatprep.subr.mxu0 %v1150
    %6083 = vmatpush1.msra.mxu0 %v1149
    %6084 = vmatprep.subr.mxu0 %v1162
    %6085 = vmatpush1.msra.mxu0 %v1161
    %6086 = vmatprep.subr.mxu0 %v1174
    %6087 = vmatpush1.msra.mxu0 %v1173
    %6088 = vmatprep.mubr.f32.mxu0 %v5766
    %6089 = vmatmul.mubr.f32.gmra.mrb[0].mxu0 %v5765
    %v6090 = vpop.f32.mrb[0].mxu0
    %v6091 = vadd.f32 0.0, %v6090
    %v6092 = vpop.f32.mrb[0].mxu0
    %v6093 = vadd.f32 0.0, %v6092
    %6094 = vdwg.mxu0
    %6095 = vmatprep.subr.mxu0 %v804
    %6096 = vmatpush1.msra.mxu0 %v803
    %6097 = vmatprep.subr.mxu0 %v816
    %6098 = vmatpush1.msra.mxu0 %v815
    %6099 = vmatprep.subr.mxu0 %v828
    %6100 = vmatpush1.msra.mxu0 %v827
    %6101 = vmatprep.subr.mxu0 %v840
    %6102 = vmatpush1.msra.mxu0 %v839
    %6103 = vmatprep.subr.mxu0 %v852
    %6104 = vmatpush1.msra.mxu0 %v851
    %6105 = vmatprep.subr.mxu0 %v864
    %6106 = vmatpush1.msra.mxu0 %v863
    %6107 = vmatprep.subr.mxu0 %v876
    %6108 = vmatpush1.msra.mxu0 %v875
    %6109 = vmatprep.subr.mxu0 %v888
    %6110 = vmatpush1.msra.mxu0 %v887
    %6111 = vmatprep.subr.mxu0 %v900
    %6112 = vmatpush1.msra.mxu0 %v899
    %6113 = vmatprep.subr.mxu0 %v912
    %6114 = vmatpush1.msra.mxu0 %v911
    %6115 = vmatprep.subr.mxu0 %v924
    %6116 = vmatpush1.msra.mxu0 %v923
    %6117 = vmatprep.subr.mxu0 %v936
    %6118 = vmatpush1.msra.mxu0 %v935
    %6119 = vmatprep.subr.mxu0 %v948
    %6120 = vmatpush1.msra.mxu0 %v947
    %6121 = vmatprep.subr.mxu0 %v960
    %6122 = vmatpush1.msra.mxu0 %v959
    %6123 = vmatprep.subr.mxu0 %v972
    %6124 = vmatpush1.msra.mxu0 %v971
    %6125 = vmatprep.subr.mxu0 %v984
    %6126 = vmatpush1.msra.mxu0 %v983
    %6127 = vmatprep.subr.mxu0 %v996
    %6128 = vmatpush1.msra.mxu0 %v995
    %6129 = vmatprep.subr.mxu0 %v1008
    %6130 = vmatpush1.msra.mxu0 %v1007
    %6131 = vmatprep.subr.mxu0 %v1020
    %6132 = vmatpush1.msra.mxu0 %v1019
    %6133 = vmatprep.subr.mxu0 %v1032
    %6134 = vmatpush1.msra.mxu0 %v1031
    %6135 = vmatprep.subr.mxu0 %v1044
    %6136 = vmatpush1.msra.mxu0 %v1043
    %6137 = vmatprep.subr.mxu0 %v1056
    %6138 = vmatpush1.msra.mxu0 %v1055
    %6139 = vmatprep.subr.mxu0 %v1068
    %6140 = vmatpush1.msra.mxu0 %v1067
    %6141 = vmatprep.subr.mxu0 %v1080
    %6142 = vmatpush1.msra.mxu0 %v1079
    %6143 = vmatprep.subr.mxu0 %v1092
    %6144 = vmatpush1.msra.mxu0 %v1091
    %6145 = vmatprep.subr.mxu0 %v1104
    %6146 = vmatpush1.msra.mxu0 %v1103
    %6147 = vmatprep.subr.mxu0 %v1116
    %6148 = vmatpush1.msra.mxu0 %v1115
    %6149 = vmatprep.subr.mxu0 %v1128
    %6150 = vmatpush1.msra.mxu0 %v1127
    %6151 = vmatprep.subr.mxu0 %v1140
    %6152 = vmatpush1.msra.mxu0 %v1139
    %6153 = vmatprep.subr.mxu0 %v1152
    %6154 = vmatpush1.msra.mxu0 %v1151
    %6155 = vmatprep.subr.mxu0 %v1164
    %6156 = vmatpush1.msra.mxu0 %v1163
    %6157 = vmatprep.subr.mxu0 %v1176
    %6158 = vmatpush1.msra.mxu0 %v1175
    %6159 = vmatprep.mubr.f32.mxu0 %v5766
    %6160 = vmatmul.mubr.f32.gmra.mrb[0].mxu0 %v5765
    %v6161 = vpop.f32.mrb[0].mxu0
    %v6162 = vadd.f32 0.0, %v6161
    %v6163 = vpop.f32.mrb[0].mxu0
    %v6164 = vadd.f32 0.0, %v6163
    %6165 = vdwg.mxu0
    %6166 = vmatprep.subr.mxu0 %v806
    %6167 = vmatpush1.msra.mxu0 %v805
    %6168 = vmatprep.subr.mxu0 %v818
    %6169 = vmatpush1.msra.mxu0 %v817
    %6170 = vmatprep.subr.mxu0 %v830
    %6171 = vmatpush1.msra.mxu0 %v829
    %6172 = vmatprep.subr.mxu0 %v842
    %6173 = vmatpush1.msra.mxu0 %v841
    %6174 = vmatprep.subr.mxu0 %v854
    %6175 = vmatpush1.msra.mxu0 %v853
    %6176 = vmatprep.subr.mxu0 %v866
    %6177 = vmatpush1.msra.mxu0 %v865
    %6178 = vmatprep.subr.mxu0 %v878
    %6179 = vmatpush1.msra.mxu0 %v877
    %6180 = vmatprep.subr.mxu0 %v890
    %6181 = vmatpush1.msra.mxu0 %v889
    %6182 = vmatprep.subr.mxu0 %v902
    %6183 = vmatpush1.msra.mxu0 %v901
    %6184 = vmatprep.subr.mxu0 %v914
    %6185 = vmatpush1.msra.mxu0 %v913
    %6186 = vmatprep.subr.mxu0 %v926
    %6187 = vmatpush1.msra.mxu0 %v925
    %6188 = vmatprep.subr.mxu0 %v938
    %6189 = vmatpush1.msra.mxu0 %v937
    %6190 = vmatprep.subr.mxu0 %v950
    %6191 = vmatpush1.msra.mxu0 %v949
    %6192 = vmatprep.subr.mxu0 %v962
    %6193 = vmatpush1.msra.mxu0 %v961
    %6194 = vmatprep.subr.mxu0 %v974
    %6195 = vmatpush1.msra.mxu0 %v973
    %6196 = vmatprep.subr.mxu0 %v986
    %6197 = vmatpush1.msra.mxu0 %v985
    %6198 = vmatprep.subr.mxu0 %v998
    %6199 = vmatpush1.msra.mxu0 %v997
    %6200 = vmatprep.subr.mxu0 %v1010
    %6201 = vmatpush1.msra.mxu0 %v1009
    %6202 = vmatprep.subr.mxu0 %v1022
    %6203 = vmatpush1.msra.mxu0 %v1021
    %6204 = vmatprep.subr.mxu0 %v1034
    %6205 = vmatpush1.msra.mxu0 %v1033
    %6206 = vmatprep.subr.mxu0 %v1046
    %6207 = vmatpush1.msra.mxu0 %v1045
    %6208 = vmatprep.subr.mxu0 %v1058
    %6209 = vmatpush1.msra.mxu0 %v1057
    %6210 = vmatprep.subr.mxu0 %v1070
    %6211 = vmatpush1.msra.mxu0 %v1069
    %6212 = vmatprep.subr.mxu0 %v1082
    %6213 = vmatpush1.msra.mxu0 %v1081
    %6214 = vmatprep.subr.mxu0 %v1094
    %6215 = vmatpush1.msra.mxu0 %v1093
    %6216 = vmatprep.subr.mxu0 %v1106
    %6217 = vmatpush1.msra.mxu0 %v1105
    %6218 = vmatprep.subr.mxu0 %v1118
    %6219 = vmatpush1.msra.mxu0 %v1117
    %6220 = vmatprep.subr.mxu0 %v1130
    %6221 = vmatpush1.msra.mxu0 %v1129
    %6222 = vmatprep.subr.mxu0 %v1142
    %6223 = vmatpush1.msra.mxu0 %v1141
    %6224 = vmatprep.subr.mxu0 %v1154
    %6225 = vmatpush1.msra.mxu0 %v1153
    %6226 = vmatprep.subr.mxu0 %v1166
    %6227 = vmatpush1.msra.mxu0 %v1165
    %6228 = vmatprep.subr.mxu0 %v1178
    %6229 = vmatpush1.msra.mxu0 %v1177
    %6230 = vmatprep.mubr.f32.mxu0 %v5766
    %6231 = vmatmul.mubr.f32.gmra.mrb[0].mxu0 %v5765
    %v6232 = vpop.f32.mrb[0].mxu0
    %v6233 = vadd.f32 0.0, %v6232
    %v6234 = vpop.f32.mrb[0].mxu0
    %v6235 = vadd.f32 0.0, %v6234
    %6236 = vdwg.mxu0
    %v6237 = vadd.f32 %v6091, %v718
    %v6238 = vadd.f32 %v6093, %v722
    %v6239 = vadd.f32 %v6162, %v726
    %v6240 = vadd.f32 %v6164, %v730
    %v6241 = vadd.f32 %v6233, %v734
    %v6242 = vadd.f32 %v6235, %v738
    %6243 = vmatprep.subr.mxu0 %v1612
    %6244 = vmatpush1.msra.mxu0 %v1611
    %6245 = vmatprep.subr.mxu0 %v1618
    %6246 = vmatpush1.msra.mxu0 %v1617
    %6247 = vmatprep.subr.mxu0 %v1624
    %6248 = vmatpush1.msra.mxu0 %v1623
    %6249 = vmatprep.subr.mxu0 %v1630
    %6250 = vmatpush1.msra.mxu0 %v1629
    %6251 = vmatprep.subr.mxu0 %v1636
    %6252 = vmatpush1.msra.mxu0 %v1635
    %6253 = vmatprep.subr.mxu0 %v1642
    %6254 = vmatpush1.msra.mxu0 %v1641
    %6255 = vmatprep.subr.mxu0 %v1648
    %6256 = vmatpush1.msra.mxu0 %v1647
    %6257 = vmatprep.subr.mxu0 %v1654
    %6258 = vmatpush1.msra.mxu0 %v1653
    %6259 = vmatprep.subr.mxu0 %v1660
    %6260 = vmatpush1.msra.mxu0 %v1659
    %6261 = vmatprep.subr.mxu0 %v1666
    %6262 = vmatpush1.msra.mxu0 %v1665
    %6263 = vmatprep.subr.mxu0 %v1672
    %6264 = vmatpush1.msra.mxu0 %v1671
    %6265 = vmatprep.subr.mxu0 %v1678
    %6266 = vmatpush1.msra.mxu0 %v1677
    %6267 = vmatprep.subr.mxu0 %v1684
    %6268 = vmatpush1.msra.mxu0 %v1683
    %6269 = vmatprep.subr.mxu0 %v1690
    %6270 = vmatpush1.msra.mxu0 %v1689
    %6271 = vmatprep.subr.mxu0 %v1696
    %6272 = vmatpush1.msra.mxu0 %v1695
    %6273 = vmatprep.subr.mxu0 %v1702
    %6274 = vmatpush1.msra.mxu0 %v1701
    %6275 = vmatprep.subr.mxu0 %v1708
    %6276 = vmatpush1.msra.mxu0 %v1707
    %6277 = vmatprep.subr.mxu0 %v1714
    %6278 = vmatpush1.msra.mxu0 %v1713
    %6279 = vmatprep.subr.mxu0 %v1720
    %6280 = vmatpush1.msra.mxu0 %v1719
    %6281 = vmatprep.subr.mxu0 %v1726
    %6282 = vmatpush1.msra.mxu0 %v1725
    %6283 = vmatprep.subr.mxu0 %v1732
    %6284 = vmatpush1.msra.mxu0 %v1731
    %6285 = vmatprep.subr.mxu0 %v1738
    %6286 = vmatpush1.msra.mxu0 %v1737
    %6287 = vmatprep.subr.mxu0 %v1744
    %6288 = vmatpush1.msra.mxu0 %v1743
    %6289 = vmatprep.subr.mxu0 %v1750
    %6290 = vmatpush1.msra.mxu0 %v1749
    %6291 = vmatprep.subr.mxu0 %v1756
    %6292 = vmatpush1.msra.mxu0 %v1755
    %6293 = vmatprep.subr.mxu0 %v1762
    %6294 = vmatpush1.msra.mxu0 %v1761
    %6295 = vmatprep.subr.mxu0 %v1768
    %6296 = vmatpush1.msra.mxu0 %v1767
    %6297 = vmatprep.subr.mxu0 %v1774
    %6298 = vmatpush1.msra.mxu0 %v1773
    %6299 = vmatprep.subr.mxu0 %v1780
    %6300 = vmatpush1.msra.mxu0 %v1779
    %6301 = vmatprep.subr.mxu0 %v1786
    %6302 = vmatpush1.msra.mxu0 %v1785
    %6303 = vmatprep.subr.mxu0 %v1792
    %6304 = vmatpush1.msra.mxu0 %v1791
    %6305 = vmatprep.subr.mxu0 %v1798
    %6306 = vmatpush1.msra.mxu0 %v1797
    %6307 = vmatprep.mubr.f32.mxu0 %v5810
    %6308 = vmatmul.mubr.f32.gmra.mrb[0].mxu0 %v5809
    %v6309 = vpop.f32.mrb[0].mxu0
    %v6310 = vadd.f32 0.0, %v6309
    %v6311 = vpop.f32.mrb[0].mxu0
    %v6312 = vadd.f32 0.0, %v6311
    %6313 = vdwg.mxu0
    %6314 = vmatprep.subr.mxu0 %v1614
    %6315 = vmatpush1.msra.mxu0 %v1613
    %6316 = vmatprep.subr.mxu0 %v1620
    %6317 = vmatpush1.msra.mxu0 %v1619
    %6318 = vmatprep.subr.mxu0 %v1626
    %6319 = vmatpush1.msra.mxu0 %v1625
    %6320 = vmatprep.subr.mxu0 %v1632
    %6321 = vmatpush1.msra.mxu0 %v1631
    %6322 = vmatprep.subr.mxu0 %v1638
    %6323 = vmatpush1.msra.mxu0 %v1637
    %6324 = vmatprep.subr.mxu0 %v1644
    %6325 = vmatpush1.msra.mxu0 %v1643
    %6326 = vmatprep.subr.mxu0 %v1650
    %6327 = vmatpush1.msra.mxu0 %v1649
    %6328 = vmatprep.subr.mxu0 %v1656
    %6329 = vmatpush1.msra.mxu0 %v1655
    %6330 = vmatprep.subr.mxu0 %v1662
    %6331 = vmatpush1.msra.mxu0 %v1661
    %6332 = vmatprep.subr.mxu0 %v1668
    %6333 = vmatpush1.msra.mxu0 %v1667
    %6334 = vmatprep.subr.mxu0 %v1674
    %6335 = vmatpush1.msra.mxu0 %v1673
    %6336 = vmatprep.subr.mxu0 %v1680
    %6337 = vmatpush1.msra.mxu0 %v1679
    %6338 = vmatprep.subr.mxu0 %v1686
    %6339 = vmatpush1.msra.mxu0 %v1685
    %6340 = vmatprep.subr.mxu0 %v1692
    %6341 = vmatpush1.msra.mxu0 %v1691
    %6342 = vmatprep.subr.mxu0 %v1698
    %6343 = vmatpush1.msra.mxu0 %v1697
    %6344 = vmatprep.subr.mxu0 %v1704
    %6345 = vmatpush1.msra.mxu0 %v1703
    %6346 = vmatprep.subr.mxu0 %v1710
    %6347 = vmatpush1.msra.mxu0 %v1709
    %6348 = vmatprep.subr.mxu0 %v1716
    %6349 = vmatpush1.msra.mxu0 %v1715
    %6350 = vmatprep.subr.mxu0 %v1722
    %6351 = vmatpush1.msra.mxu0 %v1721
    %6352 = vmatprep.subr.mxu0 %v1728
    %6353 = vmatpush1.msra.mxu0 %v1727
    %6354 = vmatprep.subr.mxu0 %v1734
    %6355 = vmatpush1.msra.mxu0 %v1733
    %6356 = vmatprep.subr.mxu0 %v1740
    %6357 = vmatpush1.msra.mxu0 %v1739
    %6358 = vmatprep.subr.mxu0 %v1746
    %6359 = vmatpush1.msra.mxu0 %v1745
    %6360 = vmatprep.subr.mxu0 %v1752
    %6361 = vmatpush1.msra.mxu0 %v1751
    %6362 = vmatprep.subr.mxu0 %v1758
    %6363 = vmatpush1.msra.mxu0 %v1757
    %6364 = vmatprep.subr.mxu0 %v1764
    %6365 = vmatpush1.msra.mxu0 %v1763
    %6366 = vmatprep.subr.mxu0 %v1770
    %6367 = vmatpush1.msra.mxu0 %v1769
    %6368 = vmatprep.subr.mxu0 %v1776
    %6369 = vmatpush1.msra.mxu0 %v1775
    %6370 = vmatprep.subr.mxu0 %v1782
    %6371 = vmatpush1.msra.mxu0 %v1781
    %6372 = vmatprep.subr.mxu0 %v1788
    %6373 = vmatpush1.msra.mxu0 %v1787
    %6374 = vmatprep.subr.mxu0 %v1794
    %6375 = vmatpush1.msra.mxu0 %v1793
    %6376 = vmatprep.subr.mxu0 %v1800
    %6377 = vmatpush1.msra.mxu0 %v1799
    %6378 = vmatprep.mubr.f32.mxu0 %v5810
    %6379 = vmatmul.mubr.f32.gmra.mrb[0].mxu0 %v5809
    %v6380 = vpop.f32.mrb[0].mxu0
    %v6381 = vadd.f32 0.0, %v6380
    %v6382 = vpop.f32.mrb[0].mxu0
    %v6383 = vadd.f32 0.0, %v6382
    %6384 = vdwg.mxu0
    %6385 = vmatprep.subr.mxu0 %v1616
    %6386 = vmatpush1.msra.mxu0 %v1615
    %6387 = vmatprep.subr.mxu0 %v1622
    %6388 = vmatpush1.msra.mxu0 %v1621
    %6389 = vmatprep.subr.mxu0 %v1628
    %6390 = vmatpush1.msra.mxu0 %v1627
    %6391 = vmatprep.subr.mxu0 %v1634
    %6392 = vmatpush1.msra.mxu0 %v1633
    %6393 = vmatprep.subr.mxu0 %v1640
    %6394 = vmatpush1.msra.mxu0 %v1639
    %6395 = vmatprep.subr.mxu0 %v1646
    %6396 = vmatpush1.msra.mxu0 %v1645
    %6397 = vmatprep.subr.mxu0 %v1652
    %6398 = vmatpush1.msra.mxu0 %v1651
    %6399 = vmatprep.subr.mxu0 %v1658
    %6400 = vmatpush1.msra.mxu0 %v1657
    %6401 = vmatprep.subr.mxu0 %v1664
    %6402 = vmatpush1.msra.mxu0 %v1663
    %6403 = vmatprep.subr.mxu0 %v1670
    %6404 = vmatpush1.msra.mxu0 %v1669
    %6405 = vmatprep.subr.mxu0 %v1676
    %6406 = vmatpush1.msra.mxu0 %v1675
    %6407 = vmatprep.subr.mxu0 %v1682
    %6408 = vmatpush1.msra.mxu0 %v1681
    %6409 = vmatprep.subr.mxu0 %v1688
    %6410 = vmatpush1.msra.mxu0 %v1687
    %6411 = vmatprep.subr.mxu0 %v1694
    %6412 = vmatpush1.msra.mxu0 %v1693
    %6413 = vmatprep.subr.mxu0 %v1700
    %6414 = vmatpush1.msra.mxu0 %v1699
    %6415 = vmatprep.subr.mxu0 %v1706
    %6416 = vmatpush1.msra.mxu0 %v1705
    %6417 = vmatprep.subr.mxu0 %v1712
    %6418 = vmatpush1.msra.mxu0 %v1711
    %6419 = vmatprep.subr.mxu0 %v1718
    %6420 = vmatpush1.msra.mxu0 %v1717
    %6421 = vmatprep.subr.mxu0 %v1724
    %6422 = vmatpush1.msra.mxu0 %v1723
    %6423 = vmatprep.subr.mxu0 %v1730
    %6424 = vmatpush1.msra.mxu0 %v1729
    %6425 = vmatprep.subr.mxu0 %v1736
    %6426 = vmatpush1.msra.mxu0 %v1735
    %6427 = vmatprep.subr.mxu0 %v1742
    %6428 = vmatpush1.msra.mxu0 %v1741
    %6429 = vmatprep.subr.mxu0 %v1748
    %6430 = vmatpush1.msra.mxu0 %v1747
    %6431 = vmatprep.subr.mxu0 %v1754
    %6432 = vmatpush1.msra.mxu0 %v1753
    %6433 = vmatprep.subr.mxu0 %v1760
    %6434 = vmatpush1.msra.mxu0 %v1759
    %6435 = vmatprep.subr.mxu0 %v1766
    %6436 = vmatpush1.msra.mxu0 %v1765
    %6437 = vmatprep.subr.mxu0 %v1772
    %6438 = vmatpush1.msra.mxu0 %v1771
    %6439 = vmatprep.subr.mxu0 %v1778
    %6440 = vmatpush1.msra.mxu0 %v1777
    %6441 = vmatprep.subr.mxu0 %v1784
    %6442 = vmatpush1.msra.mxu0 %v1783
    %6443 = vmatprep.subr.mxu0 %v1790
    %6444 = vmatpush1.msra.mxu0 %v1789
    %6445 = vmatprep.subr.mxu0 %v1796
    %6446 = vmatpush1.msra.mxu0 %v1795
    %6447 = vmatprep.subr.mxu0 %v1802
    %6448 = vmatpush1.msra.mxu0 %v1801
    %6449 = vmatprep.mubr.f32.mxu0 %v5810
    %6450 = vmatmul.mubr.f32.gmra.mrb[0].mxu0 %v5809
    %v6451 = vpop.f32.mrb[0].mxu0
    %v6452 = vadd.f32 0.0, %v6451
    %v6453 = vpop.f32.mrb[0].mxu0
    %v6454 = vadd.f32 0.0, %v6453
    %6455 = vdwg.mxu0
    %s6456 = scalar_lea.vmem [#allocation2], 336
    %v6457 = vld [vmem:[%s6456] sm:$0xff]
    %v6458 = vld [vmem:[%s6456 + $0x8] sm:$0xff]
    %v6459 = vld [vmem:[%s6456 + $0x10] sm:$0xff]
    %v6460 = vld [vmem:[%s6456 + $0x18] sm:$0xff]
    %v6461 = vld [vmem:[%s6456 + $0x20] sm:$0xff]
    %v6462 = vld [vmem:[%s6456 + $0x28] sm:$0xff]
    %v6463 = vadd.f32 %v6457, %v5878
    %v6464 = vadd.f32 %v6458, %v5880
    %v6465 = vxor.u32 %v6463, 2147483648
    %v6466 = vxor.u32 %v6464, 2147483648
    %v6467 = vmul.f32 %v6465, 1.442695
    %v6468 = vpow.pop %v6467
    %v6469 = vmul.f32 %v6466, 1.442695
    %v6470 = vpow.pop %v6469
    %v6471 = vadd.f32 %v6468, 1.0
    %v6472 = vadd.f32 %v6470, 1.0
    %v6473 = vrcp.pop %v6471
    %v6474 = vmul.f32 1.0, %v6473
    %v6475 = vrcp.pop %v6472
    %v6476 = vmul.f32 1.0, %v6475
    %v6477 = vadd.f32 %v6459, %v5949
    %v6478 = vadd.f32 %v6460, %v5951
    %v6479 = vxor.u32 %v6477, 2147483648
    %v6480 = vxor.u32 %v6478, 2147483648
    %v6481 = vmul.f32 %v6479, 1.442695
    %v6482 = vpow.pop %v6481
    %v6483 = vmul.f32 %v6480, 1.442695
    %v6484 = vpow.pop %v6483
    %v6485 = vadd.f32 %v6482, 1.0
    %v6486 = vadd.f32 %v6484, 1.0
    %v6487 = vrcp.pop %v6485
    %v6488 = vmul.f32 1.0, %v6487
    %v6489 = vrcp.pop %v6486
    %v6490 = vmul.f32 1.0, %v6489
    %v6491 = vadd.f32 %v6020, %v694
    %v6492 = vadd.f32 %v6022, %v698
    %v6493 = vmul.f32 %v6474, %v6491
    %v6494 = vmul.f32 %v6476, %v6492
    %v6495 = vadd.f32 %v6461, %v6493
    %v6496 = vadd.f32 %v6462, %v6494
    %v6497 = vtanh.pop %v6495
    %v6498 = vtanh.pop %v6496
    %v6499 = vsub.f32 1.0, %v6488
    %v6500 = vsub.f32 1.0, %v6490
    %v6501 = vmul.f32 %v6499, %v6497
    %v6502 = vmul.f32 %v6500, %v6498
    %v6503 = vmul.f32 %v6488, %v5765
    %v6504 = vmul.f32 %v6490, %v5766
    %v6505 = vadd.f32 %v6501, %v6503
    %v6506 = vadd.f32 %v6502, %v6504
    %v6507 = vadd.f32 %v6237, %v6310
    %v6508 = vadd.f32 %v6238, %v6312
    %v6509 = vxor.u32 %v6507, 2147483648
    %v6510 = vxor.u32 %v6508, 2147483648
    %v6511 = vmul.f32 %v6509, 1.442695
    %v6512 = vpow.pop %v6511
    %v6513 = vmul.f32 %v6510, 1.442695
    %v6514 = vpow.pop %v6513
    %v6515 = vadd.f32 %v6512, 1.0
    %v6516 = vadd.f32 %v6514, 1.0
    %v6517 = vrcp.pop %v6515
    %v6518 = vmul.f32 1.0, %v6517
    %v6519 = vrcp.pop %v6516
    %v6520 = vmul.f32 1.0, %v6519
    %v6521 = vadd.f32 %v6239, %v6381
    %v6522 = vadd.f32 %v6240, %v6383
    %v6523 = vxor.u32 %v6521, 2147483648
    %v6524 = vxor.u32 %v6522, 2147483648
    %v6525 = vmul.f32 %v6523, 1.442695
    %v6526 = vpow.pop %v6525
    %v6527 = vmul.f32 %v6524, 1.442695
    %v6528 = vpow.pop %v6527
    %v6529 = vadd.f32 %v6526, 1.0
    %v6530 = vadd.f32 %v6528, 1.0
    %v6531 = vrcp.pop %v6529
    %v6532 = vmul.f32 1.0, %v6531
    %v6533 = vrcp.pop %v6530
    %v6534 = vmul.f32 1.0, %v6533
    %v6535 = vadd.f32 %v6452, %v706
    %v6536 = vadd.f32 %v6454, %v710
    %v6537 = vmul.f32 %v6518, %v6535
    %v6538 = vmul.f32 %v6520, %v6536
    %v6539 = vadd.f32 %v6241, %v6537
    %v6540 = vadd.f32 %v6242, %v6538
    %v6541 = vtanh.pop %v6539
    %v6542 = vtanh.pop %v6540
    %v6543 = vsub.f32 1.0, %v6532
    %v6544 = vsub.f32 1.0, %v6534
    %v6545 = vmul.f32 %v6543, %v6541
    %v6546 = vmul.f32 %v6544, %v6542
    %v6547 = vmul.f32 %v6532, %v5809
    %v6548 = vmul.f32 %v6534, %v5810
    %v6549 = vadd.f32 %v6545, %v6547
    %v6550 = vadd.f32 %v6546, %v6548
    %6551 = vmatprep.subr.mxu0 %v802
    %6552 = vmatpush1.msra.mxu0 %v801
    %6553 = vmatprep.subr.mxu0 %v814
    %6554 = vmatpush1.msra.mxu0 %v813
    %6555 = vmatprep.subr.mxu0 %v826
    %6556 = vmatpush1.msra.mxu0 %v825
    %6557 = vmatprep.subr.mxu0 %v838
    %6558 = vmatpush1.msra.mxu0 %v837
    %6559 = vmatprep.subr.mxu0 %v850
    %6560 = vmatpush1.msra.mxu0 %v849
    %6561 = vmatprep.subr.mxu0 %v862
    %6562 = vmatpush1.msra.mxu0 %v861
    %6563 = vmatprep.subr.mxu0 %v874
    %6564 = vmatpush1.msra.mxu0 %v873
    %6565 = vmatprep.subr.mxu0 %v886
    %6566 = vmatpush1.msra.mxu0 %v885
    %6567 = vmatprep.subr.mxu0 %v898
    %6568 = vmatpush1.msra.mxu0 %v897
    %6569 = vmatprep.subr.mxu0 %v910
    %6570 = vmatpush1.msra.mxu0 %v909
    %6571 = vmatprep.subr.mxu0 %v922
    %6572 = vmatpush1.msra.mxu0 %v921
    %6573 = vmatprep.subr.mxu0 %v934
    %6574 = vmatpush1.msra.mxu0 %v933
    %6575 = vmatprep.subr.mxu0 %v946
    %6576 = vmatpush1.msra.mxu0 %v945
    %6577 = vmatprep.subr.mxu0 %v958
    %6578 = vmatpush1.msra.mxu0 %v957
    %6579 = vmatprep.subr.mxu0 %v970
    %6580 = vmatpush1.msra.mxu0 %v969
    %6581 = vmatprep.subr.mxu0 %v982
    %6582 = vmatpush1.msra.mxu0 %v981
    %6583 = vmatprep.subr.mxu0 %v994
    %6584 = vmatpush1.msra.mxu0 %v993
    %6585 = vmatprep.subr.mxu0 %v1006
    %6586 = vmatpush1.msra.mxu0 %v1005
    %6587 = vmatprep.subr.mxu0 %v1018
    %6588 = vmatpush1.msra.mxu0 %v1017
    %6589 = vmatprep.subr.mxu0 %v1030
    %6590 = vmatpush1.msra.mxu0 %v1029
    %6591 = vmatprep.subr.mxu0 %v1042
    %6592 = vmatpush1.msra.mxu0 %v1041
    %6593 = vmatprep.subr.mxu0 %v1054
    %6594 = vmatpush1.msra.mxu0 %v1053
    %6595 = vmatprep.subr.mxu0 %v1066
    %6596 = vmatpush1.msra.mxu0 %v1065
    %6597 = vmatprep.subr.mxu0 %v1078
    %6598 = vmatpush1.msra.mxu0 %v1077
    %6599 = vmatprep.subr.mxu0 %v1090
    %6600 = vmatpush1.msra.mxu0 %v1089
    %6601 = vmatprep.subr.mxu0 %v1102
    %6602 = vmatpush1.msra.mxu0 %v1101
    %6603 = vmatprep.subr.mxu0 %v1114
    %6604 = vmatpush1.msra.mxu0 %v1113
    %6605 = vmatprep.subr.mxu0 %v1126
    %6606 = vmatpush1.msra.mxu0 %v1125
    %6607 = vmatprep.subr.mxu0 %v1138
    %6608 = vmatpush1.msra.mxu0 %v1137
    %6609 = vmatprep.subr.mxu0 %v1150
    %6610 = vmatpush1.msra.mxu0 %v1149
    %6611 = vmatprep.subr.mxu0 %v1162
    %6612 = vmatpush1.msra.mxu0 %v1161
    %6613 = vmatprep.subr.mxu0 %v1174
    %6614 = vmatpush1.msra.mxu0 %v1173
    %6615 = vmatprep.mubr.f32.mxu0 %v6506
    %6616 = vmatmul.mubr.f32.gmra.mrb[0].mxu0 %v6505
    %v6617 = vpop.f32.mrb[0].mxu0
    %v6618 = vadd.f32 0.0, %v6617
    %v6619 = vpop.f32.mrb[0].mxu0
    %v6620 = vadd.f32 0.0, %v6619
    %6621 = vdwg.mxu0
    %6622 = vmatprep.subr.mxu0 %v804
    %6623 = vmatpush1.msra.mxu0 %v803
    %6624 = vmatprep.subr.mxu0 %v816
    %6625 = vmatpush1.msra.mxu0 %v815
    %6626 = vmatprep.subr.mxu0 %v828
    %6627 = vmatpush1.msra.mxu0 %v827
    %6628 = vmatprep.subr.mxu0 %v840
    %6629 = vmatpush1.msra.mxu0 %v839
    %6630 = vmatprep.subr.mxu0 %v852
    %6631 = vmatpush1.msra.mxu0 %v851
    %6632 = vmatprep.subr.mxu0 %v864
    %6633 = vmatpush1.msra.mxu0 %v863
    %6634 = vmatprep.subr.mxu0 %v876
    %6635 = vmatpush1.msra.mxu0 %v875
    %6636 = vmatprep.subr.mxu0 %v888
    %6637 = vmatpush1.msra.mxu0 %v887
    %6638 = vmatprep.subr.mxu0 %v900
    %6639 = vmatpush1.msra.mxu0 %v899
    %6640 = vmatprep.subr.mxu0 %v912
    %6641 = vmatpush1.msra.mxu0 %v911
    %6642 = vmatprep.subr.mxu0 %v924
    %6643 = vmatpush1.msra.mxu0 %v923
    %6644 = vmatprep.subr.mxu0 %v936
    %6645 = vmatpush1.msra.mxu0 %v935
    %6646 = vmatprep.subr.mxu0 %v948
    %6647 = vmatpush1.msra.mxu0 %v947
    %6648 = vmatprep.subr.mxu0 %v960
    %6649 = vmatpush1.msra.mxu0 %v959
    %6650 = vmatprep.subr.mxu0 %v972
    %6651 = vmatpush1.msra.mxu0 %v971
    %6652 = vmatprep.subr.mxu0 %v984
    %6653 = vmatpush1.msra.mxu0 %v983
    %6654 = vmatprep.subr.mxu0 %v996
    %6655 = vmatpush1.msra.mxu0 %v995
    %6656 = vmatprep.subr.mxu0 %v1008
    %6657 = vmatpush1.msra.mxu0 %v1007
    %6658 = vmatprep.subr.mxu0 %v1020
    %6659 = vmatpush1.msra.mxu0 %v1019
    %6660 = vmatprep.subr.mxu0 %v1032
    %6661 = vmatpush1.msra.mxu0 %v1031
    %6662 = vmatprep.subr.mxu0 %v1044
    %6663 = vmatpush1.msra.mxu0 %v1043
    %6664 = vmatprep.subr.mxu0 %v1056
    %6665 = vmatpush1.msra.mxu0 %v1055
    %6666 = vmatprep.subr.mxu0 %v1068
    %6667 = vmatpush1.msra.mxu0 %v1067
    %6668 = vmatprep.subr.mxu0 %v1080
    %6669 = vmatpush1.msra.mxu0 %v1079
    %6670 = vmatprep.subr.mxu0 %v1092
    %6671 = vmatpush1.msra.mxu0 %v1091
    %6672 = vmatprep.subr.mxu0 %v1104
    %6673 = vmatpush1.msra.mxu0 %v1103
    %6674 = vmatprep.subr.mxu0 %v1116
    %6675 = vmatpush1.msra.mxu0 %v1115
    %6676 = vmatprep.subr.mxu0 %v1128
    %6677 = vmatpush1.msra.mxu0 %v1127
    %6678 = vmatprep.subr.mxu0 %v1140
    %6679 = vmatpush1.msra.mxu0 %v1139
    %6680 = vmatprep.subr.mxu0 %v1152
    %6681 = vmatpush1.msra.mxu0 %v1151
    %6682 = vmatprep.subr.mxu0 %v1164
    %6683 = vmatpush1.msra.mxu0 %v1163
    %6684 = vmatprep.subr.mxu0 %v1176
    %6685 = vmatpush1.msra.mxu0 %v1175
    %6686 = vmatprep.mubr.f32.mxu0 %v6506
    %6687 = vmatmul.mubr.f32.gmra.mrb[0].mxu0 %v6505
    %v6688 = vpop.f32.mrb[0].mxu0
    %v6689 = vadd.f32 0.0, %v6688
    %v6690 = vpop.f32.mrb[0].mxu0
    %v6691 = vadd.f32 0.0, %v6690
    %6692 = vdwg.mxu0
    %6693 = vmatprep.subr.mxu0 %v806
    %6694 = vmatpush1.msra.mxu0 %v805
    %6695 = vmatprep.subr.mxu0 %v818
    %6696 = vmatpush1.msra.mxu0 %v817
    %6697 = vmatprep.subr.mxu0 %v830
    %6698 = vmatpush1.msra.mxu0 %v829
    %6699 = vmatprep.subr.mxu0 %v842
    %6700 = vmatpush1.msra.mxu0 %v841
    %6701 = vmatprep.subr.mxu0 %v854
    %6702 = vmatpush1.msra.mxu0 %v853
    %6703 = vmatprep.subr.mxu0 %v866
    %6704 = vmatpush1.msra.mxu0 %v865
    %6705 = vmatprep.subr.mxu0 %v878
    %6706 = vmatpush1.msra.mxu0 %v877
    %6707 = vmatprep.subr.mxu0 %v890
    %6708 = vmatpush1.msra.mxu0 %v889
    %6709 = vmatprep.subr.mxu0 %v902
    %6710 = vmatpush1.msra.mxu0 %v901
    %6711 = vmatprep.subr.mxu0 %v914
    %6712 = vmatpush1.msra.mxu0 %v913
    %6713 = vmatprep.subr.mxu0 %v926
    %6714 = vmatpush1.msra.mxu0 %v925
    %6715 = vmatprep.subr.mxu0 %v938
    %6716 = vmatpush1.msra.mxu0 %v937
    %6717 = vmatprep.subr.mxu0 %v950
    %6718 = vmatpush1.msra.mxu0 %v949
    %6719 = vmatprep.subr.mxu0 %v962
    %6720 = vmatpush1.msra.mxu0 %v961
    %6721 = vmatprep.subr.mxu0 %v974
    %6722 = vmatpush1.msra.mxu0 %v973
    %6723 = vmatprep.subr.mxu0 %v986
    %6724 = vmatpush1.msra.mxu0 %v985
    %6725 = vmatprep.subr.mxu0 %v998
    %6726 = vmatpush1.msra.mxu0 %v997
    %6727 = vmatprep.subr.mxu0 %v1010
    %6728 = vmatpush1.msra.mxu0 %v1009
    %6729 = vmatprep.subr.mxu0 %v1022
    %6730 = vmatpush1.msra.mxu0 %v1021
    %6731 = vmatprep.subr.mxu0 %v1034
    %6732 = vmatpush1.msra.mxu0 %v1033
    %6733 = vmatprep.subr.mxu0 %v1046
    %6734 = vmatpush1.msra.mxu0 %v1045
    %6735 = vmatprep.subr.mxu0 %v1058
    %6736 = vmatpush1.msra.mxu0 %v1057
    %6737 = vmatprep.subr.mxu0 %v1070
    %6738 = vmatpush1.msra.mxu0 %v1069
    %6739 = vmatprep.subr.mxu0 %v1082
    %6740 = vmatpush1.msra.mxu0 %v1081
    %6741 = vmatprep.subr.mxu0 %v1094
    %6742 = vmatpush1.msra.mxu0 %v1093
    %6743 = vmatprep.subr.mxu0 %v1106
    %6744 = vmatpush1.msra.mxu0 %v1105
    %6745 = vmatprep.subr.mxu0 %v1118
    %6746 = vmatpush1.msra.mxu0 %v1117
    %6747 = vmatprep.subr.mxu0 %v1130
    %6748 = vmatpush1.msra.mxu0 %v1129
    %6749 = vmatprep.subr.mxu0 %v1142
    %6750 = vmatpush1.msra.mxu0 %v1141
    %6751 = vmatprep.subr.mxu0 %v1154
    %6752 = vmatpush1.msra.mxu0 %v1153
    %6753 = vmatprep.subr.mxu0 %v1166
    %6754 = vmatpush1.msra.mxu0 %v1165
    %6755 = vmatprep.subr.mxu0 %v1178
    %6756 = vmatpush1.msra.mxu0 %v1177
    %6757 = vmatprep.mubr.f32.mxu0 %v6506
    %6758 = vmatmul.mubr.f32.gmra.mrb[0].mxu0 %v6505
    %v6759 = vpop.f32.mrb[0].mxu0
    %v6760 = vadd.f32 0.0, %v6759
    %v6761 = vpop.f32.mrb[0].mxu0
    %v6762 = vadd.f32 0.0, %v6761
    %6763 = vdwg.mxu0
    %v6764 = vadd.f32 %v6618, %v718
    %v6765 = vadd.f32 %v6620, %v722
    %v6766 = vadd.f32 %v6689, %v726
    %v6767 = vadd.f32 %v6691, %v730
    %v6768 = vadd.f32 %v6760, %v734
    %v6769 = vadd.f32 %v6762, %v738
    %6770 = vmatprep.subr.mxu0 %v1612
    %6771 = vmatpush1.msra.mxu0 %v1611
    %6772 = vmatprep.subr.mxu0 %v1618
    %6773 = vmatpush1.msra.mxu0 %v1617
    %6774 = vmatprep.subr.mxu0 %v1624
    %6775 = vmatpush1.msra.mxu0 %v1623
    %6776 = vmatprep.subr.mxu0 %v1630
    %6777 = vmatpush1.msra.mxu0 %v1629
    %6778 = vmatprep.subr.mxu0 %v1636
    %6779 = vmatpush1.msra.mxu0 %v1635
    %6780 = vmatprep.subr.mxu0 %v1642
    %6781 = vmatpush1.msra.mxu0 %v1641
    %6782 = vmatprep.subr.mxu0 %v1648
    %6783 = vmatpush1.msra.mxu0 %v1647
    %6784 = vmatprep.subr.mxu0 %v1654
    %6785 = vmatpush1.msra.mxu0 %v1653
    %6786 = vmatprep.subr.mxu0 %v1660
    %6787 = vmatpush1.msra.mxu0 %v1659
    %6788 = vmatprep.subr.mxu0 %v1666
    %6789 = vmatpush1.msra.mxu0 %v1665
    %6790 = vmatprep.subr.mxu0 %v1672
    %6791 = vmatpush1.msra.mxu0 %v1671
    %6792 = vmatprep.subr.mxu0 %v1678
    %6793 = vmatpush1.msra.mxu0 %v1677
    %6794 = vmatprep.subr.mxu0 %v1684
    %6795 = vmatpush1.msra.mxu0 %v1683
    %6796 = vmatprep.subr.mxu0 %v1690
    %6797 = vmatpush1.msra.mxu0 %v1689
    %6798 = vmatprep.subr.mxu0 %v1696
    %6799 = vmatpush1.msra.mxu0 %v1695
    %6800 = vmatprep.subr.mxu0 %v1702
    %6801 = vmatpush1.msra.mxu0 %v1701
    %6802 = vmatprep.subr.mxu0 %v1708
    %6803 = vmatpush1.msra.mxu0 %v1707
    %6804 = vmatprep.subr.mxu0 %v1714
    %6805 = vmatpush1.msra.mxu0 %v1713
    %6806 = vmatprep.subr.mxu0 %v1720
    %6807 = vmatpush1.msra.mxu0 %v1719
    %6808 = vmatprep.subr.mxu0 %v1726
    %6809 = vmatpush1.msra.mxu0 %v1725
    %6810 = vmatprep.subr.mxu0 %v1732
    %6811 = vmatpush1.msra.mxu0 %v1731
    %6812 = vmatprep.subr.mxu0 %v1738
    %6813 = vmatpush1.msra.mxu0 %v1737
    %6814 = vmatprep.subr.mxu0 %v1744
    %6815 = vmatpush1.msra.mxu0 %v1743
    %6816 = vmatprep.subr.mxu0 %v1750
    %6817 = vmatpush1.msra.mxu0 %v1749
    %6818 = vmatprep.subr.mxu0 %v1756
    %6819 = vmatpush1.msra.mxu0 %v1755
    %6820 = vmatprep.subr.mxu0 %v1762
    %6821 = vmatpush1.msra.mxu0 %v1761
    %6822 = vmatprep.subr.mxu0 %v1768
    %6823 = vmatpush1.msra.mxu0 %v1767
    %6824 = vmatprep.subr.mxu0 %v1774
    %6825 = vmatpush1.msra.mxu0 %v1773
    %6826 = vmatprep.subr.mxu0 %v1780
    %6827 = vmatpush1.msra.mxu0 %v1779
    %6828 = vmatprep.subr.mxu0 %v1786
    %6829 = vmatpush1.msra.mxu0 %v1785
    %6830 = vmatprep.subr.mxu0 %v1792
    %6831 = vmatpush1.msra.mxu0 %v1791
    %6832 = vmatprep.subr.mxu0 %v1798
    %6833 = vmatpush1.msra.mxu0 %v1797
    %6834 = vmatprep.mubr.f32.mxu0 %v6550
    %6835 = vmatmul.mubr.f32.gmra.mrb[0].mxu0 %v6549
    %v6836 = vpop.f32.mrb[0].mxu0
    %v6837 = vadd.f32 0.0, %v6836
    %v6838 = vpop.f32.mrb[0].mxu0
    %v6839 = vadd.f32 0.0, %v6838
    %6840 = vdwg.mxu0
    %6841 = vmatprep.subr.mxu0 %v1614
    %6842 = vmatpush1.msra.mxu0 %v1613
    %6843 = vmatprep.subr.mxu0 %v1620
    %6844 = vmatpush1.msra.mxu0 %v1619
    %6845 = vmatprep.subr.mxu0 %v1626
    %6846 = vmatpush1.msra.mxu0 %v1625
    %6847 = vmatprep.subr.mxu0 %v1632
    %6848 = vmatpush1.msra.mxu0 %v1631
    %6849 = vmatprep.subr.mxu0 %v1638
    %6850 = vmatpush1.msra.mxu0 %v1637
    %6851 = vmatprep.subr.mxu0 %v1644
    %6852 = vmatpush1.msra.mxu0 %v1643
    %6853 = vmatprep.subr.mxu0 %v1650
    %6854 = vmatpush1.msra.mxu0 %v1649
    %6855 = vmatprep.subr.mxu0 %v1656
    %6856 = vmatpush1.msra.mxu0 %v1655
    %6857 = vmatprep.subr.mxu0 %v1662
    %6858 = vmatpush1.msra.mxu0 %v1661
    %6859 = vmatprep.subr.mxu0 %v1668
    %6860 = vmatpush1.msra.mxu0 %v1667
    %6861 = vmatprep.subr.mxu0 %v1674
    %6862 = vmatpush1.msra.mxu0 %v1673
    %6863 = vmatprep.subr.mxu0 %v1680
    %6864 = vmatpush1.msra.mxu0 %v1679
    %6865 = vmatprep.subr.mxu0 %v1686
    %6866 = vmatpush1.msra.mxu0 %v1685
    %6867 = vmatprep.subr.mxu0 %v1692
    %6868 = vmatpush1.msra.mxu0 %v1691
    %6869 = vmatprep.subr.mxu0 %v1698
    %6870 = vmatpush1.msra.mxu0 %v1697
    %6871 = vmatprep.subr.mxu0 %v1704
    %6872 = vmatpush1.msra.mxu0 %v1703
    %6873 = vmatprep.subr.mxu0 %v1710
    %6874 = vmatpush1.msra.mxu0 %v1709
    %6875 = vmatprep.subr.mxu0 %v1716
    %6876 = vmatpush1.msra.mxu0 %v1715
    %6877 = vmatprep.subr.mxu0 %v1722
    %6878 = vmatpush1.msra.mxu0 %v1721
    %6879 = vmatprep.subr.mxu0 %v1728
    %6880 = vmatpush1.msra.mxu0 %v1727
    %6881 = vmatprep.subr.mxu0 %v1734
    %6882 = vmatpush1.msra.mxu0 %v1733
    %6883 = vmatprep.subr.mxu0 %v1740
    %6884 = vmatpush1.msra.mxu0 %v1739
    %6885 = vmatprep.subr.mxu0 %v1746
    %6886 = vmatpush1.msra.mxu0 %v1745
    %6887 = vmatprep.subr.mxu0 %v1752
    %6888 = vmatpush1.msra.mxu0 %v1751
    %6889 = vmatprep.subr.mxu0 %v1758
    %6890 = vmatpush1.msra.mxu0 %v1757
    %6891 = vmatprep.subr.mxu0 %v1764
    %6892 = vmatpush1.msra.mxu0 %v1763
    %6893 = vmatprep.subr.mxu0 %v1770
    %6894 = vmatpush1.msra.mxu0 %v1769
    %6895 = vmatprep.subr.mxu0 %v1776
    %6896 = vmatpush1.msra.mxu0 %v1775
    %6897 = vmatprep.subr.mxu0 %v1782
    %6898 = vmatpush1.msra.mxu0 %v1781
    %6899 = vmatprep.subr.mxu0 %v1788
    %6900 = vmatpush1.msra.mxu0 %v1787
    %6901 = vmatprep.subr.mxu0 %v1794
    %6902 = vmatpush1.msra.mxu0 %v1793
    %6903 = vmatprep.subr.mxu0 %v1800
    %6904 = vmatpush1.msra.mxu0 %v1799
    %6905 = vmatprep.mubr.f32.mxu0 %v6550
    %6906 = vmatmul.mubr.f32.gmra.mrb[0].mxu0 %v6549
    %v6907 = vpop.f32.mrb[0].mxu0
    %v6908 = vadd.f32 0.0, %v6907
    %v6909 = vpop.f32.mrb[0].mxu0
    %v6910 = vadd.f32 0.0, %v6909
    %6911 = vdwg.mxu0
    %6912 = vmatprep.subr.mxu0 %v1616
    %6913 = vmatpush1.msra.mxu0 %v1615
    %6914 = vmatprep.subr.mxu0 %v1622
    %6915 = vmatpush1.msra.mxu0 %v1621
    %6916 = vmatprep.subr.mxu0 %v1628
    %6917 = vmatpush1.msra.mxu0 %v1627
    %6918 = vmatprep.subr.mxu0 %v1634
    %6919 = vmatpush1.msra.mxu0 %v1633
    %6920 = vmatprep.subr.mxu0 %v1640
    %6921 = vmatpush1.msra.mxu0 %v1639
    %6922 = vmatprep.subr.mxu0 %v1646
    %6923 = vmatpush1.msra.mxu0 %v1645
    %6924 = vmatprep.subr.mxu0 %v1652
    %6925 = vmatpush1.msra.mxu0 %v1651
    %6926 = vmatprep.subr.mxu0 %v1658
    %6927 = vmatpush1.msra.mxu0 %v1657
    %6928 = vmatprep.subr.mxu0 %v1664
    %6929 = vmatpush1.msra.mxu0 %v1663
    %6930 = vmatprep.subr.mxu0 %v1670
    %6931 = vmatpush1.msra.mxu0 %v1669
    %6932 = vmatprep.subr.mxu0 %v1676
    %6933 = vmatpush1.msra.mxu0 %v1675
    %6934 = vmatprep.subr.mxu0 %v1682
    %6935 = vmatpush1.msra.mxu0 %v1681
    %6936 = vmatprep.subr.mxu0 %v1688
    %6937 = vmatpush1.msra.mxu0 %v1687
    %6938 = vmatprep.subr.mxu0 %v1694
    %6939 = vmatpush1.msra.mxu0 %v1693
    %6940 = vmatprep.subr.mxu0 %v1700
    %6941 = vmatpush1.msra.mxu0 %v1699
    %6942 = vmatprep.subr.mxu0 %v1706
    %6943 = vmatpush1.msra.mxu0 %v1705
    %6944 = vmatprep.subr.mxu0 %v1712
    %6945 = vmatpush1.msra.mxu0 %v1711
    %6946 = vmatprep.subr.mxu0 %v1718
    %6947 = vmatpush1.msra.mxu0 %v1717
    %6948 = vmatprep.subr.mxu0 %v1724
    %6949 = vmatpush1.msra.mxu0 %v1723
    %6950 = vmatprep.subr.mxu0 %v1730
    %6951 = vmatpush1.msra.mxu0 %v1729
    %6952 = vmatprep.subr.mxu0 %v1736
    %6953 = vmatpush1.msra.mxu0 %v1735
    %6954 = vmatprep.subr.mxu0 %v1742
    %6955 = vmatpush1.msra.mxu0 %v1741
    %6956 = vmatprep.subr.mxu0 %v1748
    %6957 = vmatpush1.msra.mxu0 %v1747
    %6958 = vmatprep.subr.mxu0 %v1754
    %6959 = vmatpush1.msra.mxu0 %v1753
    %6960 = vmatprep.subr.mxu0 %v1760
    %6961 = vmatpush1.msra.mxu0 %v1759
    %6962 = vmatprep.subr.mxu0 %v1766
    %6963 = vmatpush1.msra.mxu0 %v1765
    %6964 = vmatprep.subr.mxu0 %v1772
    %6965 = vmatpush1.msra.mxu0 %v1771
    %6966 = vmatprep.subr.mxu0 %v1778
    %6967 = vmatpush1.msra.mxu0 %v1777
    %6968 = vmatprep.subr.mxu0 %v1784
    %6969 = vmatpush1.msra.mxu0 %v1783
    %6970 = vmatprep.subr.mxu0 %v1790
    %6971 = vmatpush1.msra.mxu0 %v1789
    %6972 = vmatprep.subr.mxu0 %v1796
    %6973 = vmatpush1.msra.mxu0 %v1795
    %6974 = vmatprep.subr.mxu0 %v1802
    %6975 = vmatpush1.msra.mxu0 %v1801
    %6976 = vmatprep.mubr.f32.mxu0 %v6550
    %6977 = vmatmul.mubr.f32.gmra.mrb[0].mxu0 %v6549
    %v6978 = vpop.f32.mrb[0].mxu0
    %v6979 = vadd.f32 0.0, %v6978
    %v6980 = vpop.f32.mrb[0].mxu0
    %v6981 = vadd.f32 0.0, %v6980
    %6982 = vdwg.mxu0
    %v6983 = vadd.f32 %v6764, %v6837
    %v6984 = vadd.f32 %v6765, %v6839
    %v6985 = vxor.u32 %v6983, 2147483648
    %v6986 = vxor.u32 %v6984, 2147483648
    %v6987 = vmul.f32 %v6985, 1.442695
    %v6988 = vpow.pop %v6987
    %v6989 = vmul.f32 %v6986, 1.442695
    %v6990 = vpow.pop %v6989
    %v6991 = vadd.f32 %v6988, 1.0
    %v6992 = vadd.f32 %v6990, 1.0
    %v6993 = vrcp.pop %v6991
    %v6994 = vmul.f32 1.0, %v6993
    %v6995 = vrcp.pop %v6992
    %v6996 = vmul.f32 1.0, %v6995
    %v6997 = vadd.f32 %v6766, %v6908
    %v6998 = vadd.f32 %v6767, %v6910
    %v6999 = vxor.u32 %v6997, 2147483648
    %v7000 = vxor.u32 %v6998, 2147483648
    %v7001 = vmul.f32 %v6999, 1.442695
    %v7002 = vpow.pop %v7001
    %v7003 = vmul.f32 %v7000, 1.442695
    %v7004 = vpow.pop %v7003
    %v7005 = vadd.f32 %v7002, 1.0
    %v7006 = vadd.f32 %v7004, 1.0
    %v7007 = vrcp.pop %v7005
    %v7008 = vmul.f32 1.0, %v7007
    %v7009 = vrcp.pop %v7006
    %v7010 = vmul.f32 1.0, %v7009
    %v7011 = vadd.f32 %v6979, %v706
    %v7012 = vadd.f32 %v6981, %v710
    %v7013 = vmul.f32 %v6994, %v7011
    %v7014 = vmul.f32 %v6996, %v7012
    %v7015 = vadd.f32 %v6768, %v7013
    %v7016 = vadd.f32 %v6769, %v7014
    %v7017 = vtanh.pop %v7015
    %v7018 = vtanh.pop %v7016
    %v7019 = vsub.f32 1.0, %v7008
    %v7020 = vsub.f32 1.0, %v7010
    %v7021 = vmul.f32 %v7019, %v7017
    %v7022 = vmul.f32 %v7020, %v7018
    %v7023 = vmul.f32 %v7008, %v6549
    %v7024 = vmul.f32 %v7010, %v6550
    %v7025 = vadd.f32 %v7021, %v7023
    %v7026 = vadd.f32 %v7022, %v7024
    %v7027 = vld [vmem:[%s8] sm:$0xff]
    %v7028 = vld [vmem:[%s8 + $0x8] sm:$0xff]
    %v7029 = vld [vmem:[%s8 + $0x10] sm:$0xff]
    %v7030 = vld [vmem:[%s8 + $0x18] sm:$0xff]
    %v7031 = vld [vmem:[%s8 + $0x20] sm:$0xff]
    %v7032 = vld [vmem:[%s8 + $0x28] sm:$0xff]
    %v7033 = vld [vmem:[%s8 + $0x30] sm:$0xff]
    %v7034 = vld [vmem:[%s8 + $0x38] sm:$0xff]
    %v7035 = vld [vmem:[%s8 + $0x40] sm:$0xff]
    %v7036 = vld [vmem:[%s8 + $0x48] sm:$0xff]
    %v7037 = vld [vmem:[%s8 + $0x50] sm:$0xff]
    %v7038 = vld [vmem:[%s8 + $0x58] sm:$0xff]
    %v7039 = vld [vmem:[%s8 + $0x60] sm:$0xff]
    %v7040 = vld [vmem:[%s8 + $0x68] sm:$0xff]
    %v7041 = vld [vmem:[%s8 + $0x70] sm:$0xff]
    %v7042 = vld [vmem:[%s8 + $0x78] sm:$0xff]
    %v7043 = vld [vmem:[%s8 + $0x80] sm:$0xff]
    %v7044 = vld [vmem:[%s8 + $0x88] sm:$0xff]
    %v7045 = vld [vmem:[%s8 + $0x90] sm:$0xff]
    %v7046 = vld [vmem:[%s8 + $0x98] sm:$0xff]
    %v7047 = vld [vmem:[%s8 + $0xa0] sm:$0xff]
    %v7048 = vld [vmem:[%s8 + $0xa8] sm:$0xff]
    %v7049 = vld [vmem:[%s8 + $0xb0] sm:$0xff]
    %v7050 = vld [vmem:[%s8 + $0xb8] sm:$0xff]
    %v7051 = vld [vmem:[%s8 + $0xc0] sm:$0xff]
    %v7052 = vld [vmem:[%s8 + $0xc8] sm:$0xff]
    %v7053 = vld [vmem:[%s8 + $0xd0] sm:$0xff]
    %v7054 = vld [vmem:[%s8 + $0xd8] sm:$0xff]
    %v7055 = vld [vmem:[%s8 + $0xe0] sm:$0xff]
    %v7056 = vld [vmem:[%s8 + $0xe8] sm:$0xff]
    %v7057 = vld [vmem:[%s8 + $0xf0] sm:$0xff]
    %v7058 = vld [vmem:[%s8 + $0xf8] sm:$0xff]
    %v7059 = vld [vmem:[#allocation17] sm:$0x1]
    %v7061 = vlaneseq
    %v7062 = vshrl.u32 %v7061, 7
    %v7063 = vsub.s32 0, %v7062
    %v7064 = vrot.slane %v7059, %v7063
    %7066 = vmatprep.subr.mxu0 0.0
    %7067 = vmatpush1.msra.mxu0 %v7027
    %7068 = vmatprep.subr.mxu0 0.0
    %7069 = vmatpush1.msra.mxu0 %v7028
    %7070 = vmatprep.subr.mxu0 0.0
    %7071 = vmatpush1.msra.mxu0 %v7029
    %7072 = vmatprep.subr.mxu0 0.0
    %7073 = vmatpush1.msra.mxu0 %v7030
    %7074 = vmatprep.subr.mxu0 0.0
    %7075 = vmatpush1.msra.mxu0 %v7031
    %7076 = vmatprep.subr.mxu0 0.0
    %7077 = vmatpush1.msra.mxu0 %v7032
    %7078 = vmatprep.subr.mxu0 0.0
    %7079 = vmatpush1.msra.mxu0 %v7033
    %7080 = vmatprep.subr.mxu0 0.0
    %7081 = vmatpush1.msra.mxu0 %v7034
    %7082 = vmatprep.subr.mxu0 0.0
    %7083 = vmatpush1.msra.mxu0 %v7035
    %7084 = vmatprep.subr.mxu0 0.0
    %7085 = vmatpush1.msra.mxu0 %v7036
    %7086 = vmatprep.subr.mxu0 0.0
    %7087 = vmatpush1.msra.mxu0 %v7037
    %7088 = vmatprep.subr.mxu0 0.0
    %7089 = vmatpush1.msra.mxu0 %v7038
    %7090 = vmatprep.subr.mxu0 0.0
    %7091 = vmatpush1.msra.mxu0 %v7039
    %7092 = vmatprep.subr.mxu0 0.0
    %7093 = vmatpush1.msra.mxu0 %v7040
    %7094 = vmatprep.subr.mxu0 0.0
    %7095 = vmatpush1.msra.mxu0 %v7041
    %7096 = vmatprep.subr.mxu0 0.0
    %7097 = vmatpush1.msra.mxu0 %v7042
    %7098 = vmatprep.subr.mxu0 0.0
    %7099 = vmatpush1.msra.mxu0 %v7043
    %7100 = vmatprep.subr.mxu0 0.0
    %7101 = vmatpush1.msra.mxu0 %v7044
    %7102 = vmatprep.subr.mxu0 0.0
    %7103 = vmatpush1.msra.mxu0 %v7045
    %7104 = vmatprep.subr.mxu0 0.0
    %7105 = vmatpush1.msra.mxu0 %v7046
    %7106 = vmatprep.subr.mxu0 0.0
    %7107 = vmatpush1.msra.mxu0 %v7047
    %7108 = vmatprep.subr.mxu0 0.0
    %7109 = vmatpush1.msra.mxu0 %v7048
    %7110 = vmatprep.subr.mxu0 0.0
    %7111 = vmatpush1.msra.mxu0 %v7049
    %7112 = vmatprep.subr.mxu0 0.0
    %7113 = vmatpush1.msra.mxu0 %v7050
    %7114 = vmatprep.subr.mxu0 0.0
    %7115 = vmatpush1.msra.mxu0 %v7051
    %7116 = vmatprep.subr.mxu0 0.0
    %7117 = vmatpush1.msra.mxu0 %v7052
    %7118 = vmatprep.subr.mxu0 0.0
    %7119 = vmatpush1.msra.mxu0 %v7053
    %7120 = vmatprep.subr.mxu0 0.0
    %7121 = vmatpush1.msra.mxu0 %v7054
    %7122 = vmatprep.subr.mxu0 0.0
    %7123 = vmatpush1.msra.mxu0 %v7055
    %7124 = vmatprep.subr.mxu0 0.0
    %7125 = vmatpush1.msra.mxu0 %v7056
    %7126 = vmatprep.subr.mxu0 0.0
    %7127 = vmatpush1.msra.mxu0 %v7057
    %7128 = vmatprep.subr.mxu0 0.0
    %7129 = vmatpush1.msra.mxu0 %v7058
    %7130 = vmatprep.mubr.f32.mxu0 %v7026
    %7131 = vmatmul.mubr.f32.gmra.mrb[0].mxu0 %v7025
    %v7132 = vpop.f32.mrb[0].mxu0
    %v7133 = vadd.f32 %v7064, %v7132
    %v7134 = vpop.f32.mrb[0].mxu0
    %7135 = vdwg.mxu0
    %v7136 = vmax.f32 %v7133, 0.0
    %v7137 = vld [vmem:[%s10] sm:$0xff]
    %v7138 = vld [vmem:[%s10 + $0x8] sm:$0xff]
    %v7139 = vld [vmem:[%s10 + $0x10] sm:$0xff]
    %v7140 = vld [vmem:[%s10 + $0x18] sm:$0xff]
    %v7141 = vld [vmem:[%s10 + $0x20] sm:$0xff]
    %v7142 = vld [vmem:[%s10 + $0x28] sm:$0xff]
    %v7143 = vld [vmem:[%s10 + $0x30] sm:$0x3]
    %v7144 = vld [vmem:[#allocation18] sm:$0x1]
    %v7146 = vlaneseq
    %v7147 = vshrl.u32 %v7146, 7
    %v7148 = vsub.s32 0, %v7147
    %v7149 = vrot.slane %v7144, %v7148
    %vm7151 = vcmask 408576
    %v7153 = vsel %vm7151, %v7136, 0
    %vm7155 = vcmask 1041408
    %v7157 = vsel %vm7155, %v7143, 0
    %7159 = vmatprep.subr.mxu0 0.0
    %7160 = vmatpush1.msra.mxu0 %v7137
    %7161 = vmatprep.subr.mxu0 0.0
    %7162 = vmatpush1.msra.mxu0 %v7138
    %7163 = vmatprep.subr.mxu0 0.0
    %7164 = vmatpush1.msra.mxu0 %v7139
    %7165 = vmatprep.subr.mxu0 0.0
    %7166 = vmatpush1.msra.mxu0 %v7140
    %7167 = vmatprep.subr.mxu0 0.0
    %7168 = vmatpush1.msra.mxu0 %v7141
    %7169 = vmatprep.subr.mxu0 0.0
    %7170 = vmatpush1.msra.mxu0 %v7142
    %7171 = vmatprep.subr.mxu0 0.0
    %7172 = vmatpush1.msra.mxu0 %v7157
    %7173 = vmatprep.subr.mxu0 0.0
    %7174 = vmatpush1.msra.mxu0 0.0
    %7175 = vmatprep.subr.mxu0 0.0
    %7176 = vmatpush1.msra.mxu0 0.0
    %7177 = vmatprep.subr.mxu0 0.0
    %7178 = vmatpush1.msra.mxu0 0.0
    %7179 = vmatprep.subr.mxu0 0.0
    %7180 = vmatpush1.msra.mxu0 0.0
    %7181 = vmatprep.subr.mxu0 0.0
    %7182 = vmatpush1.msra.mxu0 0.0
    %7183 = vmatprep.subr.mxu0 0.0
    %7184 = vmatpush1.msra.mxu0 0.0
    %7185 = vmatprep.subr.mxu0 0.0
    %7186 = vmatpush1.msra.mxu0 0.0
    %7187 = vmatprep.subr.mxu0 0.0
    %7188 = vmatpush1.msra.mxu0 0.0
    %7189 = vmatprep.subr.mxu0 0.0
    %7190 = vmatpush1.msra.mxu0 0.0
    %7191 = vmatprep.subr.mxu0 0.0
    %7192 = vmatpush1.msra.mxu0 0.0
    %7193 = vmatprep.subr.mxu0 0.0
    %7194 = vmatpush1.msra.mxu0 0.0
    %7195 = vmatprep.subr.mxu0 0.0
    %7196 = vmatpush1.msra.mxu0 0.0
    %7197 = vmatprep.subr.mxu0 0.0
    %7198 = vmatpush1.msra.mxu0 0.0
    %7199 = vmatprep.subr.mxu0 0.0
    %7200 = vmatpush1.msra.mxu0 0.0
    %7201 = vmatprep.subr.mxu0 0.0
    %7202 = vmatpush1.msra.mxu0 0.0
    %7203 = vmatprep.subr.mxu0 0.0
    %7204 = vmatpush1.msra.mxu0 0.0
    %7205 = vmatprep.subr.mxu0 0.0
    %7206 = vmatpush1.msra.mxu0 0.0
    %7207 = vmatprep.subr.mxu0 0.0
    %7208 = vmatpush1.msra.mxu0 0.0
    %7209 = vmatprep.subr.mxu0 0.0
    %7210 = vmatpush1.msra.mxu0 0.0
    %7211 = vmatprep.subr.mxu0 0.0
    %7212 = vmatpush1.msra.mxu0 0.0
    %7213 = vmatprep.subr.mxu0 0.0
    %7214 = vmatpush1.msra.mxu0 0.0
    %7215 = vmatprep.subr.mxu0 0.0
    %7216 = vmatpush1.msra.mxu0 0.0
    %7217 = vmatprep.subr.mxu0 0.0
    %7218 = vmatpush1.msra.mxu0 0.0
    %7219 = vmatprep.subr.mxu0 0.0
    %7220 = vmatpush1.msra.mxu0 0.0
    %7221 = vmatprep.subr.mxu0 0.0
    %7222 = vmatpush1.msra.mxu0 0.0
    %7223 = vmatprep.mubr.f32.mxu0 0.0
    %7224 = vmatmul.mubr.f32.gmra.mrb[0].mxu0 %v7153
    %v7225 = vpop.f32.mrb[0].mxu0
    %v7226 = vadd.f32 %v7149, %v7225
    %v7227 = vpop.f32.mrb[0].mxu0
    %7228 = vdwg.mxu0
    %vm7229 = vcmask 56320
    %7230 = vst.msk [vmem:[#allocation20] sm:$0xff] %vm7229, %v7226
    // Predicated region
    $region90: #{tpu_custom_call.1} parent=1 // pred_check
      _
    $region91: #{tpu_custom_call.1} parent=1 // pred_check_branch
      %7232 = sbr.rel (0) target = $region93
    $region92: #{tpu_custom_call.1} parent=1 // pred_region
      %s7234 = ssub.s32 128, 128
      %7235 = vsyncadd [#allocation5], %s7234
      %s7237 = sshll.u32 [#allocation20], 4
      %s7238 = int_to_ptr.vmem [resolvable:$true] %s7237
      %7240 = dma.vmem_to_hbm [thread:$0]  %s7238, 128, %s12, [#allocation5]
    $region93: #{tpu_custom_call.1} parent=1 // pred_fallthru
      _
    // Predicated region
    $region94: #{tpu_custom_call.1} parent=1 // pred_check
      _
    $region95: #{tpu_custom_call.1} parent=1 // pred_check_branch
      %7242 = sbr.rel (0) target = $region97
    $region96: #{tpu_custom_call.1} parent=1 // pred_region
      %7243 = dma.done [#allocation5], 128
    $region97: #{tpu_custom_call.1} parent=1 // pred_fallthru
      _
    %7244 = vsyncpa [#allocation4], 1
    %7245 = vsyncpa [#allocation7], 1
    %7246 = vsyncpa [#allocation10], 1
    %7247 = vsyncpa [#allocation13], 1
    %7248 = vsyncpa [#allocation16], 1
    %7249 = vsyncpa [#allocation19], 1
    %7250 = vsyncpa [#allocation5], 1

</llo_original>
